<compile_context>
chip_gen: v7x
topology: tpu7x:2x2x1
jax: 0.10.0
libtpu: 0.0.40
codegen_flags: <defaults>
</compile_context>

<pallas_src>
import jax
import jax.numpy as jnp
from jax.experimental import pallas as pl
from jax.experimental.pallas import tpu as pltpu


def _round_up(n, m):
    return (n + m - 1) // m * m


def _pad_to(a, shape):
    return jnp.pad(a, [(0, s - d) for d, s in zip(a.shape, shape)])


# ----------------------------------------------------------------------------
# Kernel
# ----------------------------------------------------------------------------
def vae_kernel(x_ref, eps_ref,
               w1_ref, b1_ref, w23_ref, b23_ref,
               w4_ref, b4_ref, w5_ref, b5_ref,
               xhat_ref, enc_ref):
    z_pad = eps_ref.shape[-1]                      # padded latent width (128)

    x = x_ref[...].astype(jnp.bfloat16)

    # ---- encode: fc1 + ReLU ----
    h = jnp.dot(x, w1_ref[...], preferred_element_type=jnp.float32) + b1_ref[...]
    h = jnp.maximum(h, 0.0)

    # ---- fused fc2|fc3 -> one matmul; lanes [0:z_pad)=mu, [z_pad:2*z_pad)=log_var
    enc = jnp.dot(h.astype(jnp.bfloat16), w23_ref[...],
                  preferred_element_type=jnp.float32) + b23_ref[...]
    mu = enc[:, :z_pad]
    log_var = enc[:, z_pad:]

    # ---- reparameterization (padded lanes: mu=0, log_var=0, eps=0 -> z=0) ----
    z = mu + jnp.exp(log_var * 0.5) * eps_ref[...]

    # ---- decode: fc4 + ReLU, fc5 + sigmoid ----
    h2 = jnp.dot(z.astype(jnp.bfloat16), w4_ref[...],
                 preferred_element_type=jnp.float32) + b4_ref[...]
    h2 = jnp.maximum(h2, 0.0)
    logits = jnp.dot(h2.astype(jnp.bfloat16), w5_ref[...],
                     preferred_element_type=jnp.float32) + b5_ref[...]

    xhat_ref[...] = jax.nn.sigmoid(logits)
    enc_ref[...] = enc                             # lane-dense (B, 256) mu|log_var slab


# ----------------------------------------------------------------------------
# Parameter prep (pad + fuse + bf16) -- do once, reuse across calls
# ----------------------------------------------------------------------------
def prepare_params(params, input_dim, h_dim, z_dim):
    (w1, b1, w2, b2, w3, b3, w4, b4, w5, b5) = params
    in_p = _round_up(input_dim, 128)
    h_p = _round_up(h_dim, 128)
    z_p = _round_up(z_dim, 128)

    w1p = _pad_to(w1, (in_p, h_p)).astype(jnp.bfloat16)
    b1p = _pad_to(b1, (1, h_p))

    # Fused fc2|fc3: mu in lanes [0:z_dim), log_var in lanes [z_p : z_p+z_dim)
    w23 = jnp.zeros((h_p, 2 * z_p), jnp.float32)
    w23 = w23.at[:h_dim, :z_dim].set(w2)
    w23 = w23.at[:h_dim, z_p:z_p + z_dim].set(w3)
    b23 = jnp.zeros((1, 2 * z_p), jnp.float32)
    b23 = b23.at[:, :z_dim].set(b2)
    b23 = b23.at[:, z_p:z_p + z_dim].set(b3)

    w4p = _pad_to(w4, (z_p, h_p)).astype(jnp.bfloat16)
    b4p = _pad_to(b4, (1, h_p))
    w5p = _pad_to(w5, (h_p, in_p)).astype(jnp.bfloat16)
    b5p = _pad_to(b5, (1, in_p))
    return (w1p, b1p, w23.astype(jnp.bfloat16), b23, w4p, b4p, w5p, b5p)


# ----------------------------------------------------------------------------
# Wrapper
# ----------------------------------------------------------------------------
def vae_forward(x, eps, prepared, *, batch_tile=128):
    """x: [B, input_dim] f32, eps: [B, z_dim] f32 (the randn_like noise)."""
    B, input_dim = x.shape
    z_dim = eps.shape[1]
    (w1, b1, w23, b23, w4, b4, w5, b5) = prepared
    in_p, h_p = w1.shape
    z_p = w4.shape[0]
    two_z_p = w23.shape[1]

    bt = min(batch_tile, _round_up(B, 8))
    b_pad = _round_up(B, bt)

    xp = _pad_to(x.astype(jnp.float32), (b_pad, in_p))
    epsp = _pad_to(eps.astype(jnp.float32), (b_pad, z_p))

    flops = 2 * b_pad * (in_p * h_p + h_p * two_z_p + z_p * h_p + h_p * in_p)
    transcendentals = b_pad * (z_p + in_p)
    bytes_accessed = (
        2 * (in_p * h_p + h_p * two_z_p + z_p * h_p + h_p * in_p)   # bf16 weights
        + 4 * (2 * h_p + two_z_p + in_p)                            # f32 biases
        + 4 * b_pad * (in_p + z_p)                                  # x, eps
        + 4 * b_pad * (in_p + two_z_p)                              # outputs
    )

    xhat_p, enc = pl.pallas_call(
        vae_kernel,
        out_shape=(
            jax.ShapeDtypeStruct((b_pad, in_p), jnp.float32),       # x_hat (padded)
            jax.ShapeDtypeStruct((b_pad, two_z_p), jnp.float32),    # mu|log_var slab
        ),
        grid=(b_pad // bt,),
        in_specs=[
            pl.BlockSpec((bt, in_p), lambda i: (i, 0)),             # x tile
            pl.BlockSpec((bt, z_p), lambda i: (i, 0)),              # eps tile
            pl.BlockSpec((in_p, h_p), lambda i: (0, 0)),            # w1 (resident)
            pl.BlockSpec((1, h_p), lambda i: (0, 0)),               # b1
            pl.BlockSpec((h_p, two_z_p), lambda i: (0, 0)),         # w2|w3 fused
            pl.BlockSpec((1, two_z_p), lambda i: (0, 0)),           # b2|b3 fused
            pl.BlockSpec((z_p, h_p), lambda i: (0, 0)),             # w4
            pl.BlockSpec((1, h_p), lambda i: (0, 0)),               # b4
            pl.BlockSpec((h_p, in_p), lambda i: (0, 0)),            # w5
            pl.BlockSpec((1, in_p), lambda i: (0, 0)),              # b5
        ],
        out_specs=(
            pl.BlockSpec((bt, in_p), lambda i: (i, 0)),
            pl.BlockSpec((bt, two_z_p), lambda i: (i, 0)),
        ),
        compiler_params=pltpu.CompilerParams(
            dimension_semantics=("parallel",),
            vmem_limit_bytes=16 << 20,
        ),
        cost_estimate=pl.CostEstimate(
            flops=flops,
            transcendentals=transcendentals,
            bytes_accessed=bytes_accessed,
        ),
    )(xp, epsp, w1, b1, w23, b23, w4, b4, w5, b5)

    x_hat = xhat_p[:B, :input_dim]
    mu = enc[:B, :z_dim]
    log_var = enc[:B, z_p:z_p + z_dim]
    return x_hat, mu, log_var


# ----------------------------------------------------------------------------
# Init + references
# ----------------------------------------------------------------------------
def init_params(key, input_dim, h_dim, z_dim):
    """nn.Linear-style init; weights stored [in_features, out_features]."""
    def linear(k, fan_in, fan_out):
        kw, kb = jax.random.split(k)
        bound = 1.0 / jnp.sqrt(fan_in)
        w = jax.random.uniform(kw, (fan_in, fan_out), jnp.float32, -bound, bound)
        b = jax.random.uniform(kb, (1, fan_out), jnp.float32, -bound, bound)
        return w, b

    keys = jax.random.split(key, 5)
    w1, b1 = linear(keys[0], input_dim, h_dim)   # fc1
    w2, b2 = linear(keys[1], h_dim, z_dim)       # fc2 (mu)
    w3, b3 = linear(keys[2], h_dim, z_dim)       # fc3 (log_var)
    w4, b4 = linear(keys[3], z_dim, h_dim)       # fc4
    w5, b5 = linear(keys[4], h_dim, input_dim)   # fc5
    return (w1, b1, w2, b2, w3, b3, w4, b4, w5, b5)


def vae_reference_f32(x, eps, params):
    """Pure-JAX f32 reference (matches the original PyTorch math exactly)."""
    (w1, b1, w2, b2, w3, b3, w4, b4, w5, b5) = params
    h = jnp.maximum(x @ w1 + b1, 0.0)
    mu = h @ w2 + b2
    log_var = h @ w3 + b3
    z = mu + jnp.exp(0.5 * log_var) * eps
    h2 = jnp.maximum(z @ w4 + b4, 0.0)
    x_hat = jax.nn.sigmoid(h2 @ w5 + b5)
    return x_hat, mu, log_var


def vae_reference_bf16(x, eps, prepared, input_dim, z_dim):
    """Pure-JAX reference using the same padded bf16 weights / bf16 activations
    as the kernel (tight correctness check on kernel plumbing)."""
    (w1, b1, w23, b23, w4, b4, w5, b5) = prepared
    in_p = w1.shape[0]
    z_p = w4.shape[0]
    B = x.shape[0]
    xp = _pad_to(x, (B, in_p)).astype(jnp.bfloat16)
    epsp = _pad_to(eps, (B, z_p))
    h = jnp.maximum(jnp.dot(xp, w1, preferred_element_type=jnp.float32) + b1, 0.0)
    enc = jnp.dot(h.astype(jnp.bfloat16), w23, preferred_element_type=jnp.float32) + b23
    mu, log_var = enc[:, :z_p], enc[:, z_p:]
    z = mu + jnp.exp(0.5 * log_var) * epsp
    h2 = jnp.maximum(jnp.dot(z.astype(jnp.bfloat16), w4,
                             preferred_element_type=jnp.float32) + b4, 0.0)
    x_hat = jax.nn.sigmoid(jnp.dot(h2.astype(jnp.bfloat16), w5,
                                   preferred_element_type=jnp.float32) + b5)
    return x_hat[:, :input_dim], mu[:, :z_dim], log_var[:, :z_dim]


if __name__ == "__main__":
    INPUT_DIM, H_DIM, Z_DIM = 784, 400, 20
    B = 256                                      # batched: fills MXU rows, grid of 2

    key = jax.random.PRNGKey(0)
    k_x, k_eps, k_params = jax.random.split(key, 3)

    x = jax.random.uniform(k_x, (B, INPUT_DIM), jnp.float32)
    # TODO(synk): torch.randn_like happens inside the module; here the noise is
    # generated outside the kernel and passed in explicitly.
    eps = jax.random.normal(k_eps, (B, Z_DIM), jnp.float32)
    params = init_params(k_params, INPUT_DIM, H_DIM, Z_DIM)
    prepared = prepare_params(params, INPUT_DIM, H_DIM, Z_DIM)

    x_hat, mu, log_var = jax.block_until_ready(vae_forward(x, eps, prepared))

    assert x_hat.shape == (B, INPUT_DIM)
    assert mu.shape == (B, Z_DIM) and log_var.shape == (B, Z_DIM)

    # Tight check: same bf16 weights/activations, pure-JAX.
    xh_q, mu_q, lv_q = vae_reference_bf16(x, eps, prepared, INPUT_DIM, Z_DIM)
    assert jnp.allclose(x_hat, xh_q, atol=2e-3, rtol=2e-3)
    assert jnp.allclose(mu, mu_q, atol=2e-3, rtol=2e-3)
    assert jnp.allclose(log_var, lv_q, atol=2e-3, rtol=2e-3)

    # Loose sanity check vs. the original f32 model (bf16 weight quantization).
    xh_r, mu_r, lv_r = vae_reference_f32(x, eps, params)
    assert jnp.allclose(x_hat, xh_r, atol=3e-2, rtol=3e-2)
    assert jnp.allclose(mu, mu_r, atol=3e-2, rtol=3e-2)
    assert jnp.allclose(log_var, lv_r, atol=3e-2, rtol=3e-2)

    print("KERNEL_OK")
</pallas_src>

<mosaic_0001>
module attributes {stable_mosaic.version = 11 : i64} {
  func.func @vae_kernel(%arg0: i32, %arg1: memref<128x896xf32, #tpu.memory_space<vmem>>, %arg2: memref<128x128xf32, #tpu.memory_space<vmem>>, %arg3: memref<896x512xbf16, #tpu.memory_space<vmem>>, %arg4: memref<1x512xf32, #tpu.memory_space<vmem>>, %arg5: memref<512x256xbf16, #tpu.memory_space<vmem>>, %arg6: memref<1x256xf32, #tpu.memory_space<vmem>>, %arg7: memref<128x512xbf16, #tpu.memory_space<vmem>>, %arg8: memref<1x512xf32, #tpu.memory_space<vmem>>, %arg9: memref<512x896xbf16, #tpu.memory_space<vmem>>, %arg10: memref<1x896xf32, #tpu.memory_space<vmem>>, %arg11: memref<128x896xf32, #tpu.memory_space<vmem>>, %arg12: memref<128x256xf32, #tpu.memory_space<vmem>>) attributes {dimension_semantics = [#tpu.dimension_semantics<parallel>], iteration_bounds = array<i64: 2>, scalar_prefetch = 0 : i64, scratch_operands = 0 : i64, tpu.core_type = #tpu.core_type<tc>, window_params = [{transform_indices = @transform_0, window_bounds = array<i64: 128, 896>}, {transform_indices = @transform_1, window_bounds = array<i64: 128, 128>}, {pipeline_mode = #tpu.pipeline_mode<synchronous>, transform_indices = @transform_2, window_bounds = array<i64: 896, 512>}, {pipeline_mode = #tpu.pipeline_mode<synchronous>, transform_indices = @transform_3, window_bounds = array<i64: 1, 512>}, {pipeline_mode = #tpu.pipeline_mode<synchronous>, transform_indices = @transform_4, window_bounds = array<i64: 512, 256>}, {pipeline_mode = #tpu.pipeline_mode<synchronous>, transform_indices = @transform_5, window_bounds = array<i64: 1, 256>}, {pipeline_mode = #tpu.pipeline_mode<synchronous>, transform_indices = @transform_6, window_bounds = array<i64: 128, 512>}, {pipeline_mode = #tpu.pipeline_mode<synchronous>, transform_indices = @transform_7, window_bounds = array<i64: 1, 512>}, {pipeline_mode = #tpu.pipeline_mode<synchronous>, transform_indices = @transform_8, window_bounds = array<i64: 512, 896>}, {pipeline_mode = #tpu.pipeline_mode<synchronous>, transform_indices = @transform_9, window_bounds = array<i64: 1, 896>}, {transform_indices = @transform_10, window_bounds = array<i64: 128, 896>}, {transform_indices = @transform_11, window_bounds = array<i64: 128, 256>}]} {
    %c0 = arith.constant 0 : index
    %c0_0 = arith.constant 0 : index
    %0 = vector.load %arg1[%c0, %c0_0] : memref<128x896xf32, #tpu.memory_space<vmem>>, vector<128x896xf32>
    %1 = arith.truncf %0 : vector<128x896xf32> to vector<128x896xbf16>
    %c0_1 = arith.constant 0 : index
    %c0_2 = arith.constant 0 : index
    %2 = vector.load %arg3[%c0_1, %c0_2] : memref<896x512xbf16, #tpu.memory_space<vmem>>, vector<896x512xbf16>
    %cst = arith.constant dense<0.000000e+00> : vector<128x512xf32>
    %3 = tpu.matmul %1, %2, %cst {dimension_numbers = #tpu.dot_dimension_numbers<[1], [0], [0], [1], [0, 0, 1, 1], [], []>} : vector<128x896xbf16>, vector<896x512xbf16>, vector<128x512xf32> -> vector<128x512xf32>
    %c0_3 = arith.constant 0 : index
    %c0_4 = arith.constant 0 : index
    %4 = vector.load %arg4[%c0_3, %c0_4] : memref<1x512xf32, #tpu.memory_space<vmem>>, vector<1x512xf32>
    %5 = vector.broadcast %4 : vector<1x512xf32> to vector<128x512xf32>
    %6 = arith.addf %3, %5 : vector<128x512xf32>
    %cst_5 = arith.constant 0.000000e+00 : f32
    %7 = vector.broadcast %cst_5 : f32 to vector<128x512xf32>
    %8 = arith.maximumf %6, %7 : vector<128x512xf32>
    %9 = arith.truncf %8 : vector<128x512xf32> to vector<128x512xbf16>
    %c0_6 = arith.constant 0 : index
    %c0_7 = arith.constant 0 : index
    %10 = vector.load %arg5[%c0_6, %c0_7] : memref<512x256xbf16, #tpu.memory_space<vmem>>, vector<512x256xbf16>
    %cst_8 = arith.constant dense<0.000000e+00> : vector<128x256xf32>
    %11 = tpu.matmul %9, %10, %cst_8 {dimension_numbers = #tpu.dot_dimension_numbers<[1], [0], [0], [1], [0, 0, 1, 1], [], []>} : vector<128x512xbf16>, vector<512x256xbf16>, vector<128x256xf32> -> vector<128x256xf32>
    %c0_9 = arith.constant 0 : index
    %c0_10 = arith.constant 0 : index
    %12 = vector.load %arg6[%c0_9, %c0_10] : memref<1x256xf32, #tpu.memory_space<vmem>>, vector<1x256xf32>
    %13 = vector.broadcast %12 : vector<1x256xf32> to vector<128x256xf32>
    %14 = arith.addf %11, %13 : vector<128x256xf32>
    %15 = vector.extract_strided_slice %14 {offsets = [0, 0], sizes = [128, 128], strides = [1, 1]} : vector<128x256xf32> to vector<128x128xf32>
    %16 = vector.extract_strided_slice %14 {offsets = [0, 128], sizes = [128, 128], strides = [1, 1]} : vector<128x256xf32> to vector<128x128xf32>
    %cst_11 = arith.constant 5.000000e-01 : f32
    %17 = vector.broadcast %cst_11 : f32 to vector<128x128xf32>
    %18 = arith.mulf %16, %17 : vector<128x128xf32>
    %19 = math.exp %18 : vector<128x128xf32>
    %c0_12 = arith.constant 0 : index
    %c0_13 = arith.constant 0 : index
    %20 = vector.load %arg2[%c0_12, %c0_13] : memref<128x128xf32, #tpu.memory_space<vmem>>, vector<128x128xf32>
    %21 = arith.mulf %19, %20 : vector<128x128xf32>
    %22 = arith.addf %15, %21 : vector<128x128xf32>
    %23 = arith.truncf %22 : vector<128x128xf32> to vector<128x128xbf16>
    %c0_14 = arith.constant 0 : index
    %c0_15 = arith.constant 0 : index
    %24 = vector.load %arg7[%c0_14, %c0_15] : memref<128x512xbf16, #tpu.memory_space<vmem>>, vector<128x512xbf16>
    %cst_16 = arith.constant dense<0.000000e+00> : vector<128x512xf32>
    %25 = tpu.matmul %23, %24, %cst_16 {dimension_numbers = #tpu.dot_dimension_numbers<[1], [0], [0], [1], [0, 0, 1, 1], [], []>} : vector<128x128xbf16>, vector<128x512xbf16>, vector<128x512xf32> -> vector<128x512xf32>
    %c0_17 = arith.constant 0 : index
    %c0_18 = arith.constant 0 : index
    %26 = vector.load %arg8[%c0_17, %c0_18] : memref<1x512xf32, #tpu.memory_space<vmem>>, vector<1x512xf32>
    %27 = vector.broadcast %26 : vector<1x512xf32> to vector<128x512xf32>
    %28 = arith.addf %25, %27 : vector<128x512xf32>
    %cst_19 = arith.constant 0.000000e+00 : f32
    %29 = vector.broadcast %cst_19 : f32 to vector<128x512xf32>
    %30 = arith.maximumf %28, %29 : vector<128x512xf32>
    %31 = arith.truncf %30 : vector<128x512xf32> to vector<128x512xbf16>
    %c0_20 = arith.constant 0 : index
    %c0_21 = arith.constant 0 : index
    %32 = vector.load %arg9[%c0_20, %c0_21] : memref<512x896xbf16, #tpu.memory_space<vmem>>, vector<512x896xbf16>
    %cst_22 = arith.constant dense<0.000000e+00> : vector<128x896xf32>
    %33 = tpu.matmul %31, %32, %cst_22 {dimension_numbers = #tpu.dot_dimension_numbers<[1], [0], [0], [1], [0, 0, 1, 1], [], []>} : vector<128x512xbf16>, vector<512x896xbf16>, vector<128x896xf32> -> vector<128x896xf32>
    %c0_23 = arith.constant 0 : index
    %c0_24 = arith.constant 0 : index
    %34 = vector.load %arg10[%c0_23, %c0_24] : memref<1x896xf32, #tpu.memory_space<vmem>>, vector<1x896xf32>
    %35 = vector.broadcast %34 : vector<1x896xf32> to vector<128x896xf32>
    %36 = arith.addf %33, %35 : vector<128x896xf32>
    %37 = arith.negf %36 : vector<128x896xf32>
    %38 = math.exp %37 : vector<128x896xf32>
    %cst_25 = arith.constant 1.000000e+00 : f32
    %39 = vector.broadcast %cst_25 : f32 to vector<128x896xf32>
    %40 = arith.addf %39, %38 : vector<128x896xf32>
    %41 = arith.divf %39, %40 : vector<128x896xf32>
    %c0_26 = arith.constant 0 : index
    %c0_27 = arith.constant 0 : index
    %42 = vector.load %arg11[%c0_26, %c0_27] : memref<128x896xf32, #tpu.memory_space<vmem>>, vector<128x896xf32>
    tpu.vector_store %arg11[%c0_26, %c0_27], %41 {strides = array<i32>} : memref<128x896xf32, #tpu.memory_space<vmem>>, vector<128x896xf32>,
    %c0_28 = arith.constant 0 : index
    %c0_29 = arith.constant 0 : index
    %43 = vector.load %arg12[%c0_28, %c0_29] : memref<128x256xf32, #tpu.memory_space<vmem>>, vector<128x256xf32>
    tpu.vector_store %arg12[%c0_28, %c0_29], %14 {strides = array<i32>} : memref<128x256xf32, #tpu.memory_space<vmem>>, vector<128x256xf32>,
    return
  }
  func.func @transform_0(%arg0: i32) -> (i32, i32) {
    %c0_i32 = arith.constant 0 : i32
    %c0_i32_0 = arith.constant 0 : i32
    return %arg0, %c0_i32 : i32, i32
  }
  func.func @transform_1(%arg0: i32) -> (i32, i32) {
    %c0_i32 = arith.constant 0 : i32
    %c0_i32_0 = arith.constant 0 : i32
    return %arg0, %c0_i32 : i32, i32
  }
  func.func @transform_2(%arg0: i32) -> (i32, i32) {
    %c0_i32 = arith.constant 0 : i32
    %c0_i32_0 = arith.constant 0 : i32
    %c0_i32_1 = arith.constant 0 : i32
    return %c0_i32, %c0_i32_0 : i32, i32
  }
  func.func @transform_3(%arg0: i32) -> (i32, i32) {
    %c0_i32 = arith.constant 0 : i32
    %c0_i32_0 = arith.constant 0 : i32
    %c0_i32_1 = arith.constant 0 : i32
    return %c0_i32, %c0_i32_0 : i32, i32
  }
  func.func @transform_4(%arg0: i32) -> (i32, i32) {
    %c0_i32 = arith.constant 0 : i32
    %c0_i32_0 = arith.constant 0 : i32
    %c0_i32_1 = arith.constant 0 : i32
    return %c0_i32, %c0_i32_0 : i32, i32
  }
  func.func @transform_5(%arg0: i32) -> (i32, i32) {
    %c0_i32 = arith.constant 0 : i32
    %c0_i32_0 = arith.constant 0 : i32
    %c0_i32_1 = arith.constant 0 : i32
    return %c0_i32, %c0_i32_0 : i32, i32
  }
  func.func @transform_6(%arg0: i32) -> (i32, i32) {
    %c0_i32 = arith.constant 0 : i32
    %c0_i32_0 = arith.constant 0 : i32
    %c0_i32_1 = arith.constant 0 : i32
    return %c0_i32, %c0_i32_0 : i32, i32
  }
  func.func @transform_7(%arg0: i32) -> (i32, i32) {
    %c0_i32 = arith.constant 0 : i32
    %c0_i32_0 = arith.constant 0 : i32
    %c0_i32_1 = arith.constant 0 : i32
    return %c0_i32, %c0_i32_0 : i32, i32
  }
  func.func @transform_8(%arg0: i32) -> (i32, i32) {
    %c0_i32 = arith.constant 0 : i32
    %c0_i32_0 = arith.constant 0 : i32
    %c0_i32_1 = arith.constant 0 : i32
    return %c0_i32, %c0_i32_0 : i32, i32
  }
  func.func @transform_9(%arg0: i32) -> (i32, i32) {
    %c0_i32 = arith.constant 0 : i32
    %c0_i32_0 = arith.constant 0 : i32
    %c0_i32_1 = arith.constant 0 : i32
    return %c0_i32, %c0_i32_0 : i32, i32
  }
  func.func @transform_10(%arg0: i32) -> (i32, i32) {
    %c0_i32 = arith.constant 0 : i32
    %c0_i32_0 = arith.constant 0 : i32
    return %arg0, %c0_i32 : i32, i32
  }
  func.func @transform_11(%arg0: i32) -> (i32, i32) {
    %c0_i32 = arith.constant 0 : i32
    %c0_i32_0 = arith.constant 0 : i32
    return %arg0, %c0_i32 : i32, i32
  }
}

</mosaic_0001>

<llo_original>
// kernel: tpu_custom_call.1
$region0: #{tpu_custom_call.1}
  #allocation0 [shape = 'u32[]', space=smem, size = 0x4, offset = 0x4, fixed_abs, tag = 'smem constant byte address 0x4 - core index']
  #allocation1 [shape = 'u32[144,128]{1,0:T(1,128)}', space=vmem, size = 0x12000, scoped, tag = 'internal scratch']
  %s0 = inlined_call_operand.hbm [shape: f32[256,896], index: 0, kind: input, shape index: {}]
  %s1 = inlined_call_operand.hbm [shape: f32[256,128], index: 1, kind: input, shape index: {}]
  %s2 = inlined_call_operand.hbm [shape: bf16[896,512], index: 2, kind: input, shape index: {}]
  %s3 = inlined_call_operand.vmem [shape: f32[1,512], index: 3, kind: input, shape index: {}]
  %s4 = inlined_call_operand.hbm [shape: bf16[512,256], index: 4, kind: input, shape index: {}]
  %s5 = inlined_call_operand.vmem [shape: f32[1,256], index: 5, kind: input, shape index: {}]
  %s6 = inlined_call_operand.hbm [shape: bf16[128,512], index: 6, kind: input, shape index: {}]
  %s7 = inlined_call_operand.vmem [shape: f32[1,512], index: 7, kind: input, shape index: {}]
  %s8 = inlined_call_operand.hbm [shape: bf16[512,896], index: 8, kind: input, shape index: {}]
  %s9 = inlined_call_operand.vmem [shape: f32[1,896], index: 9, kind: input, shape index: {}]
  %s10 = inlined_call_operand.hbm [shape: f32[256,896], index: 10, kind: output, shape index: {0}]
  %s11 = inlined_call_operand.hbm [shape: f32[256,256], index: 11, kind: output, shape index: {1}]
  %12 = xla_tuple %s10, %s11
  %s13 = sld [smem:[#allocation0]]
  $region105: #{tpu_custom_call.1} parent=0
    _
  %s15 = ssub.s32 1, %s13
  %s16 = scalar_select 0, %s15, %s13
  $region1: #{tpu_custom_call.1} parent=0
    #allocation2 [shape = 'u8[917504]{0}', space=vmem, size = 0xe0000, scoped, tag = 'input window, operand 0']
    #allocation3 [shape = 's32[2]{0}', space=sflag, size = 0x8, scoped, tag = 'scoped memory for tpu_custom_call.1']
    #allocation4 [shape = 's32[2]{0}', space=sflag, size = 0x8, scoped, tag = 'scoped memory for tpu_custom_call.1']
    #allocation5 [shape = 'u8[131072]{0}', space=vmem, size = 0x20000, scoped, tag = 'input window, operand 1']
    #allocation6 [shape = 's32[2]{0}', space=sflag, size = 0x8, scoped, tag = 'scoped memory for tpu_custom_call.1']
    #allocation7 [shape = 'u8[917504]{0}', space=vmem, size = 0xe0000, scoped, tag = 'input window, operand 2, single buffered']
    #allocation8 [shape = 'u8[262144]{0}', space=vmem, size = 0x40000, scoped, tag = 'input window, operand 4, single buffered']
    #allocation9 [shape = 's32[1]{0}', space=sflag, size = 0x4, scoped, tag = 'scoped memory for tpu_custom_call.1']
    #allocation10 [shape = 'u8[131072]{0}', space=vmem, size = 0x20000, scoped, tag = 'input window, operand 6, single buffered']
    #allocation11 [shape = 'u8[917504]{0}', space=vmem, size = 0xe0000, scoped, tag = 'input window, operand 8, single buffered']
    #allocation12 [shape = 's32[1]{0}', space=sflag, size = 0x4, scoped, tag = 'scoped memory for tpu_custom_call.1']
    #allocation13 [shape = 'u8[917504]{0}', space=vmem, size = 0xe0000, scoped, tag = 'output window, operand 0']
    #allocation14 [shape = 'u8[262144]{0}', space=vmem, size = 0x40000, scoped, tag = 'output window, operand 1']
    #allocation15 [shape = 's32[2]{0}', space=sflag, size = 0x8, scoped, tag = 'scoped memory for tpu_custom_call.1']
    %17 = vsyncpa [#allocation3], 0
    %s18 = scalar_lea.sflag [#allocation3], 1
    %19 = vsyncpa %s18, 0
    %20 = vsyncpa [#allocation6], 0
    %s21 = scalar_lea.sflag [#allocation6], 1
    %22 = vsyncpa %s21, 0
    %23 = vsyncpa [#allocation9], 0
    %24 = vsyncpa [#allocation12], 0
    %25 = vsyncpa [#allocation4], 0
    %s26 = scalar_lea.sflag [#allocation4], 1
    %27 = vsyncpa %s26, 0
    %28 = vsyncpa [#allocation15], 0
    %s29 = scalar_lea.sflag [#allocation15], 1
    %30 = vsyncpa %s29, 0
    loop: start=0, step=1, limit=4
    $region2: #{tpu_custom_call.1} parent=1 // loop_pre_header
      _
    $region3: #{tpu_custom_call.1} parent=1 // loop_header
      %s32 = sphi 0, %s36
      %p33 = scmp.ge.s32.totalorder %s32, 4
      %s42 = sphi 0, %s44
      %s45 = sphi 0, %s42
      %s46 = sphi 0, %s45
      %s62 = sphi 0, %s46
      %s68 = sphi 0, %s70
      %s71 = sphi 0, %s68
      %s72 = sphi 0, %s71
      %s88 = sphi 0, %s72
      %s92 = sphi 0, %s92
      %s94 = sphi 0, %s92
      %s95 = sphi 0, %s94
      %s109 = sphi 0, %s95
      %s113 = sphi 0, %s113
      %s115 = sphi 0, %s113
      %s116 = sphi 0, %s115
      %s130 = sphi 0, %s116
      %s134 = sphi 0, %s134
      %s136 = sphi 0, %s134
      %s137 = sphi 0, %s136
      %s151 = sphi 0, %s137
      %s155 = sphi 0, %s155
      %s157 = sphi 0, %s155
      %s158 = sphi 0, %s157
      %s172 = sphi 0, %s158
      %s176 = sphi 0, %s176
      %s178 = sphi 0, %s176
      %s179 = sphi 0, %s178
      %s193 = sphi 0, %s179
      %s197 = sphi 0, %s197
      %s199 = sphi 0, %s197
      %s200 = sphi 0, %s199
      %s214 = sphi 0, %s200
      %s218 = sphi 0, %s218
      %s220 = sphi 0, %s218
      %s221 = sphi 0, %s220
      %s235 = sphi 0, %s221
      %s239 = sphi 0, %s239
      %s241 = sphi 0, %s239
      %s242 = sphi 0, %s241
      %s256 = sphi 0, %s242
      %s262 = sphi 0, %s264
      %s265 = sphi 0, %s262
      %s266 = sphi 0, %s265
      %s282 = sphi 0, %s266
      %s288 = sphi 0, %s290
      %s291 = sphi 0, %s288
      %s292 = sphi 0, %s291
      %s308 = sphi 0, %s292
    $region4: #{tpu_custom_call.1} parent=1 // loop_header_branch
      %35 = sbr.rel (%p33) target = $region8
    $region5: #{tpu_custom_call.1} parent=1 // loop_body
      %s37 = ssub.s32 %s32, 1
      %s38 = ssub.s32 %s32, 2
      %s39 = sadd.s32 %s32, 1
      %s40 = ssub.s32 %s32, %s39
      %p41 = scmp.eq.s32.totalorder %s40, 0
      %s43 = sadd.s32 %s42, 1
      %s44 = scalar_select %p41, %s42, %s43
      %p47 = pneg %p41
      %p48 = scmp.eq.s32.totalorder %s32, 1
      %p49 = por %p47, %p48
      %p50 = scmp.ne.s32.totalorder %s42, %s45
      %p51 = scmp.eq.s32.totalorder %s32, 0
      %p52 = por %p50, %p51
      %p53 = scmp.ne.s32.totalorder %s42, %s45
      %p54 = scmp.eq.s32.totalorder %s37, 1
      %p55 = por %p53, %p54
      %p56 = scmp.ne.s32.totalorder %s45, %s46
      %p57 = scmp.eq.s32.totalorder %s37, 0
      %p58 = por %p56, %p57
      %p59 = scmp.ne.s32.totalorder %s45, %s46
      %p60 = scmp.eq.s32.totalorder %s38, 1
      %p61 = por %p59, %p60
      %p63 = scmp.ne.s32.totalorder %s46, %s62
      %p64 = scmp.eq.s32.totalorder %s38, 0
      %p65 = por %p63, %p64
      %s66 = ssub.s32 %s32, %s39
      %p67 = scmp.eq.s32.totalorder %s66, 0
      %s69 = sadd.s32 %s68, 1
      %s70 = scalar_select %p67, %s68, %s69
      %p73 = pneg %p67
      %p74 = scmp.eq.s32.totalorder %s32, 1
      %p75 = por %p73, %p74
      %p76 = scmp.ne.s32.totalorder %s68, %s71
      %p77 = scmp.eq.s32.totalorder %s32, 0
      %p78 = por %p76, %p77
      %p79 = scmp.ne.s32.totalorder %s68, %s71
      %p80 = scmp.eq.s32.totalorder %s37, 1
      %p81 = por %p79, %p80
      %p82 = scmp.ne.s32.totalorder %s71, %s72
      %p83 = scmp.eq.s32.totalorder %s37, 0
      %p84 = por %p82, %p83
      %p85 = scmp.ne.s32.totalorder %s71, %s72
      %p86 = scmp.eq.s32.totalorder %s38, 1
      %p87 = por %p85, %p86
      %p89 = scmp.ne.s32.totalorder %s72, %s88
      %p90 = scmp.eq.s32.totalorder %s38, 0
      %p91 = por %p89, %p90
      %s93 = sadd.s32 %s92, 1
      %p96 = scmp.eq.s32.totalorder %s32, 1
      %p97 = scmp.ne.s32.totalorder %s92, %s94
      %p98 = scmp.eq.s32.totalorder %s32, 0
      %p99 = por %p97, %p98
      %p100 = scmp.ne.s32.totalorder %s92, %s94
      %p101 = scmp.eq.s32.totalorder %s37, 1
      %p102 = por %p100, %p101
      %p103 = scmp.ne.s32.totalorder %s94, %s95
      %p104 = scmp.eq.s32.totalorder %s37, 0
      %p105 = por %p103, %p104
      %p106 = scmp.ne.s32.totalorder %s94, %s95
      %p107 = scmp.eq.s32.totalorder %s38, 1
      %p108 = por %p106, %p107
      %p110 = scmp.ne.s32.totalorder %s95, %s109
      %p111 = scmp.eq.s32.totalorder %s38, 0
      %p112 = por %p110, %p111
      %s114 = sadd.s32 %s113, 1
      %p117 = scmp.eq.s32.totalorder %s32, 1
      %p118 = scmp.ne.s32.totalorder %s113, %s115
      %p119 = scmp.eq.s32.totalorder %s32, 0
      %p120 = por %p118, %p119
      %p121 = scmp.ne.s32.totalorder %s113, %s115
      %p122 = scmp.eq.s32.totalorder %s37, 1
      %p123 = por %p121, %p122
      %p124 = scmp.ne.s32.totalorder %s115, %s116
      %p125 = scmp.eq.s32.totalorder %s37, 0
      %p126 = por %p124, %p125
      %p127 = scmp.ne.s32.totalorder %s115, %s116
      %p128 = scmp.eq.s32.totalorder %s38, 1
      %p129 = por %p127, %p128
      %p131 = scmp.ne.s32.totalorder %s116, %s130
      %p132 = scmp.eq.s32.totalorder %s38, 0
      %p133 = por %p131, %p132
      %s135 = sadd.s32 %s134, 1
      %p138 = scmp.eq.s32.totalorder %s32, 1
      %p139 = scmp.ne.s32.totalorder %s134, %s136
      %p140 = scmp.eq.s32.totalorder %s32, 0
      %p141 = por %p139, %p140
      %p142 = scmp.ne.s32.totalorder %s134, %s136
      %p143 = scmp.eq.s32.totalorder %s37, 1
      %p144 = por %p142, %p143
      %p145 = scmp.ne.s32.totalorder %s136, %s137
      %p146 = scmp.eq.s32.totalorder %s37, 0
      %p147 = por %p145, %p146
      %p148 = scmp.ne.s32.totalorder %s136, %s137
      %p149 = scmp.eq.s32.totalorder %s38, 1
      %p150 = por %p148, %p149
      %p152 = scmp.ne.s32.totalorder %s137, %s151
      %p153 = scmp.eq.s32.totalorder %s38, 0
      %p154 = por %p152, %p153
      %s156 = sadd.s32 %s155, 1
      %p159 = scmp.eq.s32.totalorder %s32, 1
      %p160 = scmp.ne.s32.totalorder %s155, %s157
      %p161 = scmp.eq.s32.totalorder %s32, 0
      %p162 = por %p160, %p161
      %p163 = scmp.ne.s32.totalorder %s155, %s157
      %p164 = scmp.eq.s32.totalorder %s37, 1
      %p165 = por %p163, %p164
      %p166 = scmp.ne.s32.totalorder %s157, %s158
      %p167 = scmp.eq.s32.totalorder %s37, 0
      %p168 = por %p166, %p167
      %p169 = scmp.ne.s32.totalorder %s157, %s158
      %p170 = scmp.eq.s32.totalorder %s38, 1
      %p171 = por %p169, %p170
      %p173 = scmp.ne.s32.totalorder %s158, %s172
      %p174 = scmp.eq.s32.totalorder %s38, 0
      %p175 = por %p173, %p174
      %s177 = sadd.s32 %s176, 1
      %p180 = scmp.eq.s32.totalorder %s32, 1
      %p181 = scmp.ne.s32.totalorder %s176, %s178
      %p182 = scmp.eq.s32.totalorder %s32, 0
      %p183 = por %p181, %p182
      %p184 = scmp.ne.s32.totalorder %s176, %s178
      %p185 = scmp.eq.s32.totalorder %s37, 1
      %p186 = por %p184, %p185
      %p187 = scmp.ne.s32.totalorder %s178, %s179
      %p188 = scmp.eq.s32.totalorder %s37, 0
      %p189 = por %p187, %p188
      %p190 = scmp.ne.s32.totalorder %s178, %s179
      %p191 = scmp.eq.s32.totalorder %s38, 1
      %p192 = por %p190, %p191
      %p194 = scmp.ne.s32.totalorder %s179, %s193
      %p195 = scmp.eq.s32.totalorder %s38, 0
      %p196 = por %p194, %p195
      %s198 = sadd.s32 %s197, 1
      %p201 = scmp.eq.s32.totalorder %s32, 1
      %p202 = scmp.ne.s32.totalorder %s197, %s199
      %p203 = scmp.eq.s32.totalorder %s32, 0
      %p204 = por %p202, %p203
      %p205 = scmp.ne.s32.totalorder %s197, %s199
      %p206 = scmp.eq.s32.totalorder %s37, 1
      %p207 = por %p205, %p206
      %p208 = scmp.ne.s32.totalorder %s199, %s200
      %p209 = scmp.eq.s32.totalorder %s37, 0
      %p210 = por %p208, %p209
      %p211 = scmp.ne.s32.totalorder %s199, %s200
      %p212 = scmp.eq.s32.totalorder %s38, 1
      %p213 = por %p211, %p212
      %p215 = scmp.ne.s32.totalorder %s200, %s214
      %p216 = scmp.eq.s32.totalorder %s38, 0
      %p217 = por %p215, %p216
      %s219 = sadd.s32 %s218, 1
      %p222 = scmp.eq.s32.totalorder %s32, 1
      %p223 = scmp.ne.s32.totalorder %s218, %s220
      %p224 = scmp.eq.s32.totalorder %s32, 0
      %p225 = por %p223, %p224
      %p226 = scmp.ne.s32.totalorder %s218, %s220
      %p227 = scmp.eq.s32.totalorder %s37, 1
      %p228 = por %p226, %p227
      %p229 = scmp.ne.s32.totalorder %s220, %s221
      %p230 = scmp.eq.s32.totalorder %s37, 0
      %p231 = por %p229, %p230
      %p232 = scmp.ne.s32.totalorder %s220, %s221
      %p233 = scmp.eq.s32.totalorder %s38, 1
      %p234 = por %p232, %p233
      %p236 = scmp.ne.s32.totalorder %s221, %s235
      %p237 = scmp.eq.s32.totalorder %s38, 0
      %p238 = por %p236, %p237
      %s240 = sadd.s32 %s239, 1
      %p243 = scmp.eq.s32.totalorder %s32, 1
      %p244 = scmp.ne.s32.totalorder %s239, %s241
      %p245 = scmp.eq.s32.totalorder %s32, 0
      %p246 = por %p244, %p245
      %p247 = scmp.ne.s32.totalorder %s239, %s241
      %p248 = scmp.eq.s32.totalorder %s37, 1
      %p249 = por %p247, %p248
      %p250 = scmp.ne.s32.totalorder %s241, %s242
      %p251 = scmp.eq.s32.totalorder %s37, 0
      %p252 = por %p250, %p251
      %p253 = scmp.ne.s32.totalorder %s241, %s242
      %p254 = scmp.eq.s32.totalorder %s38, 1
      %p255 = por %p253, %p254
      %p257 = scmp.ne.s32.totalorder %s242, %s256
      %p258 = scmp.eq.s32.totalorder %s38, 0
      %p259 = por %p257, %p258
      %s260 = ssub.s32 %s32, %s39
      %p261 = scmp.eq.s32.totalorder %s260, 0
      %s263 = sadd.s32 %s262, 1
      %s264 = scalar_select %p261, %s262, %s263
      %p267 = pneg %p261
      %p268 = scmp.eq.s32.totalorder %s32, 1
      %p269 = por %p267, %p268
      %p270 = scmp.ne.s32.totalorder %s262, %s265
      %p271 = scmp.eq.s32.totalorder %s32, 0
      %p272 = por %p270, %p271
      %p273 = scmp.ne.s32.totalorder %s262, %s265
      %p274 = scmp.eq.s32.totalorder %s37, 1
      %p275 = por %p273, %p274
      %p276 = scmp.ne.s32.totalorder %s265, %s266
      %p277 = scmp.eq.s32.totalorder %s37, 0
      %p278 = por %p276, %p277
      %p279 = scmp.ne.s32.totalorder %s265, %s266
      %p280 = scmp.eq.s32.totalorder %s38, 1
      %p281 = por %p279, %p280
      %p283 = scmp.ne.s32.totalorder %s266, %s282
      %p284 = scmp.eq.s32.totalorder %s38, 0
      %p285 = por %p283, %p284
      %s286 = ssub.s32 %s32, %s39
      %p287 = scmp.eq.s32.totalorder %s286, 0
      %s289 = sadd.s32 %s288, 1
      %s290 = scalar_select %p287, %s288, %s289
      %p293 = pneg %p287
      %p294 = scmp.eq.s32.totalorder %s32, 1
      %p295 = por %p293, %p294
      %p296 = scmp.ne.s32.totalorder %s288, %s291
      %p297 = scmp.eq.s32.totalorder %s32, 0
      %p298 = por %p296, %p297
      %p299 = scmp.ne.s32.totalorder %s288, %s291
      %p300 = scmp.eq.s32.totalorder %s37, 1
      %p301 = por %p299, %p300
      %p302 = scmp.ne.s32.totalorder %s291, %s292
      %p303 = scmp.eq.s32.totalorder %s37, 0
      %p304 = por %p302, %p303
      %p305 = scmp.ne.s32.totalorder %s291, %s292
      %p306 = scmp.eq.s32.totalorder %s38, 1
      %p307 = por %p305, %p306
      %p309 = scmp.ne.s32.totalorder %s292, %s308
      %p310 = scmp.eq.s32.totalorder %s38, 0
      %p311 = por %p309, %p310
      %p312 = scmp.le.s32.totalorder 1, %s32
      %p313 = scmp.lt.s32.totalorder %s32, 3
      %p314 = pnand %p312, %p313
      %p315 = pneg %p314
      // Predicated region
      $region9: #{tpu_custom_call.1} parent=5 // pred_check
        _
      $region10: #{tpu_custom_call.1} parent=5 // pred_check_branch
        %317 = sbr.rel (%p314) target = $region12
      $region11: #{tpu_custom_call.1} parent=5 // pred_region
        %s318 = ssub.s32 %s32, 1
        // Predicated region
        $region13: #{tpu_custom_call.1} parent=11 // pred_check
          %p319 = pneg %p105
        $region14: #{tpu_custom_call.1} parent=11 // pred_check_branch
          %321 = sbr.rel (%p319) target = $region16
        $region15: #{tpu_custom_call.1} parent=11 // pred_region
          %s323 = ssub.s32 28672, 28672
          %324 = vsyncadd [#allocation6], %s323
          %s325 = sshll.u32 [#allocation7], 4
          %s326 = int_to_ptr.vmem [resolvable:$true] %s325
          %331 = dma.hbm_to_vmem [thread:$0]  %s2, 28672, %s326, [#allocation6], 256, 256, 16
        $region16: #{tpu_custom_call.1} parent=11 // pred_fallthru
          _
        // Predicated region
        $region17: #{tpu_custom_call.1} parent=11 // pred_check
          %p332 = pneg %p126
        $region18: #{tpu_custom_call.1} parent=11 // pred_check_branch
          %334 = sbr.rel (%p332) target = $region20
        $region19: #{tpu_custom_call.1} parent=11 // pred_region
          _
        $region20: #{tpu_custom_call.1} parent=11 // pred_fallthru
          _
        // Predicated region
        $region21: #{tpu_custom_call.1} parent=11 // pred_check
          %p335 = pneg %p147
        $region22: #{tpu_custom_call.1} parent=11 // pred_check_branch
          %337 = sbr.rel (%p335) target = $region24
        $region23: #{tpu_custom_call.1} parent=11 // pred_region
          %s339 = ssub.s32 8192, 8192
          %340 = vsyncadd [#allocation9], %s339
          %s341 = sshll.u32 [#allocation8], 4
          %s342 = int_to_ptr.vmem [resolvable:$true] %s341
          %347 = dma.hbm_to_vmem [thread:$0]  %s4, 8192, %s342, [#allocation9], 128, 128, 8
        $region24: #{tpu_custom_call.1} parent=11 // pred_fallthru
          _
        // Predicated region
        $region25: #{tpu_custom_call.1} parent=11 // pred_check
          %p348 = pneg %p168
        $region26: #{tpu_custom_call.1} parent=11 // pred_check_branch
          %350 = sbr.rel (%p348) target = $region28
        $region27: #{tpu_custom_call.1} parent=11 // pred_region
          _
        $region28: #{tpu_custom_call.1} parent=11 // pred_fallthru
          _
        // Predicated region
        $region29: #{tpu_custom_call.1} parent=11 // pred_check
          %p351 = pneg %p189
        $region30: #{tpu_custom_call.1} parent=11 // pred_check_branch
          %353 = sbr.rel (%p351) target = $region32
        $region31: #{tpu_custom_call.1} parent=11 // pred_region
          %s355 = ssub.s32 4096, 4096
          %356 = vsyncadd [#allocation9], %s355
          %s357 = sshll.u32 [#allocation10], 4
          %s358 = int_to_ptr.vmem [resolvable:$true] %s357
          %363 = dma.hbm_to_vmem [thread:$0]  %s6, 4096, %s358, [#allocation9], 256, 256, 16
        $region32: #{tpu_custom_call.1} parent=11 // pred_fallthru
          _
        // Predicated region
        $region33: #{tpu_custom_call.1} parent=11 // pred_check
          %p364 = pneg %p210
        $region34: #{tpu_custom_call.1} parent=11 // pred_check_branch
          %366 = sbr.rel (%p364) target = $region36
        $region35: #{tpu_custom_call.1} parent=11 // pred_region
          _
        $region36: #{tpu_custom_call.1} parent=11 // pred_fallthru
          _
        // Predicated region
        $region37: #{tpu_custom_call.1} parent=11 // pred_check
          %p367 = pneg %p231
        $region38: #{tpu_custom_call.1} parent=11 // pred_check_branch
          %369 = sbr.rel (%p367) target = $region40
        $region39: #{tpu_custom_call.1} parent=11 // pred_region
          %s371 = ssub.s32 28672, 28672
          %372 = vsyncadd [#allocation12], %s371
          %s373 = sshll.u32 [#allocation11], 4
          %s374 = int_to_ptr.vmem [resolvable:$true] %s373
          %379 = dma.hbm_to_vmem [thread:$0]  %s8, 28672, %s374, [#allocation12], 448, 448, 28
        $region40: #{tpu_custom_call.1} parent=11 // pred_fallthru
          _
        // Predicated region
        $region41: #{tpu_custom_call.1} parent=11 // pred_check
          %p380 = pneg %p252
        $region42: #{tpu_custom_call.1} parent=11 // pred_check_branch
          %382 = sbr.rel (%p380) target = $region44
        $region43: #{tpu_custom_call.1} parent=11 // pred_region
          _
        $region44: #{tpu_custom_call.1} parent=11 // pred_fallthru
          _
      $region12: #{tpu_custom_call.1} parent=5 // pred_fallthru
        _
      %p383 = scmp.lt.s32.totalorder %s32, 2
      // Predicated region
      $region45: #{tpu_custom_call.1} parent=5 // pred_check
        %p384 = pneg %p383
      $region46: #{tpu_custom_call.1} parent=5 // pred_check_branch
        %386 = sbr.rel (%p384) target = $region48
      $region47: #{tpu_custom_call.1} parent=5 // pred_region
        // Predicated region
        $region49: #{tpu_custom_call.1} parent=47 // pred_check
          %p387 = pneg %p52
        $region50: #{tpu_custom_call.1} parent=47 // pred_check_branch
          %389 = sbr.rel (%p387) target = $region52
        $region51: #{tpu_custom_call.1} parent=47 // pred_region
          %s390 = sand.u32 %s42, 1
          %s391 = scalar_lea.sflag [#allocation3], %s390
          %s392 = sand.u32 %s42, 1
          %s393 = smul.addr %s392, 896
          %s394 = scalar_lea.vmem [#allocation2], %s393
          %s395 = smul.u32 16, %s32
          %s397 = ssub.s32 14336, 14336
          %398 = vsyncadd %s391, %s397
          %s399 = smul.addr %s395, 7
          %s400 = smul.addr %s399, 128
          %s401 = scalar_lea.hbm %s0, %s400
          %s402 = sshll.u32 %s394, 4
          %s403 = int_to_ptr.vmem [resolvable:$true] %s402
          %408 = dma.hbm_to_vmem [thread:$0]  %s401, 14336, %s403, %s391, 896, 896, 56
        $region52: #{tpu_custom_call.1} parent=47 // pred_fallthru
          _
        // Predicated region
        $region53: #{tpu_custom_call.1} parent=47 // pred_check
          %p409 = pneg %p78
        $region54: #{tpu_custom_call.1} parent=47 // pred_check_branch
          %411 = sbr.rel (%p409) target = $region56
        $region55: #{tpu_custom_call.1} parent=47 // pred_region
          %s412 = sand.u32 %s32, 1
          %s413 = scalar_lea.sflag [#allocation6], %s412
          %s414 = sand.u32 %s68, 1
          %s415 = smul.addr %s414, 128
          %s416 = scalar_lea.vmem [#allocation5], %s415
          %s417 = smul.u32 16, %s32
          %s419 = ssub.s32 2048, 2048
          %420 = vsyncadd %s413, %s419
          %s421 = smul.addr %s417, 128
          %s422 = scalar_lea.hbm %s1, %s421
          %s423 = sshll.u32 %s416, 4
          %s424 = int_to_ptr.vmem [resolvable:$true] %s423
          %429 = dma.hbm_to_vmem [thread:$0]  %s422, 2048, %s424, %s413, 128, 128, 8
        $region56: #{tpu_custom_call.1} parent=47 // pred_fallthru
          _
      $region48: #{tpu_custom_call.1} parent=5 // pred_fallthru
        _
      %p430 = scmp.le.s32.totalorder 1, %s32
      %p431 = scmp.lt.s32.totalorder %s32, 3
      %p432 = pnand %p430, %p431
      %p433 = pneg %p432
      // Predicated region
      $region57: #{tpu_custom_call.1} parent=5 // pred_check
        _
      $region58: #{tpu_custom_call.1} parent=5 // pred_check_branch
        %435 = sbr.rel (%p432) target = $region60
      $region59: #{tpu_custom_call.1} parent=5 // pred_region
        %s436 = ssub.s32 %s32, 1
        %s437 = sand.u32 %s45, 1
        %s438 = scalar_lea.sflag [#allocation3], %s437
        %s439 = sand.u32 %s45, 1
        %s440 = smul.addr %s439, 896
        %s441 = scalar_lea.vmem [#allocation2], %s440
        // Predicated region
        $region61: #{tpu_custom_call.1} parent=59 // pred_check
          %p442 = pneg %p58
        $region62: #{tpu_custom_call.1} parent=59 // pred_check_branch
          %444 = sbr.rel (%p442) target = $region64
        $region63: #{tpu_custom_call.1} parent=59 // pred_region
          %445 = dma.done %s438, 14336
        $region64: #{tpu_custom_call.1} parent=59 // pred_fallthru
          _
        %s446 = sand.u32 %s37, 1
        %s447 = scalar_lea.sflag [#allocation6], %s446
        %s448 = sand.u32 %s71, 1
        %s449 = smul.addr %s448, 128
        %s450 = scalar_lea.vmem [#allocation5], %s449
        // Predicated region
        $region65: #{tpu_custom_call.1} parent=59 // pred_check
          %p451 = pneg %p84
        $region66: #{tpu_custom_call.1} parent=59 // pred_check_branch
          %453 = sbr.rel (%p451) target = $region68
        $region67: #{tpu_custom_call.1} parent=59 // pred_region
          %454 = dma.done %s447, 2048
        $region68: #{tpu_custom_call.1} parent=59 // pred_fallthru
          _
        // Predicated region
        $region69: #{tpu_custom_call.1} parent=59 // pred_check
          %p455 = pneg %p105
        $region70: #{tpu_custom_call.1} parent=59 // pred_check_branch
          %457 = sbr.rel (%p455) target = $region72
        $region71: #{tpu_custom_call.1} parent=59 // pred_region
          %458 = dma.done [#allocation6], 28672
        $region72: #{tpu_custom_call.1} parent=59 // pred_fallthru
          _
        // Predicated region
        $region73: #{tpu_custom_call.1} parent=59 // pred_check
          %p459 = pneg %p147
        $region74: #{tpu_custom_call.1} parent=59 // pred_check_branch
          %461 = sbr.rel (%p459) target = $region76
        $region75: #{tpu_custom_call.1} parent=59 // pred_region
          %462 = dma.done [#allocation9], 8192
        $region76: #{tpu_custom_call.1} parent=59 // pred_fallthru
          _
        // Predicated region
        $region77: #{tpu_custom_call.1} parent=59 // pred_check
          %p463 = pneg %p189
        $region78: #{tpu_custom_call.1} parent=59 // pred_check_branch
          %465 = sbr.rel (%p463) target = $region80
        $region79: #{tpu_custom_call.1} parent=59 // pred_region
          %466 = dma.done [#allocation9], 4096
        $region80: #{tpu_custom_call.1} parent=59 // pred_fallthru
          _
        // Predicated region
        $region81: #{tpu_custom_call.1} parent=59 // pred_check
          %p467 = pneg %p231
        $region82: #{tpu_custom_call.1} parent=59 // pred_check_branch
          %469 = sbr.rel (%p467) target = $region84
        $region83: #{tpu_custom_call.1} parent=59 // pred_region
          %470 = dma.done [#allocation12], 28672
        $region84: #{tpu_custom_call.1} parent=59 // pred_fallthru
          _
        %s471 = sand.u32 %s45, 1
        %s472 = scalar_lea.sflag [#allocation3], %s471
        %s473 = sand.u32 %s45, 1
        %s474 = smul.addr %s473, 896
        %s475 = scalar_lea.vmem [#allocation2], %s474
        %p476 = pneg %p58
        %p477 = pneg %p55
        %s478 = sand.u32 %s37, 1
        %s479 = scalar_lea.sflag [#allocation6], %s478
        %s480 = sand.u32 %s71, 1
        %s481 = smul.addr %s480, 128
        %s482 = scalar_lea.vmem [#allocation5], %s481
        %p483 = pneg %p84
        %p484 = pneg %p81
        %p485 = pneg %p105
        %p486 = pneg %p102
        %p487 = pneg %p126
        %p488 = pneg %p123
        %p489 = pneg %p147
        %p490 = pneg %p144
        %p491 = pneg %p168
        %p492 = pneg %p165
        %p493 = pneg %p189
        %p494 = pneg %p186
        %p495 = pneg %p210
        %p496 = pneg %p207
        %p497 = pneg %p231
        %p498 = pneg %p228
        %p499 = pneg %p252
        %p500 = pneg %p249
        %p501 = pneg %p278
        %p502 = pneg %p275
        %s503 = sand.u32 %s265, 1
        %s504 = scalar_lea.sflag [#allocation4], %s503
        %s505 = sand.u32 %s265, 1
        %s506 = smul.addr %s505, 896
        %s507 = scalar_lea.vmem [#allocation13], %s506
        %p508 = pneg %p304
        %p509 = pneg %p301
        %s510 = sand.u32 %s291, 1
        %s511 = scalar_lea.sflag [#allocation15], %s510
        %s512 = sand.u32 %s291, 1
        %s513 = smul.addr %s512, 256
        %s514 = scalar_lea.vmem [#allocation14], %s513
        %s515 = smul.u32 16, %s37
        %s516 = smul.u32 16, %s37
        %s517 = smul.u32 16, %s37
        %s518 = smul.u32 16, %s37
        %v520 = vld [vmem:[%s441] sm:$0xff]
        %v521 = vld [vmem:[%s441 + $0x8] sm:$0xff]
        %v522 = vld [vmem:[%s441 + $0x10] sm:$0xff]
        %v523 = vld [vmem:[%s441 + $0x18] sm:$0xff]
        %v524 = vld [vmem:[%s441 + $0x20] sm:$0xff]
        %v525 = vld [vmem:[%s441 + $0x28] sm:$0xff]
        %v526 = vld [vmem:[%s441 + $0x30] sm:$0xff]
        %v527 = vld [vmem:[%s441 + $0x38] sm:$0xff]
        %v528 = vld [vmem:[%s441 + $0x40] sm:$0xff]
        %v529 = vld [vmem:[%s441 + $0x48] sm:$0xff]
        %v530 = vld [vmem:[%s441 + $0x50] sm:$0xff]
        %v531 = vld [vmem:[%s441 + $0x58] sm:$0xff]
        %v532 = vld [vmem:[%s441 + $0x60] sm:$0xff]
        %v533 = vld [vmem:[%s441 + $0x68] sm:$0xff]
        %v534 = vld [vmem:[%s441 + $0x70] sm:$0xff]
        %v535 = vld [vmem:[%s441 + $0x78] sm:$0xff]
        %v536 = vld [vmem:[%s441 + $0x80] sm:$0xff]
        %v537 = vld [vmem:[%s441 + $0x88] sm:$0xff]
        %v538 = vld [vmem:[%s441 + $0x90] sm:$0xff]
        %v539 = vld [vmem:[%s441 + $0x98] sm:$0xff]
        %v540 = vld [vmem:[%s441 + $0xa0] sm:$0xff]
        %v541 = vld [vmem:[%s441 + $0xa8] sm:$0xff]
        %v542 = vld [vmem:[%s441 + $0xb0] sm:$0xff]
        %v543 = vld [vmem:[%s441 + $0xb8] sm:$0xff]
        %v544 = vld [vmem:[%s441 + $0xc0] sm:$0xff]
        %v545 = vld [vmem:[%s441 + $0xc8] sm:$0xff]
        %v546 = vld [vmem:[%s441 + $0xd0] sm:$0xff]
        %v547 = vld [vmem:[%s441 + $0xd8] sm:$0xff]
        %v548 = vld [vmem:[%s441 + $0xe0] sm:$0xff]
        %v549 = vld [vmem:[%s441 + $0xe8] sm:$0xff]
        %v550 = vld [vmem:[%s441 + $0xf0] sm:$0xff]
        %v551 = vld [vmem:[%s441 + $0xf8] sm:$0xff]
        %v552 = vld [vmem:[%s441 + $0x100] sm:$0xff]
        %v553 = vld [vmem:[%s441 + $0x108] sm:$0xff]
        %v554 = vld [vmem:[%s441 + $0x110] sm:$0xff]
        %v555 = vld [vmem:[%s441 + $0x118] sm:$0xff]
        %v556 = vld [vmem:[%s441 + $0x120] sm:$0xff]
        %v557 = vld [vmem:[%s441 + $0x128] sm:$0xff]
        %v558 = vld [vmem:[%s441 + $0x130] sm:$0xff]
        %v559 = vld [vmem:[%s441 + $0x138] sm:$0xff]
        %v560 = vld [vmem:[%s441 + $0x140] sm:$0xff]
        %v561 = vld [vmem:[%s441 + $0x148] sm:$0xff]
        %v562 = vld [vmem:[%s441 + $0x150] sm:$0xff]
        %v563 = vld [vmem:[%s441 + $0x158] sm:$0xff]
        %v564 = vld [vmem:[%s441 + $0x160] sm:$0xff]
        %v565 = vld [vmem:[%s441 + $0x168] sm:$0xff]
        %v566 = vld [vmem:[%s441 + $0x170] sm:$0xff]
        %v567 = vld [vmem:[%s441 + $0x178] sm:$0xff]
        %v568 = vld [vmem:[%s441 + $0x180] sm:$0xff]
        %v569 = vld [vmem:[%s441 + $0x188] sm:$0xff]
        %v570 = vld [vmem:[%s441 + $0x190] sm:$0xff]
        %v571 = vld [vmem:[%s441 + $0x198] sm:$0xff]
        %v572 = vld [vmem:[%s441 + $0x1a0] sm:$0xff]
        %v573 = vld [vmem:[%s441 + $0x1a8] sm:$0xff]
        %v574 = vld [vmem:[%s441 + $0x1b0] sm:$0xff]
        %v575 = vld [vmem:[%s441 + $0x1b8] sm:$0xff]
        %v576 = vld [vmem:[%s441 + $0x1c0] sm:$0xff]
        %v577 = vld [vmem:[%s441 + $0x1c8] sm:$0xff]
        %v578 = vld [vmem:[%s441 + $0x1d0] sm:$0xff]
        %v579 = vld [vmem:[%s441 + $0x1d8] sm:$0xff]
        %v580 = vld [vmem:[%s441 + $0x1e0] sm:$0xff]
        %v581 = vld [vmem:[%s441 + $0x1e8] sm:$0xff]
        %v582 = vld [vmem:[%s441 + $0x1f0] sm:$0xff]
        %v583 = vld [vmem:[%s441 + $0x1f8] sm:$0xff]
        %v584 = vld [vmem:[%s441 + $0x200] sm:$0xff]
        %v585 = vld [vmem:[%s441 + $0x208] sm:$0xff]
        %v586 = vld [vmem:[%s441 + $0x210] sm:$0xff]
        %v587 = vld [vmem:[%s441 + $0x218] sm:$0xff]
        %v588 = vld [vmem:[%s441 + $0x220] sm:$0xff]
        %v589 = vld [vmem:[%s441 + $0x228] sm:$0xff]
        %v590 = vld [vmem:[%s441 + $0x230] sm:$0xff]
        %v591 = vld [vmem:[%s441 + $0x238] sm:$0xff]
        %v592 = vld [vmem:[%s441 + $0x240] sm:$0xff]
        %v593 = vld [vmem:[%s441 + $0x248] sm:$0xff]
        %v594 = vld [vmem:[%s441 + $0x250] sm:$0xff]
        %v595 = vld [vmem:[%s441 + $0x258] sm:$0xff]
        %v596 = vld [vmem:[%s441 + $0x260] sm:$0xff]
        %v597 = vld [vmem:[%s441 + $0x268] sm:$0xff]
        %v598 = vld [vmem:[%s441 + $0x270] sm:$0xff]
        %v599 = vld [vmem:[%s441 + $0x278] sm:$0xff]
        %v600 = vld [vmem:[%s441 + $0x280] sm:$0xff]
        %v601 = vld [vmem:[%s441 + $0x288] sm:$0xff]
        %v602 = vld [vmem:[%s441 + $0x290] sm:$0xff]
        %v603 = vld [vmem:[%s441 + $0x298] sm:$0xff]
        %v604 = vld [vmem:[%s441 + $0x2a0] sm:$0xff]
        %v605 = vld [vmem:[%s441 + $0x2a8] sm:$0xff]
        %v606 = vld [vmem:[%s441 + $0x2b0] sm:$0xff]
        %v607 = vld [vmem:[%s441 + $0x2b8] sm:$0xff]
        %v608 = vld [vmem:[%s441 + $0x2c0] sm:$0xff]
        %v609 = vld [vmem:[%s441 + $0x2c8] sm:$0xff]
        %v610 = vld [vmem:[%s441 + $0x2d0] sm:$0xff]
        %v611 = vld [vmem:[%s441 + $0x2d8] sm:$0xff]
        %v612 = vld [vmem:[%s441 + $0x2e0] sm:$0xff]
        %v613 = vld [vmem:[%s441 + $0x2e8] sm:$0xff]
        %v614 = vld [vmem:[%s441 + $0x2f0] sm:$0xff]
        %v615 = vld [vmem:[%s441 + $0x2f8] sm:$0xff]
        %v616 = vld [vmem:[%s441 + $0x300] sm:$0xff]
        %v617 = vld [vmem:[%s441 + $0x308] sm:$0xff]
        %v618 = vld [vmem:[%s441 + $0x310] sm:$0xff]
        %v619 = vld [vmem:[%s441 + $0x318] sm:$0xff]
        %v620 = vld [vmem:[%s441 + $0x320] sm:$0xff]
        %v621 = vld [vmem:[%s441 + $0x328] sm:$0xff]
        %v622 = vld [vmem:[%s441 + $0x330] sm:$0xff]
        %v623 = vld [vmem:[%s441 + $0x338] sm:$0xff]
        %v624 = vld [vmem:[%s441 + $0x340] sm:$0xff]
        %v625 = vld [vmem:[%s441 + $0x348] sm:$0xff]
        %v626 = vld [vmem:[%s441 + $0x350] sm:$0xff]
        %v627 = vld [vmem:[%s441 + $0x358] sm:$0xff]
        %v628 = vld [vmem:[%s441 + $0x360] sm:$0xff]
        %v629 = vld [vmem:[%s441 + $0x368] sm:$0xff]
        %v630 = vld [vmem:[%s441 + $0x370] sm:$0xff]
        %v631 = vld [vmem:[%s441 + $0x378] sm:$0xff]
        %v632 = vpack.c.bf16 %v527, %v520
        %v633 = vpack.c.bf16 %v528, %v521
        %v634 = vpack.c.bf16 %v529, %v522
        %v635 = vpack.c.bf16 %v530, %v523
        %v636 = vpack.c.bf16 %v531, %v524
        %v637 = vpack.c.bf16 %v532, %v525
        %v638 = vpack.c.bf16 %v533, %v526
        %v639 = vpack.c.bf16 %v541, %v534
        %v640 = vpack.c.bf16 %v542, %v535
        %v641 = vpack.c.bf16 %v543, %v536
        %v642 = vpack.c.bf16 %v544, %v537
        %v643 = vpack.c.bf16 %v545, %v538
        %v644 = vpack.c.bf16 %v546, %v539
        %v645 = vpack.c.bf16 %v547, %v540
        %v646 = vpack.c.bf16 %v555, %v548
        %v647 = vpack.c.bf16 %v556, %v549
        %v648 = vpack.c.bf16 %v557, %v550
        %v649 = vpack.c.bf16 %v558, %v551
        %v650 = vpack.c.bf16 %v559, %v552
        %v651 = vpack.c.bf16 %v560, %v553
        %v652 = vpack.c.bf16 %v561, %v554
        %v653 = vpack.c.bf16 %v569, %v562
        %v654 = vpack.c.bf16 %v570, %v563
        %v655 = vpack.c.bf16 %v571, %v564
        %v656 = vpack.c.bf16 %v572, %v565
        %v657 = vpack.c.bf16 %v573, %v566
        %v658 = vpack.c.bf16 %v574, %v567
        %v659 = vpack.c.bf16 %v575, %v568
        %v660 = vpack.c.bf16 %v583, %v576
        %v661 = vpack.c.bf16 %v584, %v577
        %v662 = vpack.c.bf16 %v585, %v578
        %v663 = vpack.c.bf16 %v586, %v579
        %v664 = vpack.c.bf16 %v587, %v580
        %v665 = vpack.c.bf16 %v588, %v581
        %v666 = vpack.c.bf16 %v589, %v582
        %v667 = vpack.c.bf16 %v597, %v590
        %v668 = vpack.c.bf16 %v598, %v591
        %v669 = vpack.c.bf16 %v599, %v592
        %v670 = vpack.c.bf16 %v600, %v593
        %v671 = vpack.c.bf16 %v601, %v594
        %v672 = vpack.c.bf16 %v602, %v595
        %v673 = vpack.c.bf16 %v603, %v596
        %v674 = vpack.c.bf16 %v611, %v604
        %v675 = vpack.c.bf16 %v612, %v605
        %v676 = vpack.c.bf16 %v613, %v606
        %v677 = vpack.c.bf16 %v614, %v607
        %v678 = vpack.c.bf16 %v615, %v608
        %v679 = vpack.c.bf16 %v616, %v609
        %v680 = vpack.c.bf16 %v617, %v610
        %v681 = vpack.c.bf16 %v625, %v618
        %v682 = vpack.c.bf16 %v626, %v619
        %v683 = vpack.c.bf16 %v627, %v620
        %v684 = vpack.c.bf16 %v628, %v621
        %v685 = vpack.c.bf16 %v629, %v622
        %v686 = vpack.c.bf16 %v630, %v623
        %v687 = vpack.c.bf16 %v631, %v624
        %v688 = vld [vmem:[#allocation7] sm:$0xff]
        %v689 = vld [vmem:[#allocation7 + $0x8] sm:$0xff]
        %v690 = vld [vmem:[#allocation7 + $0x10] sm:$0xff]
        %v691 = vld [vmem:[#allocation7 + $0x18] sm:$0xff]
        %v692 = vld [vmem:[#allocation7 + $0x20] sm:$0xff]
        %v693 = vld [vmem:[#allocation7 + $0x28] sm:$0xff]
        %v694 = vld [vmem:[#allocation7 + $0x30] sm:$0xff]
        %v695 = vld [vmem:[#allocation7 + $0x38] sm:$0xff]
        %v696 = vld [vmem:[#allocation7 + $0x40] sm:$0xff]
        %v697 = vld [vmem:[#allocation7 + $0x48] sm:$0xff]
        %v698 = vld [vmem:[#allocation7 + $0x50] sm:$0xff]
        %v699 = vld [vmem:[#allocation7 + $0x58] sm:$0xff]
        %v700 = vld [vmem:[#allocation7 + $0x60] sm:$0xff]
        %v701 = vld [vmem:[#allocation7 + $0x68] sm:$0xff]
        %v702 = vld [vmem:[#allocation7 + $0x70] sm:$0xff]
        %v703 = vld [vmem:[#allocation7 + $0x78] sm:$0xff]
        %v704 = vld [vmem:[#allocation7 + $0x80] sm:$0xff]
        %v705 = vld [vmem:[#allocation7 + $0x88] sm:$0xff]
        %v706 = vld [vmem:[#allocation7 + $0x90] sm:$0xff]
        %v707 = vld [vmem:[#allocation7 + $0x98] sm:$0xff]
        %v708 = vld [vmem:[#allocation7 + $0xa0] sm:$0xff]
        %v709 = vld [vmem:[#allocation7 + $0xa8] sm:$0xff]
        %v710 = vld [vmem:[#allocation7 + $0xb0] sm:$0xff]
        %v711 = vld [vmem:[#allocation7 + $0xb8] sm:$0xff]
        %v712 = vld [vmem:[#allocation7 + $0xc0] sm:$0xff]
        %v713 = vld [vmem:[#allocation7 + $0xc8] sm:$0xff]
        %v714 = vld [vmem:[#allocation7 + $0xd0] sm:$0xff]
        %v715 = vld [vmem:[#allocation7 + $0xd8] sm:$0xff]
        %v716 = vld [vmem:[#allocation7 + $0xe0] sm:$0xff]
        %v717 = vld [vmem:[#allocation7 + $0xe8] sm:$0xff]
        %v718 = vld [vmem:[#allocation7 + $0xf0] sm:$0xff]
        %v719 = vld [vmem:[#allocation7 + $0xf8] sm:$0xff]
        %v720 = vld [vmem:[#allocation7 + $0x100] sm:$0xff]
        %v721 = vld [vmem:[#allocation7 + $0x108] sm:$0xff]
        %v722 = vld [vmem:[#allocation7 + $0x110] sm:$0xff]
        %v723 = vld [vmem:[#allocation7 + $0x118] sm:$0xff]
        %v724 = vld [vmem:[#allocation7 + $0x120] sm:$0xff]
        %v725 = vld [vmem:[#allocation7 + $0x128] sm:$0xff]
        %v726 = vld [vmem:[#allocation7 + $0x130] sm:$0xff]
        %v727 = vld [vmem:[#allocation7 + $0x138] sm:$0xff]
        %v728 = vld [vmem:[#allocation7 + $0x140] sm:$0xff]
        %v729 = vld [vmem:[#allocation7 + $0x148] sm:$0xff]
        %v730 = vld [vmem:[#allocation7 + $0x150] sm:$0xff]
        %v731 = vld [vmem:[#allocation7 + $0x158] sm:$0xff]
        %v732 = vld [vmem:[#allocation7 + $0x160] sm:$0xff]
        %v733 = vld [vmem:[#allocation7 + $0x168] sm:$0xff]
        %v734 = vld [vmem:[#allocation7 + $0x170] sm:$0xff]
        %v735 = vld [vmem:[#allocation7 + $0x178] sm:$0xff]
        %v736 = vld [vmem:[#allocation7 + $0x180] sm:$0xff]
        %v737 = vld [vmem:[#allocation7 + $0x188] sm:$0xff]
        %v738 = vld [vmem:[#allocation7 + $0x190] sm:$0xff]
        %v739 = vld [vmem:[#allocation7 + $0x198] sm:$0xff]
        %v740 = vld [vmem:[#allocation7 + $0x1a0] sm:$0xff]
        %v741 = vld [vmem:[#allocation7 + $0x1a8] sm:$0xff]
        %v742 = vld [vmem:[#allocation7 + $0x1b0] sm:$0xff]
        %v743 = vld [vmem:[#allocation7 + $0x1b8] sm:$0xff]
        %v744 = vld [vmem:[#allocation7 + $0x1c0] sm:$0xff]
        %v745 = vld [vmem:[#allocation7 + $0x1c8] sm:$0xff]
        %v746 = vld [vmem:[#allocation7 + $0x1d0] sm:$0xff]
        %v747 = vld [vmem:[#allocation7 + $0x1d8] sm:$0xff]
        %v748 = vld [vmem:[#allocation7 + $0x1e0] sm:$0xff]
        %v749 = vld [vmem:[#allocation7 + $0x1e8] sm:$0xff]
        %v750 = vld [vmem:[#allocation7 + $0x1f0] sm:$0xff]
        %v751 = vld [vmem:[#allocation7 + $0x1f8] sm:$0xff]
        %v752 = vld [vmem:[#allocation7 + $0x200] sm:$0xff]
        %v753 = vld [vmem:[#allocation7 + $0x208] sm:$0xff]
        %v754 = vld [vmem:[#allocation7 + $0x210] sm:$0xff]
        %v755 = vld [vmem:[#allocation7 + $0x218] sm:$0xff]
        %v756 = vld [vmem:[#allocation7 + $0x220] sm:$0xff]
        %v757 = vld [vmem:[#allocation7 + $0x228] sm:$0xff]
        %v758 = vld [vmem:[#allocation7 + $0x230] sm:$0xff]
        %v759 = vld [vmem:[#allocation7 + $0x238] sm:$0xff]
        %v760 = vld [vmem:[#allocation7 + $0x240] sm:$0xff]
        %v761 = vld [vmem:[#allocation7 + $0x248] sm:$0xff]
        %v762 = vld [vmem:[#allocation7 + $0x250] sm:$0xff]
        %v763 = vld [vmem:[#allocation7 + $0x258] sm:$0xff]
        %v764 = vld [vmem:[#allocation7 + $0x260] sm:$0xff]
        %v765 = vld [vmem:[#allocation7 + $0x268] sm:$0xff]
        %v766 = vld [vmem:[#allocation7 + $0x270] sm:$0xff]
        %v767 = vld [vmem:[#allocation7 + $0x278] sm:$0xff]
        %v768 = vld [vmem:[#allocation7 + $0x280] sm:$0xff]
        %v769 = vld [vmem:[#allocation7 + $0x288] sm:$0xff]
        %v770 = vld [vmem:[#allocation7 + $0x290] sm:$0xff]
        %v771 = vld [vmem:[#allocation7 + $0x298] sm:$0xff]
        %v772 = vld [vmem:[#allocation7 + $0x2a0] sm:$0xff]
        %v773 = vld [vmem:[#allocation7 + $0x2a8] sm:$0xff]
        %v774 = vld [vmem:[#allocation7 + $0x2b0] sm:$0xff]
        %v775 = vld [vmem:[#allocation7 + $0x2b8] sm:$0xff]
        %v776 = vld [vmem:[#allocation7 + $0x2c0] sm:$0xff]
        %v777 = vld [vmem:[#allocation7 + $0x2c8] sm:$0xff]
        %v778 = vld [vmem:[#allocation7 + $0x2d0] sm:$0xff]
        %v779 = vld [vmem:[#allocation7 + $0x2d8] sm:$0xff]
        %v780 = vld [vmem:[#allocation7 + $0x2e0] sm:$0xff]
        %v781 = vld [vmem:[#allocation7 + $0x2e8] sm:$0xff]
        %v782 = vld [vmem:[#allocation7 + $0x2f0] sm:$0xff]
        %v783 = vld [vmem:[#allocation7 + $0x2f8] sm:$0xff]
        %v784 = vld [vmem:[#allocation7 + $0x300] sm:$0xff]
        %v785 = vld [vmem:[#allocation7 + $0x308] sm:$0xff]
        %v786 = vld [vmem:[#allocation7 + $0x310] sm:$0xff]
        %v787 = vld [vmem:[#allocation7 + $0x318] sm:$0xff]
        %v788 = vld [vmem:[#allocation7 + $0x320] sm:$0xff]
        %v789 = vld [vmem:[#allocation7 + $0x328] sm:$0xff]
        %v790 = vld [vmem:[#allocation7 + $0x330] sm:$0xff]
        %v791 = vld [vmem:[#allocation7 + $0x338] sm:$0xff]
        %v792 = vld [vmem:[#allocation7 + $0x340] sm:$0xff]
        %v793 = vld [vmem:[#allocation7 + $0x348] sm:$0xff]
        %v794 = vld [vmem:[#allocation7 + $0x350] sm:$0xff]
        %v795 = vld [vmem:[#allocation7 + $0x358] sm:$0xff]
        %v796 = vld [vmem:[#allocation7 + $0x360] sm:$0xff]
        %v797 = vld [vmem:[#allocation7 + $0x368] sm:$0xff]
        %v798 = vld [vmem:[#allocation7 + $0x370] sm:$0xff]
        %v799 = vld [vmem:[#allocation7 + $0x378] sm:$0xff]
        %v800 = vld [vmem:[#allocation7 + $0x380] sm:$0xff]
        %v801 = vld [vmem:[#allocation7 + $0x388] sm:$0xff]
        %v802 = vld [vmem:[#allocation7 + $0x390] sm:$0xff]
        %v803 = vld [vmem:[#allocation7 + $0x398] sm:$0xff]
        %v804 = vld [vmem:[#allocation7 + $0x3a0] sm:$0xff]
        %v805 = vld [vmem:[#allocation7 + $0x3a8] sm:$0xff]
        %v806 = vld [vmem:[#allocation7 + $0x3b0] sm:$0xff]
        %v807 = vld [vmem:[#allocation7 + $0x3b8] sm:$0xff]
        %v808 = vld [vmem:[#allocation7 + $0x3c0] sm:$0xff]
        %v809 = vld [vmem:[#allocation7 + $0x3c8] sm:$0xff]
        %v810 = vld [vmem:[#allocation7 + $0x3d0] sm:$0xff]
        %v811 = vld [vmem:[#allocation7 + $0x3d8] sm:$0xff]
        %v812 = vld [vmem:[#allocation7 + $0x3e0] sm:$0xff]
        %v813 = vld [vmem:[#allocation7 + $0x3e8] sm:$0xff]
        %v814 = vld [vmem:[#allocation7 + $0x3f0] sm:$0xff]
        %v815 = vld [vmem:[#allocation7 + $0x3f8] sm:$0xff]
        %v816 = vld [vmem:[#allocation7 + $0x400] sm:$0xff]
        %v817 = vld [vmem:[#allocation7 + $0x408] sm:$0xff]
        %v818 = vld [vmem:[#allocation7 + $0x410] sm:$0xff]
        %v819 = vld [vmem:[#allocation7 + $0x418] sm:$0xff]
        %v820 = vld [vmem:[#allocation7 + $0x420] sm:$0xff]
        %v821 = vld [vmem:[#allocation7 + $0x428] sm:$0xff]
        %v822 = vld [vmem:[#allocation7 + $0x430] sm:$0xff]
        %v823 = vld [vmem:[#allocation7 + $0x438] sm:$0xff]
        %v824 = vld [vmem:[#allocation7 + $0x440] sm:$0xff]
        %v825 = vld [vmem:[#allocation7 + $0x448] sm:$0xff]
        %v826 = vld [vmem:[#allocation7 + $0x450] sm:$0xff]
        %v827 = vld [vmem:[#allocation7 + $0x458] sm:$0xff]
        %v828 = vld [vmem:[#allocation7 + $0x460] sm:$0xff]
        %v829 = vld [vmem:[#allocation7 + $0x468] sm:$0xff]
        %v830 = vld [vmem:[#allocation7 + $0x470] sm:$0xff]
        %v831 = vld [vmem:[#allocation7 + $0x478] sm:$0xff]
        %v832 = vld [vmem:[#allocation7 + $0x480] sm:$0xff]
        %v833 = vld [vmem:[#allocation7 + $0x488] sm:$0xff]
        %v834 = vld [vmem:[#allocation7 + $0x490] sm:$0xff]
        %v835 = vld [vmem:[#allocation7 + $0x498] sm:$0xff]
        %v836 = vld [vmem:[#allocation7 + $0x4a0] sm:$0xff]
        %v837 = vld [vmem:[#allocation7 + $0x4a8] sm:$0xff]
        %v838 = vld [vmem:[#allocation7 + $0x4b0] sm:$0xff]
        %v839 = vld [vmem:[#allocation7 + $0x4b8] sm:$0xff]
        %v840 = vld [vmem:[#allocation7 + $0x4c0] sm:$0xff]
        %v841 = vld [vmem:[#allocation7 + $0x4c8] sm:$0xff]
        %v842 = vld [vmem:[#allocation7 + $0x4d0] sm:$0xff]
        %v843 = vld [vmem:[#allocation7 + $0x4d8] sm:$0xff]
        %v844 = vld [vmem:[#allocation7 + $0x4e0] sm:$0xff]
        %v845 = vld [vmem:[#allocation7 + $0x4e8] sm:$0xff]
        %v846 = vld [vmem:[#allocation7 + $0x4f0] sm:$0xff]
        %v847 = vld [vmem:[#allocation7 + $0x4f8] sm:$0xff]
        %v848 = vld [vmem:[#allocation7 + $0x500] sm:$0xff]
        %v849 = vld [vmem:[#allocation7 + $0x508] sm:$0xff]
        %v850 = vld [vmem:[#allocation7 + $0x510] sm:$0xff]
        %v851 = vld [vmem:[#allocation7 + $0x518] sm:$0xff]
        %v852 = vld [vmem:[#allocation7 + $0x520] sm:$0xff]
        %v853 = vld [vmem:[#allocation7 + $0x528] sm:$0xff]
        %v854 = vld [vmem:[#allocation7 + $0x530] sm:$0xff]
        %v855 = vld [vmem:[#allocation7 + $0x538] sm:$0xff]
        %v856 = vld [vmem:[#allocation7 + $0x540] sm:$0xff]
        %v857 = vld [vmem:[#allocation7 + $0x548] sm:$0xff]
        %v858 = vld [vmem:[#allocation7 + $0x550] sm:$0xff]
        %v859 = vld [vmem:[#allocation7 + $0x558] sm:$0xff]
        %v860 = vld [vmem:[#allocation7 + $0x560] sm:$0xff]
        %v861 = vld [vmem:[#allocation7 + $0x568] sm:$0xff]
        %v862 = vld [vmem:[#allocation7 + $0x570] sm:$0xff]
        %v863 = vld [vmem:[#allocation7 + $0x578] sm:$0xff]
        %v864 = vld [vmem:[#allocation7 + $0x580] sm:$0xff]
        %v865 = vld [vmem:[#allocation7 + $0x588] sm:$0xff]
        %v866 = vld [vmem:[#allocation7 + $0x590] sm:$0xff]
        %v867 = vld [vmem:[#allocation7 + $0x598] sm:$0xff]
        %v868 = vld [vmem:[#allocation7 + $0x5a0] sm:$0xff]
        %v869 = vld [vmem:[#allocation7 + $0x5a8] sm:$0xff]
        %v870 = vld [vmem:[#allocation7 + $0x5b0] sm:$0xff]
        %v871 = vld [vmem:[#allocation7 + $0x5b8] sm:$0xff]
        %v872 = vld [vmem:[#allocation7 + $0x5c0] sm:$0xff]
        %v873 = vld [vmem:[#allocation7 + $0x5c8] sm:$0xff]
        %v874 = vld [vmem:[#allocation7 + $0x5d0] sm:$0xff]
        %v875 = vld [vmem:[#allocation7 + $0x5d8] sm:$0xff]
        %v876 = vld [vmem:[#allocation7 + $0x5e0] sm:$0xff]
        %v877 = vld [vmem:[#allocation7 + $0x5e8] sm:$0xff]
        %v878 = vld [vmem:[#allocation7 + $0x5f0] sm:$0xff]
        %v879 = vld [vmem:[#allocation7 + $0x5f8] sm:$0xff]
        %v880 = vld [vmem:[#allocation7 + $0x600] sm:$0xff]
        %v881 = vld [vmem:[#allocation7 + $0x608] sm:$0xff]
        %v882 = vld [vmem:[#allocation7 + $0x610] sm:$0xff]
        %v883 = vld [vmem:[#allocation7 + $0x618] sm:$0xff]
        %v884 = vld [vmem:[#allocation7 + $0x620] sm:$0xff]
        %v885 = vld [vmem:[#allocation7 + $0x628] sm:$0xff]
        %v886 = vld [vmem:[#allocation7 + $0x630] sm:$0xff]
        %v887 = vld [vmem:[#allocation7 + $0x638] sm:$0xff]
        %v888 = vld [vmem:[#allocation7 + $0x640] sm:$0xff]
        %v889 = vld [vmem:[#allocation7 + $0x648] sm:$0xff]
        %v890 = vld [vmem:[#allocation7 + $0x650] sm:$0xff]
        %v891 = vld [vmem:[#allocation7 + $0x658] sm:$0xff]
        %v892 = vld [vmem:[#allocation7 + $0x660] sm:$0xff]
        %v893 = vld [vmem:[#allocation7 + $0x668] sm:$0xff]
        %v894 = vld [vmem:[#allocation7 + $0x670] sm:$0xff]
        %v895 = vld [vmem:[#allocation7 + $0x678] sm:$0xff]
        %v896 = vld [vmem:[#allocation7 + $0x680] sm:$0xff]
        %v897 = vld [vmem:[#allocation7 + $0x688] sm:$0xff]
        %v898 = vld [vmem:[#allocation7 + $0x690] sm:$0xff]
        %v899 = vld [vmem:[#allocation7 + $0x698] sm:$0xff]
        %v900 = vld [vmem:[#allocation7 + $0x6a0] sm:$0xff]
        %v901 = vld [vmem:[#allocation7 + $0x6a8] sm:$0xff]
        %v902 = vld [vmem:[#allocation7 + $0x6b0] sm:$0xff]
        %v903 = vld [vmem:[#allocation7 + $0x6b8] sm:$0xff]
        %v904 = vld [vmem:[#allocation7 + $0x6c0] sm:$0xff]
        %v905 = vld [vmem:[#allocation7 + $0x6c8] sm:$0xff]
        %v906 = vld [vmem:[#allocation7 + $0x6d0] sm:$0xff]
        %v907 = vld [vmem:[#allocation7 + $0x6d8] sm:$0xff]
        %v908 = vld [vmem:[#allocation7 + $0x6e0] sm:$0xff]
        %v909 = vld [vmem:[#allocation7 + $0x6e8] sm:$0xff]
        %v910 = vld [vmem:[#allocation7 + $0x6f0] sm:$0xff]
        %v911 = vld [vmem:[#allocation7 + $0x6f8] sm:$0xff]
        %v912 = vld [vmem:[%s3] sm:$0xf]
        %v914 = vlaneseq
        %v915 = vshrl.u32 %v914, 7
        %v916 = vsub.s32 0, %v915
        %v917 = vrot.slane %v912, %v916
        %v918 = vlaneseq
        %v919 = vshrl.u32 %v918, 7
        %v920 = vsub.s32 1, %v919
        %v921 = vrot.slane %v912, %v920
        %v922 = vlaneseq
        %v923 = vshrl.u32 %v922, 7
        %v924 = vsub.s32 2, %v923
        %v925 = vrot.slane %v912, %v924
        %v926 = vlaneseq
        %v927 = vshrl.u32 %v926, 7
        %v928 = vsub.s32 3, %v927
        %v929 = vrot.slane %v912, %v928
        %v1158 = vunpack.c.l.b16 %v688
        %v1159 = vunpack.c.h.b16 %v688
        %v1160 = vunpack.c.l.b16 %v689
        %v1161 = vunpack.c.h.b16 %v689
        %v1162 = vunpack.c.l.b16 %v690
        %v1163 = vunpack.c.h.b16 %v690
        %v1164 = vunpack.c.l.b16 %v691
        %v1165 = vunpack.c.h.b16 %v691
        %v1166 = vunpack.c.l.b16 %v692
        %v1167 = vunpack.c.h.b16 %v692
        %v1168 = vunpack.c.l.b16 %v693
        %v1169 = vunpack.c.h.b16 %v693
        %v1170 = vunpack.c.l.b16 %v694
        %v1171 = vunpack.c.h.b16 %v694
        %v1172 = vunpack.c.l.b16 %v695
        %v1173 = vunpack.c.h.b16 %v695
        %v1174 = vunpack.c.l.b16 %v696
        %v1175 = vunpack.c.h.b16 %v696
        %v1176 = vunpack.c.l.b16 %v697
        %v1177 = vunpack.c.h.b16 %v697
        %v1178 = vunpack.c.l.b16 %v698
        %v1179 = vunpack.c.h.b16 %v698
        %v1180 = vunpack.c.l.b16 %v699
        %v1181 = vunpack.c.h.b16 %v699
        %v1182 = vunpack.c.l.b16 %v700
        %v1183 = vunpack.c.h.b16 %v700
        %v1184 = vunpack.c.l.b16 %v701
        %v1185 = vunpack.c.h.b16 %v701
        %v1186 = vunpack.c.l.b16 %v702
        %v1187 = vunpack.c.h.b16 %v702
        %v1188 = vunpack.c.l.b16 %v703
        %v1189 = vunpack.c.h.b16 %v703
        %v1190 = vunpack.c.l.b16 %v704
        %v1191 = vunpack.c.h.b16 %v704
        %v1192 = vunpack.c.l.b16 %v705
        %v1193 = vunpack.c.h.b16 %v705
        %v1194 = vunpack.c.l.b16 %v706
        %v1195 = vunpack.c.h.b16 %v706
        %v1196 = vunpack.c.l.b16 %v707
        %v1197 = vunpack.c.h.b16 %v707
        %v1198 = vunpack.c.l.b16 %v708
        %v1199 = vunpack.c.h.b16 %v708
        %v1200 = vunpack.c.l.b16 %v709
        %v1201 = vunpack.c.h.b16 %v709
        %v1202 = vunpack.c.l.b16 %v710
        %v1203 = vunpack.c.h.b16 %v710
        %v1204 = vunpack.c.l.b16 %v711
        %v1205 = vunpack.c.h.b16 %v711
        %v1206 = vunpack.c.l.b16 %v712
        %v1207 = vunpack.c.h.b16 %v712
        %v1208 = vunpack.c.l.b16 %v713
        %v1209 = vunpack.c.h.b16 %v713
        %v1210 = vunpack.c.l.b16 %v714
        %v1211 = vunpack.c.h.b16 %v714
        %v1212 = vunpack.c.l.b16 %v715
        %v1213 = vunpack.c.h.b16 %v715
        %v1214 = vunpack.c.l.b16 %v716
        %v1215 = vunpack.c.h.b16 %v716
        %v1216 = vunpack.c.l.b16 %v717
        %v1217 = vunpack.c.h.b16 %v717
        %v1218 = vunpack.c.l.b16 %v718
        %v1219 = vunpack.c.h.b16 %v718
        %v1220 = vunpack.c.l.b16 %v719
        %v1221 = vunpack.c.h.b16 %v719
        %v1222 = vunpack.c.l.b16 %v720
        %v1223 = vunpack.c.h.b16 %v720
        %v1224 = vunpack.c.l.b16 %v721
        %v1225 = vunpack.c.h.b16 %v721
        %v1226 = vunpack.c.l.b16 %v722
        %v1227 = vunpack.c.h.b16 %v722
        %v1228 = vunpack.c.l.b16 %v723
        %v1229 = vunpack.c.h.b16 %v723
        %v1230 = vunpack.c.l.b16 %v724
        %v1231 = vunpack.c.h.b16 %v724
        %v1232 = vunpack.c.l.b16 %v725
        %v1233 = vunpack.c.h.b16 %v725
        %v1234 = vunpack.c.l.b16 %v726
        %v1235 = vunpack.c.h.b16 %v726
        %v1236 = vunpack.c.l.b16 %v727
        %v1237 = vunpack.c.h.b16 %v727
        %v1238 = vunpack.c.l.b16 %v728
        %v1239 = vunpack.c.h.b16 %v728
        %v1240 = vunpack.c.l.b16 %v729
        %v1241 = vunpack.c.h.b16 %v729
        %v1242 = vunpack.c.l.b16 %v730
        %v1243 = vunpack.c.h.b16 %v730
        %v1244 = vunpack.c.l.b16 %v731
        %v1245 = vunpack.c.h.b16 %v731
        %v1246 = vunpack.c.l.b16 %v732
        %v1247 = vunpack.c.h.b16 %v732
        %v1248 = vunpack.c.l.b16 %v733
        %v1249 = vunpack.c.h.b16 %v733
        %v1250 = vunpack.c.l.b16 %v734
        %v1251 = vunpack.c.h.b16 %v734
        %v1252 = vunpack.c.l.b16 %v735
        %v1253 = vunpack.c.h.b16 %v735
        %v1254 = vunpack.c.l.b16 %v736
        %v1255 = vunpack.c.h.b16 %v736
        %v1256 = vunpack.c.l.b16 %v737
        %v1257 = vunpack.c.h.b16 %v737
        %v1258 = vunpack.c.l.b16 %v738
        %v1259 = vunpack.c.h.b16 %v738
        %v1260 = vunpack.c.l.b16 %v739
        %v1261 = vunpack.c.h.b16 %v739
        %v1262 = vunpack.c.l.b16 %v740
        %v1263 = vunpack.c.h.b16 %v740
        %v1264 = vunpack.c.l.b16 %v741
        %v1265 = vunpack.c.h.b16 %v741
        %v1266 = vunpack.c.l.b16 %v742
        %v1267 = vunpack.c.h.b16 %v742
        %v1268 = vunpack.c.l.b16 %v743
        %v1269 = vunpack.c.h.b16 %v743
        %v1270 = vunpack.c.l.b16 %v744
        %v1271 = vunpack.c.h.b16 %v744
        %v1272 = vunpack.c.l.b16 %v745
        %v1273 = vunpack.c.h.b16 %v745
        %v1274 = vunpack.c.l.b16 %v746
        %v1275 = vunpack.c.h.b16 %v746
        %v1276 = vunpack.c.l.b16 %v747
        %v1277 = vunpack.c.h.b16 %v747
        %v1278 = vunpack.c.l.b16 %v748
        %v1279 = vunpack.c.h.b16 %v748
        %v1280 = vunpack.c.l.b16 %v749
        %v1281 = vunpack.c.h.b16 %v749
        %v1282 = vunpack.c.l.b16 %v750
        %v1283 = vunpack.c.h.b16 %v750
        %v1284 = vunpack.c.l.b16 %v751
        %v1285 = vunpack.c.h.b16 %v751
        %v1286 = vunpack.c.l.b16 %v752
        %v1287 = vunpack.c.h.b16 %v752
        %v1288 = vunpack.c.l.b16 %v753
        %v1289 = vunpack.c.h.b16 %v753
        %v1290 = vunpack.c.l.b16 %v754
        %v1291 = vunpack.c.h.b16 %v754
        %v1292 = vunpack.c.l.b16 %v755
        %v1293 = vunpack.c.h.b16 %v755
        %v1294 = vunpack.c.l.b16 %v756
        %v1295 = vunpack.c.h.b16 %v756
        %v1296 = vunpack.c.l.b16 %v757
        %v1297 = vunpack.c.h.b16 %v757
        %v1298 = vunpack.c.l.b16 %v758
        %v1299 = vunpack.c.h.b16 %v758
        %v1300 = vunpack.c.l.b16 %v759
        %v1301 = vunpack.c.h.b16 %v759
        %v1302 = vunpack.c.l.b16 %v760
        %v1303 = vunpack.c.h.b16 %v760
        %v1304 = vunpack.c.l.b16 %v761
        %v1305 = vunpack.c.h.b16 %v761
        %v1306 = vunpack.c.l.b16 %v762
        %v1307 = vunpack.c.h.b16 %v762
        %v1308 = vunpack.c.l.b16 %v763
        %v1309 = vunpack.c.h.b16 %v763
        %v1310 = vunpack.c.l.b16 %v764
        %v1311 = vunpack.c.h.b16 %v764
        %v1312 = vunpack.c.l.b16 %v765
        %v1313 = vunpack.c.h.b16 %v765
        %v1314 = vunpack.c.l.b16 %v766
        %v1315 = vunpack.c.h.b16 %v766
        %v1316 = vunpack.c.l.b16 %v767
        %v1317 = vunpack.c.h.b16 %v767
        %v1318 = vunpack.c.l.b16 %v768
        %v1319 = vunpack.c.h.b16 %v768
        %v1320 = vunpack.c.l.b16 %v769
        %v1321 = vunpack.c.h.b16 %v769
        %v1322 = vunpack.c.l.b16 %v770
        %v1323 = vunpack.c.h.b16 %v770
        %v1324 = vunpack.c.l.b16 %v771
        %v1325 = vunpack.c.h.b16 %v771
        %v1326 = vunpack.c.l.b16 %v772
        %v1327 = vunpack.c.h.b16 %v772
        %v1328 = vunpack.c.l.b16 %v773
        %v1329 = vunpack.c.h.b16 %v773
        %v1330 = vunpack.c.l.b16 %v774
        %v1331 = vunpack.c.h.b16 %v774
        %v1332 = vunpack.c.l.b16 %v775
        %v1333 = vunpack.c.h.b16 %v775
        %v1334 = vunpack.c.l.b16 %v776
        %v1335 = vunpack.c.h.b16 %v776
        %v1336 = vunpack.c.l.b16 %v777
        %v1337 = vunpack.c.h.b16 %v777
        %v1338 = vunpack.c.l.b16 %v778
        %v1339 = vunpack.c.h.b16 %v778
        %v1340 = vunpack.c.l.b16 %v779
        %v1341 = vunpack.c.h.b16 %v779
        %v1342 = vunpack.c.l.b16 %v780
        %v1343 = vunpack.c.h.b16 %v780
        %v1344 = vunpack.c.l.b16 %v781
        %v1345 = vunpack.c.h.b16 %v781
        %v1346 = vunpack.c.l.b16 %v782
        %v1347 = vunpack.c.h.b16 %v782
        %v1348 = vunpack.c.l.b16 %v783
        %v1349 = vunpack.c.h.b16 %v783
        %v1350 = vunpack.c.l.b16 %v784
        %v1351 = vunpack.c.h.b16 %v784
        %v1352 = vunpack.c.l.b16 %v785
        %v1353 = vunpack.c.h.b16 %v785
        %v1354 = vunpack.c.l.b16 %v786
        %v1355 = vunpack.c.h.b16 %v786
        %v1356 = vunpack.c.l.b16 %v787
        %v1357 = vunpack.c.h.b16 %v787
        %v1358 = vunpack.c.l.b16 %v788
        %v1359 = vunpack.c.h.b16 %v788
        %v1360 = vunpack.c.l.b16 %v789
        %v1361 = vunpack.c.h.b16 %v789
        %v1362 = vunpack.c.l.b16 %v790
        %v1363 = vunpack.c.h.b16 %v790
        %v1364 = vunpack.c.l.b16 %v791
        %v1365 = vunpack.c.h.b16 %v791
        %v1366 = vunpack.c.l.b16 %v792
        %v1367 = vunpack.c.h.b16 %v792
        %v1368 = vunpack.c.l.b16 %v793
        %v1369 = vunpack.c.h.b16 %v793
        %v1370 = vunpack.c.l.b16 %v794
        %v1371 = vunpack.c.h.b16 %v794
        %v1372 = vunpack.c.l.b16 %v795
        %v1373 = vunpack.c.h.b16 %v795
        %v1374 = vunpack.c.l.b16 %v796
        %v1375 = vunpack.c.h.b16 %v796
        %v1376 = vunpack.c.l.b16 %v797
        %v1377 = vunpack.c.h.b16 %v797
        %v1378 = vunpack.c.l.b16 %v798
        %v1379 = vunpack.c.h.b16 %v798
        %v1380 = vunpack.c.l.b16 %v799
        %v1381 = vunpack.c.h.b16 %v799
        %v1382 = vunpack.c.l.b16 %v800
        %v1383 = vunpack.c.h.b16 %v800
        %v1384 = vunpack.c.l.b16 %v801
        %v1385 = vunpack.c.h.b16 %v801
        %v1386 = vunpack.c.l.b16 %v802
        %v1387 = vunpack.c.h.b16 %v802
        %v1388 = vunpack.c.l.b16 %v803
        %v1389 = vunpack.c.h.b16 %v803
        %v1390 = vunpack.c.l.b16 %v804
        %v1391 = vunpack.c.h.b16 %v804
        %v1392 = vunpack.c.l.b16 %v805
        %v1393 = vunpack.c.h.b16 %v805
        %v1394 = vunpack.c.l.b16 %v806
        %v1395 = vunpack.c.h.b16 %v806
        %v1396 = vunpack.c.l.b16 %v807
        %v1397 = vunpack.c.h.b16 %v807
        %v1398 = vunpack.c.l.b16 %v808
        %v1399 = vunpack.c.h.b16 %v808
        %v1400 = vunpack.c.l.b16 %v809
        %v1401 = vunpack.c.h.b16 %v809
        %v1402 = vunpack.c.l.b16 %v810
        %v1403 = vunpack.c.h.b16 %v810
        %v1404 = vunpack.c.l.b16 %v811
        %v1405 = vunpack.c.h.b16 %v811
        %v1406 = vunpack.c.l.b16 %v812
        %v1407 = vunpack.c.h.b16 %v812
        %v1408 = vunpack.c.l.b16 %v813
        %v1409 = vunpack.c.h.b16 %v813
        %v1410 = vunpack.c.l.b16 %v814
        %v1411 = vunpack.c.h.b16 %v814
        %v1412 = vunpack.c.l.b16 %v815
        %v1413 = vunpack.c.h.b16 %v815
        %v1414 = vunpack.c.l.b16 %v816
        %v1415 = vunpack.c.h.b16 %v816
        %v1416 = vunpack.c.l.b16 %v817
        %v1417 = vunpack.c.h.b16 %v817
        %v1418 = vunpack.c.l.b16 %v818
        %v1419 = vunpack.c.h.b16 %v818
        %v1420 = vunpack.c.l.b16 %v819
        %v1421 = vunpack.c.h.b16 %v819
        %v1422 = vunpack.c.l.b16 %v820
        %v1423 = vunpack.c.h.b16 %v820
        %v1424 = vunpack.c.l.b16 %v821
        %v1425 = vunpack.c.h.b16 %v821
        %v1426 = vunpack.c.l.b16 %v822
        %v1427 = vunpack.c.h.b16 %v822
        %v1428 = vunpack.c.l.b16 %v823
        %v1429 = vunpack.c.h.b16 %v823
        %v1430 = vunpack.c.l.b16 %v824
        %v1431 = vunpack.c.h.b16 %v824
        %v1432 = vunpack.c.l.b16 %v825
        %v1433 = vunpack.c.h.b16 %v825
        %v1434 = vunpack.c.l.b16 %v826
        %v1435 = vunpack.c.h.b16 %v826
        %v1436 = vunpack.c.l.b16 %v827
        %v1437 = vunpack.c.h.b16 %v827
        %v1438 = vunpack.c.l.b16 %v828
        %v1439 = vunpack.c.h.b16 %v828
        %v1440 = vunpack.c.l.b16 %v829
        %v1441 = vunpack.c.h.b16 %v829
        %v1442 = vunpack.c.l.b16 %v830
        %v1443 = vunpack.c.h.b16 %v830
        %v1444 = vunpack.c.l.b16 %v831
        %v1445 = vunpack.c.h.b16 %v831
        %v1446 = vunpack.c.l.b16 %v832
        %v1447 = vunpack.c.h.b16 %v832
        %v1448 = vunpack.c.l.b16 %v833
        %v1449 = vunpack.c.h.b16 %v833
        %v1450 = vunpack.c.l.b16 %v834
        %v1451 = vunpack.c.h.b16 %v834
        %v1452 = vunpack.c.l.b16 %v835
        %v1453 = vunpack.c.h.b16 %v835
        %v1454 = vunpack.c.l.b16 %v836
        %v1455 = vunpack.c.h.b16 %v836
        %v1456 = vunpack.c.l.b16 %v837
        %v1457 = vunpack.c.h.b16 %v837
        %v1458 = vunpack.c.l.b16 %v838
        %v1459 = vunpack.c.h.b16 %v838
        %v1460 = vunpack.c.l.b16 %v839
        %v1461 = vunpack.c.h.b16 %v839
        %v1462 = vunpack.c.l.b16 %v840
        %v1463 = vunpack.c.h.b16 %v840
        %v1464 = vunpack.c.l.b16 %v841
        %v1465 = vunpack.c.h.b16 %v841
        %v1466 = vunpack.c.l.b16 %v842
        %v1467 = vunpack.c.h.b16 %v842
        %v1468 = vunpack.c.l.b16 %v843
        %v1469 = vunpack.c.h.b16 %v843
        %v1470 = vunpack.c.l.b16 %v844
        %v1471 = vunpack.c.h.b16 %v844
        %v1472 = vunpack.c.l.b16 %v845
        %v1473 = vunpack.c.h.b16 %v845
        %v1474 = vunpack.c.l.b16 %v846
        %v1475 = vunpack.c.h.b16 %v846
        %v1476 = vunpack.c.l.b16 %v847
        %v1477 = vunpack.c.h.b16 %v847
        %v1478 = vunpack.c.l.b16 %v848
        %v1479 = vunpack.c.h.b16 %v848
        %v1480 = vunpack.c.l.b16 %v849
        %v1481 = vunpack.c.h.b16 %v849
        %v1482 = vunpack.c.l.b16 %v850
        %v1483 = vunpack.c.h.b16 %v850
        %v1484 = vunpack.c.l.b16 %v851
        %v1485 = vunpack.c.h.b16 %v851
        %v1486 = vunpack.c.l.b16 %v852
        %v1487 = vunpack.c.h.b16 %v852
        %v1488 = vunpack.c.l.b16 %v853
        %v1489 = vunpack.c.h.b16 %v853
        %v1490 = vunpack.c.l.b16 %v854
        %v1491 = vunpack.c.h.b16 %v854
        %v1492 = vunpack.c.l.b16 %v855
        %v1493 = vunpack.c.h.b16 %v855
        %v1494 = vunpack.c.l.b16 %v856
        %v1495 = vunpack.c.h.b16 %v856
        %v1496 = vunpack.c.l.b16 %v857
        %v1497 = vunpack.c.h.b16 %v857
        %v1498 = vunpack.c.l.b16 %v858
        %v1499 = vunpack.c.h.b16 %v858
        %v1500 = vunpack.c.l.b16 %v859
        %v1501 = vunpack.c.h.b16 %v859
        %v1502 = vunpack.c.l.b16 %v860
        %v1503 = vunpack.c.h.b16 %v860
        %v1504 = vunpack.c.l.b16 %v861
        %v1505 = vunpack.c.h.b16 %v861
        %v1506 = vunpack.c.l.b16 %v862
        %v1507 = vunpack.c.h.b16 %v862
        %v1508 = vunpack.c.l.b16 %v863
        %v1509 = vunpack.c.h.b16 %v863
        %v1510 = vunpack.c.l.b16 %v864
        %v1511 = vunpack.c.h.b16 %v864
        %v1512 = vunpack.c.l.b16 %v865
        %v1513 = vunpack.c.h.b16 %v865
        %v1514 = vunpack.c.l.b16 %v866
        %v1515 = vunpack.c.h.b16 %v866
        %v1516 = vunpack.c.l.b16 %v867
        %v1517 = vunpack.c.h.b16 %v867
        %v1518 = vunpack.c.l.b16 %v868
        %v1519 = vunpack.c.h.b16 %v868
        %v1520 = vunpack.c.l.b16 %v869
        %v1521 = vunpack.c.h.b16 %v869
        %v1522 = vunpack.c.l.b16 %v870
        %v1523 = vunpack.c.h.b16 %v870
        %v1524 = vunpack.c.l.b16 %v871
        %v1525 = vunpack.c.h.b16 %v871
        %v1526 = vunpack.c.l.b16 %v872
        %v1527 = vunpack.c.h.b16 %v872
        %v1528 = vunpack.c.l.b16 %v873
        %v1529 = vunpack.c.h.b16 %v873
        %v1530 = vunpack.c.l.b16 %v874
        %v1531 = vunpack.c.h.b16 %v874
        %v1532 = vunpack.c.l.b16 %v875
        %v1533 = vunpack.c.h.b16 %v875
        %v1534 = vunpack.c.l.b16 %v876
        %v1535 = vunpack.c.h.b16 %v876
        %v1536 = vunpack.c.l.b16 %v877
        %v1537 = vunpack.c.h.b16 %v877
        %v1538 = vunpack.c.l.b16 %v878
        %v1539 = vunpack.c.h.b16 %v878
        %v1540 = vunpack.c.l.b16 %v879
        %v1541 = vunpack.c.h.b16 %v879
        %v1542 = vunpack.c.l.b16 %v880
        %v1543 = vunpack.c.h.b16 %v880
        %v1544 = vunpack.c.l.b16 %v881
        %v1545 = vunpack.c.h.b16 %v881
        %v1546 = vunpack.c.l.b16 %v882
        %v1547 = vunpack.c.h.b16 %v882
        %v1548 = vunpack.c.l.b16 %v883
        %v1549 = vunpack.c.h.b16 %v883
        %v1550 = vunpack.c.l.b16 %v884
        %v1551 = vunpack.c.h.b16 %v884
        %v1552 = vunpack.c.l.b16 %v885
        %v1553 = vunpack.c.h.b16 %v885
        %v1554 = vunpack.c.l.b16 %v886
        %v1555 = vunpack.c.h.b16 %v886
        %v1556 = vunpack.c.l.b16 %v887
        %v1557 = vunpack.c.h.b16 %v887
        %v1558 = vunpack.c.l.b16 %v888
        %v1559 = vunpack.c.h.b16 %v888
        %v1560 = vunpack.c.l.b16 %v889
        %v1561 = vunpack.c.h.b16 %v889
        %v1562 = vunpack.c.l.b16 %v890
        %v1563 = vunpack.c.h.b16 %v890
        %v1564 = vunpack.c.l.b16 %v891
        %v1565 = vunpack.c.h.b16 %v891
        %v1566 = vunpack.c.l.b16 %v892
        %v1567 = vunpack.c.h.b16 %v892
        %v1568 = vunpack.c.l.b16 %v893
        %v1569 = vunpack.c.h.b16 %v893
        %v1570 = vunpack.c.l.b16 %v894
        %v1571 = vunpack.c.h.b16 %v894
        %v1572 = vunpack.c.l.b16 %v895
        %v1573 = vunpack.c.h.b16 %v895
        %v1574 = vunpack.c.l.b16 %v896
        %v1575 = vunpack.c.h.b16 %v896
        %v1576 = vunpack.c.l.b16 %v897
        %v1577 = vunpack.c.h.b16 %v897
        %v1578 = vunpack.c.l.b16 %v898
        %v1579 = vunpack.c.h.b16 %v898
        %v1580 = vunpack.c.l.b16 %v899
        %v1581 = vunpack.c.h.b16 %v899
        %v1582 = vunpack.c.l.b16 %v900
        %v1583 = vunpack.c.h.b16 %v900
        %v1584 = vunpack.c.l.b16 %v901
        %v1585 = vunpack.c.h.b16 %v901
        %v1586 = vunpack.c.l.b16 %v902
        %v1587 = vunpack.c.h.b16 %v902
        %v1588 = vunpack.c.l.b16 %v903
        %v1589 = vunpack.c.h.b16 %v903
        %v1590 = vunpack.c.l.b16 %v904
        %v1591 = vunpack.c.h.b16 %v904
        %v1592 = vunpack.c.l.b16 %v905
        %v1593 = vunpack.c.h.b16 %v905
        %v1594 = vunpack.c.l.b16 %v906
        %v1595 = vunpack.c.h.b16 %v906
        %v1596 = vunpack.c.l.b16 %v907
        %v1597 = vunpack.c.h.b16 %v907
        %v1598 = vunpack.c.l.b16 %v908
        %v1599 = vunpack.c.h.b16 %v908
        %v1600 = vunpack.c.l.b16 %v909
        %v1601 = vunpack.c.h.b16 %v909
        %v1602 = vunpack.c.l.b16 %v910
        %v1603 = vunpack.c.h.b16 %v910
        %v1604 = vunpack.c.l.b16 %v911
        %v1605 = vunpack.c.h.b16 %v911
        %v1606 = vpack.c.b16 %v1162, %v1158
        %v1607 = vpack.c.b16 %v1163, %v1159
        %v1608 = vpack.c.b16 %v1164, %v1160
        %v1609 = vpack.c.b16 %v1165, %v1161
        %v1610 = vpack.c.b16 %v1170, %v1166
        %v1611 = vpack.c.b16 %v1171, %v1167
        %v1612 = vpack.c.b16 %v1172, %v1168
        %v1613 = vpack.c.b16 %v1173, %v1169
        %v1614 = vpack.c.b16 %v1178, %v1174
        %v1615 = vpack.c.b16 %v1179, %v1175
        %v1616 = vpack.c.b16 %v1180, %v1176
        %v1617 = vpack.c.b16 %v1181, %v1177
        %v1618 = vpack.c.b16 %v1186, %v1182
        %v1619 = vpack.c.b16 %v1187, %v1183
        %v1620 = vpack.c.b16 %v1188, %v1184
        %v1621 = vpack.c.b16 %v1189, %v1185
        %v1622 = vpack.c.b16 %v1194, %v1190
        %v1623 = vpack.c.b16 %v1195, %v1191
        %v1624 = vpack.c.b16 %v1196, %v1192
        %v1625 = vpack.c.b16 %v1197, %v1193
        %v1626 = vpack.c.b16 %v1202, %v1198
        %v1627 = vpack.c.b16 %v1203, %v1199
        %v1628 = vpack.c.b16 %v1204, %v1200
        %v1629 = vpack.c.b16 %v1205, %v1201
        %v1630 = vpack.c.b16 %v1210, %v1206
        %v1631 = vpack.c.b16 %v1211, %v1207
        %v1632 = vpack.c.b16 %v1212, %v1208
        %v1633 = vpack.c.b16 %v1213, %v1209
        %v1634 = vpack.c.b16 %v1218, %v1214
        %v1635 = vpack.c.b16 %v1219, %v1215
        %v1636 = vpack.c.b16 %v1220, %v1216
        %v1637 = vpack.c.b16 %v1221, %v1217
        %v1638 = vpack.c.b16 %v1226, %v1222
        %v1639 = vpack.c.b16 %v1227, %v1223
        %v1640 = vpack.c.b16 %v1228, %v1224
        %v1641 = vpack.c.b16 %v1229, %v1225
        %v1642 = vpack.c.b16 %v1234, %v1230
        %v1643 = vpack.c.b16 %v1235, %v1231
        %v1644 = vpack.c.b16 %v1236, %v1232
        %v1645 = vpack.c.b16 %v1237, %v1233
        %v1646 = vpack.c.b16 %v1242, %v1238
        %v1647 = vpack.c.b16 %v1243, %v1239
        %v1648 = vpack.c.b16 %v1244, %v1240
        %v1649 = vpack.c.b16 %v1245, %v1241
        %v1650 = vpack.c.b16 %v1250, %v1246
        %v1651 = vpack.c.b16 %v1251, %v1247
        %v1652 = vpack.c.b16 %v1252, %v1248
        %v1653 = vpack.c.b16 %v1253, %v1249
        %v1654 = vpack.c.b16 %v1258, %v1254
        %v1655 = vpack.c.b16 %v1259, %v1255
        %v1656 = vpack.c.b16 %v1260, %v1256
        %v1657 = vpack.c.b16 %v1261, %v1257
        %v1658 = vpack.c.b16 %v1266, %v1262
        %v1659 = vpack.c.b16 %v1267, %v1263
        %v1660 = vpack.c.b16 %v1268, %v1264
        %v1661 = vpack.c.b16 %v1269, %v1265
        %v1662 = vpack.c.b16 %v1274, %v1270
        %v1663 = vpack.c.b16 %v1275, %v1271
        %v1664 = vpack.c.b16 %v1276, %v1272
        %v1665 = vpack.c.b16 %v1277, %v1273
        %v1666 = vpack.c.b16 %v1282, %v1278
        %v1667 = vpack.c.b16 %v1283, %v1279
        %v1668 = vpack.c.b16 %v1284, %v1280
        %v1669 = vpack.c.b16 %v1285, %v1281
        %v1670 = vpack.c.b16 %v1290, %v1286
        %v1671 = vpack.c.b16 %v1291, %v1287
        %v1672 = vpack.c.b16 %v1292, %v1288
        %v1673 = vpack.c.b16 %v1293, %v1289
        %v1674 = vpack.c.b16 %v1298, %v1294
        %v1675 = vpack.c.b16 %v1299, %v1295
        %v1676 = vpack.c.b16 %v1300, %v1296
        %v1677 = vpack.c.b16 %v1301, %v1297
        %v1678 = vpack.c.b16 %v1306, %v1302
        %v1679 = vpack.c.b16 %v1307, %v1303
        %v1680 = vpack.c.b16 %v1308, %v1304
        %v1681 = vpack.c.b16 %v1309, %v1305
        %v1682 = vpack.c.b16 %v1314, %v1310
        %v1683 = vpack.c.b16 %v1315, %v1311
        %v1684 = vpack.c.b16 %v1316, %v1312
        %v1685 = vpack.c.b16 %v1317, %v1313
        %v1686 = vpack.c.b16 %v1322, %v1318
        %v1687 = vpack.c.b16 %v1323, %v1319
        %v1688 = vpack.c.b16 %v1324, %v1320
        %v1689 = vpack.c.b16 %v1325, %v1321
        %v1690 = vpack.c.b16 %v1330, %v1326
        %v1691 = vpack.c.b16 %v1331, %v1327
        %v1692 = vpack.c.b16 %v1332, %v1328
        %v1693 = vpack.c.b16 %v1333, %v1329
        %v1694 = vpack.c.b16 %v1338, %v1334
        %v1695 = vpack.c.b16 %v1339, %v1335
        %v1696 = vpack.c.b16 %v1340, %v1336
        %v1697 = vpack.c.b16 %v1341, %v1337
        %v1698 = vpack.c.b16 %v1346, %v1342
        %v1699 = vpack.c.b16 %v1347, %v1343
        %v1700 = vpack.c.b16 %v1348, %v1344
        %v1701 = vpack.c.b16 %v1349, %v1345
        %v1702 = vpack.c.b16 %v1354, %v1350
        %v1703 = vpack.c.b16 %v1355, %v1351
        %v1704 = vpack.c.b16 %v1356, %v1352
        %v1705 = vpack.c.b16 %v1357, %v1353
        %v1706 = vpack.c.b16 %v1362, %v1358
        %v1707 = vpack.c.b16 %v1363, %v1359
        %v1708 = vpack.c.b16 %v1364, %v1360
        %v1709 = vpack.c.b16 %v1365, %v1361
        %v1710 = vpack.c.b16 %v1370, %v1366
        %v1711 = vpack.c.b16 %v1371, %v1367
        %v1712 = vpack.c.b16 %v1372, %v1368
        %v1713 = vpack.c.b16 %v1373, %v1369
        %v1714 = vpack.c.b16 %v1378, %v1374
        %v1715 = vpack.c.b16 %v1379, %v1375
        %v1716 = vpack.c.b16 %v1380, %v1376
        %v1717 = vpack.c.b16 %v1381, %v1377
        %v1718 = vpack.c.b16 %v1386, %v1382
        %v1719 = vpack.c.b16 %v1387, %v1383
        %v1720 = vpack.c.b16 %v1388, %v1384
        %v1721 = vpack.c.b16 %v1389, %v1385
        %v1722 = vpack.c.b16 %v1394, %v1390
        %v1723 = vpack.c.b16 %v1395, %v1391
        %v1724 = vpack.c.b16 %v1396, %v1392
        %v1725 = vpack.c.b16 %v1397, %v1393
        %v1726 = vpack.c.b16 %v1402, %v1398
        %v1727 = vpack.c.b16 %v1403, %v1399
        %v1728 = vpack.c.b16 %v1404, %v1400
        %v1729 = vpack.c.b16 %v1405, %v1401
        %v1730 = vpack.c.b16 %v1410, %v1406
        %v1731 = vpack.c.b16 %v1411, %v1407
        %v1732 = vpack.c.b16 %v1412, %v1408
        %v1733 = vpack.c.b16 %v1413, %v1409
        %v1734 = vpack.c.b16 %v1418, %v1414
        %v1735 = vpack.c.b16 %v1419, %v1415
        %v1736 = vpack.c.b16 %v1420, %v1416
        %v1737 = vpack.c.b16 %v1421, %v1417
        %v1738 = vpack.c.b16 %v1426, %v1422
        %v1739 = vpack.c.b16 %v1427, %v1423
        %v1740 = vpack.c.b16 %v1428, %v1424
        %v1741 = vpack.c.b16 %v1429, %v1425
        %v1742 = vpack.c.b16 %v1434, %v1430
        %v1743 = vpack.c.b16 %v1435, %v1431
        %v1744 = vpack.c.b16 %v1436, %v1432
        %v1745 = vpack.c.b16 %v1437, %v1433
        %v1746 = vpack.c.b16 %v1442, %v1438
        %v1747 = vpack.c.b16 %v1443, %v1439
        %v1748 = vpack.c.b16 %v1444, %v1440
        %v1749 = vpack.c.b16 %v1445, %v1441
        %v1750 = vpack.c.b16 %v1450, %v1446
        %v1751 = vpack.c.b16 %v1451, %v1447
        %v1752 = vpack.c.b16 %v1452, %v1448
        %v1753 = vpack.c.b16 %v1453, %v1449
        %v1754 = vpack.c.b16 %v1458, %v1454
        %v1755 = vpack.c.b16 %v1459, %v1455
        %v1756 = vpack.c.b16 %v1460, %v1456
        %v1757 = vpack.c.b16 %v1461, %v1457
        %v1758 = vpack.c.b16 %v1466, %v1462
        %v1759 = vpack.c.b16 %v1467, %v1463
        %v1760 = vpack.c.b16 %v1468, %v1464
        %v1761 = vpack.c.b16 %v1469, %v1465
        %v1762 = vpack.c.b16 %v1474, %v1470
        %v1763 = vpack.c.b16 %v1475, %v1471
        %v1764 = vpack.c.b16 %v1476, %v1472
        %v1765 = vpack.c.b16 %v1477, %v1473
        %v1766 = vpack.c.b16 %v1482, %v1478
        %v1767 = vpack.c.b16 %v1483, %v1479
        %v1768 = vpack.c.b16 %v1484, %v1480
        %v1769 = vpack.c.b16 %v1485, %v1481
        %v1770 = vpack.c.b16 %v1490, %v1486
        %v1771 = vpack.c.b16 %v1491, %v1487
        %v1772 = vpack.c.b16 %v1492, %v1488
        %v1773 = vpack.c.b16 %v1493, %v1489
        %v1774 = vpack.c.b16 %v1498, %v1494
        %v1775 = vpack.c.b16 %v1499, %v1495
        %v1776 = vpack.c.b16 %v1500, %v1496
        %v1777 = vpack.c.b16 %v1501, %v1497
        %v1778 = vpack.c.b16 %v1506, %v1502
        %v1779 = vpack.c.b16 %v1507, %v1503
        %v1780 = vpack.c.b16 %v1508, %v1504
        %v1781 = vpack.c.b16 %v1509, %v1505
        %v1782 = vpack.c.b16 %v1514, %v1510
        %v1783 = vpack.c.b16 %v1515, %v1511
        %v1784 = vpack.c.b16 %v1516, %v1512
        %v1785 = vpack.c.b16 %v1517, %v1513
        %v1786 = vpack.c.b16 %v1522, %v1518
        %v1787 = vpack.c.b16 %v1523, %v1519
        %v1788 = vpack.c.b16 %v1524, %v1520
        %v1789 = vpack.c.b16 %v1525, %v1521
        %v1790 = vpack.c.b16 %v1530, %v1526
        %v1791 = vpack.c.b16 %v1531, %v1527
        %v1792 = vpack.c.b16 %v1532, %v1528
        %v1793 = vpack.c.b16 %v1533, %v1529
        %v1794 = vpack.c.b16 %v1538, %v1534
        %v1795 = vpack.c.b16 %v1539, %v1535
        %v1796 = vpack.c.b16 %v1540, %v1536
        %v1797 = vpack.c.b16 %v1541, %v1537
        %v1798 = vpack.c.b16 %v1546, %v1542
        %v1799 = vpack.c.b16 %v1547, %v1543
        %v1800 = vpack.c.b16 %v1548, %v1544
        %v1801 = vpack.c.b16 %v1549, %v1545
        %v1802 = vpack.c.b16 %v1554, %v1550
        %v1803 = vpack.c.b16 %v1555, %v1551
        %v1804 = vpack.c.b16 %v1556, %v1552
        %v1805 = vpack.c.b16 %v1557, %v1553
        %v1806 = vpack.c.b16 %v1562, %v1558
        %v1807 = vpack.c.b16 %v1563, %v1559
        %v1808 = vpack.c.b16 %v1564, %v1560
        %v1809 = vpack.c.b16 %v1565, %v1561
        %v1810 = vpack.c.b16 %v1570, %v1566
        %v1811 = vpack.c.b16 %v1571, %v1567
        %v1812 = vpack.c.b16 %v1572, %v1568
        %v1813 = vpack.c.b16 %v1573, %v1569
        %v1814 = vpack.c.b16 %v1578, %v1574
        %v1815 = vpack.c.b16 %v1579, %v1575
        %v1816 = vpack.c.b16 %v1580, %v1576
        %v1817 = vpack.c.b16 %v1581, %v1577
        %v1818 = vpack.c.b16 %v1586, %v1582
        %v1819 = vpack.c.b16 %v1587, %v1583
        %v1820 = vpack.c.b16 %v1588, %v1584
        %v1821 = vpack.c.b16 %v1589, %v1585
        %v1822 = vpack.c.b16 %v1594, %v1590
        %v1823 = vpack.c.b16 %v1595, %v1591
        %v1824 = vpack.c.b16 %v1596, %v1592
        %v1825 = vpack.c.b16 %v1597, %v1593
        %v1826 = vpack.c.b16 %v1602, %v1598
        %v1827 = vpack.c.b16 %v1603, %v1599
        %v1828 = vpack.c.b16 %v1604, %v1600
        %v1829 = vpack.c.b16 %v1605, %v1601
        %2054 = vmatprep.subr.bf16.mxu0 %v1607
        %2055 = vmatpush1.bf16.msra.mxu0 %v1606
        %2056 = vmatprep.subr.bf16.mxu0 %v1611
        %2057 = vmatpush1.bf16.msra.mxu0 %v1610
        %2058 = vmatprep.subr.bf16.mxu0 %v1615
        %2059 = vmatpush1.bf16.msra.mxu0 %v1614
        %2060 = vmatprep.subr.bf16.mxu0 %v1619
        %2061 = vmatpush1.bf16.msra.mxu0 %v1618
        %2062 = vmatprep.subr.bf16.mxu0 %v1623
        %2063 = vmatpush1.bf16.msra.mxu0 %v1622
        %2064 = vmatprep.subr.bf16.mxu0 %v1627
        %2065 = vmatpush1.bf16.msra.mxu0 %v1626
        %2066 = vmatprep.subr.bf16.mxu0 %v1631
        %2067 = vmatpush1.bf16.msra.mxu0 %v1630
        %2068 = vmatprep.subr.bf16.mxu0 %v1635
        %2069 = vmatpush1.bf16.msra.mxu0 %v1634
        %2070 = vmatprep.subr.bf16.mxu0 %v1639
        %2071 = vmatpush1.bf16.msra.mxu0 %v1638
        %2072 = vmatprep.subr.bf16.mxu0 %v1643
        %2073 = vmatpush1.bf16.msra.mxu0 %v1642
        %2074 = vmatprep.subr.bf16.mxu0 %v1647
        %2075 = vmatpush1.bf16.msra.mxu0 %v1646
        %2076 = vmatprep.subr.bf16.mxu0 %v1651
        %2077 = vmatpush1.bf16.msra.mxu0 %v1650
        %2078 = vmatprep.subr.bf16.mxu0 %v1655
        %2079 = vmatpush1.bf16.msra.mxu0 %v1654
        %2080 = vmatprep.subr.bf16.mxu0 %v1659
        %2081 = vmatpush1.bf16.msra.mxu0 %v1658
        %2082 = vmatprep.subr.bf16.mxu0 %v1663
        %2083 = vmatpush1.bf16.msra.mxu0 %v1662
        %2084 = vmatprep.subr.bf16.mxu0 %v1667
        %2085 = vmatpush1.bf16.msra.mxu0 %v1666
        %2086 = vmatprep.mubr.bf16.mxu0 %v633
        %2087 = vmatmul.mubr.bf16.gmra.mrb[0].mxu0 %v632
        %v2088 = vpop.f32.mrb[0].mxu0
        %v2089 = vadd.f32 %v917, %v2088
        %v2090 = vpop.f32.mrb[0].mxu0
        %v2091 = vadd.f32 %v921, %v2090
        %v2092 = vpop.f32.mrb[0].mxu0
        %v2093 = vadd.f32 %v917, %v2092
        %v2094 = vpop.f32.mrb[0].mxu0
        %v2095 = vadd.f32 %v921, %v2094
        %2096 = vmatprep.mubr.bf16.mxu0 %v640
        %2097 = vmatmul.mubr.bf16.gmra.mrb[0].mxu0 %v639
        %v2098 = vpop.f32.mrb[0].mxu0
        %v2099 = vadd.f32 %v917, %v2098
        %v2100 = vpop.f32.mrb[0].mxu0
        %v2101 = vadd.f32 %v921, %v2100
        %v2102 = vpop.f32.mrb[0].mxu0
        %v2103 = vadd.f32 %v917, %v2102
        %v2104 = vpop.f32.mrb[0].mxu0
        %v2105 = vadd.f32 %v921, %v2104
        %2106 = vmatprep.mubr.bf16.mxu0 %v647
        %2107 = vmatmul.mubr.bf16.gmra.mrb[0].mxu0 %v646
        %v2108 = vpop.f32.mrb[0].mxu0
        %v2109 = vadd.f32 %v917, %v2108
        %v2110 = vpop.f32.mrb[0].mxu0
        %v2111 = vadd.f32 %v921, %v2110
        %v2112 = vpop.f32.mrb[0].mxu0
        %v2113 = vadd.f32 %v917, %v2112
        %v2114 = vpop.f32.mrb[0].mxu0
        %v2115 = vadd.f32 %v921, %v2114
        %2116 = vmatprep.mubr.bf16.mxu0 %v654
        %2117 = vmatmul.mubr.bf16.gmra.mrb[0].mxu0 %v653
        %v2118 = vpop.f32.mrb[0].mxu0
        %v2119 = vadd.f32 %v917, %v2118
        %v2120 = vpop.f32.mrb[0].mxu0
        %v2121 = vadd.f32 %v921, %v2120
        %v2122 = vpop.f32.mrb[0].mxu0
        %v2123 = vadd.f32 %v917, %v2122
        %v2124 = vpop.f32.mrb[0].mxu0
        %v2125 = vadd.f32 %v921, %v2124
        %2126 = vmatprep.mubr.bf16.mxu0 %v661
        %2127 = vmatmul.mubr.bf16.gmra.mrb[0].mxu0 %v660
        %v2128 = vpop.f32.mrb[0].mxu0
        %v2129 = vadd.f32 %v917, %v2128
        %v2130 = vpop.f32.mrb[0].mxu0
        %v2131 = vadd.f32 %v921, %v2130
        %v2132 = vpop.f32.mrb[0].mxu0
        %v2133 = vadd.f32 %v917, %v2132
        %v2134 = vpop.f32.mrb[0].mxu0
        %v2135 = vadd.f32 %v921, %v2134
        %2136 = vmatprep.mubr.bf16.mxu0 %v668
        %2137 = vmatmul.mubr.bf16.gmra.mrb[0].mxu0 %v667
        %v2138 = vpop.f32.mrb[0].mxu0
        %v2139 = vadd.f32 %v917, %v2138
        %v2140 = vpop.f32.mrb[0].mxu0
        %v2141 = vadd.f32 %v921, %v2140
        %v2142 = vpop.f32.mrb[0].mxu0
        %v2143 = vadd.f32 %v917, %v2142
        %v2144 = vpop.f32.mrb[0].mxu0
        %v2145 = vadd.f32 %v921, %v2144
        %2146 = vmatprep.mubr.bf16.mxu0 %v675
        %2147 = vmatmul.mubr.bf16.gmra.mrb[0].mxu0 %v674
        %v2148 = vpop.f32.mrb[0].mxu0
        %v2149 = vadd.f32 %v917, %v2148
        %v2150 = vpop.f32.mrb[0].mxu0
        %v2151 = vadd.f32 %v921, %v2150
        %v2152 = vpop.f32.mrb[0].mxu0
        %v2153 = vadd.f32 %v917, %v2152
        %v2154 = vpop.f32.mrb[0].mxu0
        %v2155 = vadd.f32 %v921, %v2154
        %2156 = vmatprep.mubr.bf16.mxu0 %v682
        %2157 = vmatmul.mubr.bf16.gmra.mrb[0].mxu0 %v681
        %v2158 = vpop.f32.mrb[0].mxu0
        %v2159 = vadd.f32 %v917, %v2158
        %v2160 = vpop.f32.mrb[0].mxu0
        %v2161 = vadd.f32 %v921, %v2160
        %v2162 = vpop.f32.mrb[0].mxu0
        %v2163 = vadd.f32 %v917, %v2162
        %v2164 = vpop.f32.mrb[0].mxu0
        %v2165 = vadd.f32 %v921, %v2164
        %2166 = vdwg.mxu0
        %2167 = vmatprep.subr.bf16.mxu0 %v1671
        %2168 = vmatpush1.bf16.msra.mxu0 %v1670
        %2169 = vmatprep.subr.bf16.mxu0 %v1675
        %2170 = vmatpush1.bf16.msra.mxu0 %v1674
        %2171 = vmatprep.subr.bf16.mxu0 %v1679
        %2172 = vmatpush1.bf16.msra.mxu0 %v1678
        %2173 = vmatprep.subr.bf16.mxu0 %v1683
        %2174 = vmatpush1.bf16.msra.mxu0 %v1682
        %2175 = vmatprep.subr.bf16.mxu0 %v1687
        %2176 = vmatpush1.bf16.msra.mxu0 %v1686
        %2177 = vmatprep.subr.bf16.mxu0 %v1691
        %2178 = vmatpush1.bf16.msra.mxu0 %v1690
        %2179 = vmatprep.subr.bf16.mxu0 %v1695
        %2180 = vmatpush1.bf16.msra.mxu0 %v1694
        %2181 = vmatprep.subr.bf16.mxu0 %v1699
        %2182 = vmatpush1.bf16.msra.mxu0 %v1698
        %2183 = vmatprep.subr.bf16.mxu0 %v1703
        %2184 = vmatpush1.bf16.msra.mxu0 %v1702
        %2185 = vmatprep.subr.bf16.mxu0 %v1707
        %2186 = vmatpush1.bf16.msra.mxu0 %v1706
        %2187 = vmatprep.subr.bf16.mxu0 %v1711
        %2188 = vmatpush1.bf16.msra.mxu0 %v1710
        %2189 = vmatprep.subr.bf16.mxu0 %v1715
        %2190 = vmatpush1.bf16.msra.mxu0 %v1714
        %2191 = vmatprep.subr.bf16.mxu0 %v1719
        %2192 = vmatpush1.bf16.msra.mxu0 %v1718
        %2193 = vmatprep.subr.bf16.mxu0 %v1723
        %2194 = vmatpush1.bf16.msra.mxu0 %v1722
        %2195 = vmatprep.subr.bf16.mxu0 %v1727
        %2196 = vmatpush1.bf16.msra.mxu0 %v1726
        %2197 = vmatprep.subr.bf16.mxu0 %v1731
        %2198 = vmatpush1.bf16.msra.mxu0 %v1730
        %2199 = vmatprep.mubr.bf16.mxu0 %v635
        %2200 = vmatmul.mubr.bf16.gmra.mrb[0].mxu0 %v634
        %v2201 = vpop.f32.mrb[0].mxu0
        %v2202 = vadd.f32 %v2089, %v2201
        %v2203 = vpop.f32.mrb[0].mxu0
        %v2204 = vadd.f32 %v2091, %v2203
        %v2205 = vpop.f32.mrb[0].mxu0
        %v2206 = vadd.f32 %v2093, %v2205
        %v2207 = vpop.f32.mrb[0].mxu0
        %v2208 = vadd.f32 %v2095, %v2207
        %2209 = vmatprep.mubr.bf16.mxu0 %v642
        %2210 = vmatmul.mubr.bf16.gmra.mrb[0].mxu0 %v641
        %v2211 = vpop.f32.mrb[0].mxu0
        %v2212 = vadd.f32 %v2099, %v2211
        %v2213 = vpop.f32.mrb[0].mxu0
        %v2214 = vadd.f32 %v2101, %v2213
        %v2215 = vpop.f32.mrb[0].mxu0
        %v2216 = vadd.f32 %v2103, %v2215
        %v2217 = vpop.f32.mrb[0].mxu0
        %v2218 = vadd.f32 %v2105, %v2217
        %2219 = vmatprep.mubr.bf16.mxu0 %v649
        %2220 = vmatmul.mubr.bf16.gmra.mrb[0].mxu0 %v648
        %v2221 = vpop.f32.mrb[0].mxu0
        %v2222 = vadd.f32 %v2109, %v2221
        %v2223 = vpop.f32.mrb[0].mxu0
        %v2224 = vadd.f32 %v2111, %v2223
        %v2225 = vpop.f32.mrb[0].mxu0
        %v2226 = vadd.f32 %v2113, %v2225
        %v2227 = vpop.f32.mrb[0].mxu0
        %v2228 = vadd.f32 %v2115, %v2227
        %2229 = vmatprep.mubr.bf16.mxu0 %v656
        %2230 = vmatmul.mubr.bf16.gmra.mrb[0].mxu0 %v655
        %v2231 = vpop.f32.mrb[0].mxu0
        %v2232 = vadd.f32 %v2119, %v2231
        %v2233 = vpop.f32.mrb[0].mxu0
        %v2234 = vadd.f32 %v2121, %v2233
        %v2235 = vpop.f32.mrb[0].mxu0
        %v2236 = vadd.f32 %v2123, %v2235
        %v2237 = vpop.f32.mrb[0].mxu0
        %v2238 = vadd.f32 %v2125, %v2237
        %2239 = vmatprep.mubr.bf16.mxu0 %v663
        %2240 = vmatmul.mubr.bf16.gmra.mrb[0].mxu0 %v662
        %v2241 = vpop.f32.mrb[0].mxu0
        %v2242 = vadd.f32 %v2129, %v2241
        %v2243 = vpop.f32.mrb[0].mxu0
        %v2244 = vadd.f32 %v2131, %v2243
        %v2245 = vpop.f32.mrb[0].mxu0
        %v2246 = vadd.f32 %v2133, %v2245
        %v2247 = vpop.f32.mrb[0].mxu0
        %v2248 = vadd.f32 %v2135, %v2247
        %2249 = vmatprep.mubr.bf16.mxu0 %v670
        %2250 = vmatmul.mubr.bf16.gmra.mrb[0].mxu0 %v669
        %v2251 = vpop.f32.mrb[0].mxu0
        %v2252 = vadd.f32 %v2139, %v2251
        %v2253 = vpop.f32.mrb[0].mxu0
        %v2254 = vadd.f32 %v2141, %v2253
        %v2255 = vpop.f32.mrb[0].mxu0
        %v2256 = vadd.f32 %v2143, %v2255
        %v2257 = vpop.f32.mrb[0].mxu0
        %v2258 = vadd.f32 %v2145, %v2257
        %2259 = vmatprep.mubr.bf16.mxu0 %v677
        %2260 = vmatmul.mubr.bf16.gmra.mrb[0].mxu0 %v676
        %v2261 = vpop.f32.mrb[0].mxu0
        %v2262 = vadd.f32 %v2149, %v2261
        %v2263 = vpop.f32.mrb[0].mxu0
        %v2264 = vadd.f32 %v2151, %v2263
        %v2265 = vpop.f32.mrb[0].mxu0
        %v2266 = vadd.f32 %v2153, %v2265
        %v2267 = vpop.f32.mrb[0].mxu0
        %v2268 = vadd.f32 %v2155, %v2267
        %2269 = vmatprep.mubr.bf16.mxu0 %v684
        %2270 = vmatmul.mubr.bf16.gmra.mrb[0].mxu0 %v683
        %v2271 = vpop.f32.mrb[0].mxu0
        %v2272 = vadd.f32 %v2159, %v2271
        %v2273 = vpop.f32.mrb[0].mxu0
        %v2274 = vadd.f32 %v2161, %v2273
        %v2275 = vpop.f32.mrb[0].mxu0
        %v2276 = vadd.f32 %v2163, %v2275
        %v2277 = vpop.f32.mrb[0].mxu0
        %v2278 = vadd.f32 %v2165, %v2277
        %2279 = vdwg.mxu0
        %2280 = vmatprep.subr.bf16.mxu0 %v1735
        %2281 = vmatpush1.bf16.msra.mxu0 %v1734
        %2282 = vmatprep.subr.bf16.mxu0 %v1739
        %2283 = vmatpush1.bf16.msra.mxu0 %v1738
        %2284 = vmatprep.subr.bf16.mxu0 %v1743
        %2285 = vmatpush1.bf16.msra.mxu0 %v1742
        %2286 = vmatprep.subr.bf16.mxu0 %v1747
        %2287 = vmatpush1.bf16.msra.mxu0 %v1746
        %2288 = vmatprep.subr.bf16.mxu0 %v1751
        %2289 = vmatpush1.bf16.msra.mxu0 %v1750
        %2290 = vmatprep.subr.bf16.mxu0 %v1755
        %2291 = vmatpush1.bf16.msra.mxu0 %v1754
        %2292 = vmatprep.subr.bf16.mxu0 %v1759
        %2293 = vmatpush1.bf16.msra.mxu0 %v1758
        %2294 = vmatprep.subr.bf16.mxu0 %v1763
        %2295 = vmatpush1.bf16.msra.mxu0 %v1762
        %2296 = vmatprep.subr.bf16.mxu0 %v1767
        %2297 = vmatpush1.bf16.msra.mxu0 %v1766
        %2298 = vmatprep.subr.bf16.mxu0 %v1771
        %2299 = vmatpush1.bf16.msra.mxu0 %v1770
        %2300 = vmatprep.subr.bf16.mxu0 %v1775
        %2301 = vmatpush1.bf16.msra.mxu0 %v1774
        %2302 = vmatprep.subr.bf16.mxu0 %v1779
        %2303 = vmatpush1.bf16.msra.mxu0 %v1778
        %2304 = vmatprep.subr.bf16.mxu0 %v1783
        %2305 = vmatpush1.bf16.msra.mxu0 %v1782
        %2306 = vmatprep.subr.bf16.mxu0 %v1787
        %2307 = vmatpush1.bf16.msra.mxu0 %v1786
        %2308 = vmatprep.subr.bf16.mxu0 %v1791
        %2309 = vmatpush1.bf16.msra.mxu0 %v1790
        %2310 = vmatprep.subr.bf16.mxu0 %v1795
        %2311 = vmatpush1.bf16.msra.mxu0 %v1794
        %2312 = vmatprep.mubr.bf16.mxu0 %v637
        %2313 = vmatmul.mubr.bf16.gmra.mrb[0].mxu0 %v636
        %v2314 = vpop.f32.mrb[0].mxu0
        %v2315 = vadd.f32 %v2202, %v2314
        %v2316 = vpop.f32.mrb[0].mxu0
        %v2317 = vadd.f32 %v2204, %v2316
        %v2318 = vpop.f32.mrb[0].mxu0
        %v2319 = vadd.f32 %v2206, %v2318
        %v2320 = vpop.f32.mrb[0].mxu0
        %v2321 = vadd.f32 %v2208, %v2320
        %2322 = vmatprep.mubr.bf16.mxu0 %v644
        %2323 = vmatmul.mubr.bf16.gmra.mrb[0].mxu0 %v643
        %v2324 = vpop.f32.mrb[0].mxu0
        %v2325 = vadd.f32 %v2212, %v2324
        %v2326 = vpop.f32.mrb[0].mxu0
        %v2327 = vadd.f32 %v2214, %v2326
        %v2328 = vpop.f32.mrb[0].mxu0
        %v2329 = vadd.f32 %v2216, %v2328
        %v2330 = vpop.f32.mrb[0].mxu0
        %v2331 = vadd.f32 %v2218, %v2330
        %2332 = vmatprep.mubr.bf16.mxu0 %v651
        %2333 = vmatmul.mubr.bf16.gmra.mrb[0].mxu0 %v650
        %v2334 = vpop.f32.mrb[0].mxu0
        %v2335 = vadd.f32 %v2222, %v2334
        %v2336 = vpop.f32.mrb[0].mxu0
        %v2337 = vadd.f32 %v2224, %v2336
        %v2338 = vpop.f32.mrb[0].mxu0
        %v2339 = vadd.f32 %v2226, %v2338
        %v2340 = vpop.f32.mrb[0].mxu0
        %v2341 = vadd.f32 %v2228, %v2340
        %2342 = vmatprep.mubr.bf16.mxu0 %v658
        %2343 = vmatmul.mubr.bf16.gmra.mrb[0].mxu0 %v657
        %v2344 = vpop.f32.mrb[0].mxu0
        %v2345 = vadd.f32 %v2232, %v2344
        %v2346 = vpop.f32.mrb[0].mxu0
        %v2347 = vadd.f32 %v2234, %v2346
        %v2348 = vpop.f32.mrb[0].mxu0
        %v2349 = vadd.f32 %v2236, %v2348
        %v2350 = vpop.f32.mrb[0].mxu0
        %v2351 = vadd.f32 %v2238, %v2350
        %2352 = vmatprep.mubr.bf16.mxu0 %v665
        %2353 = vmatmul.mubr.bf16.gmra.mrb[0].mxu0 %v664
        %v2354 = vpop.f32.mrb[0].mxu0
        %v2355 = vadd.f32 %v2242, %v2354
        %v2356 = vpop.f32.mrb[0].mxu0
        %v2357 = vadd.f32 %v2244, %v2356
        %v2358 = vpop.f32.mrb[0].mxu0
        %v2359 = vadd.f32 %v2246, %v2358
        %v2360 = vpop.f32.mrb[0].mxu0
        %v2361 = vadd.f32 %v2248, %v2360
        %2362 = vmatprep.mubr.bf16.mxu0 %v672
        %2363 = vmatmul.mubr.bf16.gmra.mrb[0].mxu0 %v671
        %v2364 = vpop.f32.mrb[0].mxu0
        %v2365 = vadd.f32 %v2252, %v2364
        %v2366 = vpop.f32.mrb[0].mxu0
        %v2367 = vadd.f32 %v2254, %v2366
        %v2368 = vpop.f32.mrb[0].mxu0
        %v2369 = vadd.f32 %v2256, %v2368
        %v2370 = vpop.f32.mrb[0].mxu0
        %v2371 = vadd.f32 %v2258, %v2370
        %2372 = vmatprep.mubr.bf16.mxu0 %v679
        %2373 = vmatmul.mubr.bf16.gmra.mrb[0].mxu0 %v678
        %v2374 = vpop.f32.mrb[0].mxu0
        %v2375 = vadd.f32 %v2262, %v2374
        %v2376 = vpop.f32.mrb[0].mxu0
        %v2377 = vadd.f32 %v2264, %v2376
        %v2378 = vpop.f32.mrb[0].mxu0
        %v2379 = vadd.f32 %v2266, %v2378
        %v2380 = vpop.f32.mrb[0].mxu0
        %v2381 = vadd.f32 %v2268, %v2380
        %2382 = vmatprep.mubr.bf16.mxu0 %v686
        %2383 = vmatmul.mubr.bf16.gmra.mrb[0].mxu0 %v685
        %v2384 = vpop.f32.mrb[0].mxu0
        %v2385 = vadd.f32 %v2272, %v2384
        %v2386 = vpop.f32.mrb[0].mxu0
        %v2387 = vadd.f32 %v2274, %v2386
        %v2388 = vpop.f32.mrb[0].mxu0
        %v2389 = vadd.f32 %v2276, %v2388
        %v2390 = vpop.f32.mrb[0].mxu0
        %v2391 = vadd.f32 %v2278, %v2390
        %2392 = vdwg.mxu0
        %2393 = vmatprep.subr.bf16.mxu0 %v1799
        %2394 = vmatpush1.bf16.msra.mxu0 %v1798
        %2395 = vmatprep.subr.bf16.mxu0 %v1803
        %2396 = vmatpush1.bf16.msra.mxu0 %v1802
        %2397 = vmatprep.subr.bf16.mxu0 %v1807
        %2398 = vmatpush1.bf16.msra.mxu0 %v1806
        %2399 = vmatprep.subr.bf16.mxu0 %v1811
        %2400 = vmatpush1.bf16.msra.mxu0 %v1810
        %2401 = vmatprep.subr.bf16.mxu0 %v1815
        %2402 = vmatpush1.bf16.msra.mxu0 %v1814
        %2403 = vmatprep.subr.bf16.mxu0 %v1819
        %2404 = vmatpush1.bf16.msra.mxu0 %v1818
        %2405 = vmatprep.subr.bf16.mxu0 %v1823
        %2406 = vmatpush1.bf16.msra.mxu0 %v1822
        %2407 = vmatprep.subr.bf16.mxu0 %v1827
        %2408 = vmatpush1.bf16.msra.mxu0 %v1826
        %2409 = vmatprep.subr.bf16.mxu0 0
        %2410 = vmatpush1.bf16.msra.mxu0 0
        %2411 = vmatprep.subr.bf16.mxu0 0
        %2412 = vmatpush1.bf16.msra.mxu0 0
        %2413 = vmatprep.subr.bf16.mxu0 0
        %2414 = vmatpush1.bf16.msra.mxu0 0
        %2415 = vmatprep.subr.bf16.mxu0 0
        %2416 = vmatpush1.bf16.msra.mxu0 0
        %2417 = vmatprep.subr.bf16.mxu0 0
        %2418 = vmatpush1.bf16.msra.mxu0 0
        %2419 = vmatprep.subr.bf16.mxu0 0
        %2420 = vmatpush1.bf16.msra.mxu0 0
        %2421 = vmatprep.subr.bf16.mxu0 0
        %2422 = vmatpush1.bf16.msra.mxu0 0
        %2423 = vmatprep.subr.bf16.mxu0 0
        %2424 = vmatpush1.bf16.msra.mxu0 0
        %2425 = vmatprep.mubr.bf16.mxu0 0
        %2426 = vmatmul.mubr.bf16.gmra.mrb[0].mxu0 %v638
        %v2427 = vpop.f32.mrb[0].mxu0
        %v2428 = vadd.f32 %v2315, %v2427
        %v2429 = vpop.f32.mrb[0].mxu0
        %v2430 = vadd.f32 %v2317, %v2429
        %v2431 = vpop.f32.mrb[0].mxu0
        %v2432 = vadd.f32 %v2319, %v2431
        %v2433 = vpop.f32.mrb[0].mxu0
        %v2434 = vadd.f32 %v2321, %v2433
        %2435 = vmatprep.mubr.bf16.mxu0 0
        %2436 = vmatmul.mubr.bf16.gmra.mrb[0].mxu0 %v645
        %v2437 = vpop.f32.mrb[0].mxu0
        %v2438 = vadd.f32 %v2325, %v2437
        %v2439 = vpop.f32.mrb[0].mxu0
        %v2440 = vadd.f32 %v2327, %v2439
        %v2441 = vpop.f32.mrb[0].mxu0
        %v2442 = vadd.f32 %v2329, %v2441
        %v2443 = vpop.f32.mrb[0].mxu0
        %v2444 = vadd.f32 %v2331, %v2443
        %2445 = vmatprep.mubr.bf16.mxu0 0
        %2446 = vmatmul.mubr.bf16.gmra.mrb[0].mxu0 %v652
        %v2447 = vpop.f32.mrb[0].mxu0
        %v2448 = vadd.f32 %v2335, %v2447
        %v2449 = vpop.f32.mrb[0].mxu0
        %v2450 = vadd.f32 %v2337, %v2449
        %v2451 = vpop.f32.mrb[0].mxu0
        %v2452 = vadd.f32 %v2339, %v2451
        %v2453 = vpop.f32.mrb[0].mxu0
        %v2454 = vadd.f32 %v2341, %v2453
        %2455 = vmatprep.mubr.bf16.mxu0 0
        %2456 = vmatmul.mubr.bf16.gmra.mrb[0].mxu0 %v659
        %v2457 = vpop.f32.mrb[0].mxu0
        %v2458 = vadd.f32 %v2345, %v2457
        %v2459 = vpop.f32.mrb[0].mxu0
        %v2460 = vadd.f32 %v2347, %v2459
        %v2461 = vpop.f32.mrb[0].mxu0
        %v2462 = vadd.f32 %v2349, %v2461
        %v2463 = vpop.f32.mrb[0].mxu0
        %v2464 = vadd.f32 %v2351, %v2463
        %2465 = vmatprep.mubr.bf16.mxu0 0
        %2466 = vmatmul.mubr.bf16.gmra.mrb[0].mxu0 %v666
        %v2467 = vpop.f32.mrb[0].mxu0
        %v2468 = vadd.f32 %v2355, %v2467
        %v2469 = vpop.f32.mrb[0].mxu0
        %v2470 = vadd.f32 %v2357, %v2469
        %v2471 = vpop.f32.mrb[0].mxu0
        %v2472 = vadd.f32 %v2359, %v2471
        %v2473 = vpop.f32.mrb[0].mxu0
        %v2474 = vadd.f32 %v2361, %v2473
        %2475 = vmatprep.mubr.bf16.mxu0 0
        %2476 = vmatmul.mubr.bf16.gmra.mrb[0].mxu0 %v673
        %v2477 = vpop.f32.mrb[0].mxu0
        %v2478 = vadd.f32 %v2365, %v2477
        %v2479 = vpop.f32.mrb[0].mxu0
        %v2480 = vadd.f32 %v2367, %v2479
        %v2481 = vpop.f32.mrb[0].mxu0
        %v2482 = vadd.f32 %v2369, %v2481
        %v2483 = vpop.f32.mrb[0].mxu0
        %v2484 = vadd.f32 %v2371, %v2483
        %2485 = vmatprep.mubr.bf16.mxu0 0
        %2486 = vmatmul.mubr.bf16.gmra.mrb[0].mxu0 %v680
        %v2487 = vpop.f32.mrb[0].mxu0
        %v2488 = vadd.f32 %v2375, %v2487
        %v2489 = vpop.f32.mrb[0].mxu0
        %v2490 = vadd.f32 %v2377, %v2489
        %v2491 = vpop.f32.mrb[0].mxu0
        %v2492 = vadd.f32 %v2379, %v2491
        %v2493 = vpop.f32.mrb[0].mxu0
        %v2494 = vadd.f32 %v2381, %v2493
        %2495 = vmatprep.mubr.bf16.mxu0 0
        %2496 = vmatmul.mubr.bf16.gmra.mrb[0].mxu0 %v687
        %v2497 = vpop.f32.mrb[0].mxu0
        %v2498 = vadd.f32 %v2385, %v2497
        %v2499 = vpop.f32.mrb[0].mxu0
        %v2500 = vadd.f32 %v2387, %v2499
        %v2501 = vpop.f32.mrb[0].mxu0
        %v2502 = vadd.f32 %v2389, %v2501
        %v2503 = vpop.f32.mrb[0].mxu0
        %v2504 = vadd.f32 %v2391, %v2503
        %2505 = vdwg.mxu0
        %2506 = vmatprep.subr.bf16.mxu0 %v1609
        %2507 = vmatpush1.bf16.msra.mxu0 %v1608
        %2508 = vmatprep.subr.bf16.mxu0 %v1613
        %2509 = vmatpush1.bf16.msra.mxu0 %v1612
        %2510 = vmatprep.subr.bf16.mxu0 %v1617
        %2511 = vmatpush1.bf16.msra.mxu0 %v1616
        %2512 = vmatprep.subr.bf16.mxu0 %v1621
        %2513 = vmatpush1.bf16.msra.mxu0 %v1620
        %2514 = vmatprep.subr.bf16.mxu0 %v1625
        %2515 = vmatpush1.bf16.msra.mxu0 %v1624
        %2516 = vmatprep.subr.bf16.mxu0 %v1629
        %2517 = vmatpush1.bf16.msra.mxu0 %v1628
        %2518 = vmatprep.subr.bf16.mxu0 %v1633
        %2519 = vmatpush1.bf16.msra.mxu0 %v1632
        %2520 = vmatprep.subr.bf16.mxu0 %v1637
        %2521 = vmatpush1.bf16.msra.mxu0 %v1636
        %2522 = vmatprep.subr.bf16.mxu0 %v1641
        %2523 = vmatpush1.bf16.msra.mxu0 %v1640
        %2524 = vmatprep.subr.bf16.mxu0 %v1645
        %2525 = vmatpush1.bf16.msra.mxu0 %v1644
        %2526 = vmatprep.subr.bf16.mxu0 %v1649
        %2527 = vmatpush1.bf16.msra.mxu0 %v1648
        %2528 = vmatprep.subr.bf16.mxu0 %v1653
        %2529 = vmatpush1.bf16.msra.mxu0 %v1652
        %2530 = vmatprep.subr.bf16.mxu0 %v1657
        %2531 = vmatpush1.bf16.msra.mxu0 %v1656
        %2532 = vmatprep.subr.bf16.mxu0 %v1661
        %2533 = vmatpush1.bf16.msra.mxu0 %v1660
        %2534 = vmatprep.subr.bf16.mxu0 %v1665
        %2535 = vmatpush1.bf16.msra.mxu0 %v1664
        %2536 = vmatprep.subr.bf16.mxu0 %v1669
        %2537 = vmatpush1.bf16.msra.mxu0 %v1668
        %2538 = vmatprep.mubr.bf16.mxu0 %v633
        %2539 = vmatmul.mubr.bf16.gmra.mrb[0].mxu0 %v632
        %v2540 = vpop.f32.mrb[0].mxu0
        %v2541 = vadd.f32 %v925, %v2540
        %v2542 = vpop.f32.mrb[0].mxu0
        %v2543 = vadd.f32 %v929, %v2542
        %v2544 = vpop.f32.mrb[0].mxu0
        %v2545 = vadd.f32 %v925, %v2544
        %v2546 = vpop.f32.mrb[0].mxu0
        %v2547 = vadd.f32 %v929, %v2546
        %2548 = vmatprep.mubr.bf16.mxu0 %v640
        %2549 = vmatmul.mubr.bf16.gmra.mrb[0].mxu0 %v639
        %v2550 = vpop.f32.mrb[0].mxu0
        %v2551 = vadd.f32 %v925, %v2550
        %v2552 = vpop.f32.mrb[0].mxu0
        %v2553 = vadd.f32 %v929, %v2552
        %v2554 = vpop.f32.mrb[0].mxu0
        %v2555 = vadd.f32 %v925, %v2554
        %v2556 = vpop.f32.mrb[0].mxu0
        %v2557 = vadd.f32 %v929, %v2556
        %2558 = vmatprep.mubr.bf16.mxu0 %v647
        %2559 = vmatmul.mubr.bf16.gmra.mrb[0].mxu0 %v646
        %v2560 = vpop.f32.mrb[0].mxu0
        %v2561 = vadd.f32 %v925, %v2560
        %v2562 = vpop.f32.mrb[0].mxu0
        %v2563 = vadd.f32 %v929, %v2562
        %v2564 = vpop.f32.mrb[0].mxu0
        %v2565 = vadd.f32 %v925, %v2564
        %v2566 = vpop.f32.mrb[0].mxu0
        %v2567 = vadd.f32 %v929, %v2566
        %2568 = vmatprep.mubr.bf16.mxu0 %v654
        %2569 = vmatmul.mubr.bf16.gmra.mrb[0].mxu0 %v653
        %v2570 = vpop.f32.mrb[0].mxu0
        %v2571 = vadd.f32 %v925, %v2570
        %v2572 = vpop.f32.mrb[0].mxu0
        %v2573 = vadd.f32 %v929, %v2572
        %v2574 = vpop.f32.mrb[0].mxu0
        %v2575 = vadd.f32 %v925, %v2574
        %v2576 = vpop.f32.mrb[0].mxu0
        %v2577 = vadd.f32 %v929, %v2576
        %2578 = vmatprep.mubr.bf16.mxu0 %v661
        %2579 = vmatmul.mubr.bf16.gmra.mrb[0].mxu0 %v660
        %v2580 = vpop.f32.mrb[0].mxu0
        %v2581 = vadd.f32 %v925, %v2580
        %v2582 = vpop.f32.mrb[0].mxu0
        %v2583 = vadd.f32 %v929, %v2582
        %v2584 = vpop.f32.mrb[0].mxu0
        %v2585 = vadd.f32 %v925, %v2584
        %v2586 = vpop.f32.mrb[0].mxu0
        %v2587 = vadd.f32 %v929, %v2586
        %2588 = vmatprep.mubr.bf16.mxu0 %v668
        %2589 = vmatmul.mubr.bf16.gmra.mrb[0].mxu0 %v667
        %v2590 = vpop.f32.mrb[0].mxu0
        %v2591 = vadd.f32 %v925, %v2590
        %v2592 = vpop.f32.mrb[0].mxu0
        %v2593 = vadd.f32 %v929, %v2592
        %v2594 = vpop.f32.mrb[0].mxu0
        %v2595 = vadd.f32 %v925, %v2594
        %v2596 = vpop.f32.mrb[0].mxu0
        %v2597 = vadd.f32 %v929, %v2596
        %2598 = vmatprep.mubr.bf16.mxu0 %v675
        %2599 = vmatmul.mubr.bf16.gmra.mrb[0].mxu0 %v674
        %v2600 = vpop.f32.mrb[0].mxu0
        %v2601 = vadd.f32 %v925, %v2600
        %v2602 = vpop.f32.mrb[0].mxu0
        %v2603 = vadd.f32 %v929, %v2602
        %v2604 = vpop.f32.mrb[0].mxu0
        %v2605 = vadd.f32 %v925, %v2604
        %v2606 = vpop.f32.mrb[0].mxu0
        %v2607 = vadd.f32 %v929, %v2606
        %2608 = vmatprep.mubr.bf16.mxu0 %v682
        %2609 = vmatmul.mubr.bf16.gmra.mrb[0].mxu0 %v681
        %v2610 = vpop.f32.mrb[0].mxu0
        %v2611 = vadd.f32 %v925, %v2610
        %v2612 = vpop.f32.mrb[0].mxu0
        %v2613 = vadd.f32 %v929, %v2612
        %v2614 = vpop.f32.mrb[0].mxu0
        %v2615 = vadd.f32 %v925, %v2614
        %v2616 = vpop.f32.mrb[0].mxu0
        %v2617 = vadd.f32 %v929, %v2616
        %2618 = vdwg.mxu0
        %2619 = vmatprep.subr.bf16.mxu0 %v1673
        %2620 = vmatpush1.bf16.msra.mxu0 %v1672
        %2621 = vmatprep.subr.bf16.mxu0 %v1677
        %2622 = vmatpush1.bf16.msra.mxu0 %v1676
        %2623 = vmatprep.subr.bf16.mxu0 %v1681
        %2624 = vmatpush1.bf16.msra.mxu0 %v1680
        %2625 = vmatprep.subr.bf16.mxu0 %v1685
        %2626 = vmatpush1.bf16.msra.mxu0 %v1684
        %2627 = vmatprep.subr.bf16.mxu0 %v1689
        %2628 = vmatpush1.bf16.msra.mxu0 %v1688
        %2629 = vmatprep.subr.bf16.mxu0 %v1693
        %2630 = vmatpush1.bf16.msra.mxu0 %v1692
        %2631 = vmatprep.subr.bf16.mxu0 %v1697
        %2632 = vmatpush1.bf16.msra.mxu0 %v1696
        %2633 = vmatprep.subr.bf16.mxu0 %v1701
        %2634 = vmatpush1.bf16.msra.mxu0 %v1700
        %2635 = vmatprep.subr.bf16.mxu0 %v1705
        %2636 = vmatpush1.bf16.msra.mxu0 %v1704
        %2637 = vmatprep.subr.bf16.mxu0 %v1709
        %2638 = vmatpush1.bf16.msra.mxu0 %v1708
        %2639 = vmatprep.subr.bf16.mxu0 %v1713
        %2640 = vmatpush1.bf16.msra.mxu0 %v1712
        %2641 = vmatprep.subr.bf16.mxu0 %v1717
        %2642 = vmatpush1.bf16.msra.mxu0 %v1716
        %2643 = vmatprep.subr.bf16.mxu0 %v1721
        %2644 = vmatpush1.bf16.msra.mxu0 %v1720
        %2645 = vmatprep.subr.bf16.mxu0 %v1725
        %2646 = vmatpush1.bf16.msra.mxu0 %v1724
        %2647 = vmatprep.subr.bf16.mxu0 %v1729
        %2648 = vmatpush1.bf16.msra.mxu0 %v1728
        %2649 = vmatprep.subr.bf16.mxu0 %v1733
        %2650 = vmatpush1.bf16.msra.mxu0 %v1732
        %2651 = vmatprep.mubr.bf16.mxu0 %v635
        %2652 = vmatmul.mubr.bf16.gmra.mrb[0].mxu0 %v634
        %v2653 = vpop.f32.mrb[0].mxu0
        %v2654 = vadd.f32 %v2541, %v2653
        %v2655 = vpop.f32.mrb[0].mxu0
        %v2656 = vadd.f32 %v2543, %v2655
        %v2657 = vpop.f32.mrb[0].mxu0
        %v2658 = vadd.f32 %v2545, %v2657
        %v2659 = vpop.f32.mrb[0].mxu0
        %v2660 = vadd.f32 %v2547, %v2659
        %2661 = vmatprep.mubr.bf16.mxu0 %v642
        %2662 = vmatmul.mubr.bf16.gmra.mrb[0].mxu0 %v641
        %v2663 = vpop.f32.mrb[0].mxu0
        %v2664 = vadd.f32 %v2551, %v2663
        %v2665 = vpop.f32.mrb[0].mxu0
        %v2666 = vadd.f32 %v2553, %v2665
        %v2667 = vpop.f32.mrb[0].mxu0
        %v2668 = vadd.f32 %v2555, %v2667
        %v2669 = vpop.f32.mrb[0].mxu0
        %v2670 = vadd.f32 %v2557, %v2669
        %2671 = vmatprep.mubr.bf16.mxu0 %v649
        %2672 = vmatmul.mubr.bf16.gmra.mrb[0].mxu0 %v648
        %v2673 = vpop.f32.mrb[0].mxu0
        %v2674 = vadd.f32 %v2561, %v2673
        %v2675 = vpop.f32.mrb[0].mxu0
        %v2676 = vadd.f32 %v2563, %v2675
        %v2677 = vpop.f32.mrb[0].mxu0
        %v2678 = vadd.f32 %v2565, %v2677
        %v2679 = vpop.f32.mrb[0].mxu0
        %v2680 = vadd.f32 %v2567, %v2679
        %2681 = vmatprep.mubr.bf16.mxu0 %v656
        %2682 = vmatmul.mubr.bf16.gmra.mrb[0].mxu0 %v655
        %v2683 = vpop.f32.mrb[0].mxu0
        %v2684 = vadd.f32 %v2571, %v2683
        %v2685 = vpop.f32.mrb[0].mxu0
        %v2686 = vadd.f32 %v2573, %v2685
        %v2687 = vpop.f32.mrb[0].mxu0
        %v2688 = vadd.f32 %v2575, %v2687
        %v2689 = vpop.f32.mrb[0].mxu0
        %v2690 = vadd.f32 %v2577, %v2689
        %2691 = vmatprep.mubr.bf16.mxu0 %v663
        %2692 = vmatmul.mubr.bf16.gmra.mrb[0].mxu0 %v662
        %v2693 = vpop.f32.mrb[0].mxu0
        %v2694 = vadd.f32 %v2581, %v2693
        %v2695 = vpop.f32.mrb[0].mxu0
        %v2696 = vadd.f32 %v2583, %v2695
        %v2697 = vpop.f32.mrb[0].mxu0
        %v2698 = vadd.f32 %v2585, %v2697
        %v2699 = vpop.f32.mrb[0].mxu0
        %v2700 = vadd.f32 %v2587, %v2699
        %2701 = vmatprep.mubr.bf16.mxu0 %v670
        %2702 = vmatmul.mubr.bf16.gmra.mrb[0].mxu0 %v669
        %v2703 = vpop.f32.mrb[0].mxu0
        %v2704 = vadd.f32 %v2591, %v2703
        %v2705 = vpop.f32.mrb[0].mxu0
        %v2706 = vadd.f32 %v2593, %v2705
        %v2707 = vpop.f32.mrb[0].mxu0
        %v2708 = vadd.f32 %v2595, %v2707
        %v2709 = vpop.f32.mrb[0].mxu0
        %v2710 = vadd.f32 %v2597, %v2709
        %2711 = vmatprep.mubr.bf16.mxu0 %v677
        %2712 = vmatmul.mubr.bf16.gmra.mrb[0].mxu0 %v676
        %v2713 = vpop.f32.mrb[0].mxu0
        %v2714 = vadd.f32 %v2601, %v2713
        %v2715 = vpop.f32.mrb[0].mxu0
        %v2716 = vadd.f32 %v2603, %v2715
        %v2717 = vpop.f32.mrb[0].mxu0
        %v2718 = vadd.f32 %v2605, %v2717
        %v2719 = vpop.f32.mrb[0].mxu0
        %v2720 = vadd.f32 %v2607, %v2719
        %2721 = vmatprep.mubr.bf16.mxu0 %v684
        %2722 = vmatmul.mubr.bf16.gmra.mrb[0].mxu0 %v683
        %v2723 = vpop.f32.mrb[0].mxu0
        %v2724 = vadd.f32 %v2611, %v2723
        %v2725 = vpop.f32.mrb[0].mxu0
        %v2726 = vadd.f32 %v2613, %v2725
        %v2727 = vpop.f32.mrb[0].mxu0
        %v2728 = vadd.f32 %v2615, %v2727
        %v2729 = vpop.f32.mrb[0].mxu0
        %v2730 = vadd.f32 %v2617, %v2729
        %2731 = vdwg.mxu0
        %2732 = vmatprep.subr.bf16.mxu0 %v1737
        %2733 = vmatpush1.bf16.msra.mxu0 %v1736
        %2734 = vmatprep.subr.bf16.mxu0 %v1741
        %2735 = vmatpush1.bf16.msra.mxu0 %v1740
        %2736 = vmatprep.subr.bf16.mxu0 %v1745
        %2737 = vmatpush1.bf16.msra.mxu0 %v1744
        %2738 = vmatprep.subr.bf16.mxu0 %v1749
        %2739 = vmatpush1.bf16.msra.mxu0 %v1748
        %2740 = vmatprep.subr.bf16.mxu0 %v1753
        %2741 = vmatpush1.bf16.msra.mxu0 %v1752
        %2742 = vmatprep.subr.bf16.mxu0 %v1757
        %2743 = vmatpush1.bf16.msra.mxu0 %v1756
        %2744 = vmatprep.subr.bf16.mxu0 %v1761
        %2745 = vmatpush1.bf16.msra.mxu0 %v1760
        %2746 = vmatprep.subr.bf16.mxu0 %v1765
        %2747 = vmatpush1.bf16.msra.mxu0 %v1764
        %2748 = vmatprep.subr.bf16.mxu0 %v1769
        %2749 = vmatpush1.bf16.msra.mxu0 %v1768
        %2750 = vmatprep.subr.bf16.mxu0 %v1773
        %2751 = vmatpush1.bf16.msra.mxu0 %v1772
        %2752 = vmatprep.subr.bf16.mxu0 %v1777
        %2753 = vmatpush1.bf16.msra.mxu0 %v1776
        %2754 = vmatprep.subr.bf16.mxu0 %v1781
        %2755 = vmatpush1.bf16.msra.mxu0 %v1780
        %2756 = vmatprep.subr.bf16.mxu0 %v1785
        %2757 = vmatpush1.bf16.msra.mxu0 %v1784
        %2758 = vmatprep.subr.bf16.mxu0 %v1789
        %2759 = vmatpush1.bf16.msra.mxu0 %v1788
        %2760 = vmatprep.subr.bf16.mxu0 %v1793
        %2761 = vmatpush1.bf16.msra.mxu0 %v1792
        %2762 = vmatprep.subr.bf16.mxu0 %v1797
        %2763 = vmatpush1.bf16.msra.mxu0 %v1796
        %2764 = vmatprep.mubr.bf16.mxu0 %v637
        %2765 = vmatmul.mubr.bf16.gmra.mrb[0].mxu0 %v636
        %v2766 = vpop.f32.mrb[0].mxu0
        %v2767 = vadd.f32 %v2654, %v2766
        %v2768 = vpop.f32.mrb[0].mxu0
        %v2769 = vadd.f32 %v2656, %v2768
        %v2770 = vpop.f32.mrb[0].mxu0
        %v2771 = vadd.f32 %v2658, %v2770
        %v2772 = vpop.f32.mrb[0].mxu0
        %v2773 = vadd.f32 %v2660, %v2772
        %2774 = vmatprep.mubr.bf16.mxu0 %v644
        %2775 = vmatmul.mubr.bf16.gmra.mrb[0].mxu0 %v643
        %v2776 = vpop.f32.mrb[0].mxu0
        %v2777 = vadd.f32 %v2664, %v2776
        %v2778 = vpop.f32.mrb[0].mxu0
        %v2779 = vadd.f32 %v2666, %v2778
        %v2780 = vpop.f32.mrb[0].mxu0
        %v2781 = vadd.f32 %v2668, %v2780
        %v2782 = vpop.f32.mrb[0].mxu0
        %v2783 = vadd.f32 %v2670, %v2782
        %2784 = vmatprep.mubr.bf16.mxu0 %v651
        %2785 = vmatmul.mubr.bf16.gmra.mrb[0].mxu0 %v650
        %v2786 = vpop.f32.mrb[0].mxu0
        %v2787 = vadd.f32 %v2674, %v2786
        %v2788 = vpop.f32.mrb[0].mxu0
        %v2789 = vadd.f32 %v2676, %v2788
        %v2790 = vpop.f32.mrb[0].mxu0
        %v2791 = vadd.f32 %v2678, %v2790
        %v2792 = vpop.f32.mrb[0].mxu0
        %v2793 = vadd.f32 %v2680, %v2792
        %2794 = vmatprep.mubr.bf16.mxu0 %v658
        %2795 = vmatmul.mubr.bf16.gmra.mrb[0].mxu0 %v657
        %v2796 = vpop.f32.mrb[0].mxu0
        %v2797 = vadd.f32 %v2684, %v2796
        %v2798 = vpop.f32.mrb[0].mxu0
        %v2799 = vadd.f32 %v2686, %v2798
        %v2800 = vpop.f32.mrb[0].mxu0
        %v2801 = vadd.f32 %v2688, %v2800
        %v2802 = vpop.f32.mrb[0].mxu0
        %v2803 = vadd.f32 %v2690, %v2802
        %2804 = vmatprep.mubr.bf16.mxu0 %v665
        %2805 = vmatmul.mubr.bf16.gmra.mrb[0].mxu0 %v664
        %v2806 = vpop.f32.mrb[0].mxu0
        %v2807 = vadd.f32 %v2694, %v2806
        %v2808 = vpop.f32.mrb[0].mxu0
        %v2809 = vadd.f32 %v2696, %v2808
        %v2810 = vpop.f32.mrb[0].mxu0
        %v2811 = vadd.f32 %v2698, %v2810
        %v2812 = vpop.f32.mrb[0].mxu0
        %v2813 = vadd.f32 %v2700, %v2812
        %2814 = vmatprep.mubr.bf16.mxu0 %v672
        %2815 = vmatmul.mubr.bf16.gmra.mrb[0].mxu0 %v671
        %v2816 = vpop.f32.mrb[0].mxu0
        %v2817 = vadd.f32 %v2704, %v2816
        %v2818 = vpop.f32.mrb[0].mxu0
        %v2819 = vadd.f32 %v2706, %v2818
        %v2820 = vpop.f32.mrb[0].mxu0
        %v2821 = vadd.f32 %v2708, %v2820
        %v2822 = vpop.f32.mrb[0].mxu0
        %v2823 = vadd.f32 %v2710, %v2822
        %2824 = vmatprep.mubr.bf16.mxu0 %v679
        %2825 = vmatmul.mubr.bf16.gmra.mrb[0].mxu0 %v678
        %v2826 = vpop.f32.mrb[0].mxu0
        %v2827 = vadd.f32 %v2714, %v2826
        %v2828 = vpop.f32.mrb[0].mxu0
        %v2829 = vadd.f32 %v2716, %v2828
        %v2830 = vpop.f32.mrb[0].mxu0
        %v2831 = vadd.f32 %v2718, %v2830
        %v2832 = vpop.f32.mrb[0].mxu0
        %v2833 = vadd.f32 %v2720, %v2832
        %2834 = vmatprep.mubr.bf16.mxu0 %v686
        %2835 = vmatmul.mubr.bf16.gmra.mrb[0].mxu0 %v685
        %v2836 = vpop.f32.mrb[0].mxu0
        %v2837 = vadd.f32 %v2724, %v2836
        %v2838 = vpop.f32.mrb[0].mxu0
        %v2839 = vadd.f32 %v2726, %v2838
        %v2840 = vpop.f32.mrb[0].mxu0
        %v2841 = vadd.f32 %v2728, %v2840
        %v2842 = vpop.f32.mrb[0].mxu0
        %v2843 = vadd.f32 %v2730, %v2842
        %2844 = vdwg.mxu0
        %2845 = vmatprep.subr.bf16.mxu0 %v1801
        %2846 = vmatpush1.bf16.msra.mxu0 %v1800
        %2847 = vmatprep.subr.bf16.mxu0 %v1805
        %2848 = vmatpush1.bf16.msra.mxu0 %v1804
        %2849 = vmatprep.subr.bf16.mxu0 %v1809
        %2850 = vmatpush1.bf16.msra.mxu0 %v1808
        %2851 = vmatprep.subr.bf16.mxu0 %v1813
        %2852 = vmatpush1.bf16.msra.mxu0 %v1812
        %2853 = vmatprep.subr.bf16.mxu0 %v1817
        %2854 = vmatpush1.bf16.msra.mxu0 %v1816
        %2855 = vmatprep.subr.bf16.mxu0 %v1821
        %2856 = vmatpush1.bf16.msra.mxu0 %v1820
        %2857 = vmatprep.subr.bf16.mxu0 %v1825
        %2858 = vmatpush1.bf16.msra.mxu0 %v1824
        %2859 = vmatprep.subr.bf16.mxu0 %v1829
        %2860 = vmatpush1.bf16.msra.mxu0 %v1828
        %2861 = vmatprep.subr.bf16.mxu0 0
        %2862 = vmatpush1.bf16.msra.mxu0 0
        %2863 = vmatprep.subr.bf16.mxu0 0
        %2864 = vmatpush1.bf16.msra.mxu0 0
        %2865 = vmatprep.subr.bf16.mxu0 0
        %2866 = vmatpush1.bf16.msra.mxu0 0
        %2867 = vmatprep.subr.bf16.mxu0 0
        %2868 = vmatpush1.bf16.msra.mxu0 0
        %2869 = vmatprep.subr.bf16.mxu0 0
        %2870 = vmatpush1.bf16.msra.mxu0 0
        %2871 = vmatprep.subr.bf16.mxu0 0
        %2872 = vmatpush1.bf16.msra.mxu0 0
        %2873 = vmatprep.subr.bf16.mxu0 0
        %2874 = vmatpush1.bf16.msra.mxu0 0
        %2875 = vmatprep.subr.bf16.mxu0 0
        %2876 = vmatpush1.bf16.msra.mxu0 0
        %2877 = vmatprep.mubr.bf16.mxu0 0
        %2878 = vmatmul.mubr.bf16.gmra.mrb[0].mxu0 %v638
        %v2879 = vpop.f32.mrb[0].mxu0
        %v2880 = vadd.f32 %v2767, %v2879
        %v2881 = vpop.f32.mrb[0].mxu0
        %v2882 = vadd.f32 %v2769, %v2881
        %v2883 = vpop.f32.mrb[0].mxu0
        %v2884 = vadd.f32 %v2771, %v2883
        %v2885 = vpop.f32.mrb[0].mxu0
        %v2886 = vadd.f32 %v2773, %v2885
        %2887 = vmatprep.mubr.bf16.mxu0 0
        %2888 = vmatmul.mubr.bf16.gmra.mrb[0].mxu0 %v645
        %v2889 = vpop.f32.mrb[0].mxu0
        %v2890 = vadd.f32 %v2777, %v2889
        %v2891 = vpop.f32.mrb[0].mxu0
        %v2892 = vadd.f32 %v2779, %v2891
        %v2893 = vpop.f32.mrb[0].mxu0
        %v2894 = vadd.f32 %v2781, %v2893
        %v2895 = vpop.f32.mrb[0].mxu0
        %v2896 = vadd.f32 %v2783, %v2895
        %2897 = vmatprep.mubr.bf16.mxu0 0
        %2898 = vmatmul.mubr.bf16.gmra.mrb[0].mxu0 %v652
        %v2899 = vpop.f32.mrb[0].mxu0
        %v2900 = vadd.f32 %v2787, %v2899
        %v2901 = vpop.f32.mrb[0].mxu0
        %v2902 = vadd.f32 %v2789, %v2901
        %v2903 = vpop.f32.mrb[0].mxu0
        %v2904 = vadd.f32 %v2791, %v2903
        %v2905 = vpop.f32.mrb[0].mxu0
        %v2906 = vadd.f32 %v2793, %v2905
        %2907 = vmatprep.mubr.bf16.mxu0 0
        %2908 = vmatmul.mubr.bf16.gmra.mrb[0].mxu0 %v659
        %v2909 = vpop.f32.mrb[0].mxu0
        %v2910 = vadd.f32 %v2797, %v2909
        %v2911 = vpop.f32.mrb[0].mxu0
        %v2912 = vadd.f32 %v2799, %v2911
        %v2913 = vpop.f32.mrb[0].mxu0
        %v2914 = vadd.f32 %v2801, %v2913
        %v2915 = vpop.f32.mrb[0].mxu0
        %v2916 = vadd.f32 %v2803, %v2915
        %2917 = vmatprep.mubr.bf16.mxu0 0
        %2918 = vmatmul.mubr.bf16.gmra.mrb[0].mxu0 %v666
        %v2919 = vpop.f32.mrb[0].mxu0
        %v2920 = vadd.f32 %v2807, %v2919
        %v2921 = vpop.f32.mrb[0].mxu0
        %v2922 = vadd.f32 %v2809, %v2921
        %v2923 = vpop.f32.mrb[0].mxu0
        %v2924 = vadd.f32 %v2811, %v2923
        %v2925 = vpop.f32.mrb[0].mxu0
        %v2926 = vadd.f32 %v2813, %v2925
        %2927 = vmatprep.mubr.bf16.mxu0 0
        %2928 = vmatmul.mubr.bf16.gmra.mrb[0].mxu0 %v673
        %v2929 = vpop.f32.mrb[0].mxu0
        %v2930 = vadd.f32 %v2817, %v2929
        %v2931 = vpop.f32.mrb[0].mxu0
        %v2932 = vadd.f32 %v2819, %v2931
        %v2933 = vpop.f32.mrb[0].mxu0
        %v2934 = vadd.f32 %v2821, %v2933
        %v2935 = vpop.f32.mrb[0].mxu0
        %v2936 = vadd.f32 %v2823, %v2935
        %2937 = vmatprep.mubr.bf16.mxu0 0
        %2938 = vmatmul.mubr.bf16.gmra.mrb[0].mxu0 %v680
        %v2939 = vpop.f32.mrb[0].mxu0
        %v2940 = vadd.f32 %v2827, %v2939
        %v2941 = vpop.f32.mrb[0].mxu0
        %v2942 = vadd.f32 %v2829, %v2941
        %v2943 = vpop.f32.mrb[0].mxu0
        %v2944 = vadd.f32 %v2831, %v2943
        %v2945 = vpop.f32.mrb[0].mxu0
        %v2946 = vadd.f32 %v2833, %v2945
        %2947 = vmatprep.mubr.bf16.mxu0 0
        %2948 = vmatmul.mubr.bf16.gmra.mrb[0].mxu0 %v687
        %v2949 = vpop.f32.mrb[0].mxu0
        %v2950 = vadd.f32 %v2837, %v2949
        %v2951 = vpop.f32.mrb[0].mxu0
        %v2952 = vadd.f32 %v2839, %v2951
        %v2953 = vpop.f32.mrb[0].mxu0
        %v2954 = vadd.f32 %v2841, %v2953
        %v2955 = vpop.f32.mrb[0].mxu0
        %v2956 = vadd.f32 %v2843, %v2955
        %2957 = vdwg.mxu0
        %v2958 = vmax.f32 %v2428, 0.0
        %v2959 = vmax.f32 %v2430, 0.0
        %v2960 = vmax.f32 %v2880, 0.0
        %v2961 = vmax.f32 %v2882, 0.0
        %v2962 = vmax.f32 %v2432, 0.0
        %v2963 = vmax.f32 %v2434, 0.0
        %v2964 = vmax.f32 %v2884, 0.0
        %v2965 = vmax.f32 %v2886, 0.0
        %v2966 = vmax.f32 %v2438, 0.0
        %v2967 = vmax.f32 %v2440, 0.0
        %v2968 = vmax.f32 %v2890, 0.0
        %v2969 = vmax.f32 %v2892, 0.0
        %v2970 = vmax.f32 %v2442, 0.0
        %v2971 = vmax.f32 %v2444, 0.0
        %v2972 = vmax.f32 %v2894, 0.0
        %v2973 = vmax.f32 %v2896, 0.0
        %v2974 = vmax.f32 %v2448, 0.0
        %v2975 = vmax.f32 %v2450, 0.0
        %v2976 = vmax.f32 %v2900, 0.0
        %v2977 = vmax.f32 %v2902, 0.0
        %v2978 = vmax.f32 %v2452, 0.0
        %v2979 = vmax.f32 %v2454, 0.0
        %v2980 = vmax.f32 %v2904, 0.0
        %v2981 = vmax.f32 %v2906, 0.0
        %v2982 = vmax.f32 %v2458, 0.0
        %v2983 = vmax.f32 %v2460, 0.0
        %v2984 = vmax.f32 %v2910, 0.0
        %v2985 = vmax.f32 %v2912, 0.0
        %v2986 = vmax.f32 %v2462, 0.0
        %v2987 = vmax.f32 %v2464, 0.0
        %v2988 = vmax.f32 %v2914, 0.0
        %v2989 = vmax.f32 %v2916, 0.0
        %v2990 = vmax.f32 %v2468, 0.0
        %v2991 = vmax.f32 %v2470, 0.0
        %v2992 = vmax.f32 %v2920, 0.0
        %v2993 = vmax.f32 %v2922, 0.0
        %v2994 = vmax.f32 %v2472, 0.0
        %v2995 = vmax.f32 %v2474, 0.0
        %v2996 = vmax.f32 %v2924, 0.0
        %v2997 = vmax.f32 %v2926, 0.0
        %v2998 = vmax.f32 %v2478, 0.0
        %v2999 = vmax.f32 %v2480, 0.0
        %v3000 = vmax.f32 %v2930, 0.0
        %v3001 = vmax.f32 %v2932, 0.0
        %v3002 = vmax.f32 %v2482, 0.0
        %v3003 = vmax.f32 %v2484, 0.0
        %v3004 = vmax.f32 %v2934, 0.0
        %v3005 = vmax.f32 %v2936, 0.0
        %v3006 = vmax.f32 %v2488, 0.0
        %v3007 = vmax.f32 %v2490, 0.0
        %v3008 = vmax.f32 %v2940, 0.0
        %v3009 = vmax.f32 %v2942, 0.0
        %v3010 = vmax.f32 %v2492, 0.0
        %v3011 = vmax.f32 %v2494, 0.0
        %v3012 = vmax.f32 %v2944, 0.0
        %v3013 = vmax.f32 %v2946, 0.0
        %v3014 = vmax.f32 %v2498, 0.0
        %v3015 = vmax.f32 %v2500, 0.0
        %v3016 = vmax.f32 %v2950, 0.0
        %v3017 = vmax.f32 %v2952, 0.0
        %v3018 = vmax.f32 %v2502, 0.0
        %v3019 = vmax.f32 %v2504, 0.0
        %v3020 = vmax.f32 %v2954, 0.0
        %v3021 = vmax.f32 %v2956, 0.0
        %v3022 = vpack.c.bf16 %v2962, %v2958
        %v3023 = vpack.c.bf16 %v2963, %v2959
        %v3024 = vpack.c.bf16 %v2964, %v2960
        %v3025 = vpack.c.bf16 %v2965, %v2961
        %v3026 = vpack.c.bf16 %v2970, %v2966
        %v3027 = vpack.c.bf16 %v2971, %v2967
        %v3028 = vpack.c.bf16 %v2972, %v2968
        %v3029 = vpack.c.bf16 %v2973, %v2969
        %v3030 = vpack.c.bf16 %v2978, %v2974
        %v3031 = vpack.c.bf16 %v2979, %v2975
        %v3032 = vpack.c.bf16 %v2980, %v2976
        %v3033 = vpack.c.bf16 %v2981, %v2977
        %v3034 = vpack.c.bf16 %v2986, %v2982
        %v3035 = vpack.c.bf16 %v2987, %v2983
        %v3036 = vpack.c.bf16 %v2988, %v2984
        %v3037 = vpack.c.bf16 %v2989, %v2985
        %v3038 = vpack.c.bf16 %v2994, %v2990
        %v3039 = vpack.c.bf16 %v2995, %v2991
        %v3040 = vpack.c.bf16 %v2996, %v2992
        %v3041 = vpack.c.bf16 %v2997, %v2993
        %v3042 = vpack.c.bf16 %v3002, %v2998
        %v3043 = vpack.c.bf16 %v3003, %v2999
        %v3044 = vpack.c.bf16 %v3004, %v3000
        %v3045 = vpack.c.bf16 %v3005, %v3001
        %v3046 = vpack.c.bf16 %v3010, %v3006
        %v3047 = vpack.c.bf16 %v3011, %v3007
        %v3048 = vpack.c.bf16 %v3012, %v3008
        %v3049 = vpack.c.bf16 %v3013, %v3009
        %v3050 = vpack.c.bf16 %v3018, %v3014
        %v3051 = vpack.c.bf16 %v3019, %v3015
        %v3052 = vpack.c.bf16 %v3020, %v3016
        %v3053 = vpack.c.bf16 %v3021, %v3017
        %v3054 = vld [vmem:[#allocation8] sm:$0xff]
        %v3055 = vld [vmem:[#allocation8 + $0x8] sm:$0xff]
        %v3056 = vld [vmem:[#allocation8 + $0x10] sm:$0xff]
        %v3057 = vld [vmem:[#allocation8 + $0x18] sm:$0xff]
        %v3058 = vld [vmem:[#allocation8 + $0x20] sm:$0xff]
        %v3059 = vld [vmem:[#allocation8 + $0x28] sm:$0xff]
        %v3060 = vld [vmem:[#allocation8 + $0x30] sm:$0xff]
        %v3061 = vld [vmem:[#allocation8 + $0x38] sm:$0xff]
        %v3062 = vld [vmem:[#allocation8 + $0x40] sm:$0xff]
        %v3063 = vld [vmem:[#allocation8 + $0x48] sm:$0xff]
        %v3064 = vld [vmem:[#allocation8 + $0x50] sm:$0xff]
        %v3065 = vld [vmem:[#allocation8 + $0x58] sm:$0xff]
        %v3066 = vld [vmem:[#allocation8 + $0x60] sm:$0xff]
        %v3067 = vld [vmem:[#allocation8 + $0x68] sm:$0xff]
        %v3068 = vld [vmem:[#allocation8 + $0x70] sm:$0xff]
        %v3069 = vld [vmem:[#allocation8 + $0x78] sm:$0xff]
        %v3070 = vld [vmem:[#allocation8 + $0x80] sm:$0xff]
        %v3071 = vld [vmem:[#allocation8 + $0x88] sm:$0xff]
        %v3072 = vld [vmem:[#allocation8 + $0x90] sm:$0xff]
        %v3073 = vld [vmem:[#allocation8 + $0x98] sm:$0xff]
        %v3074 = vld [vmem:[#allocation8 + $0xa0] sm:$0xff]
        %v3075 = vld [vmem:[#allocation8 + $0xa8] sm:$0xff]
        %v3076 = vld [vmem:[#allocation8 + $0xb0] sm:$0xff]
        %v3077 = vld [vmem:[#allocation8 + $0xb8] sm:$0xff]
        %v3078 = vld [vmem:[#allocation8 + $0xc0] sm:$0xff]
        %v3079 = vld [vmem:[#allocation8 + $0xc8] sm:$0xff]
        %v3080 = vld [vmem:[#allocation8 + $0xd0] sm:$0xff]
        %v3081 = vld [vmem:[#allocation8 + $0xd8] sm:$0xff]
        %v3082 = vld [vmem:[#allocation8 + $0xe0] sm:$0xff]
        %v3083 = vld [vmem:[#allocation8 + $0xe8] sm:$0xff]
        %v3084 = vld [vmem:[#allocation8 + $0xf0] sm:$0xff]
        %v3085 = vld [vmem:[#allocation8 + $0xf8] sm:$0xff]
        %v3086 = vld [vmem:[#allocation8 + $0x100] sm:$0xff]
        %v3087 = vld [vmem:[#allocation8 + $0x108] sm:$0xff]
        %v3088 = vld [vmem:[#allocation8 + $0x110] sm:$0xff]
        %v3089 = vld [vmem:[#allocation8 + $0x118] sm:$0xff]
        %v3090 = vld [vmem:[#allocation8 + $0x120] sm:$0xff]
        %v3091 = vld [vmem:[#allocation8 + $0x128] sm:$0xff]
        %v3092 = vld [vmem:[#allocation8 + $0x130] sm:$0xff]
        %v3093 = vld [vmem:[#allocation8 + $0x138] sm:$0xff]
        %v3094 = vld [vmem:[#allocation8 + $0x140] sm:$0xff]
        %v3095 = vld [vmem:[#allocation8 + $0x148] sm:$0xff]
        %v3096 = vld [vmem:[#allocation8 + $0x150] sm:$0xff]
        %v3097 = vld [vmem:[#allocation8 + $0x158] sm:$0xff]
        %v3098 = vld [vmem:[#allocation8 + $0x160] sm:$0xff]
        %v3099 = vld [vmem:[#allocation8 + $0x168] sm:$0xff]
        %v3100 = vld [vmem:[#allocation8 + $0x170] sm:$0xff]
        %v3101 = vld [vmem:[#allocation8 + $0x178] sm:$0xff]
        %v3102 = vld [vmem:[#allocation8 + $0x180] sm:$0xff]
        %v3103 = vld [vmem:[#allocation8 + $0x188] sm:$0xff]
        %v3104 = vld [vmem:[#allocation8 + $0x190] sm:$0xff]
        %v3105 = vld [vmem:[#allocation8 + $0x198] sm:$0xff]
        %v3106 = vld [vmem:[#allocation8 + $0x1a0] sm:$0xff]
        %v3107 = vld [vmem:[#allocation8 + $0x1a8] sm:$0xff]
        %v3108 = vld [vmem:[#allocation8 + $0x1b0] sm:$0xff]
        %v3109 = vld [vmem:[#allocation8 + $0x1b8] sm:$0xff]
        %v3110 = vld [vmem:[#allocation8 + $0x1c0] sm:$0xff]
        %v3111 = vld [vmem:[#allocation8 + $0x1c8] sm:$0xff]
        %v3112 = vld [vmem:[#allocation8 + $0x1d0] sm:$0xff]
        %v3113 = vld [vmem:[#allocation8 + $0x1d8] sm:$0xff]
        %v3114 = vld [vmem:[#allocation8 + $0x1e0] sm:$0xff]
        %v3115 = vld [vmem:[#allocation8 + $0x1e8] sm:$0xff]
        %v3116 = vld [vmem:[#allocation8 + $0x1f0] sm:$0xff]
        %v3117 = vld [vmem:[#allocation8 + $0x1f8] sm:$0xff]
        %v3118 = vld [vmem:[%s5] sm:$0x3]
        %v3120 = vlaneseq
        %v3121 = vshrl.u32 %v3120, 7
        %v3122 = vsub.s32 0, %v3121
        %v3123 = vrot.slane %v3118, %v3122
        %v3124 = vlaneseq
        %v3125 = vshrl.u32 %v3124, 7
        %v3126 = vsub.s32 1, %v3125
        %v3127 = vrot.slane %v3118, %v3126
        %v3194 = vunpack.c.l.b16 %v3054
        %v3195 = vunpack.c.h.b16 %v3054
        %v3196 = vunpack.c.l.b16 %v3055
        %v3197 = vunpack.c.h.b16 %v3055
        %v3198 = vunpack.c.l.b16 %v3056
        %v3199 = vunpack.c.h.b16 %v3056
        %v3200 = vunpack.c.l.b16 %v3057
        %v3201 = vunpack.c.h.b16 %v3057
        %v3202 = vunpack.c.l.b16 %v3058
        %v3203 = vunpack.c.h.b16 %v3058
        %v3204 = vunpack.c.l.b16 %v3059
        %v3205 = vunpack.c.h.b16 %v3059
        %v3206 = vunpack.c.l.b16 %v3060
        %v3207 = vunpack.c.h.b16 %v3060
        %v3208 = vunpack.c.l.b16 %v3061
        %v3209 = vunpack.c.h.b16 %v3061
        %v3210 = vunpack.c.l.b16 %v3062
        %v3211 = vunpack.c.h.b16 %v3062
        %v3212 = vunpack.c.l.b16 %v3063
        %v3213 = vunpack.c.h.b16 %v3063
        %v3214 = vunpack.c.l.b16 %v3064
        %v3215 = vunpack.c.h.b16 %v3064
        %v3216 = vunpack.c.l.b16 %v3065
        %v3217 = vunpack.c.h.b16 %v3065
        %v3218 = vunpack.c.l.b16 %v3066
        %v3219 = vunpack.c.h.b16 %v3066
        %v3220 = vunpack.c.l.b16 %v3067
        %v3221 = vunpack.c.h.b16 %v3067
        %v3222 = vunpack.c.l.b16 %v3068
        %v3223 = vunpack.c.h.b16 %v3068
        %v3224 = vunpack.c.l.b16 %v3069
        %v3225 = vunpack.c.h.b16 %v3069
        %v3226 = vunpack.c.l.b16 %v3070
        %v3227 = vunpack.c.h.b16 %v3070
        %v3228 = vunpack.c.l.b16 %v3071
        %v3229 = vunpack.c.h.b16 %v3071
        %v3230 = vunpack.c.l.b16 %v3072
        %v3231 = vunpack.c.h.b16 %v3072
        %v3232 = vunpack.c.l.b16 %v3073
        %v3233 = vunpack.c.h.b16 %v3073
        %v3234 = vunpack.c.l.b16 %v3074
        %v3235 = vunpack.c.h.b16 %v3074
        %v3236 = vunpack.c.l.b16 %v3075
        %v3237 = vunpack.c.h.b16 %v3075
        %v3238 = vunpack.c.l.b16 %v3076
        %v3239 = vunpack.c.h.b16 %v3076
        %v3240 = vunpack.c.l.b16 %v3077
        %v3241 = vunpack.c.h.b16 %v3077
        %v3242 = vunpack.c.l.b16 %v3078
        %v3243 = vunpack.c.h.b16 %v3078
        %v3244 = vunpack.c.l.b16 %v3079
        %v3245 = vunpack.c.h.b16 %v3079
        %v3246 = vunpack.c.l.b16 %v3080
        %v3247 = vunpack.c.h.b16 %v3080
        %v3248 = vunpack.c.l.b16 %v3081
        %v3249 = vunpack.c.h.b16 %v3081
        %v3250 = vunpack.c.l.b16 %v3082
        %v3251 = vunpack.c.h.b16 %v3082
        %v3252 = vunpack.c.l.b16 %v3083
        %v3253 = vunpack.c.h.b16 %v3083
        %v3254 = vunpack.c.l.b16 %v3084
        %v3255 = vunpack.c.h.b16 %v3084
        %v3256 = vunpack.c.l.b16 %v3085
        %v3257 = vunpack.c.h.b16 %v3085
        %v3258 = vunpack.c.l.b16 %v3086
        %v3259 = vunpack.c.h.b16 %v3086
        %v3260 = vunpack.c.l.b16 %v3087
        %v3261 = vunpack.c.h.b16 %v3087
        %v3262 = vunpack.c.l.b16 %v3088
        %v3263 = vunpack.c.h.b16 %v3088
        %v3264 = vunpack.c.l.b16 %v3089
        %v3265 = vunpack.c.h.b16 %v3089
        %v3266 = vunpack.c.l.b16 %v3090
        %v3267 = vunpack.c.h.b16 %v3090
        %v3268 = vunpack.c.l.b16 %v3091
        %v3269 = vunpack.c.h.b16 %v3091
        %v3270 = vunpack.c.l.b16 %v3092
        %v3271 = vunpack.c.h.b16 %v3092
        %v3272 = vunpack.c.l.b16 %v3093
        %v3273 = vunpack.c.h.b16 %v3093
        %v3274 = vunpack.c.l.b16 %v3094
        %v3275 = vunpack.c.h.b16 %v3094
        %v3276 = vunpack.c.l.b16 %v3095
        %v3277 = vunpack.c.h.b16 %v3095
        %v3278 = vunpack.c.l.b16 %v3096
        %v3279 = vunpack.c.h.b16 %v3096
        %v3280 = vunpack.c.l.b16 %v3097
        %v3281 = vunpack.c.h.b16 %v3097
        %v3282 = vunpack.c.l.b16 %v3098
        %v3283 = vunpack.c.h.b16 %v3098
        %v3284 = vunpack.c.l.b16 %v3099
        %v3285 = vunpack.c.h.b16 %v3099
        %v3286 = vunpack.c.l.b16 %v3100
        %v3287 = vunpack.c.h.b16 %v3100
        %v3288 = vunpack.c.l.b16 %v3101
        %v3289 = vunpack.c.h.b16 %v3101
        %v3290 = vunpack.c.l.b16 %v3102
        %v3291 = vunpack.c.h.b16 %v3102
        %v3292 = vunpack.c.l.b16 %v3103
        %v3293 = vunpack.c.h.b16 %v3103
        %v3294 = vunpack.c.l.b16 %v3104
        %v3295 = vunpack.c.h.b16 %v3104
        %v3296 = vunpack.c.l.b16 %v3105
        %v3297 = vunpack.c.h.b16 %v3105
        %v3298 = vunpack.c.l.b16 %v3106
        %v3299 = vunpack.c.h.b16 %v3106
        %v3300 = vunpack.c.l.b16 %v3107
        %v3301 = vunpack.c.h.b16 %v3107
        %v3302 = vunpack.c.l.b16 %v3108
        %v3303 = vunpack.c.h.b16 %v3108
        %v3304 = vunpack.c.l.b16 %v3109
        %v3305 = vunpack.c.h.b16 %v3109
        %v3306 = vunpack.c.l.b16 %v3110
        %v3307 = vunpack.c.h.b16 %v3110
        %v3308 = vunpack.c.l.b16 %v3111
        %v3309 = vunpack.c.h.b16 %v3111
        %v3310 = vunpack.c.l.b16 %v3112
        %v3311 = vunpack.c.h.b16 %v3112
        %v3312 = vunpack.c.l.b16 %v3113
        %v3313 = vunpack.c.h.b16 %v3113
        %v3314 = vunpack.c.l.b16 %v3114
        %v3315 = vunpack.c.h.b16 %v3114
        %v3316 = vunpack.c.l.b16 %v3115
        %v3317 = vunpack.c.h.b16 %v3115
        %v3318 = vunpack.c.l.b16 %v3116
        %v3319 = vunpack.c.h.b16 %v3116
        %v3320 = vunpack.c.l.b16 %v3117
        %v3321 = vunpack.c.h.b16 %v3117
        %v3322 = vpack.c.b16 %v3196, %v3194
        %v3323 = vpack.c.b16 %v3197, %v3195
        %v3324 = vpack.c.b16 %v3200, %v3198
        %v3325 = vpack.c.b16 %v3201, %v3199
        %v3326 = vpack.c.b16 %v3204, %v3202
        %v3327 = vpack.c.b16 %v3205, %v3203
        %v3328 = vpack.c.b16 %v3208, %v3206
        %v3329 = vpack.c.b16 %v3209, %v3207
        %v3330 = vpack.c.b16 %v3212, %v3210
        %v3331 = vpack.c.b16 %v3213, %v3211
        %v3332 = vpack.c.b16 %v3216, %v3214
        %v3333 = vpack.c.b16 %v3217, %v3215
        %v3334 = vpack.c.b16 %v3220, %v3218
        %v3335 = vpack.c.b16 %v3221, %v3219
        %v3336 = vpack.c.b16 %v3224, %v3222
        %v3337 = vpack.c.b16 %v3225, %v3223
        %v3338 = vpack.c.b16 %v3228, %v3226
        %v3339 = vpack.c.b16 %v3229, %v3227
        %v3340 = vpack.c.b16 %v3232, %v3230
        %v3341 = vpack.c.b16 %v3233, %v3231
        %v3342 = vpack.c.b16 %v3236, %v3234
        %v3343 = vpack.c.b16 %v3237, %v3235
        %v3344 = vpack.c.b16 %v3240, %v3238
        %v3345 = vpack.c.b16 %v3241, %v3239
        %v3346 = vpack.c.b16 %v3244, %v3242
        %v3347 = vpack.c.b16 %v3245, %v3243
        %v3348 = vpack.c.b16 %v3248, %v3246
        %v3349 = vpack.c.b16 %v3249, %v3247
        %v3350 = vpack.c.b16 %v3252, %v3250
        %v3351 = vpack.c.b16 %v3253, %v3251
        %v3352 = vpack.c.b16 %v3256, %v3254
        %v3353 = vpack.c.b16 %v3257, %v3255
        %v3354 = vpack.c.b16 %v3260, %v3258
        %v3355 = vpack.c.b16 %v3261, %v3259
        %v3356 = vpack.c.b16 %v3264, %v3262
        %v3357 = vpack.c.b16 %v3265, %v3263
        %v3358 = vpack.c.b16 %v3268, %v3266
        %v3359 = vpack.c.b16 %v3269, %v3267
        %v3360 = vpack.c.b16 %v3272, %v3270
        %v3361 = vpack.c.b16 %v3273, %v3271
        %v3362 = vpack.c.b16 %v3276, %v3274
        %v3363 = vpack.c.b16 %v3277, %v3275
        %v3364 = vpack.c.b16 %v3280, %v3278
        %v3365 = vpack.c.b16 %v3281, %v3279
        %v3366 = vpack.c.b16 %v3284, %v3282
        %v3367 = vpack.c.b16 %v3285, %v3283
        %v3368 = vpack.c.b16 %v3288, %v3286
        %v3369 = vpack.c.b16 %v3289, %v3287
        %v3370 = vpack.c.b16 %v3292, %v3290
        %v3371 = vpack.c.b16 %v3293, %v3291
        %v3372 = vpack.c.b16 %v3296, %v3294
        %v3373 = vpack.c.b16 %v3297, %v3295
        %v3374 = vpack.c.b16 %v3300, %v3298
        %v3375 = vpack.c.b16 %v3301, %v3299
        %v3376 = vpack.c.b16 %v3304, %v3302
        %v3377 = vpack.c.b16 %v3305, %v3303
        %v3378 = vpack.c.b16 %v3308, %v3306
        %v3379 = vpack.c.b16 %v3309, %v3307
        %v3380 = vpack.c.b16 %v3312, %v3310
        %v3381 = vpack.c.b16 %v3313, %v3311
        %v3382 = vpack.c.b16 %v3316, %v3314
        %v3383 = vpack.c.b16 %v3317, %v3315
        %v3384 = vpack.c.b16 %v3320, %v3318
        %v3385 = vpack.c.b16 %v3321, %v3319
        %3450 = vmatprep.subr.bf16.mxu0 %v3323
        %3451 = vmatpush1.bf16.msra.mxu0 %v3322
        %3452 = vmatprep.subr.bf16.mxu0 %v3325
        %3453 = vmatpush1.bf16.msra.mxu0 %v3324
        %3454 = vmatprep.subr.bf16.mxu0 %v3327
        %3455 = vmatpush1.bf16.msra.mxu0 %v3326
        %3456 = vmatprep.subr.bf16.mxu0 %v3329
        %3457 = vmatpush1.bf16.msra.mxu0 %v3328
        %3458 = vmatprep.subr.bf16.mxu0 %v3331
        %3459 = vmatpush1.bf16.msra.mxu0 %v3330
        %3460 = vmatprep.subr.bf16.mxu0 %v3333
        %3461 = vmatpush1.bf16.msra.mxu0 %v3332
        %3462 = vmatprep.subr.bf16.mxu0 %v3335
        %3463 = vmatpush1.bf16.msra.mxu0 %v3334
        %3464 = vmatprep.subr.bf16.mxu0 %v3337
        %3465 = vmatpush1.bf16.msra.mxu0 %v3336
        %3466 = vmatprep.subr.bf16.mxu0 %v3339
        %3467 = vmatpush1.bf16.msra.mxu0 %v3338
        %3468 = vmatprep.subr.bf16.mxu0 %v3341
        %3469 = vmatpush1.bf16.msra.mxu0 %v3340
        %3470 = vmatprep.subr.bf16.mxu0 %v3343
        %3471 = vmatpush1.bf16.msra.mxu0 %v3342
        %3472 = vmatprep.subr.bf16.mxu0 %v3345
        %3473 = vmatpush1.bf16.msra.mxu0 %v3344
        %3474 = vmatprep.subr.bf16.mxu0 %v3347
        %3475 = vmatpush1.bf16.msra.mxu0 %v3346
        %3476 = vmatprep.subr.bf16.mxu0 %v3349
        %3477 = vmatpush1.bf16.msra.mxu0 %v3348
        %3478 = vmatprep.subr.bf16.mxu0 %v3351
        %3479 = vmatpush1.bf16.msra.mxu0 %v3350
        %3480 = vmatprep.subr.bf16.mxu0 %v3353
        %3481 = vmatpush1.bf16.msra.mxu0 %v3352
        %3482 = vmatprep.mubr.bf16.mxu0 %v3023
        %3483 = vmatmul.mubr.bf16.gmra.mrb[0].mxu0 %v3022
        %v3484 = vpop.f32.mrb[0].mxu0
        %v3485 = vadd.f32 %v3123, %v3484
        %v3486 = vpop.f32.mrb[0].mxu0
        %v3487 = vadd.f32 %v3127, %v3486
        %v3488 = vpop.f32.mrb[0].mxu0
        %v3489 = vadd.f32 %v3123, %v3488
        %v3490 = vpop.f32.mrb[0].mxu0
        %v3491 = vadd.f32 %v3127, %v3490
        %3492 = vmatprep.mubr.bf16.mxu0 %v3027
        %3493 = vmatmul.mubr.bf16.gmra.mrb[0].mxu0 %v3026
        %v3494 = vpop.f32.mrb[0].mxu0
        %v3495 = vadd.f32 %v3123, %v3494
        %v3496 = vpop.f32.mrb[0].mxu0
        %v3497 = vadd.f32 %v3127, %v3496
        %v3498 = vpop.f32.mrb[0].mxu0
        %v3499 = vadd.f32 %v3123, %v3498
        %v3500 = vpop.f32.mrb[0].mxu0
        %v3501 = vadd.f32 %v3127, %v3500
        %3502 = vmatprep.mubr.bf16.mxu0 %v3031
        %3503 = vmatmul.mubr.bf16.gmra.mrb[0].mxu0 %v3030
        %v3504 = vpop.f32.mrb[0].mxu0
        %v3505 = vadd.f32 %v3123, %v3504
        %v3506 = vpop.f32.mrb[0].mxu0
        %v3507 = vadd.f32 %v3127, %v3506
        %v3508 = vpop.f32.mrb[0].mxu0
        %v3509 = vadd.f32 %v3123, %v3508
        %v3510 = vpop.f32.mrb[0].mxu0
        %v3511 = vadd.f32 %v3127, %v3510
        %3512 = vmatprep.mubr.bf16.mxu0 %v3035
        %3513 = vmatmul.mubr.bf16.gmra.mrb[0].mxu0 %v3034
        %v3514 = vpop.f32.mrb[0].mxu0
        %v3515 = vadd.f32 %v3123, %v3514
        %v3516 = vpop.f32.mrb[0].mxu0
        %v3517 = vadd.f32 %v3127, %v3516
        %v3518 = vpop.f32.mrb[0].mxu0
        %v3519 = vadd.f32 %v3123, %v3518
        %v3520 = vpop.f32.mrb[0].mxu0
        %v3521 = vadd.f32 %v3127, %v3520
        %3522 = vmatprep.mubr.bf16.mxu0 %v3039
        %3523 = vmatmul.mubr.bf16.gmra.mrb[0].mxu0 %v3038
        %v3524 = vpop.f32.mrb[0].mxu0
        %v3525 = vadd.f32 %v3123, %v3524
        %v3526 = vpop.f32.mrb[0].mxu0
        %v3527 = vadd.f32 %v3127, %v3526
        %v3528 = vpop.f32.mrb[0].mxu0
        %v3529 = vadd.f32 %v3123, %v3528
        %v3530 = vpop.f32.mrb[0].mxu0
        %v3531 = vadd.f32 %v3127, %v3530
        %3532 = vmatprep.mubr.bf16.mxu0 %v3043
        %3533 = vmatmul.mubr.bf16.gmra.mrb[0].mxu0 %v3042
        %v3534 = vpop.f32.mrb[0].mxu0
        %v3535 = vadd.f32 %v3123, %v3534
        %v3536 = vpop.f32.mrb[0].mxu0
        %v3537 = vadd.f32 %v3127, %v3536
        %v3538 = vpop.f32.mrb[0].mxu0
        %v3539 = vadd.f32 %v3123, %v3538
        %v3540 = vpop.f32.mrb[0].mxu0
        %v3541 = vadd.f32 %v3127, %v3540
        %3542 = vmatprep.mubr.bf16.mxu0 %v3047
        %3543 = vmatmul.mubr.bf16.gmra.mrb[0].mxu0 %v3046
        %v3544 = vpop.f32.mrb[0].mxu0
        %v3545 = vadd.f32 %v3123, %v3544
        %v3546 = vpop.f32.mrb[0].mxu0
        %v3547 = vadd.f32 %v3127, %v3546
        %v3548 = vpop.f32.mrb[0].mxu0
        %v3549 = vadd.f32 %v3123, %v3548
        %v3550 = vpop.f32.mrb[0].mxu0
        %v3551 = vadd.f32 %v3127, %v3550
        %3552 = vmatprep.mubr.bf16.mxu0 %v3051
        %3553 = vmatmul.mubr.bf16.gmra.mrb[0].mxu0 %v3050
        %v3554 = vpop.f32.mrb[0].mxu0
        %v3555 = vadd.f32 %v3123, %v3554
        %v3556 = vpop.f32.mrb[0].mxu0
        %v3557 = vadd.f32 %v3127, %v3556
        %v3558 = vpop.f32.mrb[0].mxu0
        %v3559 = vadd.f32 %v3123, %v3558
        %v3560 = vpop.f32.mrb[0].mxu0
        %v3561 = vadd.f32 %v3127, %v3560
        %3562 = vdwg.mxu0
        %3563 = vmatprep.subr.bf16.mxu0 %v3355
        %3564 = vmatpush1.bf16.msra.mxu0 %v3354
        %3565 = vmatprep.subr.bf16.mxu0 %v3357
        %3566 = vmatpush1.bf16.msra.mxu0 %v3356
        %3567 = vmatprep.subr.bf16.mxu0 %v3359
        %3568 = vmatpush1.bf16.msra.mxu0 %v3358
        %3569 = vmatprep.subr.bf16.mxu0 %v3361
        %3570 = vmatpush1.bf16.msra.mxu0 %v3360
        %3571 = vmatprep.subr.bf16.mxu0 %v3363
        %3572 = vmatpush1.bf16.msra.mxu0 %v3362
        %3573 = vmatprep.subr.bf16.mxu0 %v3365
        %3574 = vmatpush1.bf16.msra.mxu0 %v3364
        %3575 = vmatprep.subr.bf16.mxu0 %v3367
        %3576 = vmatpush1.bf16.msra.mxu0 %v3366
        %3577 = vmatprep.subr.bf16.mxu0 %v3369
        %3578 = vmatpush1.bf16.msra.mxu0 %v3368
        %3579 = vmatprep.subr.bf16.mxu0 %v3371
        %3580 = vmatpush1.bf16.msra.mxu0 %v3370
        %3581 = vmatprep.subr.bf16.mxu0 %v3373
        %3582 = vmatpush1.bf16.msra.mxu0 %v3372
        %3583 = vmatprep.subr.bf16.mxu0 %v3375
        %3584 = vmatpush1.bf16.msra.mxu0 %v3374
        %3585 = vmatprep.subr.bf16.mxu0 %v3377
        %3586 = vmatpush1.bf16.msra.mxu0 %v3376
        %3587 = vmatprep.subr.bf16.mxu0 %v3379
        %3588 = vmatpush1.bf16.msra.mxu0 %v3378
        %3589 = vmatprep.subr.bf16.mxu0 %v3381
        %3590 = vmatpush1.bf16.msra.mxu0 %v3380
        %3591 = vmatprep.subr.bf16.mxu0 %v3383
        %3592 = vmatpush1.bf16.msra.mxu0 %v3382
        %3593 = vmatprep.subr.bf16.mxu0 %v3385
        %3594 = vmatpush1.bf16.msra.mxu0 %v3384
        %3595 = vmatprep.mubr.bf16.mxu0 %v3025
        %3596 = vmatmul.mubr.bf16.gmra.mrb[0].mxu0 %v3024
        %v3597 = vpop.f32.mrb[0].mxu0
        %v3598 = vadd.f32 %v3485, %v3597
        %v3599 = vpop.f32.mrb[0].mxu0
        %v3600 = vadd.f32 %v3487, %v3599
        %v3601 = vpop.f32.mrb[0].mxu0
        %v3602 = vadd.f32 %v3489, %v3601
        %v3603 = vpop.f32.mrb[0].mxu0
        %v3604 = vadd.f32 %v3491, %v3603
        %3605 = vmatprep.mubr.bf16.mxu0 %v3029
        %3606 = vmatmul.mubr.bf16.gmra.mrb[0].mxu0 %v3028
        %v3607 = vpop.f32.mrb[0].mxu0
        %v3608 = vadd.f32 %v3495, %v3607
        %v3609 = vpop.f32.mrb[0].mxu0
        %v3610 = vadd.f32 %v3497, %v3609
        %v3611 = vpop.f32.mrb[0].mxu0
        %v3612 = vadd.f32 %v3499, %v3611
        %v3613 = vpop.f32.mrb[0].mxu0
        %v3614 = vadd.f32 %v3501, %v3613
        %3615 = vmatprep.mubr.bf16.mxu0 %v3033
        %3616 = vmatmul.mubr.bf16.gmra.mrb[0].mxu0 %v3032
        %v3617 = vpop.f32.mrb[0].mxu0
        %v3618 = vadd.f32 %v3505, %v3617
        %v3619 = vpop.f32.mrb[0].mxu0
        %v3620 = vadd.f32 %v3507, %v3619
        %v3621 = vpop.f32.mrb[0].mxu0
        %v3622 = vadd.f32 %v3509, %v3621
        %v3623 = vpop.f32.mrb[0].mxu0
        %v3624 = vadd.f32 %v3511, %v3623
        %3625 = vmatprep.mubr.bf16.mxu0 %v3037
        %3626 = vmatmul.mubr.bf16.gmra.mrb[0].mxu0 %v3036
        %v3627 = vpop.f32.mrb[0].mxu0
        %v3628 = vadd.f32 %v3515, %v3627
        %v3629 = vpop.f32.mrb[0].mxu0
        %v3630 = vadd.f32 %v3517, %v3629
        %v3631 = vpop.f32.mrb[0].mxu0
        %v3632 = vadd.f32 %v3519, %v3631
        %v3633 = vpop.f32.mrb[0].mxu0
        %v3634 = vadd.f32 %v3521, %v3633
        %3635 = vmatprep.mubr.bf16.mxu0 %v3041
        %3636 = vmatmul.mubr.bf16.gmra.mrb[0].mxu0 %v3040
        %v3637 = vpop.f32.mrb[0].mxu0
        %v3638 = vadd.f32 %v3525, %v3637
        %v3639 = vpop.f32.mrb[0].mxu0
        %v3640 = vadd.f32 %v3527, %v3639
        %v3641 = vpop.f32.mrb[0].mxu0
        %v3642 = vadd.f32 %v3529, %v3641
        %v3643 = vpop.f32.mrb[0].mxu0
        %v3644 = vadd.f32 %v3531, %v3643
        %3645 = vmatprep.mubr.bf16.mxu0 %v3045
        %3646 = vmatmul.mubr.bf16.gmra.mrb[0].mxu0 %v3044
        %v3647 = vpop.f32.mrb[0].mxu0
        %v3648 = vadd.f32 %v3535, %v3647
        %v3649 = vpop.f32.mrb[0].mxu0
        %v3650 = vadd.f32 %v3537, %v3649
        %v3651 = vpop.f32.mrb[0].mxu0
        %v3652 = vadd.f32 %v3539, %v3651
        %v3653 = vpop.f32.mrb[0].mxu0
        %v3654 = vadd.f32 %v3541, %v3653
        %3655 = vmatprep.mubr.bf16.mxu0 %v3049
        %3656 = vmatmul.mubr.bf16.gmra.mrb[0].mxu0 %v3048
        %v3657 = vpop.f32.mrb[0].mxu0
        %v3658 = vadd.f32 %v3545, %v3657
        %v3659 = vpop.f32.mrb[0].mxu0
        %v3660 = vadd.f32 %v3547, %v3659
        %v3661 = vpop.f32.mrb[0].mxu0
        %v3662 = vadd.f32 %v3549, %v3661
        %v3663 = vpop.f32.mrb[0].mxu0
        %v3664 = vadd.f32 %v3551, %v3663
        %3665 = vmatprep.mubr.bf16.mxu0 %v3053
        %3666 = vmatmul.mubr.bf16.gmra.mrb[0].mxu0 %v3052
        %v3667 = vpop.f32.mrb[0].mxu0
        %v3668 = vadd.f32 %v3555, %v3667
        %v3669 = vpop.f32.mrb[0].mxu0
        %v3670 = vadd.f32 %v3557, %v3669
        %v3671 = vpop.f32.mrb[0].mxu0
        %v3672 = vadd.f32 %v3559, %v3671
        %v3673 = vpop.f32.mrb[0].mxu0
        %v3674 = vadd.f32 %v3561, %v3673
        %3675 = vdwg.mxu0
        %v3676 = vmul.f32 %v3600, 0.5
        %v3677 = vmul.f32 %v3604, 0.5
        %v3678 = vmul.f32 %v3610, 0.5
        %v3679 = vmul.f32 %v3614, 0.5
        %v3680 = vmul.f32 %v3620, 0.5
        %v3681 = vmul.f32 %v3624, 0.5
        %v3682 = vmul.f32 %v3630, 0.5
        %v3683 = vmul.f32 %v3634, 0.5
        %v3684 = vmul.f32 %v3640, 0.5
        %v3685 = vmul.f32 %v3644, 0.5
        %v3686 = vmul.f32 %v3650, 0.5
        %v3687 = vmul.f32 %v3654, 0.5
        %v3688 = vmul.f32 %v3660, 0.5
        %v3689 = vmul.f32 %v3664, 0.5
        %v3690 = vmul.f32 %v3670, 0.5
        %v3691 = vmul.f32 %v3674, 0.5
        %v3692 = vmul.f32 %v3676, 1.442695
        %v3693 = vpow.pop %v3692
        %v3694 = vmul.f32 %v3677, 1.442695
        %v3695 = vpow.pop %v3694
        %v3696 = vmul.f32 %v3678, 1.442695
        %v3697 = vpow.pop %v3696
        %v3698 = vmul.f32 %v3679, 1.442695
        %v3699 = vpow.pop %v3698
        %v3700 = vmul.f32 %v3680, 1.442695
        %v3701 = vpow.pop %v3700
        %v3702 = vmul.f32 %v3681, 1.442695
        %v3703 = vpow.pop %v3702
        %v3704 = vmul.f32 %v3682, 1.442695
        %v3705 = vpow.pop %v3704
        %v3706 = vmul.f32 %v3683, 1.442695
        %v3707 = vpow.pop %v3706
        %v3708 = vmul.f32 %v3684, 1.442695
        %v3709 = vpow.pop %v3708
        %v3710 = vmul.f32 %v3685, 1.442695
        %v3711 = vpow.pop %v3710
        %v3712 = vmul.f32 %v3686, 1.442695
        %v3713 = vpow.pop %v3712
        %v3714 = vmul.f32 %v3687, 1.442695
        %v3715 = vpow.pop %v3714
        %v3716 = vmul.f32 %v3688, 1.442695
        %v3717 = vpow.pop %v3716
        %v3718 = vmul.f32 %v3689, 1.442695
        %v3719 = vpow.pop %v3718
        %v3720 = vmul.f32 %v3690, 1.442695
        %v3721 = vpow.pop %v3720
        %v3722 = vmul.f32 %v3691, 1.442695
        %v3723 = vpow.pop %v3722
        %v3724 = vld [vmem:[%s450] sm:$0xff]
        %v3725 = vld [vmem:[%s450 + $0x8] sm:$0xff]
        %v3726 = vld [vmem:[%s450 + $0x10] sm:$0xff]
        %v3727 = vld [vmem:[%s450 + $0x18] sm:$0xff]
        %v3728 = vld [vmem:[%s450 + $0x20] sm:$0xff]
        %v3729 = vld [vmem:[%s450 + $0x28] sm:$0xff]
        %v3730 = vld [vmem:[%s450 + $0x30] sm:$0xff]
        %v3731 = vld [vmem:[%s450 + $0x38] sm:$0xff]
        %v3732 = vld [vmem:[%s450 + $0x40] sm:$0xff]
        %v3733 = vld [vmem:[%s450 + $0x48] sm:$0xff]
        %v3734 = vld [vmem:[%s450 + $0x50] sm:$0xff]
        %v3735 = vld [vmem:[%s450 + $0x58] sm:$0xff]
        %v3736 = vld [vmem:[%s450 + $0x60] sm:$0xff]
        %v3737 = vld [vmem:[%s450 + $0x68] sm:$0xff]
        %v3738 = vld [vmem:[%s450 + $0x70] sm:$0xff]
        %v3739 = vld [vmem:[%s450 + $0x78] sm:$0xff]
        %v3740 = vmul.f32 %v3693, %v3724
        %v3741 = vmul.f32 %v3695, %v3725
        %v3742 = vmul.f32 %v3697, %v3726
        %v3743 = vmul.f32 %v3699, %v3727
        %v3744 = vmul.f32 %v3701, %v3728
        %v3745 = vmul.f32 %v3703, %v3729
        %v3746 = vmul.f32 %v3705, %v3730
        %v3747 = vmul.f32 %v3707, %v3731
        %v3748 = vmul.f32 %v3709, %v3732
        %v3749 = vmul.f32 %v3711, %v3733
        %v3750 = vmul.f32 %v3713, %v3734
        %v3751 = vmul.f32 %v3715, %v3735
        %v3752 = vmul.f32 %v3717, %v3736
        %v3753 = vmul.f32 %v3719, %v3737
        %v3754 = vmul.f32 %v3721, %v3738
        %v3755 = vmul.f32 %v3723, %v3739
        %v3756 = vadd.f32 %v3598, %v3740
        %v3757 = vadd.f32 %v3602, %v3741
        %v3758 = vadd.f32 %v3608, %v3742
        %v3759 = vadd.f32 %v3612, %v3743
        %v3760 = vadd.f32 %v3618, %v3744
        %v3761 = vadd.f32 %v3622, %v3745
        %v3762 = vadd.f32 %v3628, %v3746
        %v3763 = vadd.f32 %v3632, %v3747
        %v3764 = vadd.f32 %v3638, %v3748
        %v3765 = vadd.f32 %v3642, %v3749
        %v3766 = vadd.f32 %v3648, %v3750
        %v3767 = vadd.f32 %v3652, %v3751
        %v3768 = vadd.f32 %v3658, %v3752
        %v3769 = vadd.f32 %v3662, %v3753
        %v3770 = vadd.f32 %v3668, %v3754
        %v3771 = vadd.f32 %v3672, %v3755
        %v3772 = vpack.c.bf16 %v3757, %v3756
        %v3773 = vpack.c.bf16 %v3759, %v3758
        %v3774 = vpack.c.bf16 %v3761, %v3760
        %v3775 = vpack.c.bf16 %v3763, %v3762
        %v3776 = vpack.c.bf16 %v3765, %v3764
        %v3777 = vpack.c.bf16 %v3767, %v3766
        %v3778 = vpack.c.bf16 %v3769, %v3768
        %v3779 = vpack.c.bf16 %v3771, %v3770
        %v3780 = vld [vmem:[#allocation10] sm:$0xff]
        %v3781 = vld [vmem:[#allocation10 + $0x8] sm:$0xff]
        %v3782 = vld [vmem:[#allocation10 + $0x10] sm:$0xff]
        %v3783 = vld [vmem:[#allocation10 + $0x18] sm:$0xff]
        %v3784 = vld [vmem:[#allocation10 + $0x20] sm:$0xff]
        %v3785 = vld [vmem:[#allocation10 + $0x28] sm:$0xff]
        %v3786 = vld [vmem:[#allocation10 + $0x30] sm:$0xff]
        %v3787 = vld [vmem:[#allocation10 + $0x38] sm:$0xff]
        %v3788 = vld [vmem:[#allocation10 + $0x40] sm:$0xff]
        %v3789 = vld [vmem:[#allocation10 + $0x48] sm:$0xff]
        %v3790 = vld [vmem:[#allocation10 + $0x50] sm:$0xff]
        %v3791 = vld [vmem:[#allocation10 + $0x58] sm:$0xff]
        %v3792 = vld [vmem:[#allocation10 + $0x60] sm:$0xff]
        %v3793 = vld [vmem:[#allocation10 + $0x68] sm:$0xff]
        %v3794 = vld [vmem:[#allocation10 + $0x70] sm:$0xff]
        %v3795 = vld [vmem:[#allocation10 + $0x78] sm:$0xff]
        %v3796 = vld [vmem:[#allocation10 + $0x80] sm:$0xff]
        %v3797 = vld [vmem:[#allocation10 + $0x88] sm:$0xff]
        %v3798 = vld [vmem:[#allocation10 + $0x90] sm:$0xff]
        %v3799 = vld [vmem:[#allocation10 + $0x98] sm:$0xff]
        %v3800 = vld [vmem:[#allocation10 + $0xa0] sm:$0xff]
        %v3801 = vld [vmem:[#allocation10 + $0xa8] sm:$0xff]
        %v3802 = vld [vmem:[#allocation10 + $0xb0] sm:$0xff]
        %v3803 = vld [vmem:[#allocation10 + $0xb8] sm:$0xff]
        %v3804 = vld [vmem:[#allocation10 + $0xc0] sm:$0xff]
        %v3805 = vld [vmem:[#allocation10 + $0xc8] sm:$0xff]
        %v3806 = vld [vmem:[#allocation10 + $0xd0] sm:$0xff]
        %v3807 = vld [vmem:[#allocation10 + $0xd8] sm:$0xff]
        %v3808 = vld [vmem:[#allocation10 + $0xe0] sm:$0xff]
        %v3809 = vld [vmem:[#allocation10 + $0xe8] sm:$0xff]
        %v3810 = vld [vmem:[#allocation10 + $0xf0] sm:$0xff]
        %v3811 = vld [vmem:[#allocation10 + $0xf8] sm:$0xff]
        %v3812 = vld [vmem:[%s7] sm:$0xf]
        %v3814 = vlaneseq
        %v3815 = vshrl.u32 %v3814, 7
        %v3816 = vsub.s32 0, %v3815
        %v3817 = vrot.slane %v3812, %v3816
        %v3818 = vlaneseq
        %v3819 = vshrl.u32 %v3818, 7
        %v3820 = vsub.s32 1, %v3819
        %v3821 = vrot.slane %v3812, %v3820
        %v3822 = vlaneseq
        %v3823 = vshrl.u32 %v3822, 7
        %v3824 = vsub.s32 2, %v3823
        %v3825 = vrot.slane %v3812, %v3824
        %v3826 = vlaneseq
        %v3827 = vshrl.u32 %v3826, 7
        %v3828 = vsub.s32 3, %v3827
        %v3829 = vrot.slane %v3812, %v3828
        %v3866 = vunpack.c.l.b16 %v3780
        %v3867 = vunpack.c.h.b16 %v3780
        %v3868 = vunpack.c.l.b16 %v3781
        %v3869 = vunpack.c.h.b16 %v3781
        %v3870 = vunpack.c.l.b16 %v3782
        %v3871 = vunpack.c.h.b16 %v3782
        %v3872 = vunpack.c.l.b16 %v3783
        %v3873 = vunpack.c.h.b16 %v3783
        %v3874 = vunpack.c.l.b16 %v3784
        %v3875 = vunpack.c.h.b16 %v3784
        %v3876 = vunpack.c.l.b16 %v3785
        %v3877 = vunpack.c.h.b16 %v3785
        %v3878 = vunpack.c.l.b16 %v3786
        %v3879 = vunpack.c.h.b16 %v3786
        %v3880 = vunpack.c.l.b16 %v3787
        %v3881 = vunpack.c.h.b16 %v3787
        %v3882 = vunpack.c.l.b16 %v3788
        %v3883 = vunpack.c.h.b16 %v3788
        %v3884 = vunpack.c.l.b16 %v3789
        %v3885 = vunpack.c.h.b16 %v3789
        %v3886 = vunpack.c.l.b16 %v3790
        %v3887 = vunpack.c.h.b16 %v3790
        %v3888 = vunpack.c.l.b16 %v3791
        %v3889 = vunpack.c.h.b16 %v3791
        %v3890 = vunpack.c.l.b16 %v3792
        %v3891 = vunpack.c.h.b16 %v3792
        %v3892 = vunpack.c.l.b16 %v3793
        %v3893 = vunpack.c.h.b16 %v3793
        %v3894 = vunpack.c.l.b16 %v3794
        %v3895 = vunpack.c.h.b16 %v3794
        %v3896 = vunpack.c.l.b16 %v3795
        %v3897 = vunpack.c.h.b16 %v3795
        %v3898 = vunpack.c.l.b16 %v3796
        %v3899 = vunpack.c.h.b16 %v3796
        %v3900 = vunpack.c.l.b16 %v3797
        %v3901 = vunpack.c.h.b16 %v3797
        %v3902 = vunpack.c.l.b16 %v3798
        %v3903 = vunpack.c.h.b16 %v3798
        %v3904 = vunpack.c.l.b16 %v3799
        %v3905 = vunpack.c.h.b16 %v3799
        %v3906 = vunpack.c.l.b16 %v3800
        %v3907 = vunpack.c.h.b16 %v3800
        %v3908 = vunpack.c.l.b16 %v3801
        %v3909 = vunpack.c.h.b16 %v3801
        %v3910 = vunpack.c.l.b16 %v3802
        %v3911 = vunpack.c.h.b16 %v3802
        %v3912 = vunpack.c.l.b16 %v3803
        %v3913 = vunpack.c.h.b16 %v3803
        %v3914 = vunpack.c.l.b16 %v3804
        %v3915 = vunpack.c.h.b16 %v3804
        %v3916 = vunpack.c.l.b16 %v3805
        %v3917 = vunpack.c.h.b16 %v3805
        %v3918 = vunpack.c.l.b16 %v3806
        %v3919 = vunpack.c.h.b16 %v3806
        %v3920 = vunpack.c.l.b16 %v3807
        %v3921 = vunpack.c.h.b16 %v3807
        %v3922 = vunpack.c.l.b16 %v3808
        %v3923 = vunpack.c.h.b16 %v3808
        %v3924 = vunpack.c.l.b16 %v3809
        %v3925 = vunpack.c.h.b16 %v3809
        %v3926 = vunpack.c.l.b16 %v3810
        %v3927 = vunpack.c.h.b16 %v3810
        %v3928 = vunpack.c.l.b16 %v3811
        %v3929 = vunpack.c.h.b16 %v3811
        %v3930 = vpack.c.b16 %v3870, %v3866
        %v3931 = vpack.c.b16 %v3871, %v3867
        %v3932 = vpack.c.b16 %v3872, %v3868
        %v3933 = vpack.c.b16 %v3873, %v3869
        %v3934 = vpack.c.b16 %v3878, %v3874
        %v3935 = vpack.c.b16 %v3879, %v3875
        %v3936 = vpack.c.b16 %v3880, %v3876
        %v3937 = vpack.c.b16 %v3881, %v3877
        %v3938 = vpack.c.b16 %v3886, %v3882
        %v3939 = vpack.c.b16 %v3887, %v3883
        %v3940 = vpack.c.b16 %v3888, %v3884
        %v3941 = vpack.c.b16 %v3889, %v3885
        %v3942 = vpack.c.b16 %v3894, %v3890
        %v3943 = vpack.c.b16 %v3895, %v3891
        %v3944 = vpack.c.b16 %v3896, %v3892
        %v3945 = vpack.c.b16 %v3897, %v3893
        %v3946 = vpack.c.b16 %v3902, %v3898
        %v3947 = vpack.c.b16 %v3903, %v3899
        %v3948 = vpack.c.b16 %v3904, %v3900
        %v3949 = vpack.c.b16 %v3905, %v3901
        %v3950 = vpack.c.b16 %v3910, %v3906
        %v3951 = vpack.c.b16 %v3911, %v3907
        %v3952 = vpack.c.b16 %v3912, %v3908
        %v3953 = vpack.c.b16 %v3913, %v3909
        %v3954 = vpack.c.b16 %v3918, %v3914
        %v3955 = vpack.c.b16 %v3919, %v3915
        %v3956 = vpack.c.b16 %v3920, %v3916
        %v3957 = vpack.c.b16 %v3921, %v3917
        %v3958 = vpack.c.b16 %v3926, %v3922
        %v3959 = vpack.c.b16 %v3927, %v3923
        %v3960 = vpack.c.b16 %v3928, %v3924
        %v3961 = vpack.c.b16 %v3929, %v3925
        %3994 = vmatprep.subr.bf16.mxu0 %v3931
        %3995 = vmatpush1.bf16.msra.mxu0 %v3930
        %3996 = vmatprep.subr.bf16.mxu0 %v3935
        %3997 = vmatpush1.bf16.msra.mxu0 %v3934
        %3998 = vmatprep.subr.bf16.mxu0 %v3939
        %3999 = vmatpush1.bf16.msra.mxu0 %v3938
        %4000 = vmatprep.subr.bf16.mxu0 %v3943
        %4001 = vmatpush1.bf16.msra.mxu0 %v3942
        %4002 = vmatprep.subr.bf16.mxu0 %v3947
        %4003 = vmatpush1.bf16.msra.mxu0 %v3946
        %4004 = vmatprep.subr.bf16.mxu0 %v3951
        %4005 = vmatpush1.bf16.msra.mxu0 %v3950
        %4006 = vmatprep.subr.bf16.mxu0 %v3955
        %4007 = vmatpush1.bf16.msra.mxu0 %v3954
        %4008 = vmatprep.subr.bf16.mxu0 %v3959
        %4009 = vmatpush1.bf16.msra.mxu0 %v3958
        %4010 = vmatprep.subr.bf16.mxu0 0
        %4011 = vmatpush1.bf16.msra.mxu0 0
        %4012 = vmatprep.subr.bf16.mxu0 0
        %4013 = vmatpush1.bf16.msra.mxu0 0
        %4014 = vmatprep.subr.bf16.mxu0 0
        %4015 = vmatpush1.bf16.msra.mxu0 0
        %4016 = vmatprep.subr.bf16.mxu0 0
        %4017 = vmatpush1.bf16.msra.mxu0 0
        %4018 = vmatprep.subr.bf16.mxu0 0
        %4019 = vmatpush1.bf16.msra.mxu0 0
        %4020 = vmatprep.subr.bf16.mxu0 0
        %4021 = vmatpush1.bf16.msra.mxu0 0
        %4022 = vmatprep.subr.bf16.mxu0 0
        %4023 = vmatpush1.bf16.msra.mxu0 0
        %4024 = vmatprep.subr.bf16.mxu0 0
        %4025 = vmatpush1.bf16.msra.mxu0 0
        %4026 = vmatprep.mubr.bf16.mxu0 0
        %4027 = vmatmul.mubr.bf16.gmra.mrb[0].mxu0 %v3772
        %v4028 = vpop.f32.mrb[0].mxu0
        %v4029 = vadd.f32 %v3817, %v4028
        %v4030 = vpop.f32.mrb[0].mxu0
        %v4031 = vadd.f32 %v3821, %v4030
        %v4032 = vpop.f32.mrb[0].mxu0
        %v4033 = vadd.f32 %v3817, %v4032
        %v4034 = vpop.f32.mrb[0].mxu0
        %v4035 = vadd.f32 %v3821, %v4034
        %4036 = vmatprep.mubr.bf16.mxu0 0
        %4037 = vmatmul.mubr.bf16.gmra.mrb[0].mxu0 %v3773
        %v4038 = vpop.f32.mrb[0].mxu0
        %v4039 = vadd.f32 %v3817, %v4038
        %v4040 = vpop.f32.mrb[0].mxu0
        %v4041 = vadd.f32 %v3821, %v4040
        %v4042 = vpop.f32.mrb[0].mxu0
        %v4043 = vadd.f32 %v3817, %v4042
        %v4044 = vpop.f32.mrb[0].mxu0
        %v4045 = vadd.f32 %v3821, %v4044
        %4046 = vmatprep.mubr.bf16.mxu0 0
        %4047 = vmatmul.mubr.bf16.gmra.mrb[0].mxu0 %v3774
        %v4048 = vpop.f32.mrb[0].mxu0
        %v4049 = vadd.f32 %v3817, %v4048
        %v4050 = vpop.f32.mrb[0].mxu0
        %v4051 = vadd.f32 %v3821, %v4050
        %v4052 = vpop.f32.mrb[0].mxu0
        %v4053 = vadd.f32 %v3817, %v4052
        %v4054 = vpop.f32.mrb[0].mxu0
        %v4055 = vadd.f32 %v3821, %v4054
        %4056 = vmatprep.mubr.bf16.mxu0 0
        %4057 = vmatmul.mubr.bf16.gmra.mrb[0].mxu0 %v3775
        %v4058 = vpop.f32.mrb[0].mxu0
        %v4059 = vadd.f32 %v3817, %v4058
        %v4060 = vpop.f32.mrb[0].mxu0
        %v4061 = vadd.f32 %v3821, %v4060
        %v4062 = vpop.f32.mrb[0].mxu0
        %v4063 = vadd.f32 %v3817, %v4062
        %v4064 = vpop.f32.mrb[0].mxu0
        %v4065 = vadd.f32 %v3821, %v4064
        %4066 = vmatprep.mubr.bf16.mxu0 0
        %4067 = vmatmul.mubr.bf16.gmra.mrb[0].mxu0 %v3776
        %v4068 = vpop.f32.mrb[0].mxu0
        %v4069 = vadd.f32 %v3817, %v4068
        %v4070 = vpop.f32.mrb[0].mxu0
        %v4071 = vadd.f32 %v3821, %v4070
        %v4072 = vpop.f32.mrb[0].mxu0
        %v4073 = vadd.f32 %v3817, %v4072
        %v4074 = vpop.f32.mrb[0].mxu0
        %v4075 = vadd.f32 %v3821, %v4074
        %4076 = vmatprep.mubr.bf16.mxu0 0
        %4077 = vmatmul.mubr.bf16.gmra.mrb[0].mxu0 %v3777
        %v4078 = vpop.f32.mrb[0].mxu0
        %v4079 = vadd.f32 %v3817, %v4078
        %v4080 = vpop.f32.mrb[0].mxu0
        %v4081 = vadd.f32 %v3821, %v4080
        %v4082 = vpop.f32.mrb[0].mxu0
        %v4083 = vadd.f32 %v3817, %v4082
        %v4084 = vpop.f32.mrb[0].mxu0
        %v4085 = vadd.f32 %v3821, %v4084
        %4086 = vmatprep.mubr.bf16.mxu0 0
        %4087 = vmatmul.mubr.bf16.gmra.mrb[0].mxu0 %v3778
        %v4088 = vpop.f32.mrb[0].mxu0
        %v4089 = vadd.f32 %v3817, %v4088
        %v4090 = vpop.f32.mrb[0].mxu0
        %v4091 = vadd.f32 %v3821, %v4090
        %v4092 = vpop.f32.mrb[0].mxu0
        %v4093 = vadd.f32 %v3817, %v4092
        %v4094 = vpop.f32.mrb[0].mxu0
        %v4095 = vadd.f32 %v3821, %v4094
        %4096 = vmatprep.mubr.bf16.mxu0 0
        %4097 = vmatmul.mubr.bf16.gmra.mrb[0].mxu0 %v3779
        %v4098 = vpop.f32.mrb[0].mxu0
        %v4099 = vadd.f32 %v3817, %v4098
        %v4100 = vpop.f32.mrb[0].mxu0
        %v4101 = vadd.f32 %v3821, %v4100
        %v4102 = vpop.f32.mrb[0].mxu0
        %v4103 = vadd.f32 %v3817, %v4102
        %v4104 = vpop.f32.mrb[0].mxu0
        %v4105 = vadd.f32 %v3821, %v4104
        %4106 = vdwg.mxu0
        %4107 = vmatprep.subr.bf16.mxu0 %v3933
        %4108 = vmatpush1.bf16.msra.mxu0 %v3932
        %4109 = vmatprep.subr.bf16.mxu0 %v3937
        %4110 = vmatpush1.bf16.msra.mxu0 %v3936
        %4111 = vmatprep.subr.bf16.mxu0 %v3941
        %4112 = vmatpush1.bf16.msra.mxu0 %v3940
        %4113 = vmatprep.subr.bf16.mxu0 %v3945
        %4114 = vmatpush1.bf16.msra.mxu0 %v3944
        %4115 = vmatprep.subr.bf16.mxu0 %v3949
        %4116 = vmatpush1.bf16.msra.mxu0 %v3948
        %4117 = vmatprep.subr.bf16.mxu0 %v3953
        %4118 = vmatpush1.bf16.msra.mxu0 %v3952
        %4119 = vmatprep.subr.bf16.mxu0 %v3957
        %4120 = vmatpush1.bf16.msra.mxu0 %v3956
        %4121 = vmatprep.subr.bf16.mxu0 %v3961
        %4122 = vmatpush1.bf16.msra.mxu0 %v3960
        %4123 = vmatprep.subr.bf16.mxu0 0
        %4124 = vmatpush1.bf16.msra.mxu0 0
        %4125 = vmatprep.subr.bf16.mxu0 0
        %4126 = vmatpush1.bf16.msra.mxu0 0
        %4127 = vmatprep.subr.bf16.mxu0 0
        %4128 = vmatpush1.bf16.msra.mxu0 0
        %4129 = vmatprep.subr.bf16.mxu0 0
        %4130 = vmatpush1.bf16.msra.mxu0 0
        %4131 = vmatprep.subr.bf16.mxu0 0
        %4132 = vmatpush1.bf16.msra.mxu0 0
        %4133 = vmatprep.subr.bf16.mxu0 0
        %4134 = vmatpush1.bf16.msra.mxu0 0
        %4135 = vmatprep.subr.bf16.mxu0 0
        %4136 = vmatpush1.bf16.msra.mxu0 0
        %4137 = vmatprep.subr.bf16.mxu0 0
        %4138 = vmatpush1.bf16.msra.mxu0 0
        %4139 = vmatprep.mubr.bf16.mxu0 0
        %4140 = vmatmul.mubr.bf16.gmra.mrb[0].mxu0 %v3772
        %v4141 = vpop.f32.mrb[0].mxu0
        %v4142 = vadd.f32 %v3825, %v4141
        %v4143 = vpop.f32.mrb[0].mxu0
        %v4144 = vadd.f32 %v3829, %v4143
        %v4145 = vpop.f32.mrb[0].mxu0
        %v4146 = vadd.f32 %v3825, %v4145
        %v4147 = vpop.f32.mrb[0].mxu0
        %v4148 = vadd.f32 %v3829, %v4147
        %4149 = vmatprep.mubr.bf16.mxu0 0
        %4150 = vmatmul.mubr.bf16.gmra.mrb[0].mxu0 %v3773
        %v4151 = vpop.f32.mrb[0].mxu0
        %v4152 = vadd.f32 %v3825, %v4151
        %v4153 = vpop.f32.mrb[0].mxu0
        %v4154 = vadd.f32 %v3829, %v4153
        %v4155 = vpop.f32.mrb[0].mxu0
        %v4156 = vadd.f32 %v3825, %v4155
        %v4157 = vpop.f32.mrb[0].mxu0
        %v4158 = vadd.f32 %v3829, %v4157
        %4159 = vmatprep.mubr.bf16.mxu0 0
        %4160 = vmatmul.mubr.bf16.gmra.mrb[0].mxu0 %v3774
        %v4161 = vpop.f32.mrb[0].mxu0
        %v4162 = vadd.f32 %v3825, %v4161
        %v4163 = vpop.f32.mrb[0].mxu0
        %v4164 = vadd.f32 %v3829, %v4163
        %v4165 = vpop.f32.mrb[0].mxu0
        %v4166 = vadd.f32 %v3825, %v4165
        %v4167 = vpop.f32.mrb[0].mxu0
        %v4168 = vadd.f32 %v3829, %v4167
        %4169 = vmatprep.mubr.bf16.mxu0 0
        %4170 = vmatmul.mubr.bf16.gmra.mrb[0].mxu0 %v3775
        %v4171 = vpop.f32.mrb[0].mxu0
        %v4172 = vadd.f32 %v3825, %v4171
        %v4173 = vpop.f32.mrb[0].mxu0
        %v4174 = vadd.f32 %v3829, %v4173
        %v4175 = vpop.f32.mrb[0].mxu0
        %v4176 = vadd.f32 %v3825, %v4175
        %v4177 = vpop.f32.mrb[0].mxu0
        %v4178 = vadd.f32 %v3829, %v4177
        %4179 = vmatprep.mubr.bf16.mxu0 0
        %4180 = vmatmul.mubr.bf16.gmra.mrb[0].mxu0 %v3776
        %v4181 = vpop.f32.mrb[0].mxu0
        %v4182 = vadd.f32 %v3825, %v4181
        %v4183 = vpop.f32.mrb[0].mxu0
        %v4184 = vadd.f32 %v3829, %v4183
        %v4185 = vpop.f32.mrb[0].mxu0
        %v4186 = vadd.f32 %v3825, %v4185
        %v4187 = vpop.f32.mrb[0].mxu0
        %v4188 = vadd.f32 %v3829, %v4187
        %4189 = vmatprep.mubr.bf16.mxu0 0
        %4190 = vmatmul.mubr.bf16.gmra.mrb[0].mxu0 %v3777
        %v4191 = vpop.f32.mrb[0].mxu0
        %v4192 = vadd.f32 %v3825, %v4191
        %v4193 = vpop.f32.mrb[0].mxu0
        %v4194 = vadd.f32 %v3829, %v4193
        %v4195 = vpop.f32.mrb[0].mxu0
        %v4196 = vadd.f32 %v3825, %v4195
        %v4197 = vpop.f32.mrb[0].mxu0
        %v4198 = vadd.f32 %v3829, %v4197
        %4199 = vmatprep.mubr.bf16.mxu0 0
        %4200 = vmatmul.mubr.bf16.gmra.mrb[0].mxu0 %v3778
        %v4201 = vpop.f32.mrb[0].mxu0
        %v4202 = vadd.f32 %v3825, %v4201
        %v4203 = vpop.f32.mrb[0].mxu0
        %v4204 = vadd.f32 %v3829, %v4203
        %v4205 = vpop.f32.mrb[0].mxu0
        %v4206 = vadd.f32 %v3825, %v4205
        %v4207 = vpop.f32.mrb[0].mxu0
        %v4208 = vadd.f32 %v3829, %v4207
        %4209 = vmatprep.mubr.bf16.mxu0 0
        %4210 = vmatmul.mubr.bf16.gmra.mrb[0].mxu0 %v3779
        %v4211 = vpop.f32.mrb[0].mxu0
        %v4212 = vadd.f32 %v3825, %v4211
        %v4213 = vpop.f32.mrb[0].mxu0
        %v4214 = vadd.f32 %v3829, %v4213
        %v4215 = vpop.f32.mrb[0].mxu0
        %v4216 = vadd.f32 %v3825, %v4215
        %v4217 = vpop.f32.mrb[0].mxu0
        %v4218 = vadd.f32 %v3829, %v4217
        %4219 = vdwg.mxu0
        %v4220 = vmax.f32 %v4029, 0.0
        %v4221 = vmax.f32 %v4031, 0.0
        %v4222 = vmax.f32 %v4142, 0.0
        %v4223 = vmax.f32 %v4144, 0.0
        %v4224 = vmax.f32 %v4033, 0.0
        %v4225 = vmax.f32 %v4035, 0.0
        %v4226 = vmax.f32 %v4146, 0.0
        %v4227 = vmax.f32 %v4148, 0.0
        %v4228 = vmax.f32 %v4039, 0.0
        %v4229 = vmax.f32 %v4041, 0.0
        %v4230 = vmax.f32 %v4152, 0.0
        %v4231 = vmax.f32 %v4154, 0.0
        %v4232 = vmax.f32 %v4043, 0.0
        %v4233 = vmax.f32 %v4045, 0.0
        %v4234 = vmax.f32 %v4156, 0.0
        %v4235 = vmax.f32 %v4158, 0.0
        %v4236 = vmax.f32 %v4049, 0.0
        %v4237 = vmax.f32 %v4051, 0.0
        %v4238 = vmax.f32 %v4162, 0.0
        %v4239 = vmax.f32 %v4164, 0.0
        %v4240 = vmax.f32 %v4053, 0.0
        %v4241 = vmax.f32 %v4055, 0.0
        %v4242 = vmax.f32 %v4166, 0.0
        %v4243 = vmax.f32 %v4168, 0.0
        %v4244 = vmax.f32 %v4059, 0.0
        %v4245 = vmax.f32 %v4061, 0.0
        %v4246 = vmax.f32 %v4172, 0.0
        %v4247 = vmax.f32 %v4174, 0.0
        %v4248 = vmax.f32 %v4063, 0.0
        %v4249 = vmax.f32 %v4065, 0.0
        %v4250 = vmax.f32 %v4176, 0.0
        %v4251 = vmax.f32 %v4178, 0.0
        %v4252 = vmax.f32 %v4069, 0.0
        %v4253 = vmax.f32 %v4071, 0.0
        %v4254 = vmax.f32 %v4182, 0.0
        %v4255 = vmax.f32 %v4184, 0.0
        %v4256 = vmax.f32 %v4073, 0.0
        %v4257 = vmax.f32 %v4075, 0.0
        %v4258 = vmax.f32 %v4186, 0.0
        %v4259 = vmax.f32 %v4188, 0.0
        %v4260 = vmax.f32 %v4079, 0.0
        %v4261 = vmax.f32 %v4081, 0.0
        %v4262 = vmax.f32 %v4192, 0.0
        %v4263 = vmax.f32 %v4194, 0.0
        %v4264 = vmax.f32 %v4083, 0.0
        %v4265 = vmax.f32 %v4085, 0.0
        %v4266 = vmax.f32 %v4196, 0.0
        %v4267 = vmax.f32 %v4198, 0.0
        %v4268 = vmax.f32 %v4089, 0.0
        %v4269 = vmax.f32 %v4091, 0.0
        %v4270 = vmax.f32 %v4202, 0.0
        %v4271 = vmax.f32 %v4204, 0.0
        %v4272 = vmax.f32 %v4093, 0.0
        %v4273 = vmax.f32 %v4095, 0.0
        %v4274 = vmax.f32 %v4206, 0.0
        %v4275 = vmax.f32 %v4208, 0.0
        %v4276 = vmax.f32 %v4099, 0.0
        %v4277 = vmax.f32 %v4101, 0.0
        %v4278 = vmax.f32 %v4212, 0.0
        %v4279 = vmax.f32 %v4214, 0.0
        %v4280 = vmax.f32 %v4103, 0.0
        %v4281 = vmax.f32 %v4105, 0.0
        %v4282 = vmax.f32 %v4216, 0.0
        %v4283 = vmax.f32 %v4218, 0.0
        %v4284 = vpack.c.bf16 %v4224, %v4220
        %v4285 = vpack.c.bf16 %v4225, %v4221
        %v4286 = vpack.c.bf16 %v4226, %v4222
        %v4287 = vpack.c.bf16 %v4227, %v4223
        %v4288 = vpack.c.bf16 %v4232, %v4228
        %v4289 = vpack.c.bf16 %v4233, %v4229
        %v4290 = vpack.c.bf16 %v4234, %v4230
        %v4291 = vpack.c.bf16 %v4235, %v4231
        %v4292 = vpack.c.bf16 %v4240, %v4236
        %v4293 = vpack.c.bf16 %v4241, %v4237
        %v4294 = vpack.c.bf16 %v4242, %v4238
        %v4295 = vpack.c.bf16 %v4243, %v4239
        %v4296 = vpack.c.bf16 %v4248, %v4244
        %v4297 = vpack.c.bf16 %v4249, %v4245
        %v4298 = vpack.c.bf16 %v4250, %v4246
        %v4299 = vpack.c.bf16 %v4251, %v4247
        %v4300 = vpack.c.bf16 %v4256, %v4252
        %v4301 = vpack.c.bf16 %v4257, %v4253
        %v4302 = vpack.c.bf16 %v4258, %v4254
        %v4303 = vpack.c.bf16 %v4259, %v4255
        %v4304 = vpack.c.bf16 %v4264, %v4260
        %v4305 = vpack.c.bf16 %v4265, %v4261
        %v4306 = vpack.c.bf16 %v4266, %v4262
        %v4307 = vpack.c.bf16 %v4267, %v4263
        %v4308 = vpack.c.bf16 %v4272, %v4268
        %v4309 = vpack.c.bf16 %v4273, %v4269
        %v4310 = vpack.c.bf16 %v4274, %v4270
        %v4311 = vpack.c.bf16 %v4275, %v4271
        %v4312 = vpack.c.bf16 %v4280, %v4276
        %v4313 = vpack.c.bf16 %v4281, %v4277
        %v4314 = vpack.c.bf16 %v4282, %v4278
        %v4315 = vpack.c.bf16 %v4283, %v4279
        %v4316 = vld [vmem:[#allocation11] sm:$0xff]
        %v4317 = vld [vmem:[#allocation11 + $0x8] sm:$0xff]
        %v4318 = vld [vmem:[#allocation11 + $0x10] sm:$0xff]
        %v4319 = vld [vmem:[#allocation11 + $0x18] sm:$0xf]
        %v4320 = vld [vmem:[#allocation11 + $0x1c] sm:$0xff]
        %v4321 = vld [vmem:[#allocation11 + $0x24] sm:$0xff]
        %v4322 = vld [vmem:[#allocation11 + $0x2c] sm:$0xff]
        %v4323 = vld [vmem:[#allocation11 + $0x34] sm:$0xf]
        %v4324 = vld [vmem:[#allocation11 + $0x38] sm:$0xff]
        %v4325 = vld [vmem:[#allocation11 + $0x40] sm:$0xff]
        %v4326 = vld [vmem:[#allocation11 + $0x48] sm:$0xff]
        %v4327 = vld [vmem:[#allocation11 + $0x50] sm:$0xf]
        %v4328 = vld [vmem:[#allocation11 + $0x54] sm:$0xff]
        %v4329 = vld [vmem:[#allocation11 + $0x5c] sm:$0xff]
        %v4330 = vld [vmem:[#allocation11 + $0x64] sm:$0xff]
        %v4331 = vld [vmem:[#allocation11 + $0x6c] sm:$0xf]
        %v4332 = vld [vmem:[#allocation11 + $0x70] sm:$0xff]
        %v4333 = vld [vmem:[#allocation11 + $0x78] sm:$0xff]
        %v4334 = vld [vmem:[#allocation11 + $0x80] sm:$0xff]
        %v4335 = vld [vmem:[#allocation11 + $0x88] sm:$0xf]
        %v4336 = vld [vmem:[#allocation11 + $0x8c] sm:$0xff]
        %v4337 = vld [vmem:[#allocation11 + $0x94] sm:$0xff]
        %v4338 = vld [vmem:[#allocation11 + $0x9c] sm:$0xff]
        %v4339 = vld [vmem:[#allocation11 + $0xa4] sm:$0xf]
        %v4340 = vld [vmem:[#allocation11 + $0xa8] sm:$0xff]
        %v4341 = vld [vmem:[#allocation11 + $0xb0] sm:$0xff]
        %v4342 = vld [vmem:[#allocation11 + $0xb8] sm:$0xff]
        %v4343 = vld [vmem:[#allocation11 + $0xc0] sm:$0xf]
        %v4344 = vld [vmem:[#allocation11 + $0xc4] sm:$0xff]
        %v4345 = vld [vmem:[#allocation11 + $0xcc] sm:$0xff]
        %v4346 = vld [vmem:[#allocation11 + $0xd4] sm:$0xff]
        %v4347 = vld [vmem:[#allocation11 + $0xdc] sm:$0xf]
        %v4348 = vld [vmem:[#allocation11 + $0xe0] sm:$0xff]
        %v4349 = vld [vmem:[#allocation11 + $0xe8] sm:$0xff]
        %v4350 = vld [vmem:[#allocation11 + $0xf0] sm:$0xff]
        %v4351 = vld [vmem:[#allocation11 + $0xf8] sm:$0xf]
        %v4352 = vld [vmem:[#allocation11 + $0xfc] sm:$0xff]
        %v4353 = vld [vmem:[#allocation11 + $0x104] sm:$0xff]
        %v4354 = vld [vmem:[#allocation11 + $0x10c] sm:$0xff]
        %v4355 = vld [vmem:[#allocation11 + $0x114] sm:$0xf]
        %v4356 = vld [vmem:[#allocation11 + $0x118] sm:$0xff]
        %v4357 = vld [vmem:[#allocation11 + $0x120] sm:$0xff]
        %v4358 = vld [vmem:[#allocation11 + $0x128] sm:$0xff]
        %v4359 = vld [vmem:[#allocation11 + $0x130] sm:$0xf]
        %v4360 = vld [vmem:[#allocation11 + $0x134] sm:$0xff]
        %v4361 = vld [vmem:[#allocation11 + $0x13c] sm:$0xff]
        %v4362 = vld [vmem:[#allocation11 + $0x144] sm:$0xff]
        %v4363 = vld [vmem:[#allocation11 + $0x14c] sm:$0xf]
        %v4364 = vld [vmem:[#allocation11 + $0x150] sm:$0xff]
        %v4365 = vld [vmem:[#allocation11 + $0x158] sm:$0xff]
        %v4366 = vld [vmem:[#allocation11 + $0x160] sm:$0xff]
        %v4367 = vld [vmem:[#allocation11 + $0x168] sm:$0xf]
        %v4368 = vld [vmem:[#allocation11 + $0x16c] sm:$0xff]
        %v4369 = vld [vmem:[#allocation11 + $0x174] sm:$0xff]
        %v4370 = vld [vmem:[#allocation11 + $0x17c] sm:$0xff]
        %v4371 = vld [vmem:[#allocation11 + $0x184] sm:$0xf]
        %v4372 = vld [vmem:[#allocation11 + $0x188] sm:$0xff]
        %v4373 = vld [vmem:[#allocation11 + $0x190] sm:$0xff]
        %v4374 = vld [vmem:[#allocation11 + $0x198] sm:$0xff]
        %v4375 = vld [vmem:[#allocation11 + $0x1a0] sm:$0xf]
        %v4376 = vld [vmem:[#allocation11 + $0x1a4] sm:$0xff]
        %v4377 = vld [vmem:[#allocation11 + $0x1ac] sm:$0xff]
        %v4378 = vld [vmem:[#allocation11 + $0x1b4] sm:$0xff]
        %v4379 = vld [vmem:[#allocation11 + $0x1bc] sm:$0xf]
        %v4380 = vld [vmem:[#allocation11 + $0x1c0] sm:$0xff]
        %v4381 = vld [vmem:[#allocation11 + $0x1c8] sm:$0xff]
        %v4382 = vld [vmem:[#allocation11 + $0x1d0] sm:$0xff]
        %v4383 = vld [vmem:[#allocation11 + $0x1d8] sm:$0xf]
        %v4384 = vld [vmem:[#allocation11 + $0x1dc] sm:$0xff]
        %v4385 = vld [vmem:[#allocation11 + $0x1e4] sm:$0xff]
        %v4386 = vld [vmem:[#allocation11 + $0x1ec] sm:$0xff]
        %v4387 = vld [vmem:[#allocation11 + $0x1f4] sm:$0xf]
        %v4388 = vld [vmem:[#allocation11 + $0x1f8] sm:$0xff]
        %v4389 = vld [vmem:[#allocation11 + $0x200] sm:$0xff]
        %v4390 = vld [vmem:[#allocation11 + $0x208] sm:$0xff]
        %v4391 = vld [vmem:[#allocation11 + $0x210] sm:$0xf]
        %v4392 = vld [vmem:[#allocation11 + $0x214] sm:$0xff]
        %v4393 = vld [vmem:[#allocation11 + $0x21c] sm:$0xff]
        %v4394 = vld [vmem:[#allocation11 + $0x224] sm:$0xff]
        %v4395 = vld [vmem:[#allocation11 + $0x22c] sm:$0xf]
        %v4396 = vld [vmem:[#allocation11 + $0x230] sm:$0xff]
        %v4397 = vld [vmem:[#allocation11 + $0x238] sm:$0xff]
        %v4398 = vld [vmem:[#allocation11 + $0x240] sm:$0xff]
        %v4399 = vld [vmem:[#allocation11 + $0x248] sm:$0xf]
        %v4400 = vld [vmem:[#allocation11 + $0x24c] sm:$0xff]
        %v4401 = vld [vmem:[#allocation11 + $0x254] sm:$0xff]
        %v4402 = vld [vmem:[#allocation11 + $0x25c] sm:$0xff]
        %v4403 = vld [vmem:[#allocation11 + $0x264] sm:$0xf]
        %v4404 = vld [vmem:[#allocation11 + $0x268] sm:$0xff]
        %v4405 = vld [vmem:[#allocation11 + $0x270] sm:$0xff]
        %v4406 = vld [vmem:[#allocation11 + $0x278] sm:$0xff]
        %v4407 = vld [vmem:[#allocation11 + $0x280] sm:$0xf]
        %v4408 = vld [vmem:[#allocation11 + $0x284] sm:$0xff]
        %v4409 = vld [vmem:[#allocation11 + $0x28c] sm:$0xff]
        %v4410 = vld [vmem:[#allocation11 + $0x294] sm:$0xff]
        %v4411 = vld [vmem:[#allocation11 + $0x29c] sm:$0xf]
        %v4412 = vld [vmem:[#allocation11 + $0x2a0] sm:$0xff]
        %v4413 = vld [vmem:[#allocation11 + $0x2a8] sm:$0xff]
        %v4414 = vld [vmem:[#allocation11 + $0x2b0] sm:$0xff]
        %v4415 = vld [vmem:[#allocation11 + $0x2b8] sm:$0xf]
        %v4416 = vld [vmem:[#allocation11 + $0x2bc] sm:$0xff]
        %v4417 = vld [vmem:[#allocation11 + $0x2c4] sm:$0xff]
        %v4418 = vld [vmem:[#allocation11 + $0x2cc] sm:$0xff]
        %v4419 = vld [vmem:[#allocation11 + $0x2d4] sm:$0xf]
        %v4420 = vld [vmem:[#allocation11 + $0x2d8] sm:$0xff]
        %v4421 = vld [vmem:[#allocation11 + $0x2e0] sm:$0xff]
        %v4422 = vld [vmem:[#allocation11 + $0x2e8] sm:$0xff]
        %v4423 = vld [vmem:[#allocation11 + $0x2f0] sm:$0xf]
        %v4424 = vld [vmem:[#allocation11 + $0x2f4] sm:$0xff]
        %v4425 = vld [vmem:[#allocation11 + $0x2fc] sm:$0xff]
        %v4426 = vld [vmem:[#allocation11 + $0x304] sm:$0xff]
        %v4427 = vld [vmem:[#allocation11 + $0x30c] sm:$0xf]
        %v4428 = vld [vmem:[#allocation11 + $0x310] sm:$0xff]
        %v4429 = vld [vmem:[#allocation11 + $0x318] sm:$0xff]
        %v4430 = vld [vmem:[#allocation11 + $0x320] sm:$0xff]
        %v4431 = vld [vmem:[#allocation11 + $0x328] sm:$0xf]
        %v4432 = vld [vmem:[#allocation11 + $0x32c] sm:$0xff]
        %v4433 = vld [vmem:[#allocation11 + $0x334] sm:$0xff]
        %v4434 = vld [vmem:[#allocation11 + $0x33c] sm:$0xff]
        %v4435 = vld [vmem:[#allocation11 + $0x344] sm:$0xf]
        %v4436 = vld [vmem:[#allocation11 + $0x348] sm:$0xff]
        %v4437 = vld [vmem:[#allocation11 + $0x350] sm:$0xff]
        %v4438 = vld [vmem:[#allocation11 + $0x358] sm:$0xff]
        %v4439 = vld [vmem:[#allocation11 + $0x360] sm:$0xf]
        %v4440 = vld [vmem:[#allocation11 + $0x364] sm:$0xff]
        %v4441 = vld [vmem:[#allocation11 + $0x36c] sm:$0xff]
        %v4442 = vld [vmem:[#allocation11 + $0x374] sm:$0xff]
        %v4443 = vld [vmem:[#allocation11 + $0x37c] sm:$0xf]
        %v4444 = vld [vmem:[#allocation11 + $0x380] sm:$0xff]
        %v4445 = vld [vmem:[#allocation11 + $0x388] sm:$0xff]
        %v4446 = vld [vmem:[#allocation11 + $0x390] sm:$0xff]
        %v4447 = vld [vmem:[#allocation11 + $0x398] sm:$0xf]
        %v4448 = vld [vmem:[#allocation11 + $0x39c] sm:$0xff]
        %v4449 = vld [vmem:[#allocation11 + $0x3a4] sm:$0xff]
        %v4450 = vld [vmem:[#allocation11 + $0x3ac] sm:$0xff]
        %v4451 = vld [vmem:[#allocation11 + $0x3b4] sm:$0xf]
        %v4452 = vld [vmem:[#allocation11 + $0x3b8] sm:$0xff]
        %v4453 = vld [vmem:[#allocation11 + $0x3c0] sm:$0xff]
        %v4454 = vld [vmem:[#allocation11 + $0x3c8] sm:$0xff]
        %v4455 = vld [vmem:[#allocation11 + $0x3d0] sm:$0xf]
        %v4456 = vld [vmem:[#allocation11 + $0x3d4] sm:$0xff]
        %v4457 = vld [vmem:[#allocation11 + $0x3dc] sm:$0xff]
        %v4458 = vld [vmem:[#allocation11 + $0x3e4] sm:$0xff]
        %v4459 = vld [vmem:[#allocation11 + $0x3ec] sm:$0xf]
        %v4460 = vld [vmem:[#allocation11 + $0x3f0] sm:$0xff]
        %v4461 = vld [vmem:[#allocation11 + $0x3f8] sm:$0xff]
        %v4462 = vld [vmem:[#allocation11 + $0x400] sm:$0xff]
        %v4463 = vld [vmem:[#allocation11 + $0x408] sm:$0xf]
        %v4464 = vld [vmem:[#allocation11 + $0x40c] sm:$0xff]
        %v4465 = vld [vmem:[#allocation11 + $0x414] sm:$0xff]
        %v4466 = vld [vmem:[#allocation11 + $0x41c] sm:$0xff]
        %v4467 = vld [vmem:[#allocation11 + $0x424] sm:$0xf]
        %v4468 = vld [vmem:[#allocation11 + $0x428] sm:$0xff]
        %v4469 = vld [vmem:[#allocation11 + $0x430] sm:$0xff]
        %v4470 = vld [vmem:[#allocation11 + $0x438] sm:$0xff]
        %v4471 = vld [vmem:[#allocation11 + $0x440] sm:$0xf]
        %v4472 = vld [vmem:[#allocation11 + $0x444] sm:$0xff]
        %v4473 = vld [vmem:[#allocation11 + $0x44c] sm:$0xff]
        %v4474 = vld [vmem:[#allocation11 + $0x454] sm:$0xff]
        %v4475 = vld [vmem:[#allocation11 + $0x45c] sm:$0xf]
        %v4476 = vld [vmem:[#allocation11 + $0x460] sm:$0xff]
        %v4477 = vld [vmem:[#allocation11 + $0x468] sm:$0xff]
        %v4478 = vld [vmem:[#allocation11 + $0x470] sm:$0xff]
        %v4479 = vld [vmem:[#allocation11 + $0x478] sm:$0xf]
        %v4480 = vld [vmem:[#allocation11 + $0x47c] sm:$0xff]
        %v4481 = vld [vmem:[#allocation11 + $0x484] sm:$0xff]
        %v4482 = vld [vmem:[#allocation11 + $0x48c] sm:$0xff]
        %v4483 = vld [vmem:[#allocation11 + $0x494] sm:$0xf]
        %v4484 = vld [vmem:[#allocation11 + $0x498] sm:$0xff]
        %v4485 = vld [vmem:[#allocation11 + $0x4a0] sm:$0xff]
        %v4486 = vld [vmem:[#allocation11 + $0x4a8] sm:$0xff]
        %v4487 = vld [vmem:[#allocation11 + $0x4b0] sm:$0xf]
        %v4488 = vld [vmem:[#allocation11 + $0x4b4] sm:$0xff]
        %v4489 = vld [vmem:[#allocation11 + $0x4bc] sm:$0xff]
        %v4490 = vld [vmem:[#allocation11 + $0x4c4] sm:$0xff]
        %v4491 = vld [vmem:[#allocation11 + $0x4cc] sm:$0xf]
        %v4492 = vld [vmem:[#allocation11 + $0x4d0] sm:$0xff]
        %v4493 = vld [vmem:[#allocation11 + $0x4d8] sm:$0xff]
        %v4494 = vld [vmem:[#allocation11 + $0x4e0] sm:$0xff]
        %v4495 = vld [vmem:[#allocation11 + $0x4e8] sm:$0xf]
        %v4496 = vld [vmem:[#allocation11 + $0x4ec] sm:$0xff]
        %v4497 = vld [vmem:[#allocation11 + $0x4f4] sm:$0xff]
        %v4498 = vld [vmem:[#allocation11 + $0x4fc] sm:$0xff]
        %v4499 = vld [vmem:[#allocation11 + $0x504] sm:$0xf]
        %v4500 = vld [vmem:[#allocation11 + $0x508] sm:$0xff]
        %v4501 = vld [vmem:[#allocation11 + $0x510] sm:$0xff]
        %v4502 = vld [vmem:[#allocation11 + $0x518] sm:$0xff]
        %v4503 = vld [vmem:[#allocation11 + $0x520] sm:$0xf]
        %v4504 = vld [vmem:[#allocation11 + $0x524] sm:$0xff]
        %v4505 = vld [vmem:[#allocation11 + $0x52c] sm:$0xff]
        %v4506 = vld [vmem:[#allocation11 + $0x534] sm:$0xff]
        %v4507 = vld [vmem:[#allocation11 + $0x53c] sm:$0xf]
        %v4508 = vld [vmem:[#allocation11 + $0x540] sm:$0xff]
        %v4509 = vld [vmem:[#allocation11 + $0x548] sm:$0xff]
        %v4510 = vld [vmem:[#allocation11 + $0x550] sm:$0xff]
        %v4511 = vld [vmem:[#allocation11 + $0x558] sm:$0xf]
        %v4512 = vld [vmem:[#allocation11 + $0x55c] sm:$0xff]
        %v4513 = vld [vmem:[#allocation11 + $0x564] sm:$0xff]
        %v4514 = vld [vmem:[#allocation11 + $0x56c] sm:$0xff]
        %v4515 = vld [vmem:[#allocation11 + $0x574] sm:$0xf]
        %v4516 = vld [vmem:[#allocation11 + $0x578] sm:$0xff]
        %v4517 = vld [vmem:[#allocation11 + $0x580] sm:$0xff]
        %v4518 = vld [vmem:[#allocation11 + $0x588] sm:$0xff]
        %v4519 = vld [vmem:[#allocation11 + $0x590] sm:$0xf]
        %v4520 = vld [vmem:[#allocation11 + $0x594] sm:$0xff]
        %v4521 = vld [vmem:[#allocation11 + $0x59c] sm:$0xff]
        %v4522 = vld [vmem:[#allocation11 + $0x5a4] sm:$0xff]
        %v4523 = vld [vmem:[#allocation11 + $0x5ac] sm:$0xf]
        %v4524 = vld [vmem:[#allocation11 + $0x5b0] sm:$0xff]
        %v4525 = vld [vmem:[#allocation11 + $0x5b8] sm:$0xff]
        %v4526 = vld [vmem:[#allocation11 + $0x5c0] sm:$0xff]
        %v4527 = vld [vmem:[#allocation11 + $0x5c8] sm:$0xf]
        %v4528 = vld [vmem:[#allocation11 + $0x5cc] sm:$0xff]
        %v4529 = vld [vmem:[#allocation11 + $0x5d4] sm:$0xff]
        %v4530 = vld [vmem:[#allocation11 + $0x5dc] sm:$0xff]
        %v4531 = vld [vmem:[#allocation11 + $0x5e4] sm:$0xf]
        %v4532 = vld [vmem:[#allocation11 + $0x5e8] sm:$0xff]
        %v4533 = vld [vmem:[#allocation11 + $0x5f0] sm:$0xff]
        %v4534 = vld [vmem:[#allocation11 + $0x5f8] sm:$0xff]
        %v4535 = vld [vmem:[#allocation11 + $0x600] sm:$0xf]
        %v4536 = vld [vmem:[#allocation11 + $0x604] sm:$0xff]
        %v4537 = vld [vmem:[#allocation11 + $0x60c] sm:$0xff]
        %v4538 = vld [vmem:[#allocation11 + $0x614] sm:$0xff]
        %v4539 = vld [vmem:[#allocation11 + $0x61c] sm:$0xf]
        %v4540 = vld [vmem:[#allocation11 + $0x620] sm:$0xff]
        %v4541 = vld [vmem:[#allocation11 + $0x628] sm:$0xff]
        %v4542 = vld [vmem:[#allocation11 + $0x630] sm:$0xff]
        %v4543 = vld [vmem:[#allocation11 + $0x638] sm:$0xf]
        %v4544 = vld [vmem:[#allocation11 + $0x63c] sm:$0xff]
        %v4545 = vld [vmem:[#allocation11 + $0x644] sm:$0xff]
        %v4546 = vld [vmem:[#allocation11 + $0x64c] sm:$0xff]
        %v4547 = vld [vmem:[#allocation11 + $0x654] sm:$0xf]
        %v4548 = vld [vmem:[#allocation11 + $0x658] sm:$0xff]
        %v4549 = vld [vmem:[#allocation11 + $0x660] sm:$0xff]
        %v4550 = vld [vmem:[#allocation11 + $0x668] sm:$0xff]
        %v4551 = vld [vmem:[#allocation11 + $0x670] sm:$0xf]
        %v4552 = vld [vmem:[#allocation11 + $0x674] sm:$0xff]
        %v4553 = vld [vmem:[#allocation11 + $0x67c] sm:$0xff]
        %v4554 = vld [vmem:[#allocation11 + $0x684] sm:$0xff]
        %v4555 = vld [vmem:[#allocation11 + $0x68c] sm:$0xf]
        %v4556 = vld [vmem:[#allocation11 + $0x690] sm:$0xff]
        %v4557 = vld [vmem:[#allocation11 + $0x698] sm:$0xff]
        %v4558 = vld [vmem:[#allocation11 + $0x6a0] sm:$0xff]
        %v4559 = vld [vmem:[#allocation11 + $0x6a8] sm:$0xf]
        %v4560 = vld [vmem:[#allocation11 + $0x6ac] sm:$0xff]
        %v4561 = vld [vmem:[#allocation11 + $0x6b4] sm:$0xff]
        %v4562 = vld [vmem:[#allocation11 + $0x6bc] sm:$0xff]
        %v4563 = vld [vmem:[#allocation11 + $0x6c4] sm:$0xf]
        %v4564 = vld [vmem:[#allocation11 + $0x6c8] sm:$0xff]
        %v4565 = vld [vmem:[#allocation11 + $0x6d0] sm:$0xff]
        %v4566 = vld [vmem:[#allocation11 + $0x6d8] sm:$0xff]
        %v4567 = vld [vmem:[#allocation11 + $0x6e0] sm:$0xf]
        %v4568 = vld [vmem:[#allocation11 + $0x6e4] sm:$0xff]
        %v4569 = vld [vmem:[#allocation11 + $0x6ec] sm:$0xff]
        %v4570 = vld [vmem:[#allocation11 + $0x6f4] sm:$0xff]
        %v4571 = vld [vmem:[#allocation11 + $0x6fc] sm:$0xf]
        %v4572 = vld [vmem:[%s9] sm:$0xff]
        %v4574 = vlaneseq
        %v4575 = vshrl.u32 %v4574, 7
        %v4576 = vsub.s32 0, %v4575
        %v4577 = vrot.slane %v4572, %v4576
        %v4578 = vlaneseq
        %v4579 = vshrl.u32 %v4578, 7
        %v4580 = vsub.s32 1, %v4579
        %v4581 = vrot.slane %v4572, %v4580
        %v4582 = vlaneseq
        %v4583 = vshrl.u32 %v4582, 7
        %v4584 = vsub.s32 2, %v4583
        %v4585 = vrot.slane %v4572, %v4584
        %v4586 = vlaneseq
        %v4587 = vshrl.u32 %v4586, 7
        %v4588 = vsub.s32 3, %v4587
        %v4589 = vrot.slane %v4572, %v4588
        %v4590 = vlaneseq
        %v4591 = vshrl.u32 %v4590, 7
        %v4592 = vsub.s32 4, %v4591
        %v4593 = vrot.slane %v4572, %v4592
        %v4594 = vlaneseq
        %v4595 = vshrl.u32 %v4594, 7
        %v4596 = vsub.s32 5, %v4595
        %v4597 = vrot.slane %v4572, %v4596
        %v4598 = vlaneseq
        %v4599 = vshrl.u32 %v4598, 7
        %v4600 = vsub.s32 6, %v4599
        %v4601 = vrot.slane %v4572, %v4600
        %v4865 = vunpack.c.l.b16 %v4316
        %v4866 = vunpack.c.h.b16 %v4316
        %v4867 = vunpack.c.l.b16 %v4317
        %v4868 = vunpack.c.h.b16 %v4317
        %v4869 = vunpack.c.l.b16 %v4318
        %v4870 = vunpack.c.h.b16 %v4318
        %v4871 = vunpack.c.l.b16 %v4319
        %v4872 = vunpack.c.l.b16 %v4320
        %v4873 = vunpack.c.h.b16 %v4320
        %v4874 = vunpack.c.l.b16 %v4321
        %v4875 = vunpack.c.h.b16 %v4321
        %v4876 = vunpack.c.l.b16 %v4322
        %v4877 = vunpack.c.h.b16 %v4322
        %v4878 = vunpack.c.l.b16 %v4323
        %v4879 = vunpack.c.l.b16 %v4324
        %v4880 = vunpack.c.h.b16 %v4324
        %v4881 = vunpack.c.l.b16 %v4325
        %v4882 = vunpack.c.h.b16 %v4325
        %v4883 = vunpack.c.l.b16 %v4326
        %v4884 = vunpack.c.h.b16 %v4326
        %v4885 = vunpack.c.l.b16 %v4327
        %v4886 = vunpack.c.l.b16 %v4328
        %v4887 = vunpack.c.h.b16 %v4328
        %v4888 = vunpack.c.l.b16 %v4329
        %v4889 = vunpack.c.h.b16 %v4329
        %v4890 = vunpack.c.l.b16 %v4330
        %v4891 = vunpack.c.h.b16 %v4330
        %v4892 = vunpack.c.l.b16 %v4331
        %v4893 = vunpack.c.l.b16 %v4332
        %v4894 = vunpack.c.h.b16 %v4332
        %v4895 = vunpack.c.l.b16 %v4333
        %v4896 = vunpack.c.h.b16 %v4333
        %v4897 = vunpack.c.l.b16 %v4334
        %v4898 = vunpack.c.h.b16 %v4334
        %v4899 = vunpack.c.l.b16 %v4335
        %v4900 = vunpack.c.l.b16 %v4336
        %v4901 = vunpack.c.h.b16 %v4336
        %v4902 = vunpack.c.l.b16 %v4337
        %v4903 = vunpack.c.h.b16 %v4337
        %v4904 = vunpack.c.l.b16 %v4338
        %v4905 = vunpack.c.h.b16 %v4338
        %v4906 = vunpack.c.l.b16 %v4339
        %v4907 = vunpack.c.l.b16 %v4340
        %v4908 = vunpack.c.h.b16 %v4340
        %v4909 = vunpack.c.l.b16 %v4341
        %v4910 = vunpack.c.h.b16 %v4341
        %v4911 = vunpack.c.l.b16 %v4342
        %v4912 = vunpack.c.h.b16 %v4342
        %v4913 = vunpack.c.l.b16 %v4343
        %v4914 = vunpack.c.l.b16 %v4344
        %v4915 = vunpack.c.h.b16 %v4344
        %v4916 = vunpack.c.l.b16 %v4345
        %v4917 = vunpack.c.h.b16 %v4345
        %v4918 = vunpack.c.l.b16 %v4346
        %v4919 = vunpack.c.h.b16 %v4346
        %v4920 = vunpack.c.l.b16 %v4347
        %v4921 = vunpack.c.l.b16 %v4348
        %v4922 = vunpack.c.h.b16 %v4348
        %v4923 = vunpack.c.l.b16 %v4349
        %v4924 = vunpack.c.h.b16 %v4349
        %v4925 = vunpack.c.l.b16 %v4350
        %v4926 = vunpack.c.h.b16 %v4350
        %v4927 = vunpack.c.l.b16 %v4351
        %v4928 = vunpack.c.l.b16 %v4352
        %v4929 = vunpack.c.h.b16 %v4352
        %v4930 = vunpack.c.l.b16 %v4353
        %v4931 = vunpack.c.h.b16 %v4353
        %v4932 = vunpack.c.l.b16 %v4354
        %v4933 = vunpack.c.h.b16 %v4354
        %v4934 = vunpack.c.l.b16 %v4355
        %v4935 = vunpack.c.l.b16 %v4356
        %v4936 = vunpack.c.h.b16 %v4356
        %v4937 = vunpack.c.l.b16 %v4357
        %v4938 = vunpack.c.h.b16 %v4357
        %v4939 = vunpack.c.l.b16 %v4358
        %v4940 = vunpack.c.h.b16 %v4358
        %v4941 = vunpack.c.l.b16 %v4359
        %v4942 = vunpack.c.l.b16 %v4360
        %v4943 = vunpack.c.h.b16 %v4360
        %v4944 = vunpack.c.l.b16 %v4361
        %v4945 = vunpack.c.h.b16 %v4361
        %v4946 = vunpack.c.l.b16 %v4362
        %v4947 = vunpack.c.h.b16 %v4362
        %v4948 = vunpack.c.l.b16 %v4363
        %v4949 = vunpack.c.l.b16 %v4364
        %v4950 = vunpack.c.h.b16 %v4364
        %v4951 = vunpack.c.l.b16 %v4365
        %v4952 = vunpack.c.h.b16 %v4365
        %v4953 = vunpack.c.l.b16 %v4366
        %v4954 = vunpack.c.h.b16 %v4366
        %v4955 = vunpack.c.l.b16 %v4367
        %v4956 = vunpack.c.l.b16 %v4368
        %v4957 = vunpack.c.h.b16 %v4368
        %v4958 = vunpack.c.l.b16 %v4369
        %v4959 = vunpack.c.h.b16 %v4369
        %v4960 = vunpack.c.l.b16 %v4370
        %v4961 = vunpack.c.h.b16 %v4370
        %v4962 = vunpack.c.l.b16 %v4371
        %v4963 = vunpack.c.l.b16 %v4372
        %v4964 = vunpack.c.h.b16 %v4372
        %v4965 = vunpack.c.l.b16 %v4373
        %v4966 = vunpack.c.h.b16 %v4373
        %v4967 = vunpack.c.l.b16 %v4374
        %v4968 = vunpack.c.h.b16 %v4374
        %v4969 = vunpack.c.l.b16 %v4375
        %v4970 = vunpack.c.l.b16 %v4376
        %v4971 = vunpack.c.h.b16 %v4376
        %v4972 = vunpack.c.l.b16 %v4377
        %v4973 = vunpack.c.h.b16 %v4377
        %v4974 = vunpack.c.l.b16 %v4378
        %v4975 = vunpack.c.h.b16 %v4378
        %v4976 = vunpack.c.l.b16 %v4379
        %v4977 = vunpack.c.l.b16 %v4380
        %v4978 = vunpack.c.h.b16 %v4380
        %v4979 = vunpack.c.l.b16 %v4381
        %v4980 = vunpack.c.h.b16 %v4381
        %v4981 = vunpack.c.l.b16 %v4382
        %v4982 = vunpack.c.h.b16 %v4382
        %v4983 = vunpack.c.l.b16 %v4383
        %v4984 = vunpack.c.l.b16 %v4384
        %v4985 = vunpack.c.h.b16 %v4384
        %v4986 = vunpack.c.l.b16 %v4385
        %v4987 = vunpack.c.h.b16 %v4385
        %v4988 = vunpack.c.l.b16 %v4386
        %v4989 = vunpack.c.h.b16 %v4386
        %v4990 = vunpack.c.l.b16 %v4387
        %v4991 = vunpack.c.l.b16 %v4388
        %v4992 = vunpack.c.h.b16 %v4388
        %v4993 = vunpack.c.l.b16 %v4389
        %v4994 = vunpack.c.h.b16 %v4389
        %v4995 = vunpack.c.l.b16 %v4390
        %v4996 = vunpack.c.h.b16 %v4390
        %v4997 = vunpack.c.l.b16 %v4391
        %v4998 = vunpack.c.l.b16 %v4392
        %v4999 = vunpack.c.h.b16 %v4392
        %v5000 = vunpack.c.l.b16 %v4393
        %v5001 = vunpack.c.h.b16 %v4393
        %v5002 = vunpack.c.l.b16 %v4394
        %v5003 = vunpack.c.h.b16 %v4394
        %v5004 = vunpack.c.l.b16 %v4395
        %v5005 = vunpack.c.l.b16 %v4396
        %v5006 = vunpack.c.h.b16 %v4396
        %v5007 = vunpack.c.l.b16 %v4397
        %v5008 = vunpack.c.h.b16 %v4397
        %v5009 = vunpack.c.l.b16 %v4398
        %v5010 = vunpack.c.h.b16 %v4398
        %v5011 = vunpack.c.l.b16 %v4399
        %v5012 = vunpack.c.l.b16 %v4400
        %v5013 = vunpack.c.h.b16 %v4400
        %v5014 = vunpack.c.l.b16 %v4401
        %v5015 = vunpack.c.h.b16 %v4401
        %v5016 = vunpack.c.l.b16 %v4402
        %v5017 = vunpack.c.h.b16 %v4402
        %v5018 = vunpack.c.l.b16 %v4403
        %v5019 = vunpack.c.l.b16 %v4404
        %v5020 = vunpack.c.h.b16 %v4404
        %v5021 = vunpack.c.l.b16 %v4405
        %v5022 = vunpack.c.h.b16 %v4405
        %v5023 = vunpack.c.l.b16 %v4406
        %v5024 = vunpack.c.h.b16 %v4406
        %v5025 = vunpack.c.l.b16 %v4407
        %v5026 = vunpack.c.l.b16 %v4408
        %v5027 = vunpack.c.h.b16 %v4408
        %v5028 = vunpack.c.l.b16 %v4409
        %v5029 = vunpack.c.h.b16 %v4409
        %v5030 = vunpack.c.l.b16 %v4410
        %v5031 = vunpack.c.h.b16 %v4410
        %v5032 = vunpack.c.l.b16 %v4411
        %v5033 = vunpack.c.l.b16 %v4412
        %v5034 = vunpack.c.h.b16 %v4412
        %v5035 = vunpack.c.l.b16 %v4413
        %v5036 = vunpack.c.h.b16 %v4413
        %v5037 = vunpack.c.l.b16 %v4414
        %v5038 = vunpack.c.h.b16 %v4414
        %v5039 = vunpack.c.l.b16 %v4415
        %v5040 = vunpack.c.l.b16 %v4416
        %v5041 = vunpack.c.h.b16 %v4416
        %v5042 = vunpack.c.l.b16 %v4417
        %v5043 = vunpack.c.h.b16 %v4417
        %v5044 = vunpack.c.l.b16 %v4418
        %v5045 = vunpack.c.h.b16 %v4418
        %v5046 = vunpack.c.l.b16 %v4419
        %v5047 = vunpack.c.l.b16 %v4420
        %v5048 = vunpack.c.h.b16 %v4420
        %v5049 = vunpack.c.l.b16 %v4421
        %v5050 = vunpack.c.h.b16 %v4421
        %v5051 = vunpack.c.l.b16 %v4422
        %v5052 = vunpack.c.h.b16 %v4422
        %v5053 = vunpack.c.l.b16 %v4423
        %v5054 = vunpack.c.l.b16 %v4424
        %v5055 = vunpack.c.h.b16 %v4424
        %v5056 = vunpack.c.l.b16 %v4425
        %v5057 = vunpack.c.h.b16 %v4425
        %v5058 = vunpack.c.l.b16 %v4426
        %v5059 = vunpack.c.h.b16 %v4426
        %v5060 = vunpack.c.l.b16 %v4427
        %v5061 = vunpack.c.l.b16 %v4428
        %v5062 = vunpack.c.h.b16 %v4428
        %v5063 = vunpack.c.l.b16 %v4429
        %v5064 = vunpack.c.h.b16 %v4429
        %v5065 = vunpack.c.l.b16 %v4430
        %v5066 = vunpack.c.h.b16 %v4430
        %v5067 = vunpack.c.l.b16 %v4431
        %v5068 = vunpack.c.l.b16 %v4432
        %v5069 = vunpack.c.h.b16 %v4432
        %v5070 = vunpack.c.l.b16 %v4433
        %v5071 = vunpack.c.h.b16 %v4433
        %v5072 = vunpack.c.l.b16 %v4434
        %v5073 = vunpack.c.h.b16 %v4434
        %v5074 = vunpack.c.l.b16 %v4435
        %v5075 = vunpack.c.l.b16 %v4436
        %v5076 = vunpack.c.h.b16 %v4436
        %v5077 = vunpack.c.l.b16 %v4437
        %v5078 = vunpack.c.h.b16 %v4437
        %v5079 = vunpack.c.l.b16 %v4438
        %v5080 = vunpack.c.h.b16 %v4438
        %v5081 = vunpack.c.l.b16 %v4439
        %v5082 = vunpack.c.l.b16 %v4440
        %v5083 = vunpack.c.h.b16 %v4440
        %v5084 = vunpack.c.l.b16 %v4441
        %v5085 = vunpack.c.h.b16 %v4441
        %v5086 = vunpack.c.l.b16 %v4442
        %v5087 = vunpack.c.h.b16 %v4442
        %v5088 = vunpack.c.l.b16 %v4443
        %v5089 = vunpack.c.l.b16 %v4444
        %v5090 = vunpack.c.h.b16 %v4444
        %v5091 = vunpack.c.l.b16 %v4445
        %v5092 = vunpack.c.h.b16 %v4445
        %v5093 = vunpack.c.l.b16 %v4446
        %v5094 = vunpack.c.h.b16 %v4446
        %v5095 = vunpack.c.l.b16 %v4447
        %v5096 = vunpack.c.l.b16 %v4448
        %v5097 = vunpack.c.h.b16 %v4448
        %v5098 = vunpack.c.l.b16 %v4449
        %v5099 = vunpack.c.h.b16 %v4449
        %v5100 = vunpack.c.l.b16 %v4450
        %v5101 = vunpack.c.h.b16 %v4450
        %v5102 = vunpack.c.l.b16 %v4451
        %v5103 = vunpack.c.l.b16 %v4452
        %v5104 = vunpack.c.h.b16 %v4452
        %v5105 = vunpack.c.l.b16 %v4453
        %v5106 = vunpack.c.h.b16 %v4453
        %v5107 = vunpack.c.l.b16 %v4454
        %v5108 = vunpack.c.h.b16 %v4454
        %v5109 = vunpack.c.l.b16 %v4455
        %v5110 = vunpack.c.l.b16 %v4456
        %v5111 = vunpack.c.h.b16 %v4456
        %v5112 = vunpack.c.l.b16 %v4457
        %v5113 = vunpack.c.h.b16 %v4457
        %v5114 = vunpack.c.l.b16 %v4458
        %v5115 = vunpack.c.h.b16 %v4458
        %v5116 = vunpack.c.l.b16 %v4459
        %v5117 = vunpack.c.l.b16 %v4460
        %v5118 = vunpack.c.h.b16 %v4460
        %v5119 = vunpack.c.l.b16 %v4461
        %v5120 = vunpack.c.h.b16 %v4461
        %v5121 = vunpack.c.l.b16 %v4462
        %v5122 = vunpack.c.h.b16 %v4462
        %v5123 = vunpack.c.l.b16 %v4463
        %v5124 = vunpack.c.l.b16 %v4464
        %v5125 = vunpack.c.h.b16 %v4464
        %v5126 = vunpack.c.l.b16 %v4465
        %v5127 = vunpack.c.h.b16 %v4465
        %v5128 = vunpack.c.l.b16 %v4466
        %v5129 = vunpack.c.h.b16 %v4466
        %v5130 = vunpack.c.l.b16 %v4467
        %v5131 = vunpack.c.l.b16 %v4468
        %v5132 = vunpack.c.h.b16 %v4468
        %v5133 = vunpack.c.l.b16 %v4469
        %v5134 = vunpack.c.h.b16 %v4469
        %v5135 = vunpack.c.l.b16 %v4470
        %v5136 = vunpack.c.h.b16 %v4470
        %v5137 = vunpack.c.l.b16 %v4471
        %v5138 = vunpack.c.l.b16 %v4472
        %v5139 = vunpack.c.h.b16 %v4472
        %v5140 = vunpack.c.l.b16 %v4473
        %v5141 = vunpack.c.h.b16 %v4473
        %v5142 = vunpack.c.l.b16 %v4474
        %v5143 = vunpack.c.h.b16 %v4474
        %v5144 = vunpack.c.l.b16 %v4475
        %v5145 = vunpack.c.l.b16 %v4476
        %v5146 = vunpack.c.h.b16 %v4476
        %v5147 = vunpack.c.l.b16 %v4477
        %v5148 = vunpack.c.h.b16 %v4477
        %v5149 = vunpack.c.l.b16 %v4478
        %v5150 = vunpack.c.h.b16 %v4478
        %v5151 = vunpack.c.l.b16 %v4479
        %v5152 = vunpack.c.l.b16 %v4480
        %v5153 = vunpack.c.h.b16 %v4480
        %v5154 = vunpack.c.l.b16 %v4481
        %v5155 = vunpack.c.h.b16 %v4481
        %v5156 = vunpack.c.l.b16 %v4482
        %v5157 = vunpack.c.h.b16 %v4482
        %v5158 = vunpack.c.l.b16 %v4483
        %v5159 = vunpack.c.l.b16 %v4484
        %v5160 = vunpack.c.h.b16 %v4484
        %v5161 = vunpack.c.l.b16 %v4485
        %v5162 = vunpack.c.h.b16 %v4485
        %v5163 = vunpack.c.l.b16 %v4486
        %v5164 = vunpack.c.h.b16 %v4486
        %v5165 = vunpack.c.l.b16 %v4487
        %v5166 = vunpack.c.l.b16 %v4488
        %v5167 = vunpack.c.h.b16 %v4488
        %v5168 = vunpack.c.l.b16 %v4489
        %v5169 = vunpack.c.h.b16 %v4489
        %v5170 = vunpack.c.l.b16 %v4490
        %v5171 = vunpack.c.h.b16 %v4490
        %v5172 = vunpack.c.l.b16 %v4491
        %v5173 = vunpack.c.l.b16 %v4492
        %v5174 = vunpack.c.h.b16 %v4492
        %v5175 = vunpack.c.l.b16 %v4493
        %v5176 = vunpack.c.h.b16 %v4493
        %v5177 = vunpack.c.l.b16 %v4494
        %v5178 = vunpack.c.h.b16 %v4494
        %v5179 = vunpack.c.l.b16 %v4495
        %v5180 = vunpack.c.l.b16 %v4496
        %v5181 = vunpack.c.h.b16 %v4496
        %v5182 = vunpack.c.l.b16 %v4497
        %v5183 = vunpack.c.h.b16 %v4497
        %v5184 = vunpack.c.l.b16 %v4498
        %v5185 = vunpack.c.h.b16 %v4498
        %v5186 = vunpack.c.l.b16 %v4499
        %v5187 = vunpack.c.l.b16 %v4500
        %v5188 = vunpack.c.h.b16 %v4500
        %v5189 = vunpack.c.l.b16 %v4501
        %v5190 = vunpack.c.h.b16 %v4501
        %v5191 = vunpack.c.l.b16 %v4502
        %v5192 = vunpack.c.h.b16 %v4502
        %v5193 = vunpack.c.l.b16 %v4503
        %v5194 = vunpack.c.l.b16 %v4504
        %v5195 = vunpack.c.h.b16 %v4504
        %v5196 = vunpack.c.l.b16 %v4505
        %v5197 = vunpack.c.h.b16 %v4505
        %v5198 = vunpack.c.l.b16 %v4506
        %v5199 = vunpack.c.h.b16 %v4506
        %v5200 = vunpack.c.l.b16 %v4507
        %v5201 = vunpack.c.l.b16 %v4508
        %v5202 = vunpack.c.h.b16 %v4508
        %v5203 = vunpack.c.l.b16 %v4509
        %v5204 = vunpack.c.h.b16 %v4509
        %v5205 = vunpack.c.l.b16 %v4510
        %v5206 = vunpack.c.h.b16 %v4510
        %v5207 = vunpack.c.l.b16 %v4511
        %v5208 = vunpack.c.l.b16 %v4512
        %v5209 = vunpack.c.h.b16 %v4512
        %v5210 = vunpack.c.l.b16 %v4513
        %v5211 = vunpack.c.h.b16 %v4513
        %v5212 = vunpack.c.l.b16 %v4514
        %v5213 = vunpack.c.h.b16 %v4514
        %v5214 = vunpack.c.l.b16 %v4515
        %v5215 = vunpack.c.l.b16 %v4516
        %v5216 = vunpack.c.h.b16 %v4516
        %v5217 = vunpack.c.l.b16 %v4517
        %v5218 = vunpack.c.h.b16 %v4517
        %v5219 = vunpack.c.l.b16 %v4518
        %v5220 = vunpack.c.h.b16 %v4518
        %v5221 = vunpack.c.l.b16 %v4519
        %v5222 = vunpack.c.l.b16 %v4520
        %v5223 = vunpack.c.h.b16 %v4520
        %v5224 = vunpack.c.l.b16 %v4521
        %v5225 = vunpack.c.h.b16 %v4521
        %v5226 = vunpack.c.l.b16 %v4522
        %v5227 = vunpack.c.h.b16 %v4522
        %v5228 = vunpack.c.l.b16 %v4523
        %v5229 = vunpack.c.l.b16 %v4524
        %v5230 = vunpack.c.h.b16 %v4524
        %v5231 = vunpack.c.l.b16 %v4525
        %v5232 = vunpack.c.h.b16 %v4525
        %v5233 = vunpack.c.l.b16 %v4526
        %v5234 = vunpack.c.h.b16 %v4526
        %v5235 = vunpack.c.l.b16 %v4527
        %v5236 = vunpack.c.l.b16 %v4528
        %v5237 = vunpack.c.h.b16 %v4528
        %v5238 = vunpack.c.l.b16 %v4529
        %v5239 = vunpack.c.h.b16 %v4529
        %v5240 = vunpack.c.l.b16 %v4530
        %v5241 = vunpack.c.h.b16 %v4530
        %v5242 = vunpack.c.l.b16 %v4531
        %v5243 = vunpack.c.l.b16 %v4532
        %v5244 = vunpack.c.h.b16 %v4532
        %v5245 = vunpack.c.l.b16 %v4533
        %v5246 = vunpack.c.h.b16 %v4533
        %v5247 = vunpack.c.l.b16 %v4534
        %v5248 = vunpack.c.h.b16 %v4534
        %v5249 = vunpack.c.l.b16 %v4535
        %v5250 = vunpack.c.l.b16 %v4536
        %v5251 = vunpack.c.h.b16 %v4536
        %v5252 = vunpack.c.l.b16 %v4537
        %v5253 = vunpack.c.h.b16 %v4537
        %v5254 = vunpack.c.l.b16 %v4538
        %v5255 = vunpack.c.h.b16 %v4538
        %v5256 = vunpack.c.l.b16 %v4539
        %v5257 = vunpack.c.l.b16 %v4540
        %v5258 = vunpack.c.h.b16 %v4540
        %v5259 = vunpack.c.l.b16 %v4541
        %v5260 = vunpack.c.h.b16 %v4541
        %v5261 = vunpack.c.l.b16 %v4542
        %v5262 = vunpack.c.h.b16 %v4542
        %v5263 = vunpack.c.l.b16 %v4543
        %v5264 = vunpack.c.l.b16 %v4544
        %v5265 = vunpack.c.h.b16 %v4544
        %v5266 = vunpack.c.l.b16 %v4545
        %v5267 = vunpack.c.h.b16 %v4545
        %v5268 = vunpack.c.l.b16 %v4546
        %v5269 = vunpack.c.h.b16 %v4546
        %v5270 = vunpack.c.l.b16 %v4547
        %v5271 = vunpack.c.l.b16 %v4548
        %v5272 = vunpack.c.h.b16 %v4548
        %v5273 = vunpack.c.l.b16 %v4549
        %v5274 = vunpack.c.h.b16 %v4549
        %v5275 = vunpack.c.l.b16 %v4550
        %v5276 = vunpack.c.h.b16 %v4550
        %v5277 = vunpack.c.l.b16 %v4551
        %v5278 = vunpack.c.l.b16 %v4552
        %v5279 = vunpack.c.h.b16 %v4552
        %v5280 = vunpack.c.l.b16 %v4553
        %v5281 = vunpack.c.h.b16 %v4553
        %v5282 = vunpack.c.l.b16 %v4554
        %v5283 = vunpack.c.h.b16 %v4554
        %v5284 = vunpack.c.l.b16 %v4555
        %v5285 = vunpack.c.l.b16 %v4556
        %v5286 = vunpack.c.h.b16 %v4556
        %v5287 = vunpack.c.l.b16 %v4557
        %v5288 = vunpack.c.h.b16 %v4557
        %v5289 = vunpack.c.l.b16 %v4558
        %v5290 = vunpack.c.h.b16 %v4558
        %v5291 = vunpack.c.l.b16 %v4559
        %v5292 = vunpack.c.l.b16 %v4560
        %v5293 = vunpack.c.h.b16 %v4560
        %v5294 = vunpack.c.l.b16 %v4561
        %v5295 = vunpack.c.h.b16 %v4561
        %v5296 = vunpack.c.l.b16 %v4562
        %v5297 = vunpack.c.h.b16 %v4562
        %v5298 = vunpack.c.l.b16 %v4563
        %v5299 = vunpack.c.l.b16 %v4564
        %v5300 = vunpack.c.h.b16 %v4564
        %v5301 = vunpack.c.l.b16 %v4565
        %v5302 = vunpack.c.h.b16 %v4565
        %v5303 = vunpack.c.l.b16 %v4566
        %v5304 = vunpack.c.h.b16 %v4566
        %v5305 = vunpack.c.l.b16 %v4567
        %v5306 = vunpack.c.l.b16 %v4568
        %v5307 = vunpack.c.h.b16 %v4568
        %v5308 = vunpack.c.l.b16 %v4569
        %v5309 = vunpack.c.h.b16 %v4569
        %v5310 = vunpack.c.l.b16 %v4570
        %v5311 = vunpack.c.h.b16 %v4570
        %v5312 = vunpack.c.l.b16 %v4571
        %v5313 = vpack.c.b16 %v4872, %v4865
        %v5314 = vpack.c.b16 %v4873, %v4866
        %v5315 = vpack.c.b16 %v4874, %v4867
        %v5316 = vpack.c.b16 %v4875, %v4868
        %v5317 = vpack.c.b16 %v4876, %v4869
        %v5318 = vpack.c.b16 %v4877, %v4870
        %v5319 = vpack.c.b16 %v4878, %v4871
        %v5320 = vpack.c.b16 %v4886, %v4879
        %v5321 = vpack.c.b16 %v4887, %v4880
        %v5322 = vpack.c.b16 %v4888, %v4881
        %v5323 = vpack.c.b16 %v4889, %v4882
        %v5324 = vpack.c.b16 %v4890, %v4883
        %v5325 = vpack.c.b16 %v4891, %v4884
        %v5326 = vpack.c.b16 %v4892, %v4885
        %v5327 = vpack.c.b16 %v4900, %v4893
        %v5328 = vpack.c.b16 %v4901, %v4894
        %v5329 = vpack.c.b16 %v4902, %v4895
        %v5330 = vpack.c.b16 %v4903, %v4896
        %v5331 = vpack.c.b16 %v4904, %v4897
        %v5332 = vpack.c.b16 %v4905, %v4898
        %v5333 = vpack.c.b16 %v4906, %v4899
        %v5334 = vpack.c.b16 %v4914, %v4907
        %v5335 = vpack.c.b16 %v4915, %v4908
        %v5336 = vpack.c.b16 %v4916, %v4909
        %v5337 = vpack.c.b16 %v4917, %v4910
        %v5338 = vpack.c.b16 %v4918, %v4911
        %v5339 = vpack.c.b16 %v4919, %v4912
        %v5340 = vpack.c.b16 %v4920, %v4913
        %v5341 = vpack.c.b16 %v4928, %v4921
        %v5342 = vpack.c.b16 %v4929, %v4922
        %v5343 = vpack.c.b16 %v4930, %v4923
        %v5344 = vpack.c.b16 %v4931, %v4924
        %v5345 = vpack.c.b16 %v4932, %v4925
        %v5346 = vpack.c.b16 %v4933, %v4926
        %v5347 = vpack.c.b16 %v4934, %v4927
        %v5348 = vpack.c.b16 %v4942, %v4935
        %v5349 = vpack.c.b16 %v4943, %v4936
        %v5350 = vpack.c.b16 %v4944, %v4937
        %v5351 = vpack.c.b16 %v4945, %v4938
        %v5352 = vpack.c.b16 %v4946, %v4939
        %v5353 = vpack.c.b16 %v4947, %v4940
        %v5354 = vpack.c.b16 %v4948, %v4941
        %v5355 = vpack.c.b16 %v4956, %v4949
        %v5356 = vpack.c.b16 %v4957, %v4950
        %v5357 = vpack.c.b16 %v4958, %v4951
        %v5358 = vpack.c.b16 %v4959, %v4952
        %v5359 = vpack.c.b16 %v4960, %v4953
        %v5360 = vpack.c.b16 %v4961, %v4954
        %v5361 = vpack.c.b16 %v4962, %v4955
        %v5362 = vpack.c.b16 %v4970, %v4963
        %v5363 = vpack.c.b16 %v4971, %v4964
        %v5364 = vpack.c.b16 %v4972, %v4965
        %v5365 = vpack.c.b16 %v4973, %v4966
        %v5366 = vpack.c.b16 %v4974, %v4967
        %v5367 = vpack.c.b16 %v4975, %v4968
        %v5368 = vpack.c.b16 %v4976, %v4969
        %v5369 = vpack.c.b16 %v4984, %v4977
        %v5370 = vpack.c.b16 %v4985, %v4978
        %v5371 = vpack.c.b16 %v4986, %v4979
        %v5372 = vpack.c.b16 %v4987, %v4980
        %v5373 = vpack.c.b16 %v4988, %v4981
        %v5374 = vpack.c.b16 %v4989, %v4982
        %v5375 = vpack.c.b16 %v4990, %v4983
        %v5376 = vpack.c.b16 %v4998, %v4991
        %v5377 = vpack.c.b16 %v4999, %v4992
        %v5378 = vpack.c.b16 %v5000, %v4993
        %v5379 = vpack.c.b16 %v5001, %v4994
        %v5380 = vpack.c.b16 %v5002, %v4995
        %v5381 = vpack.c.b16 %v5003, %v4996
        %v5382 = vpack.c.b16 %v5004, %v4997
        %v5383 = vpack.c.b16 %v5012, %v5005
        %v5384 = vpack.c.b16 %v5013, %v5006
        %v5385 = vpack.c.b16 %v5014, %v5007
        %v5386 = vpack.c.b16 %v5015, %v5008
        %v5387 = vpack.c.b16 %v5016, %v5009
        %v5388 = vpack.c.b16 %v5017, %v5010
        %v5389 = vpack.c.b16 %v5018, %v5011
        %v5390 = vpack.c.b16 %v5026, %v5019
        %v5391 = vpack.c.b16 %v5027, %v5020
        %v5392 = vpack.c.b16 %v5028, %v5021
        %v5393 = vpack.c.b16 %v5029, %v5022
        %v5394 = vpack.c.b16 %v5030, %v5023
        %v5395 = vpack.c.b16 %v5031, %v5024
        %v5396 = vpack.c.b16 %v5032, %v5025
        %v5397 = vpack.c.b16 %v5040, %v5033
        %v5398 = vpack.c.b16 %v5041, %v5034
        %v5399 = vpack.c.b16 %v5042, %v5035
        %v5400 = vpack.c.b16 %v5043, %v5036
        %v5401 = vpack.c.b16 %v5044, %v5037
        %v5402 = vpack.c.b16 %v5045, %v5038
        %v5403 = vpack.c.b16 %v5046, %v5039
        %v5404 = vpack.c.b16 %v5054, %v5047
        %v5405 = vpack.c.b16 %v5055, %v5048
        %v5406 = vpack.c.b16 %v5056, %v5049
        %v5407 = vpack.c.b16 %v5057, %v5050
        %v5408 = vpack.c.b16 %v5058, %v5051
        %v5409 = vpack.c.b16 %v5059, %v5052
        %v5410 = vpack.c.b16 %v5060, %v5053
        %v5411 = vpack.c.b16 %v5068, %v5061
        %v5412 = vpack.c.b16 %v5069, %v5062
        %v5413 = vpack.c.b16 %v5070, %v5063
        %v5414 = vpack.c.b16 %v5071, %v5064
        %v5415 = vpack.c.b16 %v5072, %v5065
        %v5416 = vpack.c.b16 %v5073, %v5066
        %v5417 = vpack.c.b16 %v5074, %v5067
        %v5418 = vpack.c.b16 %v5082, %v5075
        %v5419 = vpack.c.b16 %v5083, %v5076
        %v5420 = vpack.c.b16 %v5084, %v5077
        %v5421 = vpack.c.b16 %v5085, %v5078
        %v5422 = vpack.c.b16 %v5086, %v5079
        %v5423 = vpack.c.b16 %v5087, %v5080
        %v5424 = vpack.c.b16 %v5088, %v5081
        %v5425 = vpack.c.b16 %v5096, %v5089
        %v5426 = vpack.c.b16 %v5097, %v5090
        %v5427 = vpack.c.b16 %v5098, %v5091
        %v5428 = vpack.c.b16 %v5099, %v5092
        %v5429 = vpack.c.b16 %v5100, %v5093
        %v5430 = vpack.c.b16 %v5101, %v5094
        %v5431 = vpack.c.b16 %v5102, %v5095
        %v5432 = vpack.c.b16 %v5110, %v5103
        %v5433 = vpack.c.b16 %v5111, %v5104
        %v5434 = vpack.c.b16 %v5112, %v5105
        %v5435 = vpack.c.b16 %v5113, %v5106
        %v5436 = vpack.c.b16 %v5114, %v5107
        %v5437 = vpack.c.b16 %v5115, %v5108
        %v5438 = vpack.c.b16 %v5116, %v5109
        %v5439 = vpack.c.b16 %v5124, %v5117
        %v5440 = vpack.c.b16 %v5125, %v5118
        %v5441 = vpack.c.b16 %v5126, %v5119
        %v5442 = vpack.c.b16 %v5127, %v5120
        %v5443 = vpack.c.b16 %v5128, %v5121
        %v5444 = vpack.c.b16 %v5129, %v5122
        %v5445 = vpack.c.b16 %v5130, %v5123
        %v5446 = vpack.c.b16 %v5138, %v5131
        %v5447 = vpack.c.b16 %v5139, %v5132
        %v5448 = vpack.c.b16 %v5140, %v5133
        %v5449 = vpack.c.b16 %v5141, %v5134
        %v5450 = vpack.c.b16 %v5142, %v5135
        %v5451 = vpack.c.b16 %v5143, %v5136
        %v5452 = vpack.c.b16 %v5144, %v5137
        %v5453 = vpack.c.b16 %v5152, %v5145
        %v5454 = vpack.c.b16 %v5153, %v5146
        %v5455 = vpack.c.b16 %v5154, %v5147
        %v5456 = vpack.c.b16 %v5155, %v5148
        %v5457 = vpack.c.b16 %v5156, %v5149
        %v5458 = vpack.c.b16 %v5157, %v5150
        %v5459 = vpack.c.b16 %v5158, %v5151
        %v5460 = vpack.c.b16 %v5166, %v5159
        %v5461 = vpack.c.b16 %v5167, %v5160
        %v5462 = vpack.c.b16 %v5168, %v5161
        %v5463 = vpack.c.b16 %v5169, %v5162
        %v5464 = vpack.c.b16 %v5170, %v5163
        %v5465 = vpack.c.b16 %v5171, %v5164
        %v5466 = vpack.c.b16 %v5172, %v5165
        %v5467 = vpack.c.b16 %v5180, %v5173
        %v5468 = vpack.c.b16 %v5181, %v5174
        %v5469 = vpack.c.b16 %v5182, %v5175
        %v5470 = vpack.c.b16 %v5183, %v5176
        %v5471 = vpack.c.b16 %v5184, %v5177
        %v5472 = vpack.c.b16 %v5185, %v5178
        %v5473 = vpack.c.b16 %v5186, %v5179
        %v5474 = vpack.c.b16 %v5194, %v5187
        %v5475 = vpack.c.b16 %v5195, %v5188
        %v5476 = vpack.c.b16 %v5196, %v5189
        %v5477 = vpack.c.b16 %v5197, %v5190
        %v5478 = vpack.c.b16 %v5198, %v5191
        %v5479 = vpack.c.b16 %v5199, %v5192
        %v5480 = vpack.c.b16 %v5200, %v5193
        %v5481 = vpack.c.b16 %v5208, %v5201
        %v5482 = vpack.c.b16 %v5209, %v5202
        %v5483 = vpack.c.b16 %v5210, %v5203
        %v5484 = vpack.c.b16 %v5211, %v5204
        %v5485 = vpack.c.b16 %v5212, %v5205
        %v5486 = vpack.c.b16 %v5213, %v5206
        %v5487 = vpack.c.b16 %v5214, %v5207
        %v5488 = vpack.c.b16 %v5222, %v5215
        %v5489 = vpack.c.b16 %v5223, %v5216
        %v5490 = vpack.c.b16 %v5224, %v5217
        %v5491 = vpack.c.b16 %v5225, %v5218
        %v5492 = vpack.c.b16 %v5226, %v5219
        %v5493 = vpack.c.b16 %v5227, %v5220
        %v5494 = vpack.c.b16 %v5228, %v5221
        %v5495 = vpack.c.b16 %v5236, %v5229
        %v5496 = vpack.c.b16 %v5237, %v5230
        %v5497 = vpack.c.b16 %v5238, %v5231
        %v5498 = vpack.c.b16 %v5239, %v5232
        %v5499 = vpack.c.b16 %v5240, %v5233
        %v5500 = vpack.c.b16 %v5241, %v5234
        %v5501 = vpack.c.b16 %v5242, %v5235
        %v5502 = vpack.c.b16 %v5250, %v5243
        %v5503 = vpack.c.b16 %v5251, %v5244
        %v5504 = vpack.c.b16 %v5252, %v5245
        %v5505 = vpack.c.b16 %v5253, %v5246
        %v5506 = vpack.c.b16 %v5254, %v5247
        %v5507 = vpack.c.b16 %v5255, %v5248
        %v5508 = vpack.c.b16 %v5256, %v5249
        %v5509 = vpack.c.b16 %v5264, %v5257
        %v5510 = vpack.c.b16 %v5265, %v5258
        %v5511 = vpack.c.b16 %v5266, %v5259
        %v5512 = vpack.c.b16 %v5267, %v5260
        %v5513 = vpack.c.b16 %v5268, %v5261
        %v5514 = vpack.c.b16 %v5269, %v5262
        %v5515 = vpack.c.b16 %v5270, %v5263
        %v5516 = vpack.c.b16 %v5278, %v5271
        %v5517 = vpack.c.b16 %v5279, %v5272
        %v5518 = vpack.c.b16 %v5280, %v5273
        %v5519 = vpack.c.b16 %v5281, %v5274
        %v5520 = vpack.c.b16 %v5282, %v5275
        %v5521 = vpack.c.b16 %v5283, %v5276
        %v5522 = vpack.c.b16 %v5284, %v5277
        %v5523 = vpack.c.b16 %v5292, %v5285
        %v5524 = vpack.c.b16 %v5293, %v5286
        %v5525 = vpack.c.b16 %v5294, %v5287
        %v5526 = vpack.c.b16 %v5295, %v5288
        %v5527 = vpack.c.b16 %v5296, %v5289
        %v5528 = vpack.c.b16 %v5297, %v5290
        %v5529 = vpack.c.b16 %v5298, %v5291
        %v5530 = vpack.c.b16 %v5306, %v5299
        %v5531 = vpack.c.b16 %v5307, %v5300
        %v5532 = vpack.c.b16 %v5308, %v5301
        %v5533 = vpack.c.b16 %v5309, %v5302
        %v5534 = vpack.c.b16 %v5310, %v5303
        %v5535 = vpack.c.b16 %v5311, %v5304
        %v5536 = vpack.c.b16 %v5312, %v5305
        %5761 = vmatprep.subr.bf16.mxu0 %v5314
        %5762 = vmatpush1.bf16.msra.mxu0 %v5313
        %5763 = vmatprep.subr.bf16.mxu0 %v5321
        %5764 = vmatpush1.bf16.msra.mxu0 %v5320
        %5765 = vmatprep.subr.bf16.mxu0 %v5328
        %5766 = vmatpush1.bf16.msra.mxu0 %v5327
        %5767 = vmatprep.subr.bf16.mxu0 %v5335
        %5768 = vmatpush1.bf16.msra.mxu0 %v5334
        %5769 = vmatprep.subr.bf16.mxu0 %v5342
        %5770 = vmatpush1.bf16.msra.mxu0 %v5341
        %5771 = vmatprep.subr.bf16.mxu0 %v5349
        %5772 = vmatpush1.bf16.msra.mxu0 %v5348
        %5773 = vmatprep.subr.bf16.mxu0 %v5356
        %5774 = vmatpush1.bf16.msra.mxu0 %v5355
        %5775 = vmatprep.subr.bf16.mxu0 %v5363
        %5776 = vmatpush1.bf16.msra.mxu0 %v5362
        %5777 = vmatprep.subr.bf16.mxu0 %v5370
        %5778 = vmatpush1.bf16.msra.mxu0 %v5369
        %5779 = vmatprep.subr.bf16.mxu0 %v5377
        %5780 = vmatpush1.bf16.msra.mxu0 %v5376
        %5781 = vmatprep.subr.bf16.mxu0 %v5384
        %5782 = vmatpush1.bf16.msra.mxu0 %v5383
        %5783 = vmatprep.subr.bf16.mxu0 %v5391
        %5784 = vmatpush1.bf16.msra.mxu0 %v5390
        %5785 = vmatprep.subr.bf16.mxu0 %v5398
        %5786 = vmatpush1.bf16.msra.mxu0 %v5397
        %5787 = vmatprep.subr.bf16.mxu0 %v5405
        %5788 = vmatpush1.bf16.msra.mxu0 %v5404
        %5789 = vmatprep.subr.bf16.mxu0 %v5412
        %5790 = vmatpush1.bf16.msra.mxu0 %v5411
        %5791 = vmatprep.subr.bf16.mxu0 %v5419
        %5792 = vmatpush1.bf16.msra.mxu0 %v5418
        %5793 = vmatprep.mubr.bf16.mxu0 %v4285
        %5794 = vmatmul.mubr.bf16.gmra.mrb[0].mxu0 %v4284
        %v5795 = vpop.f32.mrb[0].mxu0
        %v5796 = vadd.f32 %v4577, %v5795
        %v5797 = vpop.f32.mrb[0].mxu0
        %v5798 = vadd.f32 %v4581, %v5797
        %v5799 = vpop.f32.mrb[0].mxu0
        %v5800 = vadd.f32 %v4577, %v5799
        %v5801 = vpop.f32.mrb[0].mxu0
        %v5802 = vadd.f32 %v4581, %v5801
        %5803 = vmatprep.mubr.bf16.mxu0 %v4289
        %5804 = vmatmul.mubr.bf16.gmra.mrb[0].mxu0 %v4288
        %v5805 = vpop.f32.mrb[0].mxu0
        %v5806 = vadd.f32 %v4577, %v5805
        %v5807 = vpop.f32.mrb[0].mxu0
        %v5808 = vadd.f32 %v4581, %v5807
        %v5809 = vpop.f32.mrb[0].mxu0
        %v5810 = vadd.f32 %v4577, %v5809
        %v5811 = vpop.f32.mrb[0].mxu0
        %v5812 = vadd.f32 %v4581, %v5811
        %5813 = vmatprep.mubr.bf16.mxu0 %v4293
        %5814 = vmatmul.mubr.bf16.gmra.mrb[0].mxu0 %v4292
        %v5815 = vpop.f32.mrb[0].mxu0
        %v5816 = vadd.f32 %v4577, %v5815
        %v5817 = vpop.f32.mrb[0].mxu0
        %v5818 = vadd.f32 %v4581, %v5817
        %v5819 = vpop.f32.mrb[0].mxu0
        %v5820 = vadd.f32 %v4577, %v5819
        %v5821 = vpop.f32.mrb[0].mxu0
        %v5822 = vadd.f32 %v4581, %v5821
        %5823 = vmatprep.mubr.bf16.mxu0 %v4297
        %5824 = vmatmul.mubr.bf16.gmra.mrb[0].mxu0 %v4296
        %v5825 = vpop.f32.mrb[0].mxu0
        %v5826 = vadd.f32 %v4577, %v5825
        %v5827 = vpop.f32.mrb[0].mxu0
        %v5828 = vadd.f32 %v4581, %v5827
        %v5829 = vpop.f32.mrb[0].mxu0
        %v5830 = vadd.f32 %v4577, %v5829
        %v5831 = vpop.f32.mrb[0].mxu0
        %v5832 = vadd.f32 %v4581, %v5831
        %5833 = vmatprep.mubr.bf16.mxu0 %v4301
        %5834 = vmatmul.mubr.bf16.gmra.mrb[0].mxu0 %v4300
        %v5835 = vpop.f32.mrb[0].mxu0
        %v5836 = vadd.f32 %v4577, %v5835
        %v5837 = vpop.f32.mrb[0].mxu0
        %v5838 = vadd.f32 %v4581, %v5837
        %v5839 = vpop.f32.mrb[0].mxu0
        %v5840 = vadd.f32 %v4577, %v5839
        %v5841 = vpop.f32.mrb[0].mxu0
        %v5842 = vadd.f32 %v4581, %v5841
        %5843 = vmatprep.mubr.bf16.mxu0 %v4305
        %5844 = vmatmul.mubr.bf16.gmra.mrb[0].mxu0 %v4304
        %v5845 = vpop.f32.mrb[0].mxu0
        %v5846 = vadd.f32 %v4577, %v5845
        %v5847 = vpop.f32.mrb[0].mxu0
        %v5848 = vadd.f32 %v4581, %v5847
        %v5849 = vpop.f32.mrb[0].mxu0
        %v5850 = vadd.f32 %v4577, %v5849
        %v5851 = vpop.f32.mrb[0].mxu0
        %v5852 = vadd.f32 %v4581, %v5851
        %5853 = vmatprep.mubr.bf16.mxu0 %v4309
        %5854 = vmatmul.mubr.bf16.gmra.mrb[0].mxu0 %v4308
        %v5855 = vpop.f32.mrb[0].mxu0
        %v5856 = vadd.f32 %v4577, %v5855
        %v5857 = vpop.f32.mrb[0].mxu0
        %v5858 = vadd.f32 %v4581, %v5857
        %v5859 = vpop.f32.mrb[0].mxu0
        %v5860 = vadd.f32 %v4577, %v5859
        %v5861 = vpop.f32.mrb[0].mxu0
        %v5862 = vadd.f32 %v4581, %v5861
        %5863 = vmatprep.mubr.bf16.mxu0 %v4313
        %5864 = vmatmul.mubr.bf16.gmra.mrb[0].mxu0 %v4312
        %v5865 = vpop.f32.mrb[0].mxu0
        %v5866 = vadd.f32 %v4577, %v5865
        %v5867 = vpop.f32.mrb[0].mxu0
        %v5868 = vadd.f32 %v4581, %v5867
        %v5869 = vpop.f32.mrb[0].mxu0
        %v5870 = vadd.f32 %v4577, %v5869
        %v5871 = vpop.f32.mrb[0].mxu0
        %v5872 = vadd.f32 %v4581, %v5871
        %5873 = vdwg.mxu0
        %5874 = vmatprep.subr.bf16.mxu0 %v5426
        %5875 = vmatpush1.bf16.msra.mxu0 %v5425
        %5876 = vmatprep.subr.bf16.mxu0 %v5433
        %5877 = vmatpush1.bf16.msra.mxu0 %v5432
        %5878 = vmatprep.subr.bf16.mxu0 %v5440
        %5879 = vmatpush1.bf16.msra.mxu0 %v5439
        %5880 = vmatprep.subr.bf16.mxu0 %v5447
        %5881 = vmatpush1.bf16.msra.mxu0 %v5446
        %5882 = vmatprep.subr.bf16.mxu0 %v5454
        %5883 = vmatpush1.bf16.msra.mxu0 %v5453
        %5884 = vmatprep.subr.bf16.mxu0 %v5461
        %5885 = vmatpush1.bf16.msra.mxu0 %v5460
        %5886 = vmatprep.subr.bf16.mxu0 %v5468
        %5887 = vmatpush1.bf16.msra.mxu0 %v5467
        %5888 = vmatprep.subr.bf16.mxu0 %v5475
        %5889 = vmatpush1.bf16.msra.mxu0 %v5474
        %5890 = vmatprep.subr.bf16.mxu0 %v5482
        %5891 = vmatpush1.bf16.msra.mxu0 %v5481
        %5892 = vmatprep.subr.bf16.mxu0 %v5489
        %5893 = vmatpush1.bf16.msra.mxu0 %v5488
        %5894 = vmatprep.subr.bf16.mxu0 %v5496
        %5895 = vmatpush1.bf16.msra.mxu0 %v5495
        %5896 = vmatprep.subr.bf16.mxu0 %v5503
        %5897 = vmatpush1.bf16.msra.mxu0 %v5502
        %5898 = vmatprep.subr.bf16.mxu0 %v5510
        %5899 = vmatpush1.bf16.msra.mxu0 %v5509
        %5900 = vmatprep.subr.bf16.mxu0 %v5517
        %5901 = vmatpush1.bf16.msra.mxu0 %v5516
        %5902 = vmatprep.subr.bf16.mxu0 %v5524
        %5903 = vmatpush1.bf16.msra.mxu0 %v5523
        %5904 = vmatprep.subr.bf16.mxu0 %v5531
        %5905 = vmatpush1.bf16.msra.mxu0 %v5530
        %5906 = vmatprep.mubr.bf16.mxu0 %v4287
        %5907 = vmatmul.mubr.bf16.gmra.mrb[0].mxu0 %v4286
        %v5908 = vpop.f32.mrb[0].mxu0
        %v5909 = vadd.f32 %v5796, %v5908
        %v5910 = vpop.f32.mrb[0].mxu0
        %v5911 = vadd.f32 %v5798, %v5910
        %v5912 = vpop.f32.mrb[0].mxu0
        %v5913 = vadd.f32 %v5800, %v5912
        %v5914 = vpop.f32.mrb[0].mxu0
        %v5915 = vadd.f32 %v5802, %v5914
        %5916 = vmatprep.mubr.bf16.mxu0 %v4291
        %5917 = vmatmul.mubr.bf16.gmra.mrb[0].mxu0 %v4290
        %v5918 = vpop.f32.mrb[0].mxu0
        %v5919 = vadd.f32 %v5806, %v5918
        %v5920 = vpop.f32.mrb[0].mxu0
        %v5921 = vadd.f32 %v5808, %v5920
        %v5922 = vpop.f32.mrb[0].mxu0
        %v5923 = vadd.f32 %v5810, %v5922
        %v5924 = vpop.f32.mrb[0].mxu0
        %v5925 = vadd.f32 %v5812, %v5924
        %5926 = vmatprep.mubr.bf16.mxu0 %v4295
        %5927 = vmatmul.mubr.bf16.gmra.mrb[0].mxu0 %v4294
        %v5928 = vpop.f32.mrb[0].mxu0
        %v5929 = vadd.f32 %v5816, %v5928
        %v5930 = vpop.f32.mrb[0].mxu0
        %v5931 = vadd.f32 %v5818, %v5930
        %v5932 = vpop.f32.mrb[0].mxu0
        %v5933 = vadd.f32 %v5820, %v5932
        %v5934 = vpop.f32.mrb[0].mxu0
        %v5935 = vadd.f32 %v5822, %v5934
        %5936 = vmatprep.mubr.bf16.mxu0 %v4299
        %5937 = vmatmul.mubr.bf16.gmra.mrb[0].mxu0 %v4298
        %v5938 = vpop.f32.mrb[0].mxu0
        %v5939 = vadd.f32 %v5826, %v5938
        %v5940 = vpop.f32.mrb[0].mxu0
        %v5941 = vadd.f32 %v5828, %v5940
        %v5942 = vpop.f32.mrb[0].mxu0
        %v5943 = vadd.f32 %v5830, %v5942
        %v5944 = vpop.f32.mrb[0].mxu0
        %v5945 = vadd.f32 %v5832, %v5944
        %5946 = vmatprep.mubr.bf16.mxu0 %v4303
        %5947 = vmatmul.mubr.bf16.gmra.mrb[0].mxu0 %v4302
        %v5948 = vpop.f32.mrb[0].mxu0
        %v5949 = vadd.f32 %v5836, %v5948
        %v5950 = vpop.f32.mrb[0].mxu0
        %v5951 = vadd.f32 %v5838, %v5950
        %v5952 = vpop.f32.mrb[0].mxu0
        %v5953 = vadd.f32 %v5840, %v5952
        %v5954 = vpop.f32.mrb[0].mxu0
        %v5955 = vadd.f32 %v5842, %v5954
        %5956 = vmatprep.mubr.bf16.mxu0 %v4307
        %5957 = vmatmul.mubr.bf16.gmra.mrb[0].mxu0 %v4306
        %v5958 = vpop.f32.mrb[0].mxu0
        %v5959 = vadd.f32 %v5846, %v5958
        %v5960 = vpop.f32.mrb[0].mxu0
        %v5961 = vadd.f32 %v5848, %v5960
        %v5962 = vpop.f32.mrb[0].mxu0
        %v5963 = vadd.f32 %v5850, %v5962
        %v5964 = vpop.f32.mrb[0].mxu0
        %v5965 = vadd.f32 %v5852, %v5964
        %5966 = vmatprep.mubr.bf16.mxu0 %v4311
        %5967 = vmatmul.mubr.bf16.gmra.mrb[0].mxu0 %v4310
        %v5968 = vpop.f32.mrb[0].mxu0
        %v5969 = vadd.f32 %v5856, %v5968
        %v5970 = vpop.f32.mrb[0].mxu0
        %v5971 = vadd.f32 %v5858, %v5970
        %v5972 = vpop.f32.mrb[0].mxu0
        %v5973 = vadd.f32 %v5860, %v5972
        %v5974 = vpop.f32.mrb[0].mxu0
        %v5975 = vadd.f32 %v5862, %v5974
        %5976 = vmatprep.mubr.bf16.mxu0 %v4315
        %5977 = vmatmul.mubr.bf16.gmra.mrb[0].mxu0 %v4314
        %v5978 = vpop.f32.mrb[0].mxu0
        %v5979 = vadd.f32 %v5866, %v5978
        %v5980 = vpop.f32.mrb[0].mxu0
        %v5981 = vadd.f32 %v5868, %v5980
        %v5982 = vpop.f32.mrb[0].mxu0
        %v5983 = vadd.f32 %v5870, %v5982
        %v5984 = vpop.f32.mrb[0].mxu0
        %v5985 = vadd.f32 %v5872, %v5984
        %5986 = vdwg.mxu0
        %5987 = vmatprep.subr.bf16.mxu0 %v5316
        %5988 = vmatpush1.bf16.msra.mxu0 %v5315
        %5989 = vmatprep.subr.bf16.mxu0 %v5323
        %5990 = vmatpush1.bf16.msra.mxu0 %v5322
        %5991 = vmatprep.subr.bf16.mxu0 %v5330
        %5992 = vmatpush1.bf16.msra.mxu0 %v5329
        %5993 = vmatprep.subr.bf16.mxu0 %v5337
        %5994 = vmatpush1.bf16.msra.mxu0 %v5336
        %5995 = vmatprep.subr.bf16.mxu0 %v5344
        %5996 = vmatpush1.bf16.msra.mxu0 %v5343
        %5997 = vmatprep.subr.bf16.mxu0 %v5351
        %5998 = vmatpush1.bf16.msra.mxu0 %v5350
        %5999 = vmatprep.subr.bf16.mxu0 %v5358
        %6000 = vmatpush1.bf16.msra.mxu0 %v5357
        %6001 = vmatprep.subr.bf16.mxu0 %v5365
        %6002 = vmatpush1.bf16.msra.mxu0 %v5364
        %6003 = vmatprep.subr.bf16.mxu0 %v5372
        %6004 = vmatpush1.bf16.msra.mxu0 %v5371
        %6005 = vmatprep.subr.bf16.mxu0 %v5379
        %6006 = vmatpush1.bf16.msra.mxu0 %v5378
        %6007 = vmatprep.subr.bf16.mxu0 %v5386
        %6008 = vmatpush1.bf16.msra.mxu0 %v5385
        %6009 = vmatprep.subr.bf16.mxu0 %v5393
        %6010 = vmatpush1.bf16.msra.mxu0 %v5392
        %6011 = vmatprep.subr.bf16.mxu0 %v5400
        %6012 = vmatpush1.bf16.msra.mxu0 %v5399
        %6013 = vmatprep.subr.bf16.mxu0 %v5407
        %6014 = vmatpush1.bf16.msra.mxu0 %v5406
        %6015 = vmatprep.subr.bf16.mxu0 %v5414
        %6016 = vmatpush1.bf16.msra.mxu0 %v5413
        %6017 = vmatprep.subr.bf16.mxu0 %v5421
        %6018 = vmatpush1.bf16.msra.mxu0 %v5420
        %6019 = vmatprep.mubr.bf16.mxu0 %v4285
        %6020 = vmatmul.mubr.bf16.gmra.mrb[0].mxu0 %v4284
        %v6021 = vpop.f32.mrb[0].mxu0
        %v6022 = vadd.f32 %v4585, %v6021
        %v6023 = vpop.f32.mrb[0].mxu0
        %v6024 = vadd.f32 %v4589, %v6023
        %v6025 = vpop.f32.mrb[0].mxu0
        %v6026 = vadd.f32 %v4585, %v6025
        %v6027 = vpop.f32.mrb[0].mxu0
        %v6028 = vadd.f32 %v4589, %v6027
        %6029 = vmatprep.mubr.bf16.mxu0 %v4289
        %6030 = vmatmul.mubr.bf16.gmra.mrb[0].mxu0 %v4288
        %v6031 = vpop.f32.mrb[0].mxu0
        %v6032 = vadd.f32 %v4585, %v6031
        %v6033 = vpop.f32.mrb[0].mxu0
        %v6034 = vadd.f32 %v4589, %v6033
        %v6035 = vpop.f32.mrb[0].mxu0
        %v6036 = vadd.f32 %v4585, %v6035
        %v6037 = vpop.f32.mrb[0].mxu0
        %v6038 = vadd.f32 %v4589, %v6037
        %6039 = vmatprep.mubr.bf16.mxu0 %v4293
        %6040 = vmatmul.mubr.bf16.gmra.mrb[0].mxu0 %v4292
        %v6041 = vpop.f32.mrb[0].mxu0
        %v6042 = vadd.f32 %v4585, %v6041
        %v6043 = vpop.f32.mrb[0].mxu0
        %v6044 = vadd.f32 %v4589, %v6043
        %v6045 = vpop.f32.mrb[0].mxu0
        %v6046 = vadd.f32 %v4585, %v6045
        %v6047 = vpop.f32.mrb[0].mxu0
        %v6048 = vadd.f32 %v4589, %v6047
        %6049 = vmatprep.mubr.bf16.mxu0 %v4297
        %6050 = vmatmul.mubr.bf16.gmra.mrb[0].mxu0 %v4296
        %v6051 = vpop.f32.mrb[0].mxu0
        %v6052 = vadd.f32 %v4585, %v6051
        %v6053 = vpop.f32.mrb[0].mxu0
        %v6054 = vadd.f32 %v4589, %v6053
        %v6055 = vpop.f32.mrb[0].mxu0
        %v6056 = vadd.f32 %v4585, %v6055
        %v6057 = vpop.f32.mrb[0].mxu0
        %v6058 = vadd.f32 %v4589, %v6057
        %6059 = vmatprep.mubr.bf16.mxu0 %v4301
        %6060 = vmatmul.mubr.bf16.gmra.mrb[0].mxu0 %v4300
        %v6061 = vpop.f32.mrb[0].mxu0
        %v6062 = vadd.f32 %v4585, %v6061
        %v6063 = vpop.f32.mrb[0].mxu0
        %v6064 = vadd.f32 %v4589, %v6063
        %v6065 = vpop.f32.mrb[0].mxu0
        %v6066 = vadd.f32 %v4585, %v6065
        %v6067 = vpop.f32.mrb[0].mxu0
        %v6068 = vadd.f32 %v4589, %v6067
        %6069 = vmatprep.mubr.bf16.mxu0 %v4305
        %6070 = vmatmul.mubr.bf16.gmra.mrb[0].mxu0 %v4304
        %v6071 = vpop.f32.mrb[0].mxu0
        %v6072 = vadd.f32 %v4585, %v6071
        %v6073 = vpop.f32.mrb[0].mxu0
        %v6074 = vadd.f32 %v4589, %v6073
        %v6075 = vpop.f32.mrb[0].mxu0
        %v6076 = vadd.f32 %v4585, %v6075
        %v6077 = vpop.f32.mrb[0].mxu0
        %v6078 = vadd.f32 %v4589, %v6077
        %6079 = vmatprep.mubr.bf16.mxu0 %v4309
        %6080 = vmatmul.mubr.bf16.gmra.mrb[0].mxu0 %v4308
        %v6081 = vpop.f32.mrb[0].mxu0
        %v6082 = vadd.f32 %v4585, %v6081
        %v6083 = vpop.f32.mrb[0].mxu0
        %v6084 = vadd.f32 %v4589, %v6083
        %v6085 = vpop.f32.mrb[0].mxu0
        %v6086 = vadd.f32 %v4585, %v6085
        %v6087 = vpop.f32.mrb[0].mxu0
        %v6088 = vadd.f32 %v4589, %v6087
        %6089 = vmatprep.mubr.bf16.mxu0 %v4313
        %6090 = vmatmul.mubr.bf16.gmra.mrb[0].mxu0 %v4312
        %v6091 = vpop.f32.mrb[0].mxu0
        %v6092 = vadd.f32 %v4585, %v6091
        %v6093 = vpop.f32.mrb[0].mxu0
        %v6094 = vadd.f32 %v4589, %v6093
        %v6095 = vpop.f32.mrb[0].mxu0
        %v6096 = vadd.f32 %v4585, %v6095
        %v6097 = vpop.f32.mrb[0].mxu0
        %v6098 = vadd.f32 %v4589, %v6097
        %6099 = vdwg.mxu0
        %6100 = vmatprep.subr.bf16.mxu0 %v5428
        %6101 = vmatpush1.bf16.msra.mxu0 %v5427
        %6102 = vmatprep.subr.bf16.mxu0 %v5435
        %6103 = vmatpush1.bf16.msra.mxu0 %v5434
        %6104 = vmatprep.subr.bf16.mxu0 %v5442
        %6105 = vmatpush1.bf16.msra.mxu0 %v5441
        %6106 = vmatprep.subr.bf16.mxu0 %v5449
        %6107 = vmatpush1.bf16.msra.mxu0 %v5448
        %6108 = vmatprep.subr.bf16.mxu0 %v5456
        %6109 = vmatpush1.bf16.msra.mxu0 %v5455
        %6110 = vmatprep.subr.bf16.mxu0 %v5463
        %6111 = vmatpush1.bf16.msra.mxu0 %v5462
        %6112 = vmatprep.subr.bf16.mxu0 %v5470
        %6113 = vmatpush1.bf16.msra.mxu0 %v5469
        %6114 = vmatprep.subr.bf16.mxu0 %v5477
        %6115 = vmatpush1.bf16.msra.mxu0 %v5476
        %6116 = vmatprep.subr.bf16.mxu0 %v5484
        %6117 = vmatpush1.bf16.msra.mxu0 %v5483
        %6118 = vmatprep.subr.bf16.mxu0 %v5491
        %6119 = vmatpush1.bf16.msra.mxu0 %v5490
        %6120 = vmatprep.subr.bf16.mxu0 %v5498
        %6121 = vmatpush1.bf16.msra.mxu0 %v5497
        %6122 = vmatprep.subr.bf16.mxu0 %v5505
        %6123 = vmatpush1.bf16.msra.mxu0 %v5504
        %6124 = vmatprep.subr.bf16.mxu0 %v5512
        %6125 = vmatpush1.bf16.msra.mxu0 %v5511
        %6126 = vmatprep.subr.bf16.mxu0 %v5519
        %6127 = vmatpush1.bf16.msra.mxu0 %v5518
        %6128 = vmatprep.subr.bf16.mxu0 %v5526
        %6129 = vmatpush1.bf16.msra.mxu0 %v5525
        %6130 = vmatprep.subr.bf16.mxu0 %v5533
        %6131 = vmatpush1.bf16.msra.mxu0 %v5532
        %6132 = vmatprep.mubr.bf16.mxu0 %v4287
        %6133 = vmatmul.mubr.bf16.gmra.mrb[0].mxu0 %v4286
        %v6134 = vpop.f32.mrb[0].mxu0
        %v6135 = vadd.f32 %v6022, %v6134
        %v6136 = vpop.f32.mrb[0].mxu0
        %v6137 = vadd.f32 %v6024, %v6136
        %v6138 = vpop.f32.mrb[0].mxu0
        %v6139 = vadd.f32 %v6026, %v6138
        %v6140 = vpop.f32.mrb[0].mxu0
        %v6141 = vadd.f32 %v6028, %v6140
        %6142 = vmatprep.mubr.bf16.mxu0 %v4291
        %6143 = vmatmul.mubr.bf16.gmra.mrb[0].mxu0 %v4290
        %v6144 = vpop.f32.mrb[0].mxu0
        %v6145 = vadd.f32 %v6032, %v6144
        %v6146 = vpop.f32.mrb[0].mxu0
        %v6147 = vadd.f32 %v6034, %v6146
        %v6148 = vpop.f32.mrb[0].mxu0
        %v6149 = vadd.f32 %v6036, %v6148
        %v6150 = vpop.f32.mrb[0].mxu0
        %v6151 = vadd.f32 %v6038, %v6150
        %6152 = vmatprep.mubr.bf16.mxu0 %v4295
        %6153 = vmatmul.mubr.bf16.gmra.mrb[0].mxu0 %v4294
        %v6154 = vpop.f32.mrb[0].mxu0
        %v6155 = vadd.f32 %v6042, %v6154
        %v6156 = vpop.f32.mrb[0].mxu0
        %v6157 = vadd.f32 %v6044, %v6156
        %v6158 = vpop.f32.mrb[0].mxu0
        %v6159 = vadd.f32 %v6046, %v6158
        %v6160 = vpop.f32.mrb[0].mxu0
        %v6161 = vadd.f32 %v6048, %v6160
        %6162 = vmatprep.mubr.bf16.mxu0 %v4299
        %6163 = vmatmul.mubr.bf16.gmra.mrb[0].mxu0 %v4298
        %v6164 = vpop.f32.mrb[0].mxu0
        %v6165 = vadd.f32 %v6052, %v6164
        %v6166 = vpop.f32.mrb[0].mxu0
        %v6167 = vadd.f32 %v6054, %v6166
        %v6168 = vpop.f32.mrb[0].mxu0
        %v6169 = vadd.f32 %v6056, %v6168
        %v6170 = vpop.f32.mrb[0].mxu0
        %v6171 = vadd.f32 %v6058, %v6170
        %6172 = vmatprep.mubr.bf16.mxu0 %v4303
        %6173 = vmatmul.mubr.bf16.gmra.mrb[0].mxu0 %v4302
        %v6174 = vpop.f32.mrb[0].mxu0
        %v6175 = vadd.f32 %v6062, %v6174
        %v6176 = vpop.f32.mrb[0].mxu0
        %v6177 = vadd.f32 %v6064, %v6176
        %v6178 = vpop.f32.mrb[0].mxu0
        %v6179 = vadd.f32 %v6066, %v6178
        %v6180 = vpop.f32.mrb[0].mxu0
        %v6181 = vadd.f32 %v6068, %v6180
        %6182 = vmatprep.mubr.bf16.mxu0 %v4307
        %6183 = vmatmul.mubr.bf16.gmra.mrb[0].mxu0 %v4306
        %v6184 = vpop.f32.mrb[0].mxu0
        %v6185 = vadd.f32 %v6072, %v6184
        %v6186 = vpop.f32.mrb[0].mxu0
        %v6187 = vadd.f32 %v6074, %v6186
        %v6188 = vpop.f32.mrb[0].mxu0
        %v6189 = vadd.f32 %v6076, %v6188
        %v6190 = vpop.f32.mrb[0].mxu0
        %v6191 = vadd.f32 %v6078, %v6190
        %6192 = vmatprep.mubr.bf16.mxu0 %v4311
        %6193 = vmatmul.mubr.bf16.gmra.mrb[0].mxu0 %v4310
        %v6194 = vpop.f32.mrb[0].mxu0
        %v6195 = vadd.f32 %v6082, %v6194
        %v6196 = vpop.f32.mrb[0].mxu0
        %v6197 = vadd.f32 %v6084, %v6196
        %v6198 = vpop.f32.mrb[0].mxu0
        %v6199 = vadd.f32 %v6086, %v6198
        %v6200 = vpop.f32.mrb[0].mxu0
        %v6201 = vadd.f32 %v6088, %v6200
        %6202 = vmatprep.mubr.bf16.mxu0 %v4315
        %6203 = vmatmul.mubr.bf16.gmra.mrb[0].mxu0 %v4314
        %v6204 = vpop.f32.mrb[0].mxu0
        %v6205 = vadd.f32 %v6092, %v6204
        %v6206 = vpop.f32.mrb[0].mxu0
        %v6207 = vadd.f32 %v6094, %v6206
        %v6208 = vpop.f32.mrb[0].mxu0
        %v6209 = vadd.f32 %v6096, %v6208
        %v6210 = vpop.f32.mrb[0].mxu0
        %v6211 = vadd.f32 %v6098, %v6210
        %6212 = vdwg.mxu0
        %6213 = vmatprep.subr.bf16.mxu0 %v5318
        %6214 = vmatpush1.bf16.msra.mxu0 %v5317
        %6215 = vmatprep.subr.bf16.mxu0 %v5325
        %6216 = vmatpush1.bf16.msra.mxu0 %v5324
        %6217 = vmatprep.subr.bf16.mxu0 %v5332
        %6218 = vmatpush1.bf16.msra.mxu0 %v5331
        %6219 = vmatprep.subr.bf16.mxu0 %v5339
        %6220 = vmatpush1.bf16.msra.mxu0 %v5338
        %6221 = vmatprep.subr.bf16.mxu0 %v5346
        %6222 = vmatpush1.bf16.msra.mxu0 %v5345
        %6223 = vmatprep.subr.bf16.mxu0 %v5353
        %6224 = vmatpush1.bf16.msra.mxu0 %v5352
        %6225 = vmatprep.subr.bf16.mxu0 %v5360
        %6226 = vmatpush1.bf16.msra.mxu0 %v5359
        %6227 = vmatprep.subr.bf16.mxu0 %v5367
        %6228 = vmatpush1.bf16.msra.mxu0 %v5366
        %6229 = vmatprep.subr.bf16.mxu0 %v5374
        %6230 = vmatpush1.bf16.msra.mxu0 %v5373
        %6231 = vmatprep.subr.bf16.mxu0 %v5381
        %6232 = vmatpush1.bf16.msra.mxu0 %v5380
        %6233 = vmatprep.subr.bf16.mxu0 %v5388
        %6234 = vmatpush1.bf16.msra.mxu0 %v5387
        %6235 = vmatprep.subr.bf16.mxu0 %v5395
        %6236 = vmatpush1.bf16.msra.mxu0 %v5394
        %6237 = vmatprep.subr.bf16.mxu0 %v5402
        %6238 = vmatpush1.bf16.msra.mxu0 %v5401
        %6239 = vmatprep.subr.bf16.mxu0 %v5409
        %6240 = vmatpush1.bf16.msra.mxu0 %v5408
        %6241 = vmatprep.subr.bf16.mxu0 %v5416
        %6242 = vmatpush1.bf16.msra.mxu0 %v5415
        %6243 = vmatprep.subr.bf16.mxu0 %v5423
        %6244 = vmatpush1.bf16.msra.mxu0 %v5422
        %6245 = vmatprep.mubr.bf16.mxu0 %v4285
        %6246 = vmatmul.mubr.bf16.gmra.mrb[0].mxu0 %v4284
        %v6247 = vpop.f32.mrb[0].mxu0
        %v6248 = vadd.f32 %v4593, %v6247
        %v6249 = vpop.f32.mrb[0].mxu0
        %v6250 = vadd.f32 %v4597, %v6249
        %v6251 = vpop.f32.mrb[0].mxu0
        %v6252 = vadd.f32 %v4593, %v6251
        %v6253 = vpop.f32.mrb[0].mxu0
        %v6254 = vadd.f32 %v4597, %v6253
        %6255 = vmatprep.mubr.bf16.mxu0 %v4289
        %6256 = vmatmul.mubr.bf16.gmra.mrb[0].mxu0 %v4288
        %v6257 = vpop.f32.mrb[0].mxu0
        %v6258 = vadd.f32 %v4593, %v6257
        %v6259 = vpop.f32.mrb[0].mxu0
        %v6260 = vadd.f32 %v4597, %v6259
        %v6261 = vpop.f32.mrb[0].mxu0
        %v6262 = vadd.f32 %v4593, %v6261
        %v6263 = vpop.f32.mrb[0].mxu0
        %v6264 = vadd.f32 %v4597, %v6263
        %6265 = vmatprep.mubr.bf16.mxu0 %v4293
        %6266 = vmatmul.mubr.bf16.gmra.mrb[0].mxu0 %v4292
        %v6267 = vpop.f32.mrb[0].mxu0
        %v6268 = vadd.f32 %v4593, %v6267
        %v6269 = vpop.f32.mrb[0].mxu0
        %v6270 = vadd.f32 %v4597, %v6269
        %v6271 = vpop.f32.mrb[0].mxu0
        %v6272 = vadd.f32 %v4593, %v6271
        %v6273 = vpop.f32.mrb[0].mxu0
        %v6274 = vadd.f32 %v4597, %v6273
        %6275 = vmatprep.mubr.bf16.mxu0 %v4297
        %6276 = vmatmul.mubr.bf16.gmra.mrb[0].mxu0 %v4296
        %v6277 = vpop.f32.mrb[0].mxu0
        %v6278 = vadd.f32 %v4593, %v6277
        %v6279 = vpop.f32.mrb[0].mxu0
        %v6280 = vadd.f32 %v4597, %v6279
        %v6281 = vpop.f32.mrb[0].mxu0
        %v6282 = vadd.f32 %v4593, %v6281
        %v6283 = vpop.f32.mrb[0].mxu0
        %v6284 = vadd.f32 %v4597, %v6283
        %6285 = vmatprep.mubr.bf16.mxu0 %v4301
        %6286 = vmatmul.mubr.bf16.gmra.mrb[0].mxu0 %v4300
        %v6287 = vpop.f32.mrb[0].mxu0
        %v6288 = vadd.f32 %v4593, %v6287
        %v6289 = vpop.f32.mrb[0].mxu0
        %v6290 = vadd.f32 %v4597, %v6289
        %v6291 = vpop.f32.mrb[0].mxu0
        %v6292 = vadd.f32 %v4593, %v6291
        %v6293 = vpop.f32.mrb[0].mxu0
        %v6294 = vadd.f32 %v4597, %v6293
        %6295 = vmatprep.mubr.bf16.mxu0 %v4305
        %6296 = vmatmul.mubr.bf16.gmra.mrb[0].mxu0 %v4304
        %v6297 = vpop.f32.mrb[0].mxu0
        %v6298 = vadd.f32 %v4593, %v6297
        %v6299 = vpop.f32.mrb[0].mxu0
        %v6300 = vadd.f32 %v4597, %v6299
        %v6301 = vpop.f32.mrb[0].mxu0
        %v6302 = vadd.f32 %v4593, %v6301
        %v6303 = vpop.f32.mrb[0].mxu0
        %v6304 = vadd.f32 %v4597, %v6303
        %6305 = vmatprep.mubr.bf16.mxu0 %v4309
        %6306 = vmatmul.mubr.bf16.gmra.mrb[0].mxu0 %v4308
        %v6307 = vpop.f32.mrb[0].mxu0
        %v6308 = vadd.f32 %v4593, %v6307
        %v6309 = vpop.f32.mrb[0].mxu0
        %v6310 = vadd.f32 %v4597, %v6309
        %v6311 = vpop.f32.mrb[0].mxu0
        %v6312 = vadd.f32 %v4593, %v6311
        %v6313 = vpop.f32.mrb[0].mxu0
        %v6314 = vadd.f32 %v4597, %v6313
        %6315 = vmatprep.mubr.bf16.mxu0 %v4313
        %6316 = vmatmul.mubr.bf16.gmra.mrb[0].mxu0 %v4312
        %v6317 = vpop.f32.mrb[0].mxu0
        %v6318 = vadd.f32 %v4593, %v6317
        %v6319 = vpop.f32.mrb[0].mxu0
        %v6320 = vadd.f32 %v4597, %v6319
        %v6321 = vpop.f32.mrb[0].mxu0
        %v6322 = vadd.f32 %v4593, %v6321
        %v6323 = vpop.f32.mrb[0].mxu0
        %v6324 = vadd.f32 %v4597, %v6323
        %6325 = vdwg.mxu0
        %6326 = vmatprep.subr.bf16.mxu0 %v5430
        %6327 = vmatpush1.bf16.msra.mxu0 %v5429
        %6328 = vmatprep.subr.bf16.mxu0 %v5437
        %6329 = vmatpush1.bf16.msra.mxu0 %v5436
        %6330 = vmatprep.subr.bf16.mxu0 %v5444
        %6331 = vmatpush1.bf16.msra.mxu0 %v5443
        %6332 = vmatprep.subr.bf16.mxu0 %v5451
        %6333 = vmatpush1.bf16.msra.mxu0 %v5450
        %6334 = vmatprep.subr.bf16.mxu0 %v5458
        %6335 = vmatpush1.bf16.msra.mxu0 %v5457
        %6336 = vmatprep.subr.bf16.mxu0 %v5465
        %6337 = vmatpush1.bf16.msra.mxu0 %v5464
        %6338 = vmatprep.subr.bf16.mxu0 %v5472
        %6339 = vmatpush1.bf16.msra.mxu0 %v5471
        %6340 = vmatprep.subr.bf16.mxu0 %v5479
        %6341 = vmatpush1.bf16.msra.mxu0 %v5478
        %6342 = vmatprep.subr.bf16.mxu0 %v5486
        %6343 = vmatpush1.bf16.msra.mxu0 %v5485
        %6344 = vmatprep.subr.bf16.mxu0 %v5493
        %6345 = vmatpush1.bf16.msra.mxu0 %v5492
        %6346 = vmatprep.subr.bf16.mxu0 %v5500
        %6347 = vmatpush1.bf16.msra.mxu0 %v5499
        %6348 = vmatprep.subr.bf16.mxu0 %v5507
        %6349 = vmatpush1.bf16.msra.mxu0 %v5506
        %6350 = vmatprep.subr.bf16.mxu0 %v5514
        %6351 = vmatpush1.bf16.msra.mxu0 %v5513
        %6352 = vmatprep.subr.bf16.mxu0 %v5521
        %6353 = vmatpush1.bf16.msra.mxu0 %v5520
        %6354 = vmatprep.subr.bf16.mxu0 %v5528
        %6355 = vmatpush1.bf16.msra.mxu0 %v5527
        %6356 = vmatprep.subr.bf16.mxu0 %v5535
        %6357 = vmatpush1.bf16.msra.mxu0 %v5534
        %6358 = vmatprep.mubr.bf16.mxu0 %v4287
        %6359 = vmatmul.mubr.bf16.gmra.mrb[0].mxu0 %v4286
        %v6360 = vpop.f32.mrb[0].mxu0
        %v6361 = vadd.f32 %v6248, %v6360
        %v6362 = vpop.f32.mrb[0].mxu0
        %v6363 = vadd.f32 %v6250, %v6362
        %v6364 = vpop.f32.mrb[0].mxu0
        %v6365 = vadd.f32 %v6252, %v6364
        %v6366 = vpop.f32.mrb[0].mxu0
        %v6367 = vadd.f32 %v6254, %v6366
        %6368 = vmatprep.mubr.bf16.mxu0 %v4291
        %6369 = vmatmul.mubr.bf16.gmra.mrb[0].mxu0 %v4290
        %v6370 = vpop.f32.mrb[0].mxu0
        %v6371 = vadd.f32 %v6258, %v6370
        %v6372 = vpop.f32.mrb[0].mxu0
        %v6373 = vadd.f32 %v6260, %v6372
        %v6374 = vpop.f32.mrb[0].mxu0
        %v6375 = vadd.f32 %v6262, %v6374
        %v6376 = vpop.f32.mrb[0].mxu0
        %v6377 = vadd.f32 %v6264, %v6376
        %6378 = vmatprep.mubr.bf16.mxu0 %v4295
        %6379 = vmatmul.mubr.bf16.gmra.mrb[0].mxu0 %v4294
        %v6380 = vpop.f32.mrb[0].mxu0
        %v6381 = vadd.f32 %v6268, %v6380
        %v6382 = vpop.f32.mrb[0].mxu0
        %v6383 = vadd.f32 %v6270, %v6382
        %v6384 = vpop.f32.mrb[0].mxu0
        %v6385 = vadd.f32 %v6272, %v6384
        %v6386 = vpop.f32.mrb[0].mxu0
        %v6387 = vadd.f32 %v6274, %v6386
        %6388 = vmatprep.mubr.bf16.mxu0 %v4299
        %6389 = vmatmul.mubr.bf16.gmra.mrb[0].mxu0 %v4298
        %v6390 = vpop.f32.mrb[0].mxu0
        %v6391 = vadd.f32 %v6278, %v6390
        %v6392 = vpop.f32.mrb[0].mxu0
        %v6393 = vadd.f32 %v6280, %v6392
        %v6394 = vpop.f32.mrb[0].mxu0
        %v6395 = vadd.f32 %v6282, %v6394
        %v6396 = vpop.f32.mrb[0].mxu0
        %v6397 = vadd.f32 %v6284, %v6396
        %6398 = vmatprep.mubr.bf16.mxu0 %v4303
        %6399 = vmatmul.mubr.bf16.gmra.mrb[0].mxu0 %v4302
        %v6400 = vpop.f32.mrb[0].mxu0
        %v6401 = vadd.f32 %v6288, %v6400
        %v6402 = vpop.f32.mrb[0].mxu0
        %v6403 = vadd.f32 %v6290, %v6402
        %v6404 = vpop.f32.mrb[0].mxu0
        %v6405 = vadd.f32 %v6292, %v6404
        %v6406 = vpop.f32.mrb[0].mxu0
        %v6407 = vadd.f32 %v6294, %v6406
        %6408 = vmatprep.mubr.bf16.mxu0 %v4307
        %6409 = vmatmul.mubr.bf16.gmra.mrb[0].mxu0 %v4306
        %v6410 = vpop.f32.mrb[0].mxu0
        %v6411 = vadd.f32 %v6298, %v6410
        %v6412 = vpop.f32.mrb[0].mxu0
        %v6413 = vadd.f32 %v6300, %v6412
        %v6414 = vpop.f32.mrb[0].mxu0
        %v6415 = vadd.f32 %v6302, %v6414
        %v6416 = vpop.f32.mrb[0].mxu0
        %v6417 = vadd.f32 %v6304, %v6416
        %6418 = vmatprep.mubr.bf16.mxu0 %v4311
        %6419 = vmatmul.mubr.bf16.gmra.mrb[0].mxu0 %v4310
        %v6420 = vpop.f32.mrb[0].mxu0
        %v6421 = vadd.f32 %v6308, %v6420
        %v6422 = vpop.f32.mrb[0].mxu0
        %v6423 = vadd.f32 %v6310, %v6422
        %v6424 = vpop.f32.mrb[0].mxu0
        %v6425 = vadd.f32 %v6312, %v6424
        %v6426 = vpop.f32.mrb[0].mxu0
        %v6427 = vadd.f32 %v6314, %v6426
        %6428 = vmatprep.mubr.bf16.mxu0 %v4315
        %6429 = vmatmul.mubr.bf16.gmra.mrb[0].mxu0 %v4314
        %v6430 = vpop.f32.mrb[0].mxu0
        %v6431 = vadd.f32 %v6318, %v6430
        %v6432 = vpop.f32.mrb[0].mxu0
        %v6433 = vadd.f32 %v6320, %v6432
        %v6434 = vpop.f32.mrb[0].mxu0
        %v6435 = vadd.f32 %v6322, %v6434
        %v6436 = vpop.f32.mrb[0].mxu0
        %v6437 = vadd.f32 %v6324, %v6436
        %6438 = vdwg.mxu0
        %6439 = vmatprep.subr.bf16.mxu0 0
        %6440 = vmatpush1.bf16.msra.mxu0 %v5319
        %6441 = vmatprep.subr.bf16.mxu0 0
        %6442 = vmatpush1.bf16.msra.mxu0 %v5326
        %6443 = vmatprep.subr.bf16.mxu0 0
        %6444 = vmatpush1.bf16.msra.mxu0 %v5333
        %6445 = vmatprep.subr.bf16.mxu0 0
        %6446 = vmatpush1.bf16.msra.mxu0 %v5340
        %6447 = vmatprep.subr.bf16.mxu0 0
        %6448 = vmatpush1.bf16.msra.mxu0 %v5347
        %6449 = vmatprep.subr.bf16.mxu0 0
        %6450 = vmatpush1.bf16.msra.mxu0 %v5354
        %6451 = vmatprep.subr.bf16.mxu0 0
        %6452 = vmatpush1.bf16.msra.mxu0 %v5361
        %6453 = vmatprep.subr.bf16.mxu0 0
        %6454 = vmatpush1.bf16.msra.mxu0 %v5368
        %6455 = vmatprep.subr.bf16.mxu0 0
        %6456 = vmatpush1.bf16.msra.mxu0 %v5375
        %6457 = vmatprep.subr.bf16.mxu0 0
        %6458 = vmatpush1.bf16.msra.mxu0 %v5382
        %6459 = vmatprep.subr.bf16.mxu0 0
        %6460 = vmatpush1.bf16.msra.mxu0 %v5389
        %6461 = vmatprep.subr.bf16.mxu0 0
        %6462 = vmatpush1.bf16.msra.mxu0 %v5396
        %6463 = vmatprep.subr.bf16.mxu0 0
        %6464 = vmatpush1.bf16.msra.mxu0 %v5403
        %6465 = vmatprep.subr.bf16.mxu0 0
        %6466 = vmatpush1.bf16.msra.mxu0 %v5410
        %6467 = vmatprep.subr.bf16.mxu0 0
        %6468 = vmatpush1.bf16.msra.mxu0 %v5417
        %6469 = vmatprep.subr.bf16.mxu0 0
        %6470 = vmatpush1.bf16.msra.mxu0 %v5424
        %6471 = vmatprep.mubr.bf16.mxu0 %v4285
        %6472 = vmatmul.mubr.bf16.gmra.mrb[0].mxu0 %v4284
        %v6473 = vpop.f32.mrb[0].mxu0
        %v6474 = vadd.f32 %v4601, %v6473
        %v6475 = vpop.f32.mrb[0].mxu0
        %v6476 = vpop.f32.mrb[0].mxu0
        %v6477 = vadd.f32 %v4601, %v6476
        %v6478 = vpop.f32.mrb[0].mxu0
        %6479 = vmatprep.mubr.bf16.mxu0 %v4289
        %6480 = vmatmul.mubr.bf16.gmra.mrb[0].mxu0 %v4288
        %v6481 = vpop.f32.mrb[0].mxu0
        %v6482 = vadd.f32 %v4601, %v6481
        %v6483 = vpop.f32.mrb[0].mxu0
        %v6484 = vpop.f32.mrb[0].mxu0
        %v6485 = vadd.f32 %v4601, %v6484
        %v6486 = vpop.f32.mrb[0].mxu0
        %6487 = vmatprep.mubr.bf16.mxu0 %v4293
        %6488 = vmatmul.mubr.bf16.gmra.mrb[0].mxu0 %v4292
        %v6489 = vpop.f32.mrb[0].mxu0
        %v6490 = vadd.f32 %v4601, %v6489
        %v6491 = vpop.f32.mrb[0].mxu0
        %v6492 = vpop.f32.mrb[0].mxu0
        %v6493 = vadd.f32 %v4601, %v6492
        %v6494 = vpop.f32.mrb[0].mxu0
        %6495 = vmatprep.mubr.bf16.mxu0 %v4297
        %6496 = vmatmul.mubr.bf16.gmra.mrb[0].mxu0 %v4296
        %v6497 = vpop.f32.mrb[0].mxu0
        %v6498 = vadd.f32 %v4601, %v6497
        %v6499 = vpop.f32.mrb[0].mxu0
        %v6500 = vpop.f32.mrb[0].mxu0
        %v6501 = vadd.f32 %v4601, %v6500
        %v6502 = vpop.f32.mrb[0].mxu0
        %6503 = vmatprep.mubr.bf16.mxu0 %v4301
        %6504 = vmatmul.mubr.bf16.gmra.mrb[0].mxu0 %v4300
        %v6505 = vpop.f32.mrb[0].mxu0
        %v6506 = vadd.f32 %v4601, %v6505
        %v6507 = vpop.f32.mrb[0].mxu0
        %v6508 = vpop.f32.mrb[0].mxu0
        %v6509 = vadd.f32 %v4601, %v6508
        %v6510 = vpop.f32.mrb[0].mxu0
        %6511 = vmatprep.mubr.bf16.mxu0 %v4305
        %6512 = vmatmul.mubr.bf16.gmra.mrb[0].mxu0 %v4304
        %v6513 = vpop.f32.mrb[0].mxu0
        %v6514 = vadd.f32 %v4601, %v6513
        %v6515 = vpop.f32.mrb[0].mxu0
        %v6516 = vpop.f32.mrb[0].mxu0
        %v6517 = vadd.f32 %v4601, %v6516
        %v6518 = vpop.f32.mrb[0].mxu0
        %6519 = vmatprep.mubr.bf16.mxu0 %v4309
        %6520 = vmatmul.mubr.bf16.gmra.mrb[0].mxu0 %v4308
        %v6521 = vpop.f32.mrb[0].mxu0
        %v6522 = vadd.f32 %v4601, %v6521
        %v6523 = vpop.f32.mrb[0].mxu0
        %v6524 = vpop.f32.mrb[0].mxu0
        %v6525 = vadd.f32 %v4601, %v6524
        %v6526 = vpop.f32.mrb[0].mxu0
        %6527 = vmatprep.mubr.bf16.mxu0 %v4313
        %6528 = vmatmul.mubr.bf16.gmra.mrb[0].mxu0 %v4312
        %v6529 = vpop.f32.mrb[0].mxu0
        %v6530 = vadd.f32 %v4601, %v6529
        %v6531 = vpop.f32.mrb[0].mxu0
        %v6532 = vpop.f32.mrb[0].mxu0
        %v6533 = vadd.f32 %v4601, %v6532
        %v6534 = vpop.f32.mrb[0].mxu0
        %6535 = vdwg.mxu0
        %6536 = vmatprep.subr.bf16.mxu0 0
        %6537 = vmatpush1.bf16.msra.mxu0 %v5431
        %6538 = vmatprep.subr.bf16.mxu0 0
        %6539 = vmatpush1.bf16.msra.mxu0 %v5438
        %6540 = vmatprep.subr.bf16.mxu0 0
        %6541 = vmatpush1.bf16.msra.mxu0 %v5445
        %6542 = vmatprep.subr.bf16.mxu0 0
        %6543 = vmatpush1.bf16.msra.mxu0 %v5452
        %6544 = vmatprep.subr.bf16.mxu0 0
        %6545 = vmatpush1.bf16.msra.mxu0 %v5459
        %6546 = vmatprep.subr.bf16.mxu0 0
        %6547 = vmatpush1.bf16.msra.mxu0 %v5466
        %6548 = vmatprep.subr.bf16.mxu0 0
        %6549 = vmatpush1.bf16.msra.mxu0 %v5473
        %6550 = vmatprep.subr.bf16.mxu0 0
        %6551 = vmatpush1.bf16.msra.mxu0 %v5480
        %6552 = vmatprep.subr.bf16.mxu0 0
        %6553 = vmatpush1.bf16.msra.mxu0 %v5487
        %6554 = vmatprep.subr.bf16.mxu0 0
        %6555 = vmatpush1.bf16.msra.mxu0 %v5494
        %6556 = vmatprep.subr.bf16.mxu0 0
        %6557 = vmatpush1.bf16.msra.mxu0 %v5501
        %6558 = vmatprep.subr.bf16.mxu0 0
        %6559 = vmatpush1.bf16.msra.mxu0 %v5508
        %6560 = vmatprep.subr.bf16.mxu0 0
        %6561 = vmatpush1.bf16.msra.mxu0 %v5515
        %6562 = vmatprep.subr.bf16.mxu0 0
        %6563 = vmatpush1.bf16.msra.mxu0 %v5522
        %6564 = vmatprep.subr.bf16.mxu0 0
        %6565 = vmatpush1.bf16.msra.mxu0 %v5529
        %6566 = vmatprep.subr.bf16.mxu0 0
        %6567 = vmatpush1.bf16.msra.mxu0 %v5536
        %6568 = vmatprep.mubr.bf16.mxu0 %v4287
        %6569 = vmatmul.mubr.bf16.gmra.mrb[0].mxu0 %v4286
        %v6570 = vpop.f32.mrb[0].mxu0
        %v6571 = vadd.f32 %v6474, %v6570
        %v6572 = vpop.f32.mrb[0].mxu0
        %v6573 = vpop.f32.mrb[0].mxu0
        %v6574 = vadd.f32 %v6477, %v6573
        %v6575 = vpop.f32.mrb[0].mxu0
        %6576 = vmatprep.mubr.bf16.mxu0 %v4291
        %6577 = vmatmul.mubr.bf16.gmra.mrb[0].mxu0 %v4290
        %v6578 = vpop.f32.mrb[0].mxu0
        %v6579 = vadd.f32 %v6482, %v6578
        %v6580 = vpop.f32.mrb[0].mxu0
        %v6581 = vpop.f32.mrb[0].mxu0
        %v6582 = vadd.f32 %v6485, %v6581
        %v6583 = vpop.f32.mrb[0].mxu0
        %6584 = vmatprep.mubr.bf16.mxu0 %v4295
        %6585 = vmatmul.mubr.bf16.gmra.mrb[0].mxu0 %v4294
        %v6586 = vpop.f32.mrb[0].mxu0
        %v6587 = vadd.f32 %v6490, %v6586
        %v6588 = vpop.f32.mrb[0].mxu0
        %v6589 = vpop.f32.mrb[0].mxu0
        %v6590 = vadd.f32 %v6493, %v6589
        %v6591 = vpop.f32.mrb[0].mxu0
        %6592 = vmatprep.mubr.bf16.mxu0 %v4299
        %6593 = vmatmul.mubr.bf16.gmra.mrb[0].mxu0 %v4298
        %v6594 = vpop.f32.mrb[0].mxu0
        %v6595 = vadd.f32 %v6498, %v6594
        %v6596 = vpop.f32.mrb[0].mxu0
        %v6597 = vpop.f32.mrb[0].mxu0
        %v6598 = vadd.f32 %v6501, %v6597
        %v6599 = vpop.f32.mrb[0].mxu0
        %6600 = vmatprep.mubr.bf16.mxu0 %v4303
        %6601 = vmatmul.mubr.bf16.gmra.mrb[0].mxu0 %v4302
        %v6602 = vpop.f32.mrb[0].mxu0
        %v6603 = vadd.f32 %v6506, %v6602
        %v6604 = vpop.f32.mrb[0].mxu0
        %v6605 = vpop.f32.mrb[0].mxu0
        %v6606 = vadd.f32 %v6509, %v6605
        %v6607 = vpop.f32.mrb[0].mxu0
        %6608 = vmatprep.mubr.bf16.mxu0 %v4307
        %6609 = vmatmul.mubr.bf16.gmra.mrb[0].mxu0 %v4306
        %v6610 = vpop.f32.mrb[0].mxu0
        %v6611 = vadd.f32 %v6514, %v6610
        %v6612 = vpop.f32.mrb[0].mxu0
        %v6613 = vpop.f32.mrb[0].mxu0
        %v6614 = vadd.f32 %v6517, %v6613
        %v6615 = vpop.f32.mrb[0].mxu0
        %6616 = vmatprep.mubr.bf16.mxu0 %v4311
        %6617 = vmatmul.mubr.bf16.gmra.mrb[0].mxu0 %v4310
        %v6618 = vpop.f32.mrb[0].mxu0
        %v6619 = vadd.f32 %v6522, %v6618
        %v6620 = vpop.f32.mrb[0].mxu0
        %v6621 = vpop.f32.mrb[0].mxu0
        %v6622 = vadd.f32 %v6525, %v6621
        %v6623 = vpop.f32.mrb[0].mxu0
        %6624 = vmatprep.mubr.bf16.mxu0 %v4315
        %6625 = vmatmul.mubr.bf16.gmra.mrb[0].mxu0 %v4314
        %v6626 = vpop.f32.mrb[0].mxu0
        %v6627 = vadd.f32 %v6530, %v6626
        %v6628 = vpop.f32.mrb[0].mxu0
        %v6629 = vpop.f32.mrb[0].mxu0
        %v6630 = vadd.f32 %v6533, %v6629
        %v6631 = vpop.f32.mrb[0].mxu0
        %6632 = vdwg.mxu0
        %v6633 = vxor.u32 %v5909, 2147483648
        %v6634 = vxor.u32 %v5911, 2147483648
        %v6635 = vxor.u32 %v6135, 2147483648
        %v6636 = vxor.u32 %v6137, 2147483648
        %v6637 = vxor.u32 %v6361, 2147483648
        %v6638 = vxor.u32 %v6363, 2147483648
        %v6639 = vxor.u32 %v6571, 2147483648
        %v6640 = vxor.u32 %v5913, 2147483648
        %v6641 = vxor.u32 %v5915, 2147483648
        %v6642 = vxor.u32 %v6139, 2147483648
        %v6643 = vxor.u32 %v6141, 2147483648
        %v6644 = vxor.u32 %v6365, 2147483648
        %v6645 = vxor.u32 %v6367, 2147483648
        %v6646 = vxor.u32 %v6574, 2147483648
        %v6647 = vxor.u32 %v5919, 2147483648
        %v6648 = vxor.u32 %v5921, 2147483648
        %v6649 = vxor.u32 %v6145, 2147483648
        %v6650 = vxor.u32 %v6147, 2147483648
        %v6651 = vxor.u32 %v6371, 2147483648
        %v6652 = vxor.u32 %v6373, 2147483648
        %v6653 = vxor.u32 %v6579, 2147483648
        %v6654 = vxor.u32 %v5923, 2147483648
        %v6655 = vxor.u32 %v5925, 2147483648
        %v6656 = vxor.u32 %v6149, 2147483648
        %v6657 = vxor.u32 %v6151, 2147483648
        %v6658 = vxor.u32 %v6375, 2147483648
        %v6659 = vxor.u32 %v6377, 2147483648
        %v6660 = vxor.u32 %v6582, 2147483648
        %v6661 = vxor.u32 %v5929, 2147483648
        %v6662 = vxor.u32 %v5931, 2147483648
        %v6663 = vxor.u32 %v6155, 2147483648
        %v6664 = vxor.u32 %v6157, 2147483648
        %v6665 = vxor.u32 %v6381, 2147483648
        %v6666 = vxor.u32 %v6383, 2147483648
        %v6667 = vxor.u32 %v6587, 2147483648
        %v6668 = vxor.u32 %v5933, 2147483648
        %v6669 = vxor.u32 %v5935, 2147483648
        %v6670 = vxor.u32 %v6159, 2147483648
        %v6671 = vxor.u32 %v6161, 2147483648
        %v6672 = vxor.u32 %v6385, 2147483648
        %v6673 = vxor.u32 %v6387, 2147483648
        %v6674 = vxor.u32 %v6590, 2147483648
        %v6675 = vxor.u32 %v5939, 2147483648
        %v6676 = vxor.u32 %v5941, 2147483648
        %v6677 = vxor.u32 %v6165, 2147483648
        %v6678 = vxor.u32 %v6167, 2147483648
        %v6679 = vxor.u32 %v6391, 2147483648
        %v6680 = vxor.u32 %v6393, 2147483648
        %v6681 = vxor.u32 %v6595, 2147483648
        %v6682 = vxor.u32 %v5943, 2147483648
        %v6683 = vxor.u32 %v5945, 2147483648
        %v6684 = vxor.u32 %v6169, 2147483648
        %v6685 = vxor.u32 %v6171, 2147483648
        %v6686 = vxor.u32 %v6395, 2147483648
        %v6687 = vxor.u32 %v6397, 2147483648
        %v6688 = vxor.u32 %v6598, 2147483648
        %v6689 = vxor.u32 %v5949, 2147483648
        %v6690 = vxor.u32 %v5951, 2147483648
        %v6691 = vxor.u32 %v6175, 2147483648
        %v6692 = vxor.u32 %v6177, 2147483648
        %v6693 = vxor.u32 %v6401, 2147483648
        %v6694 = vxor.u32 %v6403, 2147483648
        %v6695 = vxor.u32 %v6603, 2147483648
        %v6696 = vxor.u32 %v5953, 2147483648
        %v6697 = vxor.u32 %v5955, 2147483648
        %v6698 = vxor.u32 %v6179, 2147483648
        %v6699 = vxor.u32 %v6181, 2147483648
        %v6700 = vxor.u32 %v6405, 2147483648
        %v6701 = vxor.u32 %v6407, 2147483648
        %v6702 = vxor.u32 %v6606, 2147483648
        %v6703 = vxor.u32 %v5959, 2147483648
        %v6704 = vxor.u32 %v5961, 2147483648
        %v6705 = vxor.u32 %v6185, 2147483648
        %v6706 = vxor.u32 %v6187, 2147483648
        %v6707 = vxor.u32 %v6411, 2147483648
        %v6708 = vxor.u32 %v6413, 2147483648
        %v6709 = vxor.u32 %v6611, 2147483648
        %v6710 = vxor.u32 %v5963, 2147483648
        %v6711 = vxor.u32 %v5965, 2147483648
        %v6712 = vxor.u32 %v6189, 2147483648
        %v6713 = vxor.u32 %v6191, 2147483648
        %v6714 = vxor.u32 %v6415, 2147483648
        %v6715 = vxor.u32 %v6417, 2147483648
        %v6716 = vxor.u32 %v6614, 2147483648
        %v6717 = vxor.u32 %v5969, 2147483648
        %v6718 = vxor.u32 %v5971, 2147483648
        %v6719 = vxor.u32 %v6195, 2147483648
        %v6720 = vxor.u32 %v6197, 2147483648
        %v6721 = vxor.u32 %v6421, 2147483648
        %v6722 = vxor.u32 %v6423, 2147483648
        %v6723 = vxor.u32 %v6619, 2147483648
        %v6724 = vxor.u32 %v5973, 2147483648
        %v6725 = vxor.u32 %v5975, 2147483648
        %v6726 = vxor.u32 %v6199, 2147483648
        %v6727 = vxor.u32 %v6201, 2147483648
        %v6728 = vxor.u32 %v6425, 2147483648
        %v6729 = vxor.u32 %v6427, 2147483648
        %v6730 = vxor.u32 %v6622, 2147483648
        %v6731 = vxor.u32 %v5979, 2147483648
        %v6732 = vxor.u32 %v5981, 2147483648
        %v6733 = vxor.u32 %v6205, 2147483648
        %v6734 = vxor.u32 %v6207, 2147483648
        %v6735 = vxor.u32 %v6431, 2147483648
        %v6736 = vxor.u32 %v6433, 2147483648
        %v6737 = vxor.u32 %v6627, 2147483648
        %v6738 = vxor.u32 %v5983, 2147483648
        %v6739 = vxor.u32 %v5985, 2147483648
        %v6740 = vxor.u32 %v6209, 2147483648
        %v6741 = vxor.u32 %v6211, 2147483648
        %v6742 = vxor.u32 %v6435, 2147483648
        %v6743 = vxor.u32 %v6437, 2147483648
        %v6744 = vxor.u32 %v6630, 2147483648
        %v6745 = vmul.f32 %v6633, 1.442695
        %v6746 = vpow.pop %v6745
        %v6747 = vmul.f32 %v6634, 1.442695
        %v6748 = vpow.pop %v6747
        %v6749 = vmul.f32 %v6635, 1.442695
        %v6750 = vpow.pop %v6749
        %v6751 = vmul.f32 %v6636, 1.442695
        %v6752 = vpow.pop %v6751
        %v6753 = vmul.f32 %v6637, 1.442695
        %v6754 = vpow.pop %v6753
        %v6755 = vmul.f32 %v6638, 1.442695
        %v6756 = vpow.pop %v6755
        %v6757 = vmul.f32 %v6639, 1.442695
        %v6758 = vpow.pop %v6757
        %v6759 = vmul.f32 %v6640, 1.442695
        %v6760 = vpow.pop %v6759
        %v6761 = vmul.f32 %v6641, 1.442695
        %v6762 = vpow.pop %v6761
        %v6763 = vmul.f32 %v6642, 1.442695
        %v6764 = vpow.pop %v6763
        %v6765 = vmul.f32 %v6643, 1.442695
        %v6766 = vpow.pop %v6765
        %v6767 = vmul.f32 %v6644, 1.442695
        %v6768 = vpow.pop %v6767
        %v6769 = vmul.f32 %v6645, 1.442695
        %v6770 = vpow.pop %v6769
        %v6771 = vmul.f32 %v6646, 1.442695
        %v6772 = vpow.pop %v6771
        %v6773 = vmul.f32 %v6647, 1.442695
        %v6774 = vpow.pop %v6773
        %v6775 = vmul.f32 %v6648, 1.442695
        %v6776 = vpow.pop %v6775
        %v6777 = vmul.f32 %v6649, 1.442695
        %v6778 = vpow.pop %v6777
        %v6779 = vmul.f32 %v6650, 1.442695
        %v6780 = vpow.pop %v6779
        %v6781 = vmul.f32 %v6651, 1.442695
        %v6782 = vpow.pop %v6781
        %v6783 = vmul.f32 %v6652, 1.442695
        %v6784 = vpow.pop %v6783
        %v6785 = vmul.f32 %v6653, 1.442695
        %v6786 = vpow.pop %v6785
        %v6787 = vmul.f32 %v6654, 1.442695
        %v6788 = vpow.pop %v6787
        %v6789 = vmul.f32 %v6655, 1.442695
        %v6790 = vpow.pop %v6789
        %v6791 = vmul.f32 %v6656, 1.442695
        %v6792 = vpow.pop %v6791
        %v6793 = vmul.f32 %v6657, 1.442695
        %v6794 = vpow.pop %v6793
        %v6795 = vmul.f32 %v6658, 1.442695
        %v6796 = vpow.pop %v6795
        %v6797 = vmul.f32 %v6659, 1.442695
        %v6798 = vpow.pop %v6797
        %v6799 = vmul.f32 %v6660, 1.442695
        %v6800 = vpow.pop %v6799
        %v6801 = vmul.f32 %v6661, 1.442695
        %v6802 = vpow.pop %v6801
        %v6803 = vmul.f32 %v6662, 1.442695
        %v6804 = vpow.pop %v6803
        %v6805 = vmul.f32 %v6663, 1.442695
        %v6806 = vpow.pop %v6805
        %v6807 = vmul.f32 %v6664, 1.442695
        %v6808 = vpow.pop %v6807
        %v6809 = vmul.f32 %v6665, 1.442695
        %v6810 = vpow.pop %v6809
        %v6811 = vmul.f32 %v6666, 1.442695
        %v6812 = vpow.pop %v6811
        %v6813 = vmul.f32 %v6667, 1.442695
        %v6814 = vpow.pop %v6813
        %v6815 = vmul.f32 %v6668, 1.442695
        %v6816 = vpow.pop %v6815
        %v6817 = vmul.f32 %v6669, 1.442695
        %v6818 = vpow.pop %v6817
        %v6819 = vmul.f32 %v6670, 1.442695
        %v6820 = vpow.pop %v6819
        %v6821 = vmul.f32 %v6671, 1.442695
        %v6822 = vpow.pop %v6821
        %v6823 = vmul.f32 %v6672, 1.442695
        %v6824 = vpow.pop %v6823
        %v6825 = vmul.f32 %v6673, 1.442695
        %v6826 = vpow.pop %v6825
        %v6827 = vmul.f32 %v6674, 1.442695
        %v6828 = vpow.pop %v6827
        %v6829 = vmul.f32 %v6675, 1.442695
        %v6830 = vpow.pop %v6829
        %v6831 = vmul.f32 %v6676, 1.442695
        %v6832 = vpow.pop %v6831
        %v6833 = vmul.f32 %v6677, 1.442695
        %v6834 = vpow.pop %v6833
        %v6835 = vmul.f32 %v6678, 1.442695
        %v6836 = vpow.pop %v6835
        %v6837 = vmul.f32 %v6679, 1.442695
        %v6838 = vpow.pop %v6837
        %v6839 = vmul.f32 %v6680, 1.442695
        %v6840 = vpow.pop %v6839
        %v6841 = vmul.f32 %v6681, 1.442695
        %v6842 = vpow.pop %v6841
        %v6843 = vmul.f32 %v6682, 1.442695
        %v6844 = vpow.pop %v6843
        %v6845 = vmul.f32 %v6683, 1.442695
        %v6846 = vpow.pop %v6845
        %v6847 = vmul.f32 %v6684, 1.442695
        %v6848 = vpow.pop %v6847
        %v6849 = vmul.f32 %v6685, 1.442695
        %v6850 = vpow.pop %v6849
        %v6851 = vmul.f32 %v6686, 1.442695
        %v6852 = vpow.pop %v6851
        %v6853 = vmul.f32 %v6687, 1.442695
        %v6854 = vpow.pop %v6853
        %v6855 = vmul.f32 %v6688, 1.442695
        %v6856 = vpow.pop %v6855
        %v6857 = vmul.f32 %v6689, 1.442695
        %v6858 = vpow.pop %v6857
        %v6859 = vmul.f32 %v6690, 1.442695
        %v6860 = vpow.pop %v6859
        %v6861 = vmul.f32 %v6691, 1.442695
        %v6862 = vpow.pop %v6861
        %v6863 = vmul.f32 %v6692, 1.442695
        %v6864 = vpow.pop %v6863
        %v6865 = vmul.f32 %v6693, 1.442695
        %v6866 = vpow.pop %v6865
        %v6867 = vmul.f32 %v6694, 1.442695
        %v6868 = vpow.pop %v6867
        %v6869 = vmul.f32 %v6695, 1.442695
        %v6870 = vpow.pop %v6869
        %v6871 = vmul.f32 %v6696, 1.442695
        %v6872 = vpow.pop %v6871
        %v6873 = vmul.f32 %v6697, 1.442695
        %v6874 = vpow.pop %v6873
        %v6875 = vmul.f32 %v6698, 1.442695
        %v6876 = vpow.pop %v6875
        %v6877 = vmul.f32 %v6699, 1.442695
        %v6878 = vpow.pop %v6877
        %v6879 = vmul.f32 %v6700, 1.442695
        %v6880 = vpow.pop %v6879
        %v6881 = vmul.f32 %v6701, 1.442695
        %v6882 = vpow.pop %v6881
        %v6883 = vmul.f32 %v6702, 1.442695
        %v6884 = vpow.pop %v6883
        %v6885 = vmul.f32 %v6703, 1.442695
        %v6886 = vpow.pop %v6885
        %v6887 = vmul.f32 %v6704, 1.442695
        %v6888 = vpow.pop %v6887
        %v6889 = vmul.f32 %v6705, 1.442695
        %v6890 = vpow.pop %v6889
        %v6891 = vmul.f32 %v6706, 1.442695
        %v6892 = vpow.pop %v6891
        %v6893 = vmul.f32 %v6707, 1.442695
        %v6894 = vpow.pop %v6893
        %v6895 = vmul.f32 %v6708, 1.442695
        %v6896 = vpow.pop %v6895
        %v6897 = vmul.f32 %v6709, 1.442695
        %v6898 = vpow.pop %v6897
        %v6899 = vmul.f32 %v6710, 1.442695
        %v6900 = vpow.pop %v6899
        %v6901 = vmul.f32 %v6711, 1.442695
        %v6902 = vpow.pop %v6901
        %v6903 = vmul.f32 %v6712, 1.442695
        %v6904 = vpow.pop %v6903
        %v6905 = vmul.f32 %v6713, 1.442695
        %v6906 = vpow.pop %v6905
        %v6907 = vmul.f32 %v6714, 1.442695
        %v6908 = vpow.pop %v6907
        %v6909 = vmul.f32 %v6715, 1.442695
        %v6910 = vpow.pop %v6909
        %v6911 = vmul.f32 %v6716, 1.442695
        %v6912 = vpow.pop %v6911
        %v6913 = vmul.f32 %v6717, 1.442695
        %v6914 = vpow.pop %v6913
        %v6915 = vmul.f32 %v6718, 1.442695
        %v6916 = vpow.pop %v6915
        %v6917 = vmul.f32 %v6719, 1.442695
        %v6918 = vpow.pop %v6917
        %v6919 = vmul.f32 %v6720, 1.442695
        %v6920 = vpow.pop %v6919
        %v6921 = vmul.f32 %v6721, 1.442695
        %v6922 = vpow.pop %v6921
        %v6923 = vmul.f32 %v6722, 1.442695
        %v6924 = vpow.pop %v6923
        %v6925 = vmul.f32 %v6723, 1.442695
        %v6926 = vpow.pop %v6925
        %v6927 = vmul.f32 %v6724, 1.442695
        %v6928 = vpow.pop %v6927
        %v6929 = vmul.f32 %v6725, 1.442695
        %v6930 = vpow.pop %v6929
        %v6931 = vmul.f32 %v6726, 1.442695
        %v6932 = vpow.pop %v6931
        %v6933 = vmul.f32 %v6727, 1.442695
        %v6934 = vpow.pop %v6933
        %v6935 = vmul.f32 %v6728, 1.442695
        %v6936 = vpow.pop %v6935
        %v6937 = vmul.f32 %v6729, 1.442695
        %v6938 = vpow.pop %v6937
        %v6939 = vmul.f32 %v6730, 1.442695
        %v6940 = vpow.pop %v6939
        %v6941 = vmul.f32 %v6731, 1.442695
        %v6942 = vpow.pop %v6941
        %v6943 = vmul.f32 %v6732, 1.442695
        %v6944 = vpow.pop %v6943
        %v6945 = vmul.f32 %v6733, 1.442695
        %v6946 = vpow.pop %v6945
        %v6947 = vmul.f32 %v6734, 1.442695
        %v6948 = vpow.pop %v6947
        %v6949 = vmul.f32 %v6735, 1.442695
        %v6950 = vpow.pop %v6949
        %v6951 = vmul.f32 %v6736, 1.442695
        %v6952 = vpow.pop %v6951
        %v6953 = vmul.f32 %v6737, 1.442695
        %v6954 = vpow.pop %v6953
        %v6955 = vmul.f32 %v6738, 1.442695
        %v6956 = vpow.pop %v6955
        %v6957 = vmul.f32 %v6739, 1.442695
        %v6958 = vpow.pop %v6957
        %v6959 = vmul.f32 %v6740, 1.442695
        %v6960 = vpow.pop %v6959
        %v6961 = vmul.f32 %v6741, 1.442695
        %v6962 = vpow.pop %v6961
        %v6963 = vmul.f32 %v6742, 1.442695
        %v6964 = vpow.pop %v6963
        %v6965 = vmul.f32 %v6743, 1.442695
        %v6966 = vpow.pop %v6965
        %v6967 = vmul.f32 %v6744, 1.442695
        %v6968 = vpow.pop %v6967
        %v6969 = vadd.f32 %v6746, 1.0
        %v6970 = vadd.f32 %v6748, 1.0
        %v6971 = vadd.f32 %v6750, 1.0
        %v6972 = vadd.f32 %v6752, 1.0
        %v6973 = vadd.f32 %v6754, 1.0
        %v6974 = vadd.f32 %v6756, 1.0
        %v6975 = vadd.f32 %v6758, 1.0
        %v6976 = vadd.f32 %v6760, 1.0
        %v6977 = vadd.f32 %v6762, 1.0
        %v6978 = vadd.f32 %v6764, 1.0
        %v6979 = vadd.f32 %v6766, 1.0
        %v6980 = vadd.f32 %v6768, 1.0
        %v6981 = vadd.f32 %v6770, 1.0
        %v6982 = vadd.f32 %v6772, 1.0
        %v6983 = vadd.f32 %v6774, 1.0
        %v6984 = vadd.f32 %v6776, 1.0
        %v6985 = vadd.f32 %v6778, 1.0
        %v6986 = vadd.f32 %v6780, 1.0
        %v6987 = vadd.f32 %v6782, 1.0
        %v6988 = vadd.f32 %v6784, 1.0
        %v6989 = vadd.f32 %v6786, 1.0
        %v6990 = vadd.f32 %v6788, 1.0
        %v6991 = vadd.f32 %v6790, 1.0
        %v6992 = vadd.f32 %v6792, 1.0
        %v6993 = vadd.f32 %v6794, 1.0
        %v6994 = vadd.f32 %v6796, 1.0
        %v6995 = vadd.f32 %v6798, 1.0
        %v6996 = vadd.f32 %v6800, 1.0
        %v6997 = vadd.f32 %v6802, 1.0
        %v6998 = vadd.f32 %v6804, 1.0
        %v6999 = vadd.f32 %v6806, 1.0
        %v7000 = vadd.f32 %v6808, 1.0
        %v7001 = vadd.f32 %v6810, 1.0
        %v7002 = vadd.f32 %v6812, 1.0
        %v7003 = vadd.f32 %v6814, 1.0
        %v7004 = vadd.f32 %v6816, 1.0
        %v7005 = vadd.f32 %v6818, 1.0
        %v7006 = vadd.f32 %v6820, 1.0
        %v7007 = vadd.f32 %v6822, 1.0
        %v7008 = vadd.f32 %v6824, 1.0
        %v7009 = vadd.f32 %v6826, 1.0
        %v7010 = vadd.f32 %v6828, 1.0
        %v7011 = vadd.f32 %v6830, 1.0
        %v7012 = vadd.f32 %v6832, 1.0
        %v7013 = vadd.f32 %v6834, 1.0
        %v7014 = vadd.f32 %v6836, 1.0
        %v7015 = vadd.f32 %v6838, 1.0
        %v7016 = vadd.f32 %v6840, 1.0
        %v7017 = vadd.f32 %v6842, 1.0
        %v7018 = vadd.f32 %v6844, 1.0
        %v7019 = vadd.f32 %v6846, 1.0
        %v7020 = vadd.f32 %v6848, 1.0
        %v7021 = vadd.f32 %v6850, 1.0
        %v7022 = vadd.f32 %v6852, 1.0
        %v7023 = vadd.f32 %v6854, 1.0
        %v7024 = vadd.f32 %v6856, 1.0
        %v7025 = vadd.f32 %v6858, 1.0
        %v7026 = vadd.f32 %v6860, 1.0
        %v7027 = vadd.f32 %v6862, 1.0
        %v7028 = vadd.f32 %v6864, 1.0
        %v7029 = vadd.f32 %v6866, 1.0
        %v7030 = vadd.f32 %v6868, 1.0
        %v7031 = vadd.f32 %v6870, 1.0
        %v7032 = vadd.f32 %v6872, 1.0
        %v7033 = vadd.f32 %v6874, 1.0
        %v7034 = vadd.f32 %v6876, 1.0
        %v7035 = vadd.f32 %v6878, 1.0
        %v7036 = vadd.f32 %v6880, 1.0
        %v7037 = vadd.f32 %v6882, 1.0
        %v7038 = vadd.f32 %v6884, 1.0
        %v7039 = vadd.f32 %v6886, 1.0
        %v7040 = vadd.f32 %v6888, 1.0
        %v7041 = vadd.f32 %v6890, 1.0
        %v7042 = vadd.f32 %v6892, 1.0
        %v7043 = vadd.f32 %v6894, 1.0
        %v7044 = vadd.f32 %v6896, 1.0
        %v7045 = vadd.f32 %v6898, 1.0
        %v7046 = vadd.f32 %v6900, 1.0
        %v7047 = vadd.f32 %v6902, 1.0
        %v7048 = vadd.f32 %v6904, 1.0
        %v7049 = vadd.f32 %v6906, 1.0
        %v7050 = vadd.f32 %v6908, 1.0
        %v7051 = vadd.f32 %v6910, 1.0
        %v7052 = vadd.f32 %v6912, 1.0
        %v7053 = vadd.f32 %v6914, 1.0
        %v7054 = vadd.f32 %v6916, 1.0
        %v7055 = vadd.f32 %v6918, 1.0
        %v7056 = vadd.f32 %v6920, 1.0
        %v7057 = vadd.f32 %v6922, 1.0
        %v7058 = vadd.f32 %v6924, 1.0
        %v7059 = vadd.f32 %v6926, 1.0
        %v7060 = vadd.f32 %v6928, 1.0
        %v7061 = vadd.f32 %v6930, 1.0
        %v7062 = vadd.f32 %v6932, 1.0
        %v7063 = vadd.f32 %v6934, 1.0
        %v7064 = vadd.f32 %v6936, 1.0
        %v7065 = vadd.f32 %v6938, 1.0
        %v7066 = vadd.f32 %v6940, 1.0
        %v7067 = vadd.f32 %v6942, 1.0
        %v7068 = vadd.f32 %v6944, 1.0
        %v7069 = vadd.f32 %v6946, 1.0
        %v7070 = vadd.f32 %v6948, 1.0
        %v7071 = vadd.f32 %v6950, 1.0
        %v7072 = vadd.f32 %v6952, 1.0
        %v7073 = vadd.f32 %v6954, 1.0
        %v7074 = vadd.f32 %v6956, 1.0
        %v7075 = vadd.f32 %v6958, 1.0
        %v7076 = vadd.f32 %v6960, 1.0
        %v7077 = vadd.f32 %v6962, 1.0
        %v7078 = vadd.f32 %v6964, 1.0
        %v7079 = vadd.f32 %v6966, 1.0
        %v7080 = vadd.f32 %v6968, 1.0
        %v7081 = vrcp.pop %v6969
        %v7082 = vmul.f32 1.0, %v7081
        %v7083 = vrcp.pop %v6970
        %v7084 = vmul.f32 1.0, %v7083
        %v7085 = vrcp.pop %v6971
        %v7086 = vmul.f32 1.0, %v7085
        %v7087 = vrcp.pop %v6972
        %v7088 = vmul.f32 1.0, %v7087
        %v7089 = vrcp.pop %v6973
        %v7090 = vmul.f32 1.0, %v7089
        %v7091 = vrcp.pop %v6974
        %v7092 = vmul.f32 1.0, %v7091
        %v7093 = vrcp.pop %v6975
        %v7094 = vmul.f32 1.0, %v7093
        %v7095 = vrcp.pop %v6976
        %v7096 = vmul.f32 1.0, %v7095
        %v7097 = vrcp.pop %v6977
        %v7098 = vmul.f32 1.0, %v7097
        %v7099 = vrcp.pop %v6978
        %v7100 = vmul.f32 1.0, %v7099
        %v7101 = vrcp.pop %v6979
        %v7102 = vmul.f32 1.0, %v7101
        %v7103 = vrcp.pop %v6980
        %v7104 = vmul.f32 1.0, %v7103
        %v7105 = vrcp.pop %v6981
        %v7106 = vmul.f32 1.0, %v7105
        %v7107 = vrcp.pop %v6982
        %v7108 = vmul.f32 1.0, %v7107
        %v7109 = vrcp.pop %v6983
        %v7110 = vmul.f32 1.0, %v7109
        %v7111 = vrcp.pop %v6984
        %v7112 = vmul.f32 1.0, %v7111
        %v7113 = vrcp.pop %v6985
        %v7114 = vmul.f32 1.0, %v7113
        %v7115 = vrcp.pop %v6986
        %v7116 = vmul.f32 1.0, %v7115
        %v7117 = vrcp.pop %v6987
        %v7118 = vmul.f32 1.0, %v7117
        %v7119 = vrcp.pop %v6988
        %v7120 = vmul.f32 1.0, %v7119
        %v7121 = vrcp.pop %v6989
        %v7122 = vmul.f32 1.0, %v7121
        %v7123 = vrcp.pop %v6990
        %v7124 = vmul.f32 1.0, %v7123
        %v7125 = vrcp.pop %v6991
        %v7126 = vmul.f32 1.0, %v7125
        %v7127 = vrcp.pop %v6992
        %v7128 = vmul.f32 1.0, %v7127
        %v7129 = vrcp.pop %v6993
        %v7130 = vmul.f32 1.0, %v7129
        %v7131 = vrcp.pop %v6994
        %v7132 = vmul.f32 1.0, %v7131
        %v7133 = vrcp.pop %v6995
        %v7134 = vmul.f32 1.0, %v7133
        %v7135 = vrcp.pop %v6996
        %v7136 = vmul.f32 1.0, %v7135
        %v7137 = vrcp.pop %v6997
        %v7138 = vmul.f32 1.0, %v7137
        %v7139 = vrcp.pop %v6998
        %v7140 = vmul.f32 1.0, %v7139
        %v7141 = vrcp.pop %v6999
        %v7142 = vmul.f32 1.0, %v7141
        %v7143 = vrcp.pop %v7000
        %v7144 = vmul.f32 1.0, %v7143
        %v7145 = vrcp.pop %v7001
        %v7146 = vmul.f32 1.0, %v7145
        %v7147 = vrcp.pop %v7002
        %v7148 = vmul.f32 1.0, %v7147
        %v7149 = vrcp.pop %v7003
        %v7150 = vmul.f32 1.0, %v7149
        %v7151 = vrcp.pop %v7004
        %v7152 = vmul.f32 1.0, %v7151
        %v7153 = vrcp.pop %v7005
        %v7154 = vmul.f32 1.0, %v7153
        %v7155 = vrcp.pop %v7006
        %v7156 = vmul.f32 1.0, %v7155
        %v7157 = vrcp.pop %v7007
        %v7158 = vmul.f32 1.0, %v7157
        %v7159 = vrcp.pop %v7008
        %v7160 = vmul.f32 1.0, %v7159
        %v7161 = vrcp.pop %v7009
        %v7162 = vmul.f32 1.0, %v7161
        %v7163 = vrcp.pop %v7010
        %v7164 = vmul.f32 1.0, %v7163
        %v7165 = vrcp.pop %v7011
        %v7166 = vmul.f32 1.0, %v7165
        %v7167 = vrcp.pop %v7012
        %v7168 = vmul.f32 1.0, %v7167
        %v7169 = vrcp.pop %v7013
        %v7170 = vmul.f32 1.0, %v7169
        %v7171 = vrcp.pop %v7014
        %v7172 = vmul.f32 1.0, %v7171
        %v7173 = vrcp.pop %v7015
        %v7174 = vmul.f32 1.0, %v7173
        %v7175 = vrcp.pop %v7016
        %v7176 = vmul.f32 1.0, %v7175
        %v7177 = vrcp.pop %v7017
        %v7178 = vmul.f32 1.0, %v7177
        %v7179 = vrcp.pop %v7018
        %v7180 = vmul.f32 1.0, %v7179
        %v7181 = vrcp.pop %v7019
        %v7182 = vmul.f32 1.0, %v7181
        %v7183 = vrcp.pop %v7020
        %v7184 = vmul.f32 1.0, %v7183
        %v7185 = vrcp.pop %v7021
        %v7186 = vmul.f32 1.0, %v7185
        %v7187 = vrcp.pop %v7022
        %v7188 = vmul.f32 1.0, %v7187
        %v7189 = vrcp.pop %v7023
        %v7190 = vmul.f32 1.0, %v7189
        %v7191 = vrcp.pop %v7024
        %v7192 = vmul.f32 1.0, %v7191
        %v7193 = vrcp.pop %v7025
        %v7194 = vmul.f32 1.0, %v7193
        %v7195 = vrcp.pop %v7026
        %v7196 = vmul.f32 1.0, %v7195
        %v7197 = vrcp.pop %v7027
        %v7198 = vmul.f32 1.0, %v7197
        %v7199 = vrcp.pop %v7028
        %v7200 = vmul.f32 1.0, %v7199
        %v7201 = vrcp.pop %v7029
        %v7202 = vmul.f32 1.0, %v7201
        %v7203 = vrcp.pop %v7030
        %v7204 = vmul.f32 1.0, %v7203
        %v7205 = vrcp.pop %v7031
        %v7206 = vmul.f32 1.0, %v7205
        %v7207 = vrcp.pop %v7032
        %v7208 = vmul.f32 1.0, %v7207
        %v7209 = vrcp.pop %v7033
        %v7210 = vmul.f32 1.0, %v7209
        %v7211 = vrcp.pop %v7034
        %v7212 = vmul.f32 1.0, %v7211
        %v7213 = vrcp.pop %v7035
        %v7214 = vmul.f32 1.0, %v7213
        %v7215 = vrcp.pop %v7036
        %v7216 = vmul.f32 1.0, %v7215
        %v7217 = vrcp.pop %v7037
        %v7218 = vmul.f32 1.0, %v7217
        %v7219 = vrcp.pop %v7038
        %v7220 = vmul.f32 1.0, %v7219
        %v7221 = vrcp.pop %v7039
        %v7222 = vmul.f32 1.0, %v7221
        %v7223 = vrcp.pop %v7040
        %v7224 = vmul.f32 1.0, %v7223
        %v7225 = vrcp.pop %v7041
        %v7226 = vmul.f32 1.0, %v7225
        %v7227 = vrcp.pop %v7042
        %v7228 = vmul.f32 1.0, %v7227
        %v7229 = vrcp.pop %v7043
        %v7230 = vmul.f32 1.0, %v7229
        %v7231 = vrcp.pop %v7044
        %v7232 = vmul.f32 1.0, %v7231
        %v7233 = vrcp.pop %v7045
        %v7234 = vmul.f32 1.0, %v7233
        %v7235 = vrcp.pop %v7046
        %v7236 = vmul.f32 1.0, %v7235
        %v7237 = vrcp.pop %v7047
        %v7238 = vmul.f32 1.0, %v7237
        %v7239 = vrcp.pop %v7048
        %v7240 = vmul.f32 1.0, %v7239
        %v7241 = vrcp.pop %v7049
        %v7242 = vmul.f32 1.0, %v7241
        %v7243 = vrcp.pop %v7050
        %v7244 = vmul.f32 1.0, %v7243
        %v7245 = vrcp.pop %v7051
        %v7246 = vmul.f32 1.0, %v7245
        %v7247 = vrcp.pop %v7052
        %v7248 = vmul.f32 1.0, %v7247
        %v7249 = vrcp.pop %v7053
        %v7250 = vmul.f32 1.0, %v7249
        %v7251 = vrcp.pop %v7054
        %v7252 = vmul.f32 1.0, %v7251
        %v7253 = vrcp.pop %v7055
        %v7254 = vmul.f32 1.0, %v7253
        %v7255 = vrcp.pop %v7056
        %v7256 = vmul.f32 1.0, %v7255
        %v7257 = vrcp.pop %v7057
        %v7258 = vmul.f32 1.0, %v7257
        %v7259 = vrcp.pop %v7058
        %v7260 = vmul.f32 1.0, %v7259
        %v7261 = vrcp.pop %v7059
        %v7262 = vmul.f32 1.0, %v7261
        %v7263 = vrcp.pop %v7060
        %v7264 = vmul.f32 1.0, %v7263
        %v7265 = vrcp.pop %v7061
        %v7266 = vmul.f32 1.0, %v7265
        %v7267 = vrcp.pop %v7062
        %v7268 = vmul.f32 1.0, %v7267
        %v7269 = vrcp.pop %v7063
        %v7270 = vmul.f32 1.0, %v7269
        %v7271 = vrcp.pop %v7064
        %v7272 = vmul.f32 1.0, %v7271
        %v7273 = vrcp.pop %v7065
        %v7274 = vmul.f32 1.0, %v7273
        %v7275 = vrcp.pop %v7066
        %v7276 = vmul.f32 1.0, %v7275
        %v7277 = vrcp.pop %v7067
        %v7278 = vmul.f32 1.0, %v7277
        %v7279 = vrcp.pop %v7068
        %v7280 = vmul.f32 1.0, %v7279
        %v7281 = vrcp.pop %v7069
        %v7282 = vmul.f32 1.0, %v7281
        %v7283 = vrcp.pop %v7070
        %v7284 = vmul.f32 1.0, %v7283
        %v7285 = vrcp.pop %v7071
        %v7286 = vmul.f32 1.0, %v7285
        %v7287 = vrcp.pop %v7072
        %v7288 = vmul.f32 1.0, %v7287
        %v7289 = vrcp.pop %v7073
        %v7290 = vmul.f32 1.0, %v7289
        %v7291 = vrcp.pop %v7074
        %v7292 = vmul.f32 1.0, %v7291
        %v7293 = vrcp.pop %v7075
        %v7294 = vmul.f32 1.0, %v7293
        %v7295 = vrcp.pop %v7076
        %v7296 = vmul.f32 1.0, %v7295
        %v7297 = vrcp.pop %v7077
        %v7298 = vmul.f32 1.0, %v7297
        %v7299 = vrcp.pop %v7078
        %v7300 = vmul.f32 1.0, %v7299
        %v7301 = vrcp.pop %v7079
        %v7302 = vmul.f32 1.0, %v7301
        %v7303 = vrcp.pop %v7080
        %v7304 = vmul.f32 1.0, %v7303
        %7305 = vst [vmem:[%s507] sm:$0xff] %v7082
        %7306 = vst [vmem:[%s507 + $0x8] sm:$0xff] %v7084
        %7307 = vst [vmem:[%s507 + $0x10] sm:$0xff] %v7086
        %7308 = vst [vmem:[%s507 + $0x18] sm:$0xff] %v7088
        %7309 = vst [vmem:[%s507 + $0x20] sm:$0xff] %v7090
        %7310 = vst [vmem:[%s507 + $0x28] sm:$0xff] %v7092
        %7311 = vst [vmem:[%s507 + $0x30] sm:$0xff] %v7094
        %7312 = vst [vmem:[%s507 + $0x38] sm:$0xff] %v7096
        %7313 = vst [vmem:[%s507 + $0x40] sm:$0xff] %v7098
        %7314 = vst [vmem:[%s507 + $0x48] sm:$0xff] %v7100
        %7315 = vst [vmem:[%s507 + $0x50] sm:$0xff] %v7102
        %7316 = vst [vmem:[%s507 + $0x58] sm:$0xff] %v7104
        %7317 = vst [vmem:[%s507 + $0x60] sm:$0xff] %v7106
        %7318 = vst [vmem:[%s507 + $0x68] sm:$0xff] %v7108
        %7319 = vst [vmem:[%s507 + $0x70] sm:$0xff] %v7110
        %7320 = vst [vmem:[%s507 + $0x78] sm:$0xff] %v7112
        %7321 = vst [vmem:[%s507 + $0x80] sm:$0xff] %v7114
        %7322 = vst [vmem:[%s507 + $0x88] sm:$0xff] %v7116
        %7323 = vst [vmem:[%s507 + $0x90] sm:$0xff] %v7118
        %7324 = vst [vmem:[%s507 + $0x98] sm:$0xff] %v7120
        %7325 = vst [vmem:[%s507 + $0xa0] sm:$0xff] %v7122
        %7326 = vst [vmem:[%s507 + $0xa8] sm:$0xff] %v7124
        %7327 = vst [vmem:[%s507 + $0xb0] sm:$0xff] %v7126
        %7328 = vst [vmem:[%s507 + $0xb8] sm:$0xff] %v7128
        %7329 = vst [vmem:[%s507 + $0xc0] sm:$0xff] %v7130
        %7330 = vst [vmem:[%s507 + $0xc8] sm:$0xff] %v7132
        %7331 = vst [vmem:[%s507 + $0xd0] sm:$0xff] %v7134
        %7332 = vst [vmem:[%s507 + $0xd8] sm:$0xff] %v7136
        %7333 = vst [vmem:[%s507 + $0xe0] sm:$0xff] %v7138
        %7334 = vst [vmem:[%s507 + $0xe8] sm:$0xff] %v7140
        %7335 = vst [vmem:[%s507 + $0xf0] sm:$0xff] %v7142
        %7336 = vst [vmem:[%s507 + $0xf8] sm:$0xff] %v7144
        %7337 = vst [vmem:[%s507 + $0x100] sm:$0xff] %v7146
        %7338 = vst [vmem:[%s507 + $0x108] sm:$0xff] %v7148
        %7339 = vst [vmem:[%s507 + $0x110] sm:$0xff] %v7150
        %7340 = vst [vmem:[%s507 + $0x118] sm:$0xff] %v7152
        %7341 = vst [vmem:[%s507 + $0x120] sm:$0xff] %v7154
        %7342 = vst [vmem:[%s507 + $0x128] sm:$0xff] %v7156
        %7343 = vst [vmem:[%s507 + $0x130] sm:$0xff] %v7158
        %7344 = vst [vmem:[%s507 + $0x138] sm:$0xff] %v7160
        %7345 = vst [vmem:[%s507 + $0x140] sm:$0xff] %v7162
        %7346 = vst [vmem:[%s507 + $0x148] sm:$0xff] %v7164
        %7347 = vst [vmem:[%s507 + $0x150] sm:$0xff] %v7166
        %7348 = vst [vmem:[%s507 + $0x158] sm:$0xff] %v7168
        %7349 = vst [vmem:[%s507 + $0x160] sm:$0xff] %v7170
        %7350 = vst [vmem:[%s507 + $0x168] sm:$0xff] %v7172
        %7351 = vst [vmem:[%s507 + $0x170] sm:$0xff] %v7174
        %7352 = vst [vmem:[%s507 + $0x178] sm:$0xff] %v7176
        %7353 = vst [vmem:[%s507 + $0x180] sm:$0xff] %v7178
        %7354 = vst [vmem:[%s507 + $0x188] sm:$0xff] %v7180
        %7355 = vst [vmem:[%s507 + $0x190] sm:$0xff] %v7182
        %7356 = vst [vmem:[%s507 + $0x198] sm:$0xff] %v7184
        %7357 = vst [vmem:[%s507 + $0x1a0] sm:$0xff] %v7186
        %7358 = vst [vmem:[%s507 + $0x1a8] sm:$0xff] %v7188
        %7359 = vst [vmem:[%s507 + $0x1b0] sm:$0xff] %v7190
        %7360 = vst [vmem:[%s507 + $0x1b8] sm:$0xff] %v7192
        %7361 = vst [vmem:[%s507 + $0x1c0] sm:$0xff] %v7194
        %7362 = vst [vmem:[%s507 + $0x1c8] sm:$0xff] %v7196
        %7363 = vst [vmem:[%s507 + $0x1d0] sm:$0xff] %v7198
        %7364 = vst [vmem:[%s507 + $0x1d8] sm:$0xff] %v7200
        %7365 = vst [vmem:[%s507 + $0x1e0] sm:$0xff] %v7202
        %7366 = vst [vmem:[%s507 + $0x1e8] sm:$0xff] %v7204
        %7367 = vst [vmem:[%s507 + $0x1f0] sm:$0xff] %v7206
        %7368 = vst [vmem:[%s507 + $0x1f8] sm:$0xff] %v7208
        %7369 = vst [vmem:[%s507 + $0x200] sm:$0xff] %v7210
        %7370 = vst [vmem:[%s507 + $0x208] sm:$0xff] %v7212
        %7371 = vst [vmem:[%s507 + $0x210] sm:$0xff] %v7214
        %7372 = vst [vmem:[%s507 + $0x218] sm:$0xff] %v7216
        %7373 = vst [vmem:[%s507 + $0x220] sm:$0xff] %v7218
        %7374 = vst [vmem:[%s507 + $0x228] sm:$0xff] %v7220
        %7375 = vst [vmem:[%s507 + $0x230] sm:$0xff] %v7222
        %7376 = vst [vmem:[%s507 + $0x238] sm:$0xff] %v7224
        %7377 = vst [vmem:[%s507 + $0x240] sm:$0xff] %v7226
        %7378 = vst [vmem:[%s507 + $0x248] sm:$0xff] %v7228
        %7379 = vst [vmem:[%s507 + $0x250] sm:$0xff] %v7230
        %7380 = vst [vmem:[%s507 + $0x258] sm:$0xff] %v7232
        %7381 = vst [vmem:[%s507 + $0x260] sm:$0xff] %v7234
        %7382 = vst [vmem:[%s507 + $0x268] sm:$0xff] %v7236
        %7383 = vst [vmem:[%s507 + $0x270] sm:$0xff] %v7238
        %7384 = vst [vmem:[%s507 + $0x278] sm:$0xff] %v7240
        %7385 = vst [vmem:[%s507 + $0x280] sm:$0xff] %v7242
        %7386 = vst [vmem:[%s507 + $0x288] sm:$0xff] %v7244
        %7387 = vst [vmem:[%s507 + $0x290] sm:$0xff] %v7246
        %7388 = vst [vmem:[%s507 + $0x298] sm:$0xff] %v7248
        %7389 = vst [vmem:[%s507 + $0x2a0] sm:$0xff] %v7250
        %7390 = vst [vmem:[%s507 + $0x2a8] sm:$0xff] %v7252
        %7391 = vst [vmem:[%s507 + $0x2b0] sm:$0xff] %v7254
        %7392 = vst [vmem:[%s507 + $0x2b8] sm:$0xff] %v7256
        %7393 = vst [vmem:[%s507 + $0x2c0] sm:$0xff] %v7258
        %7394 = vst [vmem:[%s507 + $0x2c8] sm:$0xff] %v7260
        %7395 = vst [vmem:[%s507 + $0x2d0] sm:$0xff] %v7262
        %7396 = vst [vmem:[%s507 + $0x2d8] sm:$0xff] %v7264
        %7397 = vst [vmem:[%s507 + $0x2e0] sm:$0xff] %v7266
        %7398 = vst [vmem:[%s507 + $0x2e8] sm:$0xff] %v7268
        %7399 = vst [vmem:[%s507 + $0x2f0] sm:$0xff] %v7270
        %7400 = vst [vmem:[%s507 + $0x2f8] sm:$0xff] %v7272
        %7401 = vst [vmem:[%s507 + $0x300] sm:$0xff] %v7274
        %7402 = vst [vmem:[%s507 + $0x308] sm:$0xff] %v7276
        %7403 = vst [vmem:[%s507 + $0x310] sm:$0xff] %v7278
        %7404 = vst [vmem:[%s507 + $0x318] sm:$0xff] %v7280
        %7405 = vst [vmem:[%s507 + $0x320] sm:$0xff] %v7282
        %7406 = vst [vmem:[%s507 + $0x328] sm:$0xff] %v7284
        %7407 = vst [vmem:[%s507 + $0x330] sm:$0xff] %v7286
        %7408 = vst [vmem:[%s507 + $0x338] sm:$0xff] %v7288
        %7409 = vst [vmem:[%s507 + $0x340] sm:$0xff] %v7290
        %7410 = vst [vmem:[%s507 + $0x348] sm:$0xff] %v7292
        %7411 = vst [vmem:[%s507 + $0x350] sm:$0xff] %v7294
        %7412 = vst [vmem:[%s507 + $0x358] sm:$0xff] %v7296
        %7413 = vst [vmem:[%s507 + $0x360] sm:$0xff] %v7298
        %7414 = vst [vmem:[%s507 + $0x368] sm:$0xff] %v7300
        %7415 = vst [vmem:[%s507 + $0x370] sm:$0xff] %v7302
        %7416 = vst [vmem:[%s507 + $0x378] sm:$0xff] %v7304
        %7417 = vst [vmem:[%s514] sm:$0xff] %v3598
        %7418 = vst [vmem:[%s514 + $0x8] sm:$0xff] %v3600
        %7419 = vst [vmem:[%s514 + $0x10] sm:$0xff] %v3602
        %7420 = vst [vmem:[%s514 + $0x18] sm:$0xff] %v3604
        %7421 = vst [vmem:[%s514 + $0x20] sm:$0xff] %v3608
        %7422 = vst [vmem:[%s514 + $0x28] sm:$0xff] %v3610
        %7423 = vst [vmem:[%s514 + $0x30] sm:$0xff] %v3612
        %7424 = vst [vmem:[%s514 + $0x38] sm:$0xff] %v3614
        %7425 = vst [vmem:[%s514 + $0x40] sm:$0xff] %v3618
        %7426 = vst [vmem:[%s514 + $0x48] sm:$0xff] %v3620
        %7427 = vst [vmem:[%s514 + $0x50] sm:$0xff] %v3622
        %7428 = vst [vmem:[%s514 + $0x58] sm:$0xff] %v3624
        %7429 = vst [vmem:[%s514 + $0x60] sm:$0xff] %v3628
        %7430 = vst [vmem:[%s514 + $0x68] sm:$0xff] %v3630
        %7431 = vst [vmem:[%s514 + $0x70] sm:$0xff] %v3632
        %7432 = vst [vmem:[%s514 + $0x78] sm:$0xff] %v3634
        %7433 = vst [vmem:[%s514 + $0x80] sm:$0xff] %v3638
        %7434 = vst [vmem:[%s514 + $0x88] sm:$0xff] %v3640
        %7435 = vst [vmem:[%s514 + $0x90] sm:$0xff] %v3642
        %7436 = vst [vmem:[%s514 + $0x98] sm:$0xff] %v3644
        %7437 = vst [vmem:[%s514 + $0xa0] sm:$0xff] %v3648
        %7438 = vst [vmem:[%s514 + $0xa8] sm:$0xff] %v3650
        %7439 = vst [vmem:[%s514 + $0xb0] sm:$0xff] %v3652
        %7440 = vst [vmem:[%s514 + $0xb8] sm:$0xff] %v3654
        %7441 = vst [vmem:[%s514 + $0xc0] sm:$0xff] %v3658
        %7442 = vst [vmem:[%s514 + $0xc8] sm:$0xff] %v3660
        %7443 = vst [vmem:[%s514 + $0xd0] sm:$0xff] %v3662
        %7444 = vst [vmem:[%s514 + $0xd8] sm:$0xff] %v3664
        %7445 = vst [vmem:[%s514 + $0xe0] sm:$0xff] %v3668
        %7446 = vst [vmem:[%s514 + $0xe8] sm:$0xff] %v3670
        %7447 = vst [vmem:[%s514 + $0xf0] sm:$0xff] %v3672
        %7448 = vst [vmem:[%s514 + $0xf8] sm:$0xff] %v3674
        %s7449 = sand.u32 %s265, 1
        %s7450 = scalar_lea.sflag [#allocation4], %s7449
        %s7451 = sand.u32 %s265, 1
        %s7452 = smul.addr %s7451, 896
        %s7453 = scalar_lea.vmem [#allocation13], %s7452
        %s7454 = sand.u32 %s291, 1
        %s7455 = scalar_lea.sflag [#allocation15], %s7454
        %s7456 = sand.u32 %s291, 1
        %s7457 = smul.addr %s7456, 256
        %s7458 = scalar_lea.vmem [#allocation14], %s7457
        // Predicated region
        $region85: #{tpu_custom_call.1} parent=59 // pred_check
          %p7459 = pneg %p275
        $region86: #{tpu_custom_call.1} parent=59 // pred_check_branch
          %7461 = sbr.rel (%p7459) target = $region88
        $region87: #{tpu_custom_call.1} parent=59 // pred_region
          %s7462 = smul.u32 16, %s37
          %s7464 = ssub.s32 14336, 14336
          %7465 = vsyncadd %s7450, %s7464
          %s7466 = smul.addr %s7462, 7
          %s7467 = smul.addr %s7466, 128
          %s7468 = scalar_lea.hbm %s10, %s7467
          %s7469 = sshll.u32 %s7453, 4
          %s7470 = int_to_ptr.vmem [resolvable:$true] %s7469
          %7475 = dma.vmem_to_hbm [thread:$0]  %s7470, 14336, %s7468, %s7450, 896, 896, 56
        $region88: #{tpu_custom_call.1} parent=59 // pred_fallthru
          _
        // Predicated region
        $region89: #{tpu_custom_call.1} parent=59 // pred_check
          %p7476 = pneg %p301
        $region90: #{tpu_custom_call.1} parent=59 // pred_check_branch
          %7478 = sbr.rel (%p7476) target = $region92
        $region91: #{tpu_custom_call.1} parent=59 // pred_region
          %s7479 = smul.u32 16, %s37
          %s7481 = ssub.s32 4096, 4096
          %7482 = vsyncadd %s7455, %s7481
          %s7483 = smul.addr %s7479, 2
          %s7484 = smul.addr %s7483, 128
          %s7485 = scalar_lea.hbm %s11, %s7484
          %s7486 = sshll.u32 %s7458, 4
          %s7487 = int_to_ptr.vmem [resolvable:$true] %s7486
          %7492 = dma.vmem_to_hbm [thread:$0]  %s7487, 4096, %s7485, %s7455, 256, 256, 16
        $region92: #{tpu_custom_call.1} parent=59 // pred_fallthru
          _
      $region60: #{tpu_custom_call.1} parent=5 // pred_fallthru
        _
      %p7493 = scmp.le.s32.totalorder 2, %s32
      // Predicated region
      $region93: #{tpu_custom_call.1} parent=5 // pred_check
        %p7494 = pneg %p7493
      $region94: #{tpu_custom_call.1} parent=5 // pred_check_branch
        %7496 = sbr.rel (%p7494) target = $region96
      $region95: #{tpu_custom_call.1} parent=5 // pred_region
        %s7497 = ssub.s32 %s32, 2
        // Predicated region
        $region97: #{tpu_custom_call.1} parent=95 // pred_check
          %p7498 = pneg %p281
        $region98: #{tpu_custom_call.1} parent=95 // pred_check_branch
          %7500 = sbr.rel (%p7498) target = $region100
        $region99: #{tpu_custom_call.1} parent=95 // pred_region
          %s7501 = sand.u32 %s266, 1
          %s7502 = scalar_lea.sflag [#allocation4], %s7501
          %s7503 = sand.u32 %s266, 1
          %s7504 = smul.addr %s7503, 896
          %s7505 = scalar_lea.vmem [#allocation13], %s7504
          %7506 = dma.done %s7502, 14336
        $region100: #{tpu_custom_call.1} parent=95 // pred_fallthru
          _
        // Predicated region
        $region101: #{tpu_custom_call.1} parent=95 // pred_check
          %p7507 = pneg %p307
        $region102: #{tpu_custom_call.1} parent=95 // pred_check_branch
          %7509 = sbr.rel (%p7507) target = $region104
        $region103: #{tpu_custom_call.1} parent=95 // pred_region
          %s7510 = sand.u32 %s292, 1
          %s7511 = scalar_lea.sflag [#allocation15], %s7510
          %s7512 = sand.u32 %s292, 1
          %s7513 = smul.addr %s7512, 256
          %s7514 = scalar_lea.vmem [#allocation14], %s7513
          %7515 = dma.done %s7511, 4096
        $region104: #{tpu_custom_call.1} parent=95 // pred_fallthru
          _
      $region96: #{tpu_custom_call.1} parent=5 // pred_fallthru
        _
    $region6: #{tpu_custom_call.1} parent=1 // loop_footer
      %s36 = sadd.s32 1, %s32
    $region7: #{tpu_custom_call.1} parent=1 // loop_footer_branch
      %31 = sbr.rel target = $region3
    $region8: #{tpu_custom_call.1} parent=1 // loop_exit
      _
    %7516 = vsyncpa [#allocation3], 1
    %s7517 = scalar_lea.sflag [#allocation3], 1
    %7518 = vsyncpa %s7517, 1
    %7519 = vsyncpa [#allocation6], 1
    %s7520 = scalar_lea.sflag [#allocation6], 1
    %7521 = vsyncpa %s7520, 1
    %7522 = vsyncpa [#allocation9], 1
    %7523 = vsyncpa [#allocation12], 1
    %7524 = vsyncpa [#allocation4], 1
    %s7525 = scalar_lea.sflag [#allocation4], 1
    %7526 = vsyncpa %s7525, 1
    %7527 = vsyncpa [#allocation15], 1
    %s7528 = scalar_lea.sflag [#allocation15], 1
    %7529 = vsyncpa %s7528, 1

</llo_original>
